<compile_context>
chip_gen: v7x
topology: tpu7x:2x2x1
jax: 0.10.0
libtpu: 0.0.40
codegen_flags: <defaults>
</compile_context>

<pallas_src>
import numpy as np
import jax
import jax.numpy as jnp
from jax import lax
from jax.experimental import pallas as pl
from jax.experimental.pallas import tpu as pltpu

_LAYERS = [  # (Cin, Cout, stride) -- matches LowLevelFeatNet.__init__
    (1, 64, 2),
    (64, 128, 1),
    (128, 128, 2),
    (128, 256, 1),
    (256, 256, 2),
    (256, 512, 1),
]

_ACT_DTYPE = jnp.bfloat16              # inter-layer activation storage dtype
_VMEM_CAP_FALLBACK = 128 * 1024 * 1024
_vmem_limit_cache = []


def _vmem_limit_bytes():
    """~75% of per-core VMEM: 96 MiB on v5e/v6e (128 MiB), 48 MiB on v7x (64 MiB)."""
    if not _vmem_limit_cache:
        cap = _VMEM_CAP_FALLBACK
        try:
            cap = int(pltpu.get_tpu_info().vmem_capacity_bytes)
        except Exception:
            pass
        _vmem_limit_cache.append(
            max(32 * 1024 * 1024, min(cap * 3 // 4, 96 * 1024 * 1024)))
    return _vmem_limit_cache[0]


def _compiler_params(n_grid_axes):
    return pltpu.CompilerParams(
        dimension_semantics=("parallel",) * n_grid_axes,
        vmem_limit_bytes=_vmem_limit_bytes(),
    )


def _fold_bn(conv_b, gamma, beta, mean, var, cout, eps=1e-5):
    """Fold eval-mode BN (+ conv bias) into a per-channel affine (f32)."""
    bn_scale = gamma / jnp.sqrt(var + eps)
    scale = bn_scale.reshape(1, cout).astype(jnp.float32)
    bias = (beta + (conv_b - mean) * bn_scale).reshape(1, cout).astype(jnp.float32)
    return scale, bias


# ---------------------------------------------------------------------------
# Pallas kernels
# ---------------------------------------------------------------------------
def _dot_bn_relu_kernel(p_ref, w_ref, s_ref, b_ref, o_ref):
    """Layer 1 (Cin=1): one (tile_m, 9) @ (9, Cout) MXU dot + BN affine + ReLU."""
    acc = jnp.dot(p_ref[...], w_ref[...], preferred_element_type=jnp.float32)
    o_ref[...] = jnp.maximum(acc * s_ref[...] + b_ref[...], 0.0).astype(o_ref.dtype)


def _make_row_conv_kernel(n_banks, tap_map, wo, tile_r):
    """Fused 3x3 conv + BN(eval) + ReLU over a block of `tile_r` output rows.

    bank refs  : n_banks x (tile_r, Wbank, Cin) bf16  (one input row per output row)
    w_ref      : (9, Cin, Tn) bf16                    (tap-major conv weights)
    s_ref/b_ref: (1, Tn) f32                          (folded BN scale / bias)
    o_ref      : (tile_r, wo, Tn)                     (bf16; f32 on last layer)

    tap_map[k] = (bank_index, column_offset) for tap k = ky*3 + kx.  The column
    taps are contiguous sublane slices of the in-VMEM bank rows, so the padded
    activation is never duplicated 9x in HBM.
    """
    def kernel(*refs):
        bank_refs = refs[:n_banks]
        w_ref, s_ref, b_ref, o_ref = refs[n_banks:]
        scale = s_ref[...]            # hoisted, loop-invariant
        bias = b_ref[...]

        def row_body(r, carry):
            acc = None
            for k, (bi, off) in enumerate(tap_map):
                tap = bank_refs[bi][r, off:off + wo, :]           # (wo, Cin) bf16
                d = jnp.dot(tap, w_ref[k], preferred_element_type=jnp.float32)
                acc = d if acc is None else acc + d
            res = jnp.maximum(acc * scale + bias, 0.0)
            o_ref[r] = res.astype(o_ref.dtype)
            return carry

        lax.fori_loop(0, tile_r, row_body, 0)

    return kernel


# ---------------------------------------------------------------------------
# Layer wrappers
# ---------------------------------------------------------------------------
def conv1_bn_relu(x_nhwc, w_hwio, conv_b, gamma, beta, mean, var, stride,
                  out_dtype):
    """First layer (Cin == 1): the wrapper-side im2col is only (M, 9) -- tiny --
    so a single MXU dot replaces the old lane-sparse VPU special case."""
    N, H, W, _ = x_nhwc.shape
    Cout = w_hwio.shape[-1]
    Ho = (H + 2 - 3) // stride + 1
    Wo = (W + 2 - 3) // stride + 1
    M = N * Ho * Wo

    xp = jnp.pad(x_nhwc, ((0, 0), (1, 1), (1, 1), (0, 0)))
    taps = []
    for ky in range(3):
        for kx in range(3):
            t = xp[:, ky:ky + stride * (Ho - 1) + 1:stride,
                      kx:kx + stride * (Wo - 1) + 1:stride, :]
            taps.append(t.reshape(M, 1))
    patches = jnp.concatenate(taps, axis=-1).astype(jnp.bfloat16)    # (M, 9)
    w_mat = w_hwio.reshape(9, Cout).astype(jnp.bfloat16)
    scale, bias = _fold_bn(conv_b, gamma, beta, mean, var, Cout)

    tile_m = M if M <= 1024 else 1024
    grid = (pl.cdiv(M, tile_m),)
    out = pl.pallas_call(
        _dot_bn_relu_kernel,
        out_shape=jax.ShapeDtypeStruct((M, Cout), out_dtype),
        grid=grid,
        in_specs=[
            pl.BlockSpec((tile_m, 9), lambda i: (i, 0)),
            pl.BlockSpec((9, Cout), lambda i: (0, 0)),
            pl.BlockSpec((1, Cout), lambda i: (0, 0)),
            pl.BlockSpec((1, Cout), lambda i: (0, 0)),
        ],
        out_specs=pl.BlockSpec((tile_m, Cout), lambda i: (i, 0)),
        compiler_params=_compiler_params(1),
    )(patches, w_mat, scale, bias)
    return out.reshape(N, Ho, Wo, Cout)


def conv3x3_bn_relu(x_nhwc, w_hwio, conv_b, gamma, beta, mean, var, stride,
                    out_dtype):
    """Conv2d(3x3, pad=1, stride) + BatchNorm2d(eval) + ReLU, row-bank form."""
    N, H, W, Cin = x_nhwc.shape
    Cout = w_hwio.shape[-1]
    Ho = (H + 2 - 3) // stride + 1
    Wo = (W + 2 - 3) // stride + 1
    R = N * Ho                                       # total output rows

    xp = jnp.pad(x_nhwc.astype(_ACT_DTYPE), ((0, 0), (1, 1), (1, 1), (0, 0)))

    banks = []
    tap_map = [None] * 9
    if stride == 1:
        # 3 row banks (one input row per output row); column taps kx = 0..2 are
        # contiguous W slices inside the kernel.
        for ky in range(3):
            banks.append(xp[:, ky:ky + Ho, :, :].reshape(R, W + 2, Cin))
            for kx in range(3):
                tap_map[ky * 3 + kx] = (ky, kx)
    else:
        # stride 2: split W into even/odd phases so the in-kernel column taps
        # stay contiguous (no sublane-strided loads, no 9x strided gathers).
        xe = xp[:, :, 0::2, :]
        xo = xp[:, :, 1::2, :]
        for ky in range(3):
            rows = slice(ky, ky + 2 * (Ho - 1) + 1, 2)
            banks.append(xe[:, rows, :, :].reshape(R, xe.shape[2], Cin))  # 2*ky
            banks.append(xo[:, rows, :, :].reshape(R, xo.shape[2], Cin))  # 2*ky+1
            tap_map[ky * 3 + 0] = (2 * ky, 0)      # input col 2*wo   -> even col wo
            tap_map[ky * 3 + 1] = (2 * ky + 1, 0)  # input col 2*wo+1 -> odd  col wo
            tap_map[ky * 3 + 2] = (2 * ky, 1)      # input col 2*wo+2 -> even col wo+1
    n_banks = len(banks)
    tap_map = tuple(tap_map)

    w_taps = w_hwio.reshape(9, Cin, Cout).astype(jnp.bfloat16)
    scale, bias = _fold_bn(conv_b, gamma, beta, mean, var, Cout)

    # --- tiling: rows per step from the per-chip VMEM budget, Cout tiles -----
    bank_row_bytes = sum(b.shape[1] for b in banks) * Cin * 2    # bf16 bytes/row
    budget = _vmem_limit_bytes() // 8      # headroom for double-buffers + weights
    tile_r = int(max(1, min(R, 256, budget // max(bank_row_bytes, 1))))
    n_rt = -(-R // tile_r)

    if Cout > 256:
        tile_n = 256                       # 2 Cout tiles for the 512-ch layer
    elif Cout == 256 and n_rt == 1:
        tile_n = 128                       # keep v7x's second core busy
    else:
        tile_n = Cout
    n_ct = Cout // tile_n

    grid = (n_ct, n_rt)                    # Cout outer -> weights stay resident
    bank_specs = [
        pl.BlockSpec((tile_r, b.shape[1], Cin), lambda c, r: (r, 0, 0))
        for b in banks
    ]
    in_specs = bank_specs + [
        pl.BlockSpec((9, Cin, tile_n), lambda c, r: (0, 0, c)),
        pl.BlockSpec((1, tile_n), lambda c, r: (0, c)),
        pl.BlockSpec((1, tile_n), lambda c, r: (0, c)),
    ]
    out_spec = pl.BlockSpec((tile_r, Wo, tile_n), lambda c, r: (r, 0, c))

    out = pl.pallas_call(
        _make_row_conv_kernel(n_banks, tap_map, Wo, tile_r),
        out_shape=jax.ShapeDtypeStruct((R, Wo, Cout), out_dtype),
        grid=grid,
        in_specs=in_specs,
        out_specs=out_spec,
        compiler_params=_compiler_params(2),
    )(*banks, w_taps, scale, bias)
    return out.reshape(N, Ho, Wo, Cout)


# ---------------------------------------------------------------------------
# Parameter construction (deterministic, synthetic)
# ---------------------------------------------------------------------------
def init_params(key):
    params = []
    for cin, cout, _stride in _LAYERS:
        key, kw, kb, kg, kbe, km, kv = jax.random.split(key, 7)
        params.append(dict(
            w=jax.random.normal(kw, (3, 3, cin, cout), jnp.float32) * 0.05,
            b=jax.random.normal(kb, (cout,), jnp.float32) * 0.01,
            gamma=1.0 + 0.1 * jax.random.normal(kg, (cout,), jnp.float32),
            beta=0.05 * jax.random.normal(kbe, (cout,), jnp.float32),
            mean=0.02 * jax.random.normal(km, (cout,), jnp.float32),
            var=1.0 + 0.05 * jax.random.uniform(kv, (cout,), jnp.float32),
        ))
    return params


# ---------------------------------------------------------------------------
# Forward pass (Pallas) and pure-JAX reference
# ---------------------------------------------------------------------------
@jax.jit
def tower(x_nchw, params):
    x = jnp.transpose(x_nchw, (0, 2, 3, 1))              # NCHW -> NHWC
    last = len(_LAYERS) - 1
    for li, (p, (cin, _cout, stride)) in enumerate(zip(params, _LAYERS)):
        out_dtype = jnp.float32 if li == last else _ACT_DTYPE
        fn = conv1_bn_relu if cin == 1 else conv3x3_bn_relu
        x = fn(x, p["w"], p["b"], p["gamma"], p["beta"], p["mean"], p["var"],
               stride, out_dtype)
    return jnp.transpose(x, (0, 3, 1, 2))                # NHWC -> NCHW (f32)


def low_level_feat_net(x1, x2, params, training=False):
    """Mirrors LowLevelFeatNet.forward.  x1, x2: NCHW float32."""
    if training:
        y1 = tower(x1, params)
        return y1, y1                                    # x2 = x1.clone()
    # Eval: one batched pass through the shared tower for both inputs.
    y = tower(jnp.concatenate([x1, x2], axis=0), params)
    n = x1.shape[0]
    return y[:n], y[n:]


def _ref_tower(x_nchw, params, eps=1e-5):
    x = jnp.transpose(x_nchw, (0, 2, 3, 1))
    for p, (_cin, _cout, stride) in zip(params, _LAYERS):
        y = jax.lax.conv_general_dilated(
            x, p["w"], (stride, stride), ((1, 1), (1, 1)),
            dimension_numbers=("NHWC", "HWIO", "NHWC")) + p["b"]
        y = (y - p["mean"]) / jnp.sqrt(p["var"] + eps) * p["gamma"] + p["beta"]
        x = jnp.maximum(y, 0.0)
    return jnp.transpose(x, (0, 3, 1, 2))


# ---------------------------------------------------------------------------
if __name__ == "__main__":
    key = jax.random.PRNGKey(0)
    key, k1, k2, kp = jax.random.split(key, 4)

    # Small shapes consistent with the module: grayscale NCHW inputs.
    x1 = jax.random.normal(k1, (2, 1, 16, 16), jnp.float32)
    x2 = jax.random.normal(k2, (2, 1, 16, 16), jnp.float32)
    params = init_params(kp)

    y1, y2 = low_level_feat_net(x1, x2, params, training=False)
    jax.block_until_ready((y1, y2))

    assert y1.shape == (2, 512, 2, 2) and y2.shape == (2, 512, 2, 2)
    assert y1.dtype == jnp.float32 and y2.dtype == jnp.float32

    # Cross-check against a pure-JAX f32 reference of the same math.
    # (Kernels use bf16 matmul operands and bf16 inter-layer activations with
    #  f32 accumulation/epilogue, so the tolerance is loosened accordingly.)
    r1 = _ref_tower(x1, params)
    r2 = _ref_tower(x2, params)
    np.testing.assert_allclose(np.asarray(y1), np.asarray(r1), rtol=8e-2, atol=2e-2)
    np.testing.assert_allclose(np.asarray(y2), np.asarray(r2), rtol=8e-2, atol=2e-2)

    print("KERNEL_OK")
</pallas_src>

<mosaic_0001>
module attributes {stable_mosaic.version = 11 : i64} {
  func.func @kernel(%arg0: i32, %arg1: i32, %arg2: memref<32x10x64xbf16, #tpu.memory_space<vmem>>, %arg3: memref<32x10x64xbf16, #tpu.memory_space<vmem>>, %arg4: memref<32x10x64xbf16, #tpu.memory_space<vmem>>, %arg5: memref<9x64x128xbf16, #tpu.memory_space<vmem>>, %arg6: memref<1x128xf32, #tpu.memory_space<vmem>>, %arg7: memref<1x128xf32, #tpu.memory_space<vmem>>, %arg8: memref<32x8x128xbf16, #tpu.memory_space<vmem>>) attributes {dimension_semantics = [#tpu.dimension_semantics<parallel>, #tpu.dimension_semantics<parallel>], iteration_bounds = array<i64: 1, 1>, scalar_prefetch = 0 : i64, scratch_operands = 0 : i64, tpu.core_type = #tpu.core_type<tc>, window_params = [{transform_indices = @transform_0, window_bounds = array<i64: 32, 10, 64>}, {transform_indices = @transform_1, window_bounds = array<i64: 32, 10, 64>}, {transform_indices = @transform_2, window_bounds = array<i64: 32, 10, 64>}, {transform_indices = @transform_3, window_bounds = array<i64: 9, 64, 128>}, {transform_indices = @transform_4, window_bounds = array<i64: 1, 128>}, {transform_indices = @transform_5, window_bounds = array<i64: 1, 128>}, {transform_indices = @transform_6, window_bounds = array<i64: 32, 8, 128>}]} {
    %c0 = arith.constant 0 : index
    %c0_0 = arith.constant 0 : index
    %0 = vector.load %arg6[%c0, %c0_0] : memref<1x128xf32, #tpu.memory_space<vmem>>, vector<1x128xf32>
    %c0_1 = arith.constant 0 : index
    %c0_2 = arith.constant 0 : index
    %1 = vector.load %arg7[%c0_1, %c0_2] : memref<1x128xf32, #tpu.memory_space<vmem>>, vector<1x128xf32>
    %c0_i32 = arith.constant 0 : i32
    %c32_i32 = arith.constant 32 : i32
    %2 = arith.addi %c0_i32, %c32_i32 : i32
    %c1_i32 = arith.constant 1 : i32
    scf.for %arg9 = %c0_i32 to %2 step %c1_i32  : i32 {
      %3 = arith.index_cast %arg9 : i32 to index
      %c0_4 = arith.constant 0 : index
      %c0_5 = arith.constant 0 : index
      %4 = vector.load %arg2[%3, %c0_4, %c0_5] : memref<32x10x64xbf16, #tpu.memory_space<vmem>>, vector<1x8x64xbf16>
      %5 = vector.shape_cast %4 : vector<1x8x64xbf16> to vector<8x64xbf16>
      %c0_6 = arith.constant 0 : index
      %c0_7 = arith.constant 0 : index
      %c0_8 = arith.constant 0 : index
      %6 = vector.load %arg5[%c0_6, %c0_7, %c0_8] : memref<9x64x128xbf16, #tpu.memory_space<vmem>>, vector<1x64x128xbf16>
      %7 = vector.shape_cast %6 : vector<1x64x128xbf16> to vector<64x128xbf16>
      %cst = arith.constant dense<0.000000e+00> : vector<8x128xf32>
      %8 = tpu.matmul %5, %7, %cst {dimension_numbers = #tpu.dot_dimension_numbers<[1], [0], [0], [1], [0, 0, 1, 1], [], []>} : vector<8x64xbf16>, vector<64x128xbf16>, vector<8x128xf32> -> vector<8x128xf32>
      %9 = arith.index_cast %arg9 : i32 to index
      %c1 = arith.constant 1 : index
      %c0_9 = arith.constant 0 : index
      %10 = vector.load %arg2[%9, %c1, %c0_9] : memref<32x10x64xbf16, #tpu.memory_space<vmem>>, vector<1x8x64xbf16>
      %11 = vector.shape_cast %10 : vector<1x8x64xbf16> to vector<8x64xbf16>
      %c1_10 = arith.constant 1 : index
      %c0_11 = arith.constant 0 : index
      %c0_12 = arith.constant 0 : index
      %12 = vector.load %arg5[%c1_10, %c0_11, %c0_12] : memref<9x64x128xbf16, #tpu.memory_space<vmem>>, vector<1x64x128xbf16>
      %13 = vector.shape_cast %12 : vector<1x64x128xbf16> to vector<64x128xbf16>
      %cst_13 = arith.constant dense<0.000000e+00> : vector<8x128xf32>
      %14 = tpu.matmul %11, %13, %cst_13 {dimension_numbers = #tpu.dot_dimension_numbers<[1], [0], [0], [1], [0, 0, 1, 1], [], []>} : vector<8x64xbf16>, vector<64x128xbf16>, vector<8x128xf32> -> vector<8x128xf32>
      %15 = arith.addf %8, %14 : vector<8x128xf32>
      %16 = arith.index_cast %arg9 : i32 to index
      %c2 = arith.constant 2 : index
      %c0_14 = arith.constant 0 : index
      %17 = vector.load %arg2[%16, %c2, %c0_14] : memref<32x10x64xbf16, #tpu.memory_space<vmem>>, vector<1x8x64xbf16>
      %18 = vector.shape_cast %17 : vector<1x8x64xbf16> to vector<8x64xbf16>
      %c2_15 = arith.constant 2 : index
      %c0_16 = arith.constant 0 : index
      %c0_17 = arith.constant 0 : index
      %19 = vector.load %arg5[%c2_15, %c0_16, %c0_17] : memref<9x64x128xbf16, #tpu.memory_space<vmem>>, vector<1x64x128xbf16>
      %20 = vector.shape_cast %19 : vector<1x64x128xbf16> to vector<64x128xbf16>
      %cst_18 = arith.constant dense<0.000000e+00> : vector<8x128xf32>
      %21 = tpu.matmul %18, %20, %cst_18 {dimension_numbers = #tpu.dot_dimension_numbers<[1], [0], [0], [1], [0, 0, 1, 1], [], []>} : vector<8x64xbf16>, vector<64x128xbf16>, vector<8x128xf32> -> vector<8x128xf32>
      %22 = arith.addf %15, %21 : vector<8x128xf32>
      %23 = arith.index_cast %arg9 : i32 to index
      %c0_19 = arith.constant 0 : index
      %c0_20 = arith.constant 0 : index
      %24 = vector.load %arg3[%23, %c0_19, %c0_20] : memref<32x10x64xbf16, #tpu.memory_space<vmem>>, vector<1x8x64xbf16>
      %25 = vector.shape_cast %24 : vector<1x8x64xbf16> to vector<8x64xbf16>
      %c3 = arith.constant 3 : index
      %c0_21 = arith.constant 0 : index
      %c0_22 = arith.constant 0 : index
      %26 = vector.load %arg5[%c3, %c0_21, %c0_22] : memref<9x64x128xbf16, #tpu.memory_space<vmem>>, vector<1x64x128xbf16>
      %27 = vector.shape_cast %26 : vector<1x64x128xbf16> to vector<64x128xbf16>
      %cst_23 = arith.constant dense<0.000000e+00> : vector<8x128xf32>
      %28 = tpu.matmul %25, %27, %cst_23 {dimension_numbers = #tpu.dot_dimension_numbers<[1], [0], [0], [1], [0, 0, 1, 1], [], []>} : vector<8x64xbf16>, vector<64x128xbf16>, vector<8x128xf32> -> vector<8x128xf32>
      %29 = arith.addf %22, %28 : vector<8x128xf32>
      %30 = arith.index_cast %arg9 : i32 to index
      %c1_24 = arith.constant 1 : index
      %c0_25 = arith.constant 0 : index
      %31 = vector.load %arg3[%30, %c1_24, %c0_25] : memref<32x10x64xbf16, #tpu.memory_space<vmem>>, vector<1x8x64xbf16>
      %32 = vector.shape_cast %31 : vector<1x8x64xbf16> to vector<8x64xbf16>
      %c4 = arith.constant 4 : index
      %c0_26 = arith.constant 0 : index
      %c0_27 = arith.constant 0 : index
      %33 = vector.load %arg5[%c4, %c0_26, %c0_27] : memref<9x64x128xbf16, #tpu.memory_space<vmem>>, vector<1x64x128xbf16>
      %34 = vector.shape_cast %33 : vector<1x64x128xbf16> to vector<64x128xbf16>
      %cst_28 = arith.constant dense<0.000000e+00> : vector<8x128xf32>
      %35 = tpu.matmul %32, %34, %cst_28 {dimension_numbers = #tpu.dot_dimension_numbers<[1], [0], [0], [1], [0, 0, 1, 1], [], []>} : vector<8x64xbf16>, vector<64x128xbf16>, vector<8x128xf32> -> vector<8x128xf32>
      %36 = arith.addf %29, %35 : vector<8x128xf32>
      %37 = arith.index_cast %arg9 : i32 to index
      %c2_29 = arith.constant 2 : index
      %c0_30 = arith.constant 0 : index
      %38 = vector.load %arg3[%37, %c2_29, %c0_30] : memref<32x10x64xbf16, #tpu.memory_space<vmem>>, vector<1x8x64xbf16>
      %39 = vector.shape_cast %38 : vector<1x8x64xbf16> to vector<8x64xbf16>
      %c5 = arith.constant 5 : index
      %c0_31 = arith.constant 0 : index
      %c0_32 = arith.constant 0 : index
      %40 = vector.load %arg5[%c5, %c0_31, %c0_32] : memref<9x64x128xbf16, #tpu.memory_space<vmem>>, vector<1x64x128xbf16>
      %41 = vector.shape_cast %40 : vector<1x64x128xbf16> to vector<64x128xbf16>
      %cst_33 = arith.constant dense<0.000000e+00> : vector<8x128xf32>
      %42 = tpu.matmul %39, %41, %cst_33 {dimension_numbers = #tpu.dot_dimension_numbers<[1], [0], [0], [1], [0, 0, 1, 1], [], []>} : vector<8x64xbf16>, vector<64x128xbf16>, vector<8x128xf32> -> vector<8x128xf32>
      %43 = arith.addf %36, %42 : vector<8x128xf32>
      %44 = arith.index_cast %arg9 : i32 to index
      %c0_34 = arith.constant 0 : index
      %c0_35 = arith.constant 0 : index
      %45 = vector.load %arg4[%44, %c0_34, %c0_35] : memref<32x10x64xbf16, #tpu.memory_space<vmem>>, vector<1x8x64xbf16>
      %46 = vector.shape_cast %45 : vector<1x8x64xbf16> to vector<8x64xbf16>
      %c6 = arith.constant 6 : index
      %c0_36 = arith.constant 0 : index
      %c0_37 = arith.constant 0 : index
      %47 = vector.load %arg5[%c6, %c0_36, %c0_37] : memref<9x64x128xbf16, #tpu.memory_space<vmem>>, vector<1x64x128xbf16>
      %48 = vector.shape_cast %47 : vector<1x64x128xbf16> to vector<64x128xbf16>
      %cst_38 = arith.constant dense<0.000000e+00> : vector<8x128xf32>
      %49 = tpu.matmul %46, %48, %cst_38 {dimension_numbers = #tpu.dot_dimension_numbers<[1], [0], [0], [1], [0, 0, 1, 1], [], []>} : vector<8x64xbf16>, vector<64x128xbf16>, vector<8x128xf32> -> vector<8x128xf32>
      %50 = arith.addf %43, %49 : vector<8x128xf32>
      %51 = arith.index_cast %arg9 : i32 to index
      %c1_39 = arith.constant 1 : index
      %c0_40 = arith.constant 0 : index
      %52 = vector.load %arg4[%51, %c1_39, %c0_40] : memref<32x10x64xbf16, #tpu.memory_space<vmem>>, vector<1x8x64xbf16>
      %53 = vector.shape_cast %52 : vector<1x8x64xbf16> to vector<8x64xbf16>
      %c7 = arith.constant 7 : index
      %c0_41 = arith.constant 0 : index
      %c0_42 = arith.constant 0 : index
      %54 = vector.load %arg5[%c7, %c0_41, %c0_42] : memref<9x64x128xbf16, #tpu.memory_space<vmem>>, vector<1x64x128xbf16>
      %55 = vector.shape_cast %54 : vector<1x64x128xbf16> to vector<64x128xbf16>
      %cst_43 = arith.constant dense<0.000000e+00> : vector<8x128xf32>
      %56 = tpu.matmul %53, %55, %cst_43 {dimension_numbers = #tpu.dot_dimension_numbers<[1], [0], [0], [1], [0, 0, 1, 1], [], []>} : vector<8x64xbf16>, vector<64x128xbf16>, vector<8x128xf32> -> vector<8x128xf32>
      %57 = arith.addf %50, %56 : vector<8x128xf32>
      %58 = arith.index_cast %arg9 : i32 to index
      %c2_44 = arith.constant 2 : index
      %c0_45 = arith.constant 0 : index
      %59 = vector.load %arg4[%58, %c2_44, %c0_45] : memref<32x10x64xbf16, #tpu.memory_space<vmem>>, vector<1x8x64xbf16>
      %60 = vector.shape_cast %59 : vector<1x8x64xbf16> to vector<8x64xbf16>
      %c8 = arith.constant 8 : index
      %c0_46 = arith.constant 0 : index
      %c0_47 = arith.constant 0 : index
      %61 = vector.load %arg5[%c8, %c0_46, %c0_47] : memref<9x64x128xbf16, #tpu.memory_space<vmem>>, vector<1x64x128xbf16>
      %62 = vector.shape_cast %61 : vector<1x64x128xbf16> to vector<64x128xbf16>
      %cst_48 = arith.constant dense<0.000000e+00> : vector<8x128xf32>
      %63 = tpu.matmul %60, %62, %cst_48 {dimension_numbers = #tpu.dot_dimension_numbers<[1], [0], [0], [1], [0, 0, 1, 1], [], []>} : vector<8x64xbf16>, vector<64x128xbf16>, vector<8x128xf32> -> vector<8x128xf32>
      %64 = arith.addf %57, %63 : vector<8x128xf32>
      %65 = vector.broadcast %0 : vector<1x128xf32> to vector<8x128xf32>
      %66 = arith.mulf %64, %65 : vector<8x128xf32>
      %67 = vector.broadcast %1 : vector<1x128xf32> to vector<8x128xf32>
      %68 = arith.addf %66, %67 : vector<8x128xf32>
      %cst_49 = arith.constant 0.000000e+00 : f32
      %69 = vector.broadcast %cst_49 : f32 to vector<8x128xf32>
      %70 = arith.maximumf %68, %69 : vector<8x128xf32>
      %71 = arith.truncf %70 : vector<8x128xf32> to vector<8x128xbf16>
      %72 = arith.index_cast %arg9 : i32 to index
      %c0_50 = arith.constant 0 : index
      %c0_51 = arith.constant 0 : index
      %73 = vector.load %arg8[%72, %c0_50, %c0_51] : memref<32x8x128xbf16, #tpu.memory_space<vmem>>, vector<1x8x128xbf16>
      %74 = vector.shape_cast %73 : vector<1x8x128xbf16> to vector<8x128xbf16>
      %75 = vector.shape_cast %71 : vector<8x128xbf16> to vector<1x8x128xbf16>
      tpu.vector_store %arg8[%72, %c0_50, %c0_51], %75 {strides = array<i32>} : memref<32x8x128xbf16, #tpu.memory_space<vmem>>, vector<1x8x128xbf16>,
    }
    %c32_i32_3 = arith.constant 32 : i32
    return
  }
  func.func @transform_0(%arg0: i32, %arg1: i32) -> (i32, i32, i32) {
    %c0_i32 = arith.constant 0 : i32
    %c0_i32_0 = arith.constant 0 : i32
    %c0_i32_1 = arith.constant 0 : i32
    return %arg1, %c0_i32, %c0_i32_0 : i32, i32, i32
  }
  func.func @transform_1(%arg0: i32, %arg1: i32) -> (i32, i32, i32) {
    %c0_i32 = arith.constant 0 : i32
    %c0_i32_0 = arith.constant 0 : i32
    %c0_i32_1 = arith.constant 0 : i32
    return %arg1, %c0_i32, %c0_i32_0 : i32, i32, i32
  }
  func.func @transform_2(%arg0: i32, %arg1: i32) -> (i32, i32, i32) {
    %c0_i32 = arith.constant 0 : i32
    %c0_i32_0 = arith.constant 0 : i32
    %c0_i32_1 = arith.constant 0 : i32
    return %arg1, %c0_i32, %c0_i32_0 : i32, i32, i32
  }
  func.func @transform_3(%arg0: i32, %arg1: i32) -> (i32, i32, i32) {
    %c0_i32 = arith.constant 0 : i32
    %c0_i32_0 = arith.constant 0 : i32
    %c0_i32_1 = arith.constant 0 : i32
    return %c0_i32, %c0_i32_0, %arg0 : i32, i32, i32
  }
  func.func @transform_4(%arg0: i32, %arg1: i32) -> (i32, i32) {
    %c0_i32 = arith.constant 0 : i32
    %c0_i32_0 = arith.constant 0 : i32
    return %c0_i32, %arg0 : i32, i32
  }
  func.func @transform_5(%arg0: i32, %arg1: i32) -> (i32, i32) {
    %c0_i32 = arith.constant 0 : i32
    %c0_i32_0 = arith.constant 0 : i32
    return %c0_i32, %arg0 : i32, i32
  }
  func.func @transform_6(%arg0: i32, %arg1: i32) -> (i32, i32, i32) {
    %c0_i32 = arith.constant 0 : i32
    %c0_i32_0 = arith.constant 0 : i32
    return %arg1, %c0_i32, %arg0 : i32, i32, i32
  }
}

module attributes {stable_mosaic.version = 11 : i64} {
  func.func @_dot_bn_relu_kernel(%arg0: i32, %arg1: memref<256x9xbf16, #tpu.memory_space<vmem>>, %arg2: memref<9x64xbf16, #tpu.memory_space<vmem>>, %arg3: memref<1x64xf32, #tpu.memory_space<vmem>>, %arg4: memref<1x64xf32, #tpu.memory_space<vmem>>, %arg5: memref<256x64xbf16, #tpu.memory_space<vmem>>) attributes {dimension_semantics = [#tpu.dimension_semantics<parallel>], iteration_bounds = array<i64: 1>, scalar_prefetch = 0 : i64, scratch_operands = 0 : i64, tpu.core_type = #tpu.core_type<tc>, window_params = [{transform_indices = @transform_0, window_bounds = array<i64: 256, 9>}, {pipeline_mode = #tpu.pipeline_mode<synchronous>, transform_indices = @transform_1, window_bounds = array<i64: 9, 64>}, {pipeline_mode = #tpu.pipeline_mode<synchronous>, transform_indices = @transform_2, window_bounds = array<i64: 1, 64>}, {pipeline_mode = #tpu.pipeline_mode<synchronous>, transform_indices = @transform_3, window_bounds = array<i64: 1, 64>}, {transform_indices = @transform_4, window_bounds = array<i64: 256, 64>}]} {
    %c0 = arith.constant 0 : index
    %c0_0 = arith.constant 0 : index
    %0 = vector.load %arg1[%c0, %c0_0] : memref<256x9xbf16, #tpu.memory_space<vmem>>, vector<256x9xbf16>
    %c0_1 = arith.constant 0 : index
    %c0_2 = arith.constant 0 : index
    %1 = vector.load %arg2[%c0_1, %c0_2] : memref<9x64xbf16, #tpu.memory_space<vmem>>, vector<9x64xbf16>
    %cst = arith.constant dense<0.000000e+00> : vector<256x64xf32>
    %2 = tpu.matmul %0, %1, %cst {dimension_numbers = #tpu.dot_dimension_numbers<[1], [0], [0], [1], [0, 0, 1, 1], [], []>} : vector<256x9xbf16>, vector<9x64xbf16>, vector<256x64xf32> -> vector<256x64xf32>
    %c0_3 = arith.constant 0 : index
    %c0_4 = arith.constant 0 : index
    %3 = vector.load %arg3[%c0_3, %c0_4] : memref<1x64xf32, #tpu.memory_space<vmem>>, vector<1x64xf32>
    %4 = vector.broadcast %3 : vector<1x64xf32> to vector<256x64xf32>
    %5 = arith.mulf %2, %4 : vector<256x64xf32>
    %c0_5 = arith.constant 0 : index
    %c0_6 = arith.constant 0 : index
    %6 = vector.load %arg4[%c0_5, %c0_6] : memref<1x64xf32, #tpu.memory_space<vmem>>, vector<1x64xf32>
    %7 = vector.broadcast %6 : vector<1x64xf32> to vector<256x64xf32>
    %8 = arith.addf %5, %7 : vector<256x64xf32>
    %cst_7 = arith.constant 0.000000e+00 : f32
    %9 = vector.broadcast %cst_7 : f32 to vector<256x64xf32>
    %10 = arith.maximumf %8, %9 : vector<256x64xf32>
    %11 = arith.truncf %10 : vector<256x64xf32> to vector<256x64xbf16>
    %c0_8 = arith.constant 0 : index
    %c0_9 = arith.constant 0 : index
    %12 = vector.load %arg5[%c0_8, %c0_9] : memref<256x64xbf16, #tpu.memory_space<vmem>>, vector<256x64xbf16>
    tpu.vector_store %arg5[%c0_8, %c0_9], %11 {strides = array<i32>} : memref<256x64xbf16, #tpu.memory_space<vmem>>, vector<256x64xbf16>,
    return
  }
  func.func @transform_0(%arg0: i32) -> (i32, i32) {
    %c0_i32 = arith.constant 0 : i32
    %c0_i32_0 = arith.constant 0 : i32
    return %arg0, %c0_i32 : i32, i32
  }
  func.func @transform_1(%arg0: i32) -> (i32, i32) {
    %c0_i32 = arith.constant 0 : i32
    %c0_i32_0 = arith.constant 0 : i32
    %c0_i32_1 = arith.constant 0 : i32
    return %c0_i32, %c0_i32_0 : i32, i32
  }
  func.func @transform_2(%arg0: i32) -> (i32, i32) {
    %c0_i32 = arith.constant 0 : i32
    %c0_i32_0 = arith.constant 0 : i32
    %c0_i32_1 = arith.constant 0 : i32
    return %c0_i32, %c0_i32_0 : i32, i32
  }
  func.func @transform_3(%arg0: i32) -> (i32, i32) {
    %c0_i32 = arith.constant 0 : i32
    %c0_i32_0 = arith.constant 0 : i32
    %c0_i32_1 = arith.constant 0 : i32
    return %c0_i32, %c0_i32_0 : i32, i32
  }
  func.func @transform_4(%arg0: i32) -> (i32, i32) {
    %c0_i32 = arith.constant 0 : i32
    %c0_i32_0 = arith.constant 0 : i32
    return %arg0, %c0_i32 : i32, i32
  }
}

module attributes {stable_mosaic.version = 11 : i64} {
  func.func @kernel(%arg0: i32, %arg1: i32, %arg2: memref<16x5x128xbf16, #tpu.memory_space<vmem>>, %arg3: memref<16x5x128xbf16, #tpu.memory_space<vmem>>, %arg4: memref<16x5x128xbf16, #tpu.memory_space<vmem>>, %arg5: memref<16x5x128xbf16, #tpu.memory_space<vmem>>, %arg6: memref<16x5x128xbf16, #tpu.memory_space<vmem>>, %arg7: memref<16x5x128xbf16, #tpu.memory_space<vmem>>, %arg8: memref<9x128x128xbf16, #tpu.memory_space<vmem>>, %arg9: memref<1x128xf32, #tpu.memory_space<vmem>>, %arg10: memref<1x128xf32, #tpu.memory_space<vmem>>, %arg11: memref<16x4x128xbf16, #tpu.memory_space<vmem>>) attributes {dimension_semantics = [#tpu.dimension_semantics<parallel>, #tpu.dimension_semantics<parallel>], iteration_bounds = array<i64: 1, 1>, scalar_prefetch = 0 : i64, scratch_operands = 0 : i64, tpu.core_type = #tpu.core_type<tc>, window_params = [{transform_indices = @transform_0, window_bounds = array<i64: 16, 5, 128>}, {transform_indices = @transform_1, window_bounds = array<i64: 16, 5, 128>}, {transform_indices = @transform_2, window_bounds = array<i64: 16, 5, 128>}, {transform_indices = @transform_3, window_bounds = array<i64: 16, 5, 128>}, {transform_indices = @transform_4, window_bounds = array<i64: 16, 5, 128>}, {transform_indices = @transform_5, window_bounds = array<i64: 16, 5, 128>}, {transform_indices = @transform_6, window_bounds = array<i64: 9, 128, 128>}, {transform_indices = @transform_7, window_bounds = array<i64: 1, 128>}, {transform_indices = @transform_8, window_bounds = array<i64: 1, 128>}, {transform_indices = @transform_9, window_bounds = array<i64: 16, 4, 128>}]} {
    %c0 = arith.constant 0 : index
    %c0_0 = arith.constant 0 : index
    %0 = vector.load %arg9[%c0, %c0_0] : memref<1x128xf32, #tpu.memory_space<vmem>>, vector<1x128xf32>
    %c0_1 = arith.constant 0 : index
    %c0_2 = arith.constant 0 : index
    %1 = vector.load %arg10[%c0_1, %c0_2] : memref<1x128xf32, #tpu.memory_space<vmem>>, vector<1x128xf32>
    %c0_i32 = arith.constant 0 : i32
    %c16_i32 = arith.constant 16 : i32
    %2 = arith.addi %c0_i32, %c16_i32 : i32
    %c1_i32 = arith.constant 1 : i32
    scf.for %arg12 = %c0_i32 to %2 step %c1_i32  : i32 {
      %3 = arith.index_cast %arg12 : i32 to index
      %c0_4 = arith.constant 0 : index
      %c0_5 = arith.constant 0 : index
      %4 = vector.load %arg2[%3, %c0_4, %c0_5] : memref<16x5x128xbf16, #tpu.memory_space<vmem>>, vector<1x4x128xbf16>
      %5 = vector.shape_cast %4 : vector<1x4x128xbf16> to vector<4x128xbf16>
      %c0_6 = arith.constant 0 : index
      %c0_7 = arith.constant 0 : index
      %c0_8 = arith.constant 0 : index
      %6 = vector.load %arg8[%c0_6, %c0_7, %c0_8] : memref<9x128x128xbf16, #tpu.memory_space<vmem>>, vector<1x128x128xbf16>
      %7 = vector.shape_cast %6 : vector<1x128x128xbf16> to vector<128x128xbf16>
      %cst = arith.constant dense<0.000000e+00> : vector<4x128xf32>
      %8 = tpu.matmul %5, %7, %cst {dimension_numbers = #tpu.dot_dimension_numbers<[1], [0], [0], [1], [0, 0, 1, 1], [], []>} : vector<4x128xbf16>, vector<128x128xbf16>, vector<4x128xf32> -> vector<4x128xf32>
      %9 = arith.index_cast %arg12 : i32 to index
      %c0_9 = arith.constant 0 : index
      %c0_10 = arith.constant 0 : index
      %10 = vector.load %arg3[%9, %c0_9, %c0_10] : memref<16x5x128xbf16, #tpu.memory_space<vmem>>, vector<1x4x128xbf16>
      %11 = vector.shape_cast %10 : vector<1x4x128xbf16> to vector<4x128xbf16>
      %c1 = arith.constant 1 : index
      %c0_11 = arith.constant 0 : index
      %c0_12 = arith.constant 0 : index
      %12 = vector.load %arg8[%c1, %c0_11, %c0_12] : memref<9x128x128xbf16, #tpu.memory_space<vmem>>, vector<1x128x128xbf16>
      %13 = vector.shape_cast %12 : vector<1x128x128xbf16> to vector<128x128xbf16>
      %cst_13 = arith.constant dense<0.000000e+00> : vector<4x128xf32>
      %14 = tpu.matmul %11, %13, %cst_13 {dimension_numbers = #tpu.dot_dimension_numbers<[1], [0], [0], [1], [0, 0, 1, 1], [], []>} : vector<4x128xbf16>, vector<128x128xbf16>, vector<4x128xf32> -> vector<4x128xf32>
      %15 = arith.addf %8, %14 : vector<4x128xf32>
      %16 = arith.index_cast %arg12 : i32 to index
      %c1_14 = arith.constant 1 : index
      %c0_15 = arith.constant 0 : index
      %17 = vector.load %arg2[%16, %c1_14, %c0_15] : memref<16x5x128xbf16, #tpu.memory_space<vmem>>, vector<1x4x128xbf16>
      %18 = vector.shape_cast %17 : vector<1x4x128xbf16> to vector<4x128xbf16>
      %c2 = arith.constant 2 : index
      %c0_16 = arith.constant 0 : index
      %c0_17 = arith.constant 0 : index
      %19 = vector.load %arg8[%c2, %c0_16, %c0_17] : memref<9x128x128xbf16, #tpu.memory_space<vmem>>, vector<1x128x128xbf16>
      %20 = vector.shape_cast %19 : vector<1x128x128xbf16> to vector<128x128xbf16>
      %cst_18 = arith.constant dense<0.000000e+00> : vector<4x128xf32>
      %21 = tpu.matmul %18, %20, %cst_18 {dimension_numbers = #tpu.dot_dimension_numbers<[1], [0], [0], [1], [0, 0, 1, 1], [], []>} : vector<4x128xbf16>, vector<128x128xbf16>, vector<4x128xf32> -> vector<4x128xf32>
      %22 = arith.addf %15, %21 : vector<4x128xf32>
      %23 = arith.index_cast %arg12 : i32 to index
      %c0_19 = arith.constant 0 : index
      %c0_20 = arith.constant 0 : index
      %24 = vector.load %arg4[%23, %c0_19, %c0_20] : memref<16x5x128xbf16, #tpu.memory_space<vmem>>, vector<1x4x128xbf16>
      %25 = vector.shape_cast %24 : vector<1x4x128xbf16> to vector<4x128xbf16>
      %c3 = arith.constant 3 : index
      %c0_21 = arith.constant 0 : index
      %c0_22 = arith.constant 0 : index
      %26 = vector.load %arg8[%c3, %c0_21, %c0_22] : memref<9x128x128xbf16, #tpu.memory_space<vmem>>, vector<1x128x128xbf16>
      %27 = vector.shape_cast %26 : vector<1x128x128xbf16> to vector<128x128xbf16>
      %cst_23 = arith.constant dense<0.000000e+00> : vector<4x128xf32>
      %28 = tpu.matmul %25, %27, %cst_23 {dimension_numbers = #tpu.dot_dimension_numbers<[1], [0], [0], [1], [0, 0, 1, 1], [], []>} : vector<4x128xbf16>, vector<128x128xbf16>, vector<4x128xf32> -> vector<4x128xf32>
      %29 = arith.addf %22, %28 : vector<4x128xf32>
      %30 = arith.index_cast %arg12 : i32 to index
      %c0_24 = arith.constant 0 : index
      %c0_25 = arith.constant 0 : index
      %31 = vector.load %arg5[%30, %c0_24, %c0_25] : memref<16x5x128xbf16, #tpu.memory_space<vmem>>, vector<1x4x128xbf16>
      %32 = vector.shape_cast %31 : vector<1x4x128xbf16> to vector<4x128xbf16>
      %c4 = arith.constant 4 : index
      %c0_26 = arith.constant 0 : index
      %c0_27 = arith.constant 0 : index
      %33 = vector.load %arg8[%c4, %c0_26, %c0_27] : memref<9x128x128xbf16, #tpu.memory_space<vmem>>, vector<1x128x128xbf16>
      %34 = vector.shape_cast %33 : vector<1x128x128xbf16> to vector<128x128xbf16>
      %cst_28 = arith.constant dense<0.000000e+00> : vector<4x128xf32>
      %35 = tpu.matmul %32, %34, %cst_28 {dimension_numbers = #tpu.dot_dimension_numbers<[1], [0], [0], [1], [0, 0, 1, 1], [], []>} : vector<4x128xbf16>, vector<128x128xbf16>, vector<4x128xf32> -> vector<4x128xf32>
      %36 = arith.addf %29, %35 : vector<4x128xf32>
      %37 = arith.index_cast %arg12 : i32 to index
      %c1_29 = arith.constant 1 : index
      %c0_30 = arith.constant 0 : index
      %38 = vector.load %arg4[%37, %c1_29, %c0_30] : memref<16x5x128xbf16, #tpu.memory_space<vmem>>, vector<1x4x128xbf16>
      %39 = vector.shape_cast %38 : vector<1x4x128xbf16> to vector<4x128xbf16>
      %c5 = arith.constant 5 : index
      %c0_31 = arith.constant 0 : index
      %c0_32 = arith.constant 0 : index
      %40 = vector.load %arg8[%c5, %c0_31, %c0_32] : memref<9x128x128xbf16, #tpu.memory_space<vmem>>, vector<1x128x128xbf16>
      %41 = vector.shape_cast %40 : vector<1x128x128xbf16> to vector<128x128xbf16>
      %cst_33 = arith.constant dense<0.000000e+00> : vector<4x128xf32>
      %42 = tpu.matmul %39, %41, %cst_33 {dimension_numbers = #tpu.dot_dimension_numbers<[1], [0], [0], [1], [0, 0, 1, 1], [], []>} : vector<4x128xbf16>, vector<128x128xbf16>, vector<4x128xf32> -> vector<4x128xf32>
      %43 = arith.addf %36, %42 : vector<4x128xf32>
      %44 = arith.index_cast %arg12 : i32 to index
      %c0_34 = arith.constant 0 : index
      %c0_35 = arith.constant 0 : index
      %45 = vector.load %arg6[%44, %c0_34, %c0_35] : memref<16x5x128xbf16, #tpu.memory_space<vmem>>, vector<1x4x128xbf16>
      %46 = vector.shape_cast %45 : vector<1x4x128xbf16> to vector<4x128xbf16>
      %c6 = arith.constant 6 : index
      %c0_36 = arith.constant 0 : index
      %c0_37 = arith.constant 0 : index
      %47 = vector.load %arg8[%c6, %c0_36, %c0_37] : memref<9x128x128xbf16, #tpu.memory_space<vmem>>, vector<1x128x128xbf16>
      %48 = vector.shape_cast %47 : vector<1x128x128xbf16> to vector<128x128xbf16>
      %cst_38 = arith.constant dense<0.000000e+00> : vector<4x128xf32>
      %49 = tpu.matmul %46, %48, %cst_38 {dimension_numbers = #tpu.dot_dimension_numbers<[1], [0], [0], [1], [0, 0, 1, 1], [], []>} : vector<4x128xbf16>, vector<128x128xbf16>, vector<4x128xf32> -> vector<4x128xf32>
      %50 = arith.addf %43, %49 : vector<4x128xf32>
      %51 = arith.index_cast %arg12 : i32 to index
      %c0_39 = arith.constant 0 : index
      %c0_40 = arith.constant 0 : index
      %52 = vector.load %arg7[%51, %c0_39, %c0_40] : memref<16x5x128xbf16, #tpu.memory_space<vmem>>, vector<1x4x128xbf16>
      %53 = vector.shape_cast %52 : vector<1x4x128xbf16> to vector<4x128xbf16>
      %c7 = arith.constant 7 : index
      %c0_41 = arith.constant 0 : index
      %c0_42 = arith.constant 0 : index
      %54 = vector.load %arg8[%c7, %c0_41, %c0_42] : memref<9x128x128xbf16, #tpu.memory_space<vmem>>, vector<1x128x128xbf16>
      %55 = vector.shape_cast %54 : vector<1x128x128xbf16> to vector<128x128xbf16>
      %cst_43 = arith.constant dense<0.000000e+00> : vector<4x128xf32>
      %56 = tpu.matmul %53, %55, %cst_43 {dimension_numbers = #tpu.dot_dimension_numbers<[1], [0], [0], [1], [0, 0, 1, 1], [], []>} : vector<4x128xbf16>, vector<128x128xbf16>, vector<4x128xf32> -> vector<4x128xf32>
      %57 = arith.addf %50, %56 : vector<4x128xf32>
      %58 = arith.index_cast %arg12 : i32 to index
      %c1_44 = arith.constant 1 : index
      %c0_45 = arith.constant 0 : index
      %59 = vector.load %arg6[%58, %c1_44, %c0_45] : memref<16x5x128xbf16, #tpu.memory_space<vmem>>, vector<1x4x128xbf16>
      %60 = vector.shape_cast %59 : vector<1x4x128xbf16> to vector<4x128xbf16>
      %c8 = arith.constant 8 : index
      %c0_46 = arith.constant 0 : index
      %c0_47 = arith.constant 0 : index
      %61 = vector.load %arg8[%c8, %c0_46, %c0_47] : memref<9x128x128xbf16, #tpu.memory_space<vmem>>, vector<1x128x128xbf16>
      %62 = vector.shape_cast %61 : vector<1x128x128xbf16> to vector<128x128xbf16>
      %cst_48 = arith.constant dense<0.000000e+00> : vector<4x128xf32>
      %63 = tpu.matmul %60, %62, %cst_48 {dimension_numbers = #tpu.dot_dimension_numbers<[1], [0], [0], [1], [0, 0, 1, 1], [], []>} : vector<4x128xbf16>, vector<128x128xbf16>, vector<4x128xf32> -> vector<4x128xf32>
      %64 = arith.addf %57, %63 : vector<4x128xf32>
      %65 = vector.broadcast %0 : vector<1x128xf32> to vector<4x128xf32>
      %66 = arith.mulf %64, %65 : vector<4x128xf32>
      %67 = vector.broadcast %1 : vector<1x128xf32> to vector<4x128xf32>
      %68 = arith.addf %66, %67 : vector<4x128xf32>
      %cst_49 = arith.constant 0.000000e+00 : f32
      %69 = vector.broadcast %cst_49 : f32 to vector<4x128xf32>
      %70 = arith.maximumf %68, %69 : vector<4x128xf32>
      %71 = arith.truncf %70 : vector<4x128xf32> to vector<4x128xbf16>
      %72 = arith.index_cast %arg12 : i32 to index
      %c0_50 = arith.constant 0 : index
      %c0_51 = arith.constant 0 : index
      %73 = vector.load %arg11[%72, %c0_50, %c0_51] : memref<16x4x128xbf16, #tpu.memory_space<vmem>>, vector<1x4x128xbf16>
      %74 = vector.shape_cast %73 : vector<1x4x128xbf16> to vector<4x128xbf16>
      %75 = vector.shape_cast %71 : vector<4x128xbf16> to vector<1x4x128xbf16>
      tpu.vector_store %arg11[%72, %c0_50, %c0_51], %75 {strides = array<i32>} : memref<16x4x128xbf16, #tpu.memory_space<vmem>>, vector<1x4x128xbf16>,
    }
    %c16_i32_3 = arith.constant 16 : i32
    return
  }
  func.func @transform_0(%arg0: i32, %arg1: i32) -> (i32, i32, i32) {
    %c0_i32 = arith.constant 0 : i32
    %c0_i32_0 = arith.constant 0 : i32
    %c0_i32_1 = arith.constant 0 : i32
    return %arg1, %c0_i32, %c0_i32_0 : i32, i32, i32
  }
  func.func @transform_1(%arg0: i32, %arg1: i32) -> (i32, i32, i32) {
    %c0_i32 = arith.constant 0 : i32
    %c0_i32_0 = arith.constant 0 : i32
    %c0_i32_1 = arith.constant 0 : i32
    return %arg1, %c0_i32, %c0_i32_0 : i32, i32, i32
  }
  func.func @transform_2(%arg0: i32, %arg1: i32) -> (i32, i32, i32) {
    %c0_i32 = arith.constant 0 : i32
    %c0_i32_0 = arith.constant 0 : i32
    %c0_i32_1 = arith.constant 0 : i32
    return %arg1, %c0_i32, %c0_i32_0 : i32, i32, i32
  }
  func.func @transform_3(%arg0: i32, %arg1: i32) -> (i32, i32, i32) {
    %c0_i32 = arith.constant 0 : i32
    %c0_i32_0 = arith.constant 0 : i32
    %c0_i32_1 = arith.constant 0 : i32
    return %arg1, %c0_i32, %c0_i32_0 : i32, i32, i32
  }
  func.func @transform_4(%arg0: i32, %arg1: i32) -> (i32, i32, i32) {
    %c0_i32 = arith.constant 0 : i32
    %c0_i32_0 = arith.constant 0 : i32
    %c0_i32_1 = arith.constant 0 : i32
    return %arg1, %c0_i32, %c0_i32_0 : i32, i32, i32
  }
  func.func @transform_5(%arg0: i32, %arg1: i32) -> (i32, i32, i32) {
    %c0_i32 = arith.constant 0 : i32
    %c0_i32_0 = arith.constant 0 : i32
    %c0_i32_1 = arith.constant 0 : i32
    return %arg1, %c0_i32, %c0_i32_0 : i32, i32, i32
  }
  func.func @transform_6(%arg0: i32, %arg1: i32) -> (i32, i32, i32) {
    %c0_i32 = arith.constant 0 : i32
    %c0_i32_0 = arith.constant 0 : i32
    %c0_i32_1 = arith.constant 0 : i32
    return %c0_i32, %c0_i32_0, %arg0 : i32, i32, i32
  }
  func.func @transform_7(%arg0: i32, %arg1: i32) -> (i32, i32) {
    %c0_i32 = arith.constant 0 : i32
    %c0_i32_0 = arith.constant 0 : i32
    return %c0_i32, %arg0 : i32, i32
  }
  func.func @transform_8(%arg0: i32, %arg1: i32) -> (i32, i32) {
    %c0_i32 = arith.constant 0 : i32
    %c0_i32_0 = arith.constant 0 : i32
    return %c0_i32, %arg0 : i32, i32
  }
  func.func @transform_9(%arg0: i32, %arg1: i32) -> (i32, i32, i32) {
    %c0_i32 = arith.constant 0 : i32
    %c0_i32_0 = arith.constant 0 : i32
    return %arg1, %c0_i32, %arg0 : i32, i32, i32
  }
}

module attributes {stable_mosaic.version = 11 : i64} {
  func.func @kernel(%arg0: i32, %arg1: i32, %arg2: memref<16x6x128xbf16, #tpu.memory_space<vmem>>, %arg3: memref<16x6x128xbf16, #tpu.memory_space<vmem>>, %arg4: memref<16x6x128xbf16, #tpu.memory_space<vmem>>, %arg5: memref<9x128x128xbf16, #tpu.memory_space<vmem>>, %arg6: memref<1x128xf32, #tpu.memory_space<vmem>>, %arg7: memref<1x128xf32, #tpu.memory_space<vmem>>, %arg8: memref<16x4x128xbf16, #tpu.memory_space<vmem>>) attributes {dimension_semantics = [#tpu.dimension_semantics<parallel>, #tpu.dimension_semantics<parallel>], iteration_bounds = array<i64: 2, 1>, scalar_prefetch = 0 : i64, scratch_operands = 0 : i64, tpu.core_type = #tpu.core_type<tc>, window_params = [{transform_indices = @transform_0, window_bounds = array<i64: 16, 6, 128>}, {transform_indices = @transform_1, window_bounds = array<i64: 16, 6, 128>}, {transform_indices = @transform_2, window_bounds = array<i64: 16, 6, 128>}, {transform_indices = @transform_3, window_bounds = array<i64: 9, 128, 128>}, {transform_indices = @transform_4, window_bounds = array<i64: 1, 128>}, {transform_indices = @transform_5, window_bounds = array<i64: 1, 128>}, {transform_indices = @transform_6, window_bounds = array<i64: 16, 4, 128>}]} {
    %c0 = arith.constant 0 : index
    %c0_0 = arith.constant 0 : index
    %0 = vector.load %arg6[%c0, %c0_0] : memref<1x128xf32, #tpu.memory_space<vmem>>, vector<1x128xf32>
    %c0_1 = arith.constant 0 : index
    %c0_2 = arith.constant 0 : index
    %1 = vector.load %arg7[%c0_1, %c0_2] : memref<1x128xf32, #tpu.memory_space<vmem>>, vector<1x128xf32>
    %c0_i32 = arith.constant 0 : i32
    %c16_i32 = arith.constant 16 : i32
    %2 = arith.addi %c0_i32, %c16_i32 : i32
    %c1_i32 = arith.constant 1 : i32
    scf.for %arg9 = %c0_i32 to %2 step %c1_i32  : i32 {
      %3 = arith.index_cast %arg9 : i32 to index
      %c0_4 = arith.constant 0 : index
      %c0_5 = arith.constant 0 : index
      %4 = vector.load %arg2[%3, %c0_4, %c0_5] : memref<16x6x128xbf16, #tpu.memory_space<vmem>>, vector<1x4x128xbf16>
      %5 = vector.shape_cast %4 : vector<1x4x128xbf16> to vector<4x128xbf16>
      %c0_6 = arith.constant 0 : index
      %c0_7 = arith.constant 0 : index
      %c0_8 = arith.constant 0 : index
      %6 = vector.load %arg5[%c0_6, %c0_7, %c0_8] : memref<9x128x128xbf16, #tpu.memory_space<vmem>>, vector<1x128x128xbf16>
      %7 = vector.shape_cast %6 : vector<1x128x128xbf16> to vector<128x128xbf16>
      %cst = arith.constant dense<0.000000e+00> : vector<4x128xf32>
      %8 = tpu.matmul %5, %7, %cst {dimension_numbers = #tpu.dot_dimension_numbers<[1], [0], [0], [1], [0, 0, 1, 1], [], []>} : vector<4x128xbf16>, vector<128x128xbf16>, vector<4x128xf32> -> vector<4x128xf32>
      %9 = arith.index_cast %arg9 : i32 to index
      %c1 = arith.constant 1 : index
      %c0_9 = arith.constant 0 : index
      %10 = vector.load %arg2[%9, %c1, %c0_9] : memref<16x6x128xbf16, #tpu.memory_space<vmem>>, vector<1x4x128xbf16>
      %11 = vector.shape_cast %10 : vector<1x4x128xbf16> to vector<4x128xbf16>
      %c1_10 = arith.constant 1 : index
      %c0_11 = arith.constant 0 : index
      %c0_12 = arith.constant 0 : index
      %12 = vector.load %arg5[%c1_10, %c0_11, %c0_12] : memref<9x128x128xbf16, #tpu.memory_space<vmem>>, vector<1x128x128xbf16>
      %13 = vector.shape_cast %12 : vector<1x128x128xbf16> to vector<128x128xbf16>
      %cst_13 = arith.constant dense<0.000000e+00> : vector<4x128xf32>
      %14 = tpu.matmul %11, %13, %cst_13 {dimension_numbers = #tpu.dot_dimension_numbers<[1], [0], [0], [1], [0, 0, 1, 1], [], []>} : vector<4x128xbf16>, vector<128x128xbf16>, vector<4x128xf32> -> vector<4x128xf32>
      %15 = arith.addf %8, %14 : vector<4x128xf32>
      %16 = arith.index_cast %arg9 : i32 to index
      %c2 = arith.constant 2 : index
      %c0_14 = arith.constant 0 : index
      %17 = vector.load %arg2[%16, %c2, %c0_14] : memref<16x6x128xbf16, #tpu.memory_space<vmem>>, vector<1x4x128xbf16>
      %18 = vector.shape_cast %17 : vector<1x4x128xbf16> to vector<4x128xbf16>
      %c2_15 = arith.constant 2 : index
      %c0_16 = arith.constant 0 : index
      %c0_17 = arith.constant 0 : index
      %19 = vector.load %arg5[%c2_15, %c0_16, %c0_17] : memref<9x128x128xbf16, #tpu.memory_space<vmem>>, vector<1x128x128xbf16>
      %20 = vector.shape_cast %19 : vector<1x128x128xbf16> to vector<128x128xbf16>
      %cst_18 = arith.constant dense<0.000000e+00> : vector<4x128xf32>
      %21 = tpu.matmul %18, %20, %cst_18 {dimension_numbers = #tpu.dot_dimension_numbers<[1], [0], [0], [1], [0, 0, 1, 1], [], []>} : vector<4x128xbf16>, vector<128x128xbf16>, vector<4x128xf32> -> vector<4x128xf32>
      %22 = arith.addf %15, %21 : vector<4x128xf32>
      %23 = arith.index_cast %arg9 : i32 to index
      %c0_19 = arith.constant 0 : index
      %c0_20 = arith.constant 0 : index
      %24 = vector.load %arg3[%23, %c0_19, %c0_20] : memref<16x6x128xbf16, #tpu.memory_space<vmem>>, vector<1x4x128xbf16>
      %25 = vector.shape_cast %24 : vector<1x4x128xbf16> to vector<4x128xbf16>
      %c3 = arith.constant 3 : index
      %c0_21 = arith.constant 0 : index
      %c0_22 = arith.constant 0 : index
      %26 = vector.load %arg5[%c3, %c0_21, %c0_22] : memref<9x128x128xbf16, #tpu.memory_space<vmem>>, vector<1x128x128xbf16>
      %27 = vector.shape_cast %26 : vector<1x128x128xbf16> to vector<128x128xbf16>
      %cst_23 = arith.constant dense<0.000000e+00> : vector<4x128xf32>
      %28 = tpu.matmul %25, %27, %cst_23 {dimension_numbers = #tpu.dot_dimension_numbers<[1], [0], [0], [1], [0, 0, 1, 1], [], []>} : vector<4x128xbf16>, vector<128x128xbf16>, vector<4x128xf32> -> vector<4x128xf32>
      %29 = arith.addf %22, %28 : vector<4x128xf32>
      %30 = arith.index_cast %arg9 : i32 to index
      %c1_24 = arith.constant 1 : index
      %c0_25 = arith.constant 0 : index
      %31 = vector.load %arg3[%30, %c1_24, %c0_25] : memref<16x6x128xbf16, #tpu.memory_space<vmem>>, vector<1x4x128xbf16>
      %32 = vector.shape_cast %31 : vector<1x4x128xbf16> to vector<4x128xbf16>
      %c4 = arith.constant 4 : index
      %c0_26 = arith.constant 0 : index
      %c0_27 = arith.constant 0 : index
      %33 = vector.load %arg5[%c4, %c0_26, %c0_27] : memref<9x128x128xbf16, #tpu.memory_space<vmem>>, vector<1x128x128xbf16>
      %34 = vector.shape_cast %33 : vector<1x128x128xbf16> to vector<128x128xbf16>
      %cst_28 = arith.constant dense<0.000000e+00> : vector<4x128xf32>
      %35 = tpu.matmul %32, %34, %cst_28 {dimension_numbers = #tpu.dot_dimension_numbers<[1], [0], [0], [1], [0, 0, 1, 1], [], []>} : vector<4x128xbf16>, vector<128x128xbf16>, vector<4x128xf32> -> vector<4x128xf32>
      %36 = arith.addf %29, %35 : vector<4x128xf32>
      %37 = arith.index_cast %arg9 : i32 to index
      %c2_29 = arith.constant 2 : index
      %c0_30 = arith.constant 0 : index
      %38 = vector.load %arg3[%37, %c2_29, %c0_30] : memref<16x6x128xbf16, #tpu.memory_space<vmem>>, vector<1x4x128xbf16>
      %39 = vector.shape_cast %38 : vector<1x4x128xbf16> to vector<4x128xbf16>
      %c5 = arith.constant 5 : index
      %c0_31 = arith.constant 0 : index
      %c0_32 = arith.constant 0 : index
      %40 = vector.load %arg5[%c5, %c0_31, %c0_32] : memref<9x128x128xbf16, #tpu.memory_space<vmem>>, vector<1x128x128xbf16>
      %41 = vector.shape_cast %40 : vector<1x128x128xbf16> to vector<128x128xbf16>
      %cst_33 = arith.constant dense<0.000000e+00> : vector<4x128xf32>
      %42 = tpu.matmul %39, %41, %cst_33 {dimension_numbers = #tpu.dot_dimension_numbers<[1], [0], [0], [1], [0, 0, 1, 1], [], []>} : vector<4x128xbf16>, vector<128x128xbf16>, vector<4x128xf32> -> vector<4x128xf32>
      %43 = arith.addf %36, %42 : vector<4x128xf32>
      %44 = arith.index_cast %arg9 : i32 to index
      %c0_34 = arith.constant 0 : index
      %c0_35 = arith.constant 0 : index
      %45 = vector.load %arg4[%44, %c0_34, %c0_35] : memref<16x6x128xbf16, #tpu.memory_space<vmem>>, vector<1x4x128xbf16>
      %46 = vector.shape_cast %45 : vector<1x4x128xbf16> to vector<4x128xbf16>
      %c6 = arith.constant 6 : index
      %c0_36 = arith.constant 0 : index
      %c0_37 = arith.constant 0 : index
      %47 = vector.load %arg5[%c6, %c0_36, %c0_37] : memref<9x128x128xbf16, #tpu.memory_space<vmem>>, vector<1x128x128xbf16>
      %48 = vector.shape_cast %47 : vector<1x128x128xbf16> to vector<128x128xbf16>
      %cst_38 = arith.constant dense<0.000000e+00> : vector<4x128xf32>
      %49 = tpu.matmul %46, %48, %cst_38 {dimension_numbers = #tpu.dot_dimension_numbers<[1], [0], [0], [1], [0, 0, 1, 1], [], []>} : vector<4x128xbf16>, vector<128x128xbf16>, vector<4x128xf32> -> vector<4x128xf32>
      %50 = arith.addf %43, %49 : vector<4x128xf32>
      %51 = arith.index_cast %arg9 : i32 to index
      %c1_39 = arith.constant 1 : index
      %c0_40 = arith.constant 0 : index
      %52 = vector.load %arg4[%51, %c1_39, %c0_40] : memref<16x6x128xbf16, #tpu.memory_space<vmem>>, vector<1x4x128xbf16>
      %53 = vector.shape_cast %52 : vector<1x4x128xbf16> to vector<4x128xbf16>
      %c7 = arith.constant 7 : index
      %c0_41 = arith.constant 0 : index
      %c0_42 = arith.constant 0 : index
      %54 = vector.load %arg5[%c7, %c0_41, %c0_42] : memref<9x128x128xbf16, #tpu.memory_space<vmem>>, vector<1x128x128xbf16>
      %55 = vector.shape_cast %54 : vector<1x128x128xbf16> to vector<128x128xbf16>
      %cst_43 = arith.constant dense<0.000000e+00> : vector<4x128xf32>
      %56 = tpu.matmul %53, %55, %cst_43 {dimension_numbers = #tpu.dot_dimension_numbers<[1], [0], [0], [1], [0, 0, 1, 1], [], []>} : vector<4x128xbf16>, vector<128x128xbf16>, vector<4x128xf32> -> vector<4x128xf32>
      %57 = arith.addf %50, %56 : vector<4x128xf32>
      %58 = arith.index_cast %arg9 : i32 to index
      %c2_44 = arith.constant 2 : index
      %c0_45 = arith.constant 0 : index
      %59 = vector.load %arg4[%58, %c2_44, %c0_45] : memref<16x6x128xbf16, #tpu.memory_space<vmem>>, vector<1x4x128xbf16>
      %60 = vector.shape_cast %59 : vector<1x4x128xbf16> to vector<4x128xbf16>
      %c8 = arith.constant 8 : index
      %c0_46 = arith.constant 0 : index
      %c0_47 = arith.constant 0 : index
      %61 = vector.load %arg5[%c8, %c0_46, %c0_47] : memref<9x128x128xbf16, #tpu.memory_space<vmem>>, vector<1x128x128xbf16>
      %62 = vector.shape_cast %61 : vector<1x128x128xbf16> to vector<128x128xbf16>
      %cst_48 = arith.constant dense<0.000000e+00> : vector<4x128xf32>
      %63 = tpu.matmul %60, %62, %cst_48 {dimension_numbers = #tpu.dot_dimension_numbers<[1], [0], [0], [1], [0, 0, 1, 1], [], []>} : vector<4x128xbf16>, vector<128x128xbf16>, vector<4x128xf32> -> vector<4x128xf32>
      %64 = arith.addf %57, %63 : vector<4x128xf32>
      %65 = vector.broadcast %0 : vector<1x128xf32> to vector<4x128xf32>
      %66 = arith.mulf %64, %65 : vector<4x128xf32>
      %67 = vector.broadcast %1 : vector<1x128xf32> to vector<4x128xf32>
      %68 = arith.addf %66, %67 : vector<4x128xf32>
      %cst_49 = arith.constant 0.000000e+00 : f32
      %69 = vector.broadcast %cst_49 : f32 to vector<4x128xf32>
      %70 = arith.maximumf %68, %69 : vector<4x128xf32>
      %71 = arith.truncf %70 : vector<4x128xf32> to vector<4x128xbf16>
      %72 = arith.index_cast %arg9 : i32 to index
      %c0_50 = arith.constant 0 : index
      %c0_51 = arith.constant 0 : index
      %73 = vector.load %arg8[%72, %c0_50, %c0_51] : memref<16x4x128xbf16, #tpu.memory_space<vmem>>, vector<1x4x128xbf16>
      %74 = vector.shape_cast %73 : vector<1x4x128xbf16> to vector<4x128xbf16>
      %75 = vector.shape_cast %71 : vector<4x128xbf16> to vector<1x4x128xbf16>
      tpu.vector_store %arg8[%72, %c0_50, %c0_51], %75 {strides = array<i32>} : memref<16x4x128xbf16, #tpu.memory_space<vmem>>, vector<1x4x128xbf16>,
    }
    %c16_i32_3 = arith.constant 16 : i32
    return
  }
  func.func @transform_0(%arg0: i32, %arg1: i32) -> (i32, i32, i32) {
    %c0_i32 = arith.constant 0 : i32
    %c0_i32_0 = arith.constant 0 : i32
    %c0_i32_1 = arith.constant 0 : i32
    return %arg1, %c0_i32, %c0_i32_0 : i32, i32, i32
  }
  func.func @transform_1(%arg0: i32, %arg1: i32) -> (i32, i32, i32) {
    %c0_i32 = arith.constant 0 : i32
    %c0_i32_0 = arith.constant 0 : i32
    %c0_i32_1 = arith.constant 0 : i32
    return %arg1, %c0_i32, %c0_i32_0 : i32, i32, i32
  }
  func.func @transform_2(%arg0: i32, %arg1: i32) -> (i32, i32, i32) {
    %c0_i32 = arith.constant 0 : i32
    %c0_i32_0 = arith.constant 0 : i32
    %c0_i32_1 = arith.constant 0 : i32
    return %arg1, %c0_i32, %c0_i32_0 : i32, i32, i32
  }
  func.func @transform_3(%arg0: i32, %arg1: i32) -> (i32, i32, i32) {
    %c0_i32 = arith.constant 0 : i32
    %c0_i32_0 = arith.constant 0 : i32
    %c0_i32_1 = arith.constant 0 : i32
    return %c0_i32, %c0_i32_0, %arg0 : i32, i32, i32
  }
  func.func @transform_4(%arg0: i32, %arg1: i32) -> (i32, i32) {
    %c0_i32 = arith.constant 0 : i32
    %c0_i32_0 = arith.constant 0 : i32
    return %c0_i32, %arg0 : i32, i32
  }
  func.func @transform_5(%arg0: i32, %arg1: i32) -> (i32, i32) {
    %c0_i32 = arith.constant 0 : i32
    %c0_i32_0 = arith.constant 0 : i32
    return %c0_i32, %arg0 : i32, i32
  }
  func.func @transform_6(%arg0: i32, %arg1: i32) -> (i32, i32, i32) {
    %c0_i32 = arith.constant 0 : i32
    %c0_i32_0 = arith.constant 0 : i32
    return %arg1, %c0_i32, %arg0 : i32, i32, i32
  }
}

module attributes {stable_mosaic.version = 11 : i64} {
  func.func @kernel(%arg0: i32, %arg1: i32, %arg2: memref<8x3x256xbf16, #tpu.memory_space<vmem>>, %arg3: memref<8x3x256xbf16, #tpu.memory_space<vmem>>, %arg4: memref<8x3x256xbf16, #tpu.memory_space<vmem>>, %arg5: memref<8x3x256xbf16, #tpu.memory_space<vmem>>, %arg6: memref<8x3x256xbf16, #tpu.memory_space<vmem>>, %arg7: memref<8x3x256xbf16, #tpu.memory_space<vmem>>, %arg8: memref<9x256x128xbf16, #tpu.memory_space<vmem>>, %arg9: memref<1x128xf32, #tpu.memory_space<vmem>>, %arg10: memref<1x128xf32, #tpu.memory_space<vmem>>, %arg11: memref<8x2x128xbf16, #tpu.memory_space<vmem>>) attributes {dimension_semantics = [#tpu.dimension_semantics<parallel>, #tpu.dimension_semantics<parallel>], iteration_bounds = array<i64: 2, 1>, scalar_prefetch = 0 : i64, scratch_operands = 0 : i64, tpu.core_type = #tpu.core_type<tc>, window_params = [{transform_indices = @transform_0, window_bounds = array<i64: 8, 3, 256>}, {transform_indices = @transform_1, window_bounds = array<i64: 8, 3, 256>}, {transform_indices = @transform_2, window_bounds = array<i64: 8, 3, 256>}, {transform_indices = @transform_3, window_bounds = array<i64: 8, 3, 256>}, {transform_indices = @transform_4, window_bounds = array<i64: 8, 3, 256>}, {transform_indices = @transform_5, window_bounds = array<i64: 8, 3, 256>}, {transform_indices = @transform_6, window_bounds = array<i64: 9, 256, 128>}, {transform_indices = @transform_7, window_bounds = array<i64: 1, 128>}, {transform_indices = @transform_8, window_bounds = array<i64: 1, 128>}, {transform_indices = @transform_9, window_bounds = array<i64: 8, 2, 128>}]} {
    %c0 = arith.constant 0 : index
    %c0_0 = arith.constant 0 : index
    %0 = vector.load %arg9[%c0, %c0_0] : memref<1x128xf32, #tpu.memory_space<vmem>>, vector<1x128xf32>
    %c0_1 = arith.constant 0 : index
    %c0_2 = arith.constant 0 : index
    %1 = vector.load %arg10[%c0_1, %c0_2] : memref<1x128xf32, #tpu.memory_space<vmem>>, vector<1x128xf32>
    %c0_i32 = arith.constant 0 : i32
    %c8_i32 = arith.constant 8 : i32
    %2 = arith.addi %c0_i32, %c8_i32 : i32
    %c1_i32 = arith.constant 1 : i32
    scf.for %arg12 = %c0_i32 to %2 step %c1_i32  : i32 {
      %3 = arith.index_cast %arg12 : i32 to index
      %c0_4 = arith.constant 0 : index
      %c0_5 = arith.constant 0 : index
      %4 = vector.load %arg2[%3, %c0_4, %c0_5] : memref<8x3x256xbf16, #tpu.memory_space<vmem>>, vector<1x2x256xbf16>
      %5 = vector.shape_cast %4 : vector<1x2x256xbf16> to vector<2x256xbf16>
      %c0_6 = arith.constant 0 : index
      %c0_7 = arith.constant 0 : index
      %c0_8 = arith.constant 0 : index
      %6 = vector.load %arg8[%c0_6, %c0_7, %c0_8] : memref<9x256x128xbf16, #tpu.memory_space<vmem>>, vector<1x256x128xbf16>
      %7 = vector.shape_cast %6 : vector<1x256x128xbf16> to vector<256x128xbf16>
      %cst = arith.constant dense<0.000000e+00> : vector<2x128xf32>
      %8 = tpu.matmul %5, %7, %cst {dimension_numbers = #tpu.dot_dimension_numbers<[1], [0], [0], [1], [0, 0, 1, 1], [], []>} : vector<2x256xbf16>, vector<256x128xbf16>, vector<2x128xf32> -> vector<2x128xf32>
      %9 = arith.index_cast %arg12 : i32 to index
      %c0_9 = arith.constant 0 : index
      %c0_10 = arith.constant 0 : index
      %10 = vector.load %arg3[%9, %c0_9, %c0_10] : memref<8x3x256xbf16, #tpu.memory_space<vmem>>, vector<1x2x256xbf16>
      %11 = vector.shape_cast %10 : vector<1x2x256xbf16> to vector<2x256xbf16>
      %c1 = arith.constant 1 : index
      %c0_11 = arith.constant 0 : index
      %c0_12 = arith.constant 0 : index
      %12 = vector.load %arg8[%c1, %c0_11, %c0_12] : memref<9x256x128xbf16, #tpu.memory_space<vmem>>, vector<1x256x128xbf16>
      %13 = vector.shape_cast %12 : vector<1x256x128xbf16> to vector<256x128xbf16>
      %cst_13 = arith.constant dense<0.000000e+00> : vector<2x128xf32>
      %14 = tpu.matmul %11, %13, %cst_13 {dimension_numbers = #tpu.dot_dimension_numbers<[1], [0], [0], [1], [0, 0, 1, 1], [], []>} : vector<2x256xbf16>, vector<256x128xbf16>, vector<2x128xf32> -> vector<2x128xf32>
      %15 = arith.addf %8, %14 : vector<2x128xf32>
      %16 = arith.index_cast %arg12 : i32 to index
      %c1_14 = arith.constant 1 : index
      %c0_15 = arith.constant 0 : index
      %17 = vector.load %arg2[%16, %c1_14, %c0_15] : memref<8x3x256xbf16, #tpu.memory_space<vmem>>, vector<1x2x256xbf16>
      %18 = vector.shape_cast %17 : vector<1x2x256xbf16> to vector<2x256xbf16>
      %c2 = arith.constant 2 : index
      %c0_16 = arith.constant 0 : index
      %c0_17 = arith.constant 0 : index
      %19 = vector.load %arg8[%c2, %c0_16, %c0_17] : memref<9x256x128xbf16, #tpu.memory_space<vmem>>, vector<1x256x128xbf16>
      %20 = vector.shape_cast %19 : vector<1x256x128xbf16> to vector<256x128xbf16>
      %cst_18 = arith.constant dense<0.000000e+00> : vector<2x128xf32>
      %21 = tpu.matmul %18, %20, %cst_18 {dimension_numbers = #tpu.dot_dimension_numbers<[1], [0], [0], [1], [0, 0, 1, 1], [], []>} : vector<2x256xbf16>, vector<256x128xbf16>, vector<2x128xf32> -> vector<2x128xf32>
      %22 = arith.addf %15, %21 : vector<2x128xf32>
      %23 = arith.index_cast %arg12 : i32 to index
      %c0_19 = arith.constant 0 : index
      %c0_20 = arith.constant 0 : index
      %24 = vector.load %arg4[%23, %c0_19, %c0_20] : memref<8x3x256xbf16, #tpu.memory_space<vmem>>, vector<1x2x256xbf16>
      %25 = vector.shape_cast %24 : vector<1x2x256xbf16> to vector<2x256xbf16>
      %c3 = arith.constant 3 : index
      %c0_21 = arith.constant 0 : index
      %c0_22 = arith.constant 0 : index
      %26 = vector.load %arg8[%c3, %c0_21, %c0_22] : memref<9x256x128xbf16, #tpu.memory_space<vmem>>, vector<1x256x128xbf16>
      %27 = vector.shape_cast %26 : vector<1x256x128xbf16> to vector<256x128xbf16>
      %cst_23 = arith.constant dense<0.000000e+00> : vector<2x128xf32>
      %28 = tpu.matmul %25, %27, %cst_23 {dimension_numbers = #tpu.dot_dimension_numbers<[1], [0], [0], [1], [0, 0, 1, 1], [], []>} : vector<2x256xbf16>, vector<256x128xbf16>, vector<2x128xf32> -> vector<2x128xf32>
      %29 = arith.addf %22, %28 : vector<2x128xf32>
      %30 = arith.index_cast %arg12 : i32 to index
      %c0_24 = arith.constant 0 : index
      %c0_25 = arith.constant 0 : index
      %31 = vector.load %arg5[%30, %c0_24, %c0_25] : memref<8x3x256xbf16, #tpu.memory_space<vmem>>, vector<1x2x256xbf16>
      %32 = vector.shape_cast %31 : vector<1x2x256xbf16> to vector<2x256xbf16>
      %c4 = arith.constant 4 : index
      %c0_26 = arith.constant 0 : index
      %c0_27 = arith.constant 0 : index
      %33 = vector.load %arg8[%c4, %c0_26, %c0_27] : memref<9x256x128xbf16, #tpu.memory_space<vmem>>, vector<1x256x128xbf16>
      %34 = vector.shape_cast %33 : vector<1x256x128xbf16> to vector<256x128xbf16>
      %cst_28 = arith.constant dense<0.000000e+00> : vector<2x128xf32>
      %35 = tpu.matmul %32, %34, %cst_28 {dimension_numbers = #tpu.dot_dimension_numbers<[1], [0], [0], [1], [0, 0, 1, 1], [], []>} : vector<2x256xbf16>, vector<256x128xbf16>, vector<2x128xf32> -> vector<2x128xf32>
      %36 = arith.addf %29, %35 : vector<2x128xf32>
      %37 = arith.index_cast %arg12 : i32 to index
      %c1_29 = arith.constant 1 : index
      %c0_30 = arith.constant 0 : index
      %38 = vector.load %arg4[%37, %c1_29, %c0_30] : memref<8x3x256xbf16, #tpu.memory_space<vmem>>, vector<1x2x256xbf16>
      %39 = vector.shape_cast %38 : vector<1x2x256xbf16> to vector<2x256xbf16>
      %c5 = arith.constant 5 : index
      %c0_31 = arith.constant 0 : index
      %c0_32 = arith.constant 0 : index
      %40 = vector.load %arg8[%c5, %c0_31, %c0_32] : memref<9x256x128xbf16, #tpu.memory_space<vmem>>, vector<1x256x128xbf16>
      %41 = vector.shape_cast %40 : vector<1x256x128xbf16> to vector<256x128xbf16>
      %cst_33 = arith.constant dense<0.000000e+00> : vector<2x128xf32>
      %42 = tpu.matmul %39, %41, %cst_33 {dimension_numbers = #tpu.dot_dimension_numbers<[1], [0], [0], [1], [0, 0, 1, 1], [], []>} : vector<2x256xbf16>, vector<256x128xbf16>, vector<2x128xf32> -> vector<2x128xf32>
      %43 = arith.addf %36, %42 : vector<2x128xf32>
      %44 = arith.index_cast %arg12 : i32 to index
      %c0_34 = arith.constant 0 : index
      %c0_35 = arith.constant 0 : index
      %45 = vector.load %arg6[%44, %c0_34, %c0_35] : memref<8x3x256xbf16, #tpu.memory_space<vmem>>, vector<1x2x256xbf16>
      %46 = vector.shape_cast %45 : vector<1x2x256xbf16> to vector<2x256xbf16>
      %c6 = arith.constant 6 : index
      %c0_36 = arith.constant 0 : index
      %c0_37 = arith.constant 0 : index
      %47 = vector.load %arg8[%c6, %c0_36, %c0_37] : memref<9x256x128xbf16, #tpu.memory_space<vmem>>, vector<1x256x128xbf16>
      %48 = vector.shape_cast %47 : vector<1x256x128xbf16> to vector<256x128xbf16>
      %cst_38 = arith.constant dense<0.000000e+00> : vector<2x128xf32>
      %49 = tpu.matmul %46, %48, %cst_38 {dimension_numbers = #tpu.dot_dimension_numbers<[1], [0], [0], [1], [0, 0, 1, 1], [], []>} : vector<2x256xbf16>, vector<256x128xbf16>, vector<2x128xf32> -> vector<2x128xf32>
      %50 = arith.addf %43, %49 : vector<2x128xf32>
      %51 = arith.index_cast %arg12 : i32 to index
      %c0_39 = arith.constant 0 : index
      %c0_40 = arith.constant 0 : index
      %52 = vector.load %arg7[%51, %c0_39, %c0_40] : memref<8x3x256xbf16, #tpu.memory_space<vmem>>, vector<1x2x256xbf16>
      %53 = vector.shape_cast %52 : vector<1x2x256xbf16> to vector<2x256xbf16>
      %c7 = arith.constant 7 : index
      %c0_41 = arith.constant 0 : index
      %c0_42 = arith.constant 0 : index
      %54 = vector.load %arg8[%c7, %c0_41, %c0_42] : memref<9x256x128xbf16, #tpu.memory_space<vmem>>, vector<1x256x128xbf16>
      %55 = vector.shape_cast %54 : vector<1x256x128xbf16> to vector<256x128xbf16>
      %cst_43 = arith.constant dense<0.000000e+00> : vector<2x128xf32>
      %56 = tpu.matmul %53, %55, %cst_43 {dimension_numbers = #tpu.dot_dimension_numbers<[1], [0], [0], [1], [0, 0, 1, 1], [], []>} : vector<2x256xbf16>, vector<256x128xbf16>, vector<2x128xf32> -> vector<2x128xf32>
      %57 = arith.addf %50, %56 : vector<2x128xf32>
      %58 = arith.index_cast %arg12 : i32 to index
      %c1_44 = arith.constant 1 : index
      %c0_45 = arith.constant 0 : index
      %59 = vector.load %arg6[%58, %c1_44, %c0_45] : memref<8x3x256xbf16, #tpu.memory_space<vmem>>, vector<1x2x256xbf16>
      %60 = vector.shape_cast %59 : vector<1x2x256xbf16> to vector<2x256xbf16>
      %c8 = arith.constant 8 : index
      %c0_46 = arith.constant 0 : index
      %c0_47 = arith.constant 0 : index
      %61 = vector.load %arg8[%c8, %c0_46, %c0_47] : memref<9x256x128xbf16, #tpu.memory_space<vmem>>, vector<1x256x128xbf16>
      %62 = vector.shape_cast %61 : vector<1x256x128xbf16> to vector<256x128xbf16>
      %cst_48 = arith.constant dense<0.000000e+00> : vector<2x128xf32>
      %63 = tpu.matmul %60, %62, %cst_48 {dimension_numbers = #tpu.dot_dimension_numbers<[1], [0], [0], [1], [0, 0, 1, 1], [], []>} : vector<2x256xbf16>, vector<256x128xbf16>, vector<2x128xf32> -> vector<2x128xf32>
      %64 = arith.addf %57, %63 : vector<2x128xf32>
      %65 = vector.broadcast %0 : vector<1x128xf32> to vector<2x128xf32>
      %66 = arith.mulf %64, %65 : vector<2x128xf32>
      %67 = vector.broadcast %1 : vector<1x128xf32> to vector<2x128xf32>
      %68 = arith.addf %66, %67 : vector<2x128xf32>
      %cst_49 = arith.constant 0.000000e+00 : f32
      %69 = vector.broadcast %cst_49 : f32 to vector<2x128xf32>
      %70 = arith.maximumf %68, %69 : vector<2x128xf32>
      %71 = arith.truncf %70 : vector<2x128xf32> to vector<2x128xbf16>
      %72 = arith.index_cast %arg12 : i32 to index
      %c0_50 = arith.constant 0 : index
      %c0_51 = arith.constant 0 : index
      %73 = vector.load %arg11[%72, %c0_50, %c0_51] : memref<8x2x128xbf16, #tpu.memory_space<vmem>>, vector<1x2x128xbf16>
      %74 = vector.shape_cast %73 : vector<1x2x128xbf16> to vector<2x128xbf16>
      %75 = vector.shape_cast %71 : vector<2x128xbf16> to vector<1x2x128xbf16>
      tpu.vector_store %arg11[%72, %c0_50, %c0_51], %75 {strides = array<i32>} : memref<8x2x128xbf16, #tpu.memory_space<vmem>>, vector<1x2x128xbf16>,
    }
    %c8_i32_3 = arith.constant 8 : i32
    return
  }
  func.func @transform_0(%arg0: i32, %arg1: i32) -> (i32, i32, i32) {
    %c0_i32 = arith.constant 0 : i32
    %c0_i32_0 = arith.constant 0 : i32
    %c0_i32_1 = arith.constant 0 : i32
    return %arg1, %c0_i32, %c0_i32_0 : i32, i32, i32
  }
  func.func @transform_1(%arg0: i32, %arg1: i32) -> (i32, i32, i32) {
    %c0_i32 = arith.constant 0 : i32
    %c0_i32_0 = arith.constant 0 : i32
    %c0_i32_1 = arith.constant 0 : i32
    return %arg1, %c0_i32, %c0_i32_0 : i32, i32, i32
  }
  func.func @transform_2(%arg0: i32, %arg1: i32) -> (i32, i32, i32) {
    %c0_i32 = arith.constant 0 : i32
    %c0_i32_0 = arith.constant 0 : i32
    %c0_i32_1 = arith.constant 0 : i32
    return %arg1, %c0_i32, %c0_i32_0 : i32, i32, i32
  }
  func.func @transform_3(%arg0: i32, %arg1: i32) -> (i32, i32, i32) {
    %c0_i32 = arith.constant 0 : i32
    %c0_i32_0 = arith.constant 0 : i32
    %c0_i32_1 = arith.constant 0 : i32
    return %arg1, %c0_i32, %c0_i32_0 : i32, i32, i32
  }
  func.func @transform_4(%arg0: i32, %arg1: i32) -> (i32, i32, i32) {
    %c0_i32 = arith.constant 0 : i32
    %c0_i32_0 = arith.constant 0 : i32
    %c0_i32_1 = arith.constant 0 : i32
    return %arg1, %c0_i32, %c0_i32_0 : i32, i32, i32
  }
  func.func @transform_5(%arg0: i32, %arg1: i32) -> (i32, i32, i32) {
    %c0_i32 = arith.constant 0 : i32
    %c0_i32_0 = arith.constant 0 : i32
    %c0_i32_1 = arith.constant 0 : i32
    return %arg1, %c0_i32, %c0_i32_0 : i32, i32, i32
  }
  func.func @transform_6(%arg0: i32, %arg1: i32) -> (i32, i32, i32) {
    %c0_i32 = arith.constant 0 : i32
    %c0_i32_0 = arith.constant 0 : i32
    %c0_i32_1 = arith.constant 0 : i32
    return %c0_i32, %c0_i32_0, %arg0 : i32, i32, i32
  }
  func.func @transform_7(%arg0: i32, %arg1: i32) -> (i32, i32) {
    %c0_i32 = arith.constant 0 : i32
    %c0_i32_0 = arith.constant 0 : i32
    return %c0_i32, %arg0 : i32, i32
  }
  func.func @transform_8(%arg0: i32, %arg1: i32) -> (i32, i32) {
    %c0_i32 = arith.constant 0 : i32
    %c0_i32_0 = arith.constant 0 : i32
    return %c0_i32, %arg0 : i32, i32
  }
  func.func @transform_9(%arg0: i32, %arg1: i32) -> (i32, i32, i32) {
    %c0_i32 = arith.constant 0 : i32
    %c0_i32_0 = arith.constant 0 : i32
    return %arg1, %c0_i32, %arg0 : i32, i32, i32
  }
}

module attributes {stable_mosaic.version = 11 : i64} {
  func.func @kernel(%arg0: i32, %arg1: i32, %arg2: memref<8x4x256xbf16, #tpu.memory_space<vmem>>, %arg3: memref<8x4x256xbf16, #tpu.memory_space<vmem>>, %arg4: memref<8x4x256xbf16, #tpu.memory_space<vmem>>, %arg5: memref<9x256x256xbf16, #tpu.memory_space<vmem>>, %arg6: memref<1x256xf32, #tpu.memory_space<vmem>>, %arg7: memref<1x256xf32, #tpu.memory_space<vmem>>, %arg8: memref<8x2x256xf32, #tpu.memory_space<vmem>>) attributes {dimension_semantics = [#tpu.dimension_semantics<parallel>, #tpu.dimension_semantics<parallel>], iteration_bounds = array<i64: 2, 1>, scalar_prefetch = 0 : i64, scratch_operands = 0 : i64, tpu.core_type = #tpu.core_type<tc>, window_params = [{transform_indices = @transform_0, window_bounds = array<i64: 8, 4, 256>}, {transform_indices = @transform_1, window_bounds = array<i64: 8, 4, 256>}, {transform_indices = @transform_2, window_bounds = array<i64: 8, 4, 256>}, {transform_indices = @transform_3, window_bounds = array<i64: 9, 256, 256>}, {transform_indices = @transform_4, window_bounds = array<i64: 1, 256>}, {transform_indices = @transform_5, window_bounds = array<i64: 1, 256>}, {transform_indices = @transform_6, window_bounds = array<i64: 8, 2, 256>}]} {
    %c0 = arith.constant 0 : index
    %c0_0 = arith.constant 0 : index
    %0 = vector.load %arg6[%c0, %c0_0] : memref<1x256xf32, #tpu.memory_space<vmem>>, vector<1x256xf32>
    %c0_1 = arith.constant 0 : index
    %c0_2 = arith.constant 0 : index
    %1 = vector.load %arg7[%c0_1, %c0_2] : memref<1x256xf32, #tpu.memory_space<vmem>>, vector<1x256xf32>
    %c0_i32 = arith.constant 0 : i32
    %c8_i32 = arith.constant 8 : i32
    %2 = arith.addi %c0_i32, %c8_i32 : i32
    %c1_i32 = arith.constant 1 : i32
    scf.for %arg9 = %c0_i32 to %2 step %c1_i32  : i32 {
      %3 = arith.index_cast %arg9 : i32 to index
      %c0_4 = arith.constant 0 : index
      %c0_5 = arith.constant 0 : index
      %4 = vector.load %arg2[%3, %c0_4, %c0_5] : memref<8x4x256xbf16, #tpu.memory_space<vmem>>, vector<1x2x256xbf16>
      %5 = vector.shape_cast %4 : vector<1x2x256xbf16> to vector<2x256xbf16>
      %c0_6 = arith.constant 0 : index
      %c0_7 = arith.constant 0 : index
      %c0_8 = arith.constant 0 : index
      %6 = vector.load %arg5[%c0_6, %c0_7, %c0_8] : memref<9x256x256xbf16, #tpu.memory_space<vmem>>, vector<1x256x256xbf16>
      %7 = vector.shape_cast %6 : vector<1x256x256xbf16> to vector<256x256xbf16>
      %cst = arith.constant dense<0.000000e+00> : vector<2x256xf32>
      %8 = tpu.matmul %5, %7, %cst {dimension_numbers = #tpu.dot_dimension_numbers<[1], [0], [0], [1], [0, 0, 1, 1], [], []>} : vector<2x256xbf16>, vector<256x256xbf16>, vector<2x256xf32> -> vector<2x256xf32>
      %9 = arith.index_cast %arg9 : i32 to index
      %c1 = arith.constant 1 : index
      %c0_9 = arith.constant 0 : index
      %10 = vector.load %arg2[%9, %c1, %c0_9] : memref<8x4x256xbf16, #tpu.memory_space<vmem>>, vector<1x2x256xbf16>
      %11 = vector.shape_cast %10 : vector<1x2x256xbf16> to vector<2x256xbf16>
      %c1_10 = arith.constant 1 : index
      %c0_11 = arith.constant 0 : index
      %c0_12 = arith.constant 0 : index
      %12 = vector.load %arg5[%c1_10, %c0_11, %c0_12] : memref<9x256x256xbf16, #tpu.memory_space<vmem>>, vector<1x256x256xbf16>
      %13 = vector.shape_cast %12 : vector<1x256x256xbf16> to vector<256x256xbf16>
      %cst_13 = arith.constant dense<0.000000e+00> : vector<2x256xf32>
      %14 = tpu.matmul %11, %13, %cst_13 {dimension_numbers = #tpu.dot_dimension_numbers<[1], [0], [0], [1], [0, 0, 1, 1], [], []>} : vector<2x256xbf16>, vector<256x256xbf16>, vector<2x256xf32> -> vector<2x256xf32>
      %15 = arith.addf %8, %14 : vector<2x256xf32>
      %16 = arith.index_cast %arg9 : i32 to index
      %c2 = arith.constant 2 : index
      %c0_14 = arith.constant 0 : index
      %17 = vector.load %arg2[%16, %c2, %c0_14] : memref<8x4x256xbf16, #tpu.memory_space<vmem>>, vector<1x2x256xbf16>
      %18 = vector.shape_cast %17 : vector<1x2x256xbf16> to vector<2x256xbf16>
      %c2_15 = arith.constant 2 : index
      %c0_16 = arith.constant 0 : index
      %c0_17 = arith.constant 0 : index
      %19 = vector.load %arg5[%c2_15, %c0_16, %c0_17] : memref<9x256x256xbf16, #tpu.memory_space<vmem>>, vector<1x256x256xbf16>
      %20 = vector.shape_cast %19 : vector<1x256x256xbf16> to vector<256x256xbf16>
      %cst_18 = arith.constant dense<0.000000e+00> : vector<2x256xf32>
      %21 = tpu.matmul %18, %20, %cst_18 {dimension_numbers = #tpu.dot_dimension_numbers<[1], [0], [0], [1], [0, 0, 1, 1], [], []>} : vector<2x256xbf16>, vector<256x256xbf16>, vector<2x256xf32> -> vector<2x256xf32>
      %22 = arith.addf %15, %21 : vector<2x256xf32>
      %23 = arith.index_cast %arg9 : i32 to index
      %c0_19 = arith.constant 0 : index
      %c0_20 = arith.constant 0 : index
      %24 = vector.load %arg3[%23, %c0_19, %c0_20] : memref<8x4x256xbf16, #tpu.memory_space<vmem>>, vector<1x2x256xbf16>
      %25 = vector.shape_cast %24 : vector<1x2x256xbf16> to vector<2x256xbf16>
      %c3 = arith.constant 3 : index
      %c0_21 = arith.constant 0 : index
      %c0_22 = arith.constant 0 : index
      %26 = vector.load %arg5[%c3, %c0_21, %c0_22] : memref<9x256x256xbf16, #tpu.memory_space<vmem>>, vector<1x256x256xbf16>
      %27 = vector.shape_cast %26 : vector<1x256x256xbf16> to vector<256x256xbf16>
      %cst_23 = arith.constant dense<0.000000e+00> : vector<2x256xf32>
      %28 = tpu.matmul %25, %27, %cst_23 {dimension_numbers = #tpu.dot_dimension_numbers<[1], [0], [0], [1], [0, 0, 1, 1], [], []>} : vector<2x256xbf16>, vector<256x256xbf16>, vector<2x256xf32> -> vector<2x256xf32>
      %29 = arith.addf %22, %28 : vector<2x256xf32>
      %30 = arith.index_cast %arg9 : i32 to index
      %c1_24 = arith.constant 1 : index
      %c0_25 = arith.constant 0 : index
      %31 = vector.load %arg3[%30, %c1_24, %c0_25] : memref<8x4x256xbf16, #tpu.memory_space<vmem>>, vector<1x2x256xbf16>
      %32 = vector.shape_cast %31 : vector<1x2x256xbf16> to vector<2x256xbf16>
      %c4 = arith.constant 4 : index
      %c0_26 = arith.constant 0 : index
      %c0_27 = arith.constant 0 : index
      %33 = vector.load %arg5[%c4, %c0_26, %c0_27] : memref<9x256x256xbf16, #tpu.memory_space<vmem>>, vector<1x256x256xbf16>
      %34 = vector.shape_cast %33 : vector<1x256x256xbf16> to vector<256x256xbf16>
      %cst_28 = arith.constant dense<0.000000e+00> : vector<2x256xf32>
      %35 = tpu.matmul %32, %34, %cst_28 {dimension_numbers = #tpu.dot_dimension_numbers<[1], [0], [0], [1], [0, 0, 1, 1], [], []>} : vector<2x256xbf16>, vector<256x256xbf16>, vector<2x256xf32> -> vector<2x256xf32>
      %36 = arith.addf %29, %35 : vector<2x256xf32>
      %37 = arith.index_cast %arg9 : i32 to index
      %c2_29 = arith.constant 2 : index
      %c0_30 = arith.constant 0 : index
      %38 = vector.load %arg3[%37, %c2_29, %c0_30] : memref<8x4x256xbf16, #tpu.memory_space<vmem>>, vector<1x2x256xbf16>
      %39 = vector.shape_cast %38 : vector<1x2x256xbf16> to vector<2x256xbf16>
      %c5 = arith.constant 5 : index
      %c0_31 = arith.constant 0 : index
      %c0_32 = arith.constant 0 : index
      %40 = vector.load %arg5[%c5, %c0_31, %c0_32] : memref<9x256x256xbf16, #tpu.memory_space<vmem>>, vector<1x256x256xbf16>
      %41 = vector.shape_cast %40 : vector<1x256x256xbf16> to vector<256x256xbf16>
      %cst_33 = arith.constant dense<0.000000e+00> : vector<2x256xf32>
      %42 = tpu.matmul %39, %41, %cst_33 {dimension_numbers = #tpu.dot_dimension_numbers<[1], [0], [0], [1], [0, 0, 1, 1], [], []>} : vector<2x256xbf16>, vector<256x256xbf16>, vector<2x256xf32> -> vector<2x256xf32>
      %43 = arith.addf %36, %42 : vector<2x256xf32>
      %44 = arith.index_cast %arg9 : i32 to index
      %c0_34 = arith.constant 0 : index
      %c0_35 = arith.constant 0 : index
      %45 = vector.load %arg4[%44, %c0_34, %c0_35] : memref<8x4x256xbf16, #tpu.memory_space<vmem>>, vector<1x2x256xbf16>
      %46 = vector.shape_cast %45 : vector<1x2x256xbf16> to vector<2x256xbf16>
      %c6 = arith.constant 6 : index
      %c0_36 = arith.constant 0 : index
      %c0_37 = arith.constant 0 : index
      %47 = vector.load %arg5[%c6, %c0_36, %c0_37] : memref<9x256x256xbf16, #tpu.memory_space<vmem>>, vector<1x256x256xbf16>
      %48 = vector.shape_cast %47 : vector<1x256x256xbf16> to vector<256x256xbf16>
      %cst_38 = arith.constant dense<0.000000e+00> : vector<2x256xf32>
      %49 = tpu.matmul %46, %48, %cst_38 {dimension_numbers = #tpu.dot_dimension_numbers<[1], [0], [0], [1], [0, 0, 1, 1], [], []>} : vector<2x256xbf16>, vector<256x256xbf16>, vector<2x256xf32> -> vector<2x256xf32>
      %50 = arith.addf %43, %49 : vector<2x256xf32>
      %51 = arith.index_cast %arg9 : i32 to index
      %c1_39 = arith.constant 1 : index
      %c0_40 = arith.constant 0 : index
      %52 = vector.load %arg4[%51, %c1_39, %c0_40] : memref<8x4x256xbf16, #tpu.memory_space<vmem>>, vector<1x2x256xbf16>
      %53 = vector.shape_cast %52 : vector<1x2x256xbf16> to vector<2x256xbf16>
      %c7 = arith.constant 7 : index
      %c0_41 = arith.constant 0 : index
      %c0_42 = arith.constant 0 : index
      %54 = vector.load %arg5[%c7, %c0_41, %c0_42] : memref<9x256x256xbf16, #tpu.memory_space<vmem>>, vector<1x256x256xbf16>
      %55 = vector.shape_cast %54 : vector<1x256x256xbf16> to vector<256x256xbf16>
      %cst_43 = arith.constant dense<0.000000e+00> : vector<2x256xf32>
      %56 = tpu.matmul %53, %55, %cst_43 {dimension_numbers = #tpu.dot_dimension_numbers<[1], [0], [0], [1], [0, 0, 1, 1], [], []>} : vector<2x256xbf16>, vector<256x256xbf16>, vector<2x256xf32> -> vector<2x256xf32>
      %57 = arith.addf %50, %56 : vector<2x256xf32>
      %58 = arith.index_cast %arg9 : i32 to index
      %c2_44 = arith.constant 2 : index
      %c0_45 = arith.constant 0 : index
      %59 = vector.load %arg4[%58, %c2_44, %c0_45] : memref<8x4x256xbf16, #tpu.memory_space<vmem>>, vector<1x2x256xbf16>
      %60 = vector.shape_cast %59 : vector<1x2x256xbf16> to vector<2x256xbf16>
      %c8 = arith.constant 8 : index
      %c0_46 = arith.constant 0 : index
      %c0_47 = arith.constant 0 : index
      %61 = vector.load %arg5[%c8, %c0_46, %c0_47] : memref<9x256x256xbf16, #tpu.memory_space<vmem>>, vector<1x256x256xbf16>
      %62 = vector.shape_cast %61 : vector<1x256x256xbf16> to vector<256x256xbf16>
      %cst_48 = arith.constant dense<0.000000e+00> : vector<2x256xf32>
      %63 = tpu.matmul %60, %62, %cst_48 {dimension_numbers = #tpu.dot_dimension_numbers<[1], [0], [0], [1], [0, 0, 1, 1], [], []>} : vector<2x256xbf16>, vector<256x256xbf16>, vector<2x256xf32> -> vector<2x256xf32>
      %64 = arith.addf %57, %63 : vector<2x256xf32>
      %65 = vector.broadcast %0 : vector<1x256xf32> to vector<2x256xf32>
      %66 = arith.mulf %64, %65 : vector<2x256xf32>
      %67 = vector.broadcast %1 : vector<1x256xf32> to vector<2x256xf32>
      %68 = arith.addf %66, %67 : vector<2x256xf32>
      %cst_49 = arith.constant 0.000000e+00 : f32
      %69 = vector.broadcast %cst_49 : f32 to vector<2x256xf32>
      %70 = arith.maximumf %68, %69 : vector<2x256xf32>
      %71 = arith.index_cast %arg9 : i32 to index
      %c0_50 = arith.constant 0 : index
      %c0_51 = arith.constant 0 : index
      %72 = vector.load %arg8[%71, %c0_50, %c0_51] : memref<8x2x256xf32, #tpu.memory_space<vmem>>, vector<1x2x256xf32>
      %73 = vector.shape_cast %72 : vector<1x2x256xf32> to vector<2x256xf32>
      %74 = vector.shape_cast %70 : vector<2x256xf32> to vector<1x2x256xf32>
      tpu.vector_store %arg8[%71, %c0_50, %c0_51], %74 {strides = array<i32>} : memref<8x2x256xf32, #tpu.memory_space<vmem>>, vector<1x2x256xf32>,
    }
    %c8_i32_3 = arith.constant 8 : i32
    return
  }
  func.func @transform_0(%arg0: i32, %arg1: i32) -> (i32, i32, i32) {
    %c0_i32 = arith.constant 0 : i32
    %c0_i32_0 = arith.constant 0 : i32
    %c0_i32_1 = arith.constant 0 : i32
    return %arg1, %c0_i32, %c0_i32_0 : i32, i32, i32
  }
  func.func @transform_1(%arg0: i32, %arg1: i32) -> (i32, i32, i32) {
    %c0_i32 = arith.constant 0 : i32
    %c0_i32_0 = arith.constant 0 : i32
    %c0_i32_1 = arith.constant 0 : i32
    return %arg1, %c0_i32, %c0_i32_0 : i32, i32, i32
  }
  func.func @transform_2(%arg0: i32, %arg1: i32) -> (i32, i32, i32) {
    %c0_i32 = arith.constant 0 : i32
    %c0_i32_0 = arith.constant 0 : i32
    %c0_i32_1 = arith.constant 0 : i32
    return %arg1, %c0_i32, %c0_i32_0 : i32, i32, i32
  }
  func.func @transform_3(%arg0: i32, %arg1: i32) -> (i32, i32, i32) {
    %c0_i32 = arith.constant 0 : i32
    %c0_i32_0 = arith.constant 0 : i32
    %c0_i32_1 = arith.constant 0 : i32
    return %c0_i32, %c0_i32_0, %arg0 : i32, i32, i32
  }
  func.func @transform_4(%arg0: i32, %arg1: i32) -> (i32, i32) {
    %c0_i32 = arith.constant 0 : i32
    %c0_i32_0 = arith.constant 0 : i32
    return %c0_i32, %arg0 : i32, i32
  }
  func.func @transform_5(%arg0: i32, %arg1: i32) -> (i32, i32) {
    %c0_i32 = arith.constant 0 : i32
    %c0_i32_0 = arith.constant 0 : i32
    return %c0_i32, %arg0 : i32, i32
  }
  func.func @transform_6(%arg0: i32, %arg1: i32) -> (i32, i32, i32) {
    %c0_i32 = arith.constant 0 : i32
    %c0_i32_0 = arith.constant 0 : i32
    return %arg1, %c0_i32, %arg0 : i32, i32, i32
  }
}

</mosaic_0001>

<llo_original>
// kernel: tower.6
$region0: #{tower.6}
  #allocation0 [shape = 'u32[]', space=smem, size = 0x4, offset = 0x4, fixed_abs, tag = 'smem constant byte address 0x4 - core index']
  #allocation1 [shape = 'u32[144,128]{1,0:T(1,128)}', space=vmem, size = 0x12000, scoped, tag = 'internal scratch']
  %s0 = inlined_call_operand.hbm [shape: bf16[256,9], index: 0, kind: input, shape index: {}]
  %s1 = inlined_call_operand.hbm [shape: bf16[9,64], index: 1, kind: input, shape index: {}]
  %s2 = inlined_call_operand.hbm [shape: f32[1,64], index: 2, kind: input, shape index: {}]
  %s3 = inlined_call_operand.hbm [shape: f32[1,64], index: 3, kind: input, shape index: {}]
  %s4 = inlined_call_operand.hbm [shape: bf16[256,64], index: 4, kind: output, shape index: {}]
  %s5 = sld [smem:[#allocation0]]
  $region42: #{tower.6} parent=0
    _
  %s7 = ssub.s32 1, %s5
  %s8 = scalar_select 0, %s7, %s5
  $region1: #{tower.6} parent=0
    #allocation2 [shape = 'u8[65536]{0}', space=vmem, size = 0x10000, scoped, tag = 'input window, operand 0, single buffered']
    #allocation3 [shape = 's32[1]{0}', space=sflag, size = 0x4, scoped, tag = 'scoped memory for tower.6']
    #allocation4 [shape = 's32[1]{0}', space=sflag, size = 0x4, scoped, tag = 'scoped memory for tower.6']
    #allocation5 [shape = 'u8[4096]{0}', space=vmem, size = 0x1000, scoped, tag = 'input window, operand 1, single buffered']
    #allocation6 [shape = 's32[1]{0}', space=sflag, size = 0x4, scoped, tag = 'scoped memory for tower.6']
    #allocation7 [shape = 'u8[512]{0}', space=vmem, size = 0x400, scoped, tag = 'input window, operand 2, single buffered']
    #allocation8 [shape = 'u8[512]{0}', space=vmem, size = 0x400, scoped, tag = 'input window, operand 3, single buffered']
    #allocation9 [shape = 's32[1]{0}', space=sflag, size = 0x4, scoped, tag = 'scoped memory for tower.6']
    #allocation10 [shape = 'u8[65536]{0}', space=vmem, size = 0x10000, scoped, tag = 'output window, operand 0, single buffered']
    %9 = vsyncpa [#allocation3], 0
    %10 = vsyncpa [#allocation6], 0
    %11 = vsyncpa [#allocation9], 0
    %12 = vsyncpa [#allocation4], 0
    // Predicated region
    $region2: #{tower.6} parent=1 // pred_check
      _
    $region3: #{tower.6} parent=1 // pred_check_branch
      %14 = sbr.rel (0) target = $region5
    $region4: #{tower.6} parent=1 // pred_region
      %s16 = ssub.s32 2048, 2048
      %17 = vsyncadd [#allocation3], %s16
      %s18 = sshll.u32 [#allocation2], 4
      %s19 = int_to_ptr.vmem [resolvable:$true] %s18
      %24 = dma.hbm_to_vmem [thread:$0]  %s0, 2048, %s19, [#allocation3], 64, 64, 4
    $region5: #{tower.6} parent=1 // pred_fallthru
      _
    // Predicated region
    $region6: #{tower.6} parent=1 // pred_check
      _
    $region7: #{tower.6} parent=1 // pred_check_branch
      %26 = sbr.rel (0) target = $region9
    $region8: #{tower.6} parent=1 // pred_region
      %s28 = ssub.s32 128, 128
      %29 = vsyncadd [#allocation6], %s28
      %s30 = sshll.u32 [#allocation5], 4
      %s31 = int_to_ptr.vmem [resolvable:$true] %s30
      %36 = dma.hbm_to_vmem [thread:$0]  %s1, 128, %s31, [#allocation6], 64, 64, 4
    $region9: #{tower.6} parent=1 // pred_fallthru
      _
    // Predicated region
    $region10: #{tower.6} parent=1 // pred_check
      _
    $region11: #{tower.6} parent=1 // pred_check_branch
      %38 = sbr.rel (0) target = $region13
    $region12: #{tower.6} parent=1 // pred_region
      %s40 = ssub.s32 16, 16
      %41 = vsyncadd [#allocation6], %s40
      %s43 = sshll.u32 [#allocation7], 4
      %s44 = int_to_ptr.vmem [resolvable:$true] %s43
      %46 = dma.hbm_to_vmem [thread:$0]  %s2, 16, %s44, [#allocation6]
    $region13: #{tower.6} parent=1 // pred_fallthru
      _
    // Predicated region
    $region14: #{tower.6} parent=1 // pred_check
      _
    $region15: #{tower.6} parent=1 // pred_check_branch
      %48 = sbr.rel (0) target = $region17
    $region16: #{tower.6} parent=1 // pred_region
      %s50 = ssub.s32 16, 16
      %51 = vsyncadd [#allocation9], %s50
      %s53 = sshll.u32 [#allocation8], 4
      %s54 = int_to_ptr.vmem [resolvable:$true] %s53
      %56 = dma.hbm_to_vmem [thread:$0]  %s3, 16, %s54, [#allocation9]
    $region17: #{tower.6} parent=1 // pred_fallthru
      _
    // Predicated region
    $region18: #{tower.6} parent=1 // pred_check
      _
    $region19: #{tower.6} parent=1 // pred_check_branch
      %58 = sbr.rel (0) target = $region21
    $region20: #{tower.6} parent=1 // pred_region
      %59 = dma.done [#allocation3], 2048
    $region21: #{tower.6} parent=1 // pred_fallthru
      _
    // Predicated region
    $region22: #{tower.6} parent=1 // pred_check
      _
    $region23: #{tower.6} parent=1 // pred_check_branch
      %61 = sbr.rel (0) target = $region25
    $region24: #{tower.6} parent=1 // pred_region
      %62 = dma.done [#allocation6], 128
    $region25: #{tower.6} parent=1 // pred_fallthru
      _
    // Predicated region
    $region26: #{tower.6} parent=1 // pred_check
      _
    $region27: #{tower.6} parent=1 // pred_check_branch
      %64 = sbr.rel (0) target = $region29
    $region28: #{tower.6} parent=1 // pred_region
      %65 = dma.done [#allocation6], 16
    $region29: #{tower.6} parent=1 // pred_fallthru
      _
    // Predicated region
    $region30: #{tower.6} parent=1 // pred_check
      _
    $region31: #{tower.6} parent=1 // pred_check_branch
      %67 = sbr.rel (0) target = $region33
    $region32: #{tower.6} parent=1 // pred_region
      %68 = dma.done [#allocation9], 16
    $region33: #{tower.6} parent=1 // pred_fallthru
      _
    %v70 = vld [vmem:[#allocation2] sm:$0xf]
    %v71 = vld [vmem:[#allocation2 + $0x4] sm:$0xf]
    %v72 = vld [vmem:[#allocation2 + $0x8] sm:$0xf]
    %v73 = vld [vmem:[#allocation2 + $0xc] sm:$0xf]
    %v74 = vld [vmem:[#allocation2 + $0x10] sm:$0xf]
    %v75 = vld [vmem:[#allocation2 + $0x14] sm:$0xf]
    %v76 = vld [vmem:[#allocation2 + $0x18] sm:$0xf]
    %v77 = vld [vmem:[#allocation2 + $0x1c] sm:$0xf]
    %v78 = vld [vmem:[#allocation2 + $0x20] sm:$0xf]
    %v79 = vld [vmem:[#allocation2 + $0x24] sm:$0xf]
    %v80 = vld [vmem:[#allocation2 + $0x28] sm:$0xf]
    %v81 = vld [vmem:[#allocation2 + $0x2c] sm:$0xf]
    %v82 = vld [vmem:[#allocation2 + $0x30] sm:$0xf]
    %v83 = vld [vmem:[#allocation2 + $0x34] sm:$0xf]
    %v84 = vld [vmem:[#allocation2 + $0x38] sm:$0xf]
    %v85 = vld [vmem:[#allocation2 + $0x3c] sm:$0xf]
    %v86 = vld [vmem:[#allocation2 + $0x40] sm:$0xf]
    %v87 = vld [vmem:[#allocation2 + $0x44] sm:$0xf]
    %v88 = vld [vmem:[#allocation2 + $0x48] sm:$0xf]
    %v89 = vld [vmem:[#allocation2 + $0x4c] sm:$0xf]
    %v90 = vld [vmem:[#allocation2 + $0x50] sm:$0xf]
    %v91 = vld [vmem:[#allocation2 + $0x54] sm:$0xf]
    %v92 = vld [vmem:[#allocation2 + $0x58] sm:$0xf]
    %v93 = vld [vmem:[#allocation2 + $0x5c] sm:$0xf]
    %v94 = vld [vmem:[#allocation2 + $0x60] sm:$0xf]
    %v95 = vld [vmem:[#allocation2 + $0x64] sm:$0xf]
    %v96 = vld [vmem:[#allocation2 + $0x68] sm:$0xf]
    %v97 = vld [vmem:[#allocation2 + $0x6c] sm:$0xf]
    %v98 = vld [vmem:[#allocation2 + $0x70] sm:$0xf]
    %v99 = vld [vmem:[#allocation2 + $0x74] sm:$0xf]
    %v100 = vld [vmem:[#allocation2 + $0x78] sm:$0xf]
    %v101 = vld [vmem:[#allocation2 + $0x7c] sm:$0xf]
    %v102 = vld [vmem:[#allocation5] sm:$0xf]
    %v103 = vld [vmem:[#allocation5 + $0x4] sm:$0x1]
    %v136 = vunpack.c.l.b16 %v70
    %v137 = vunpack.c.l.b16 %v71
    %v138 = vunpack.c.l.b16 %v72
    %v139 = vunpack.c.l.b16 %v73
    %v140 = vunpack.c.l.b16 %v74
    %v141 = vunpack.c.l.b16 %v75
    %v142 = vunpack.c.l.b16 %v76
    %v143 = vunpack.c.l.b16 %v77
    %v144 = vunpack.c.l.b16 %v78
    %v145 = vunpack.c.l.b16 %v79
    %v146 = vunpack.c.l.b16 %v80
    %v147 = vunpack.c.l.b16 %v81
    %v148 = vunpack.c.l.b16 %v82
    %v149 = vunpack.c.l.b16 %v83
    %v150 = vunpack.c.l.b16 %v84
    %v151 = vunpack.c.l.b16 %v85
    %v152 = vunpack.c.l.b16 %v86
    %v153 = vunpack.c.l.b16 %v87
    %v154 = vunpack.c.l.b16 %v88
    %v155 = vunpack.c.l.b16 %v89
    %v156 = vunpack.c.l.b16 %v90
    %v157 = vunpack.c.l.b16 %v91
    %v158 = vunpack.c.l.b16 %v92
    %v159 = vunpack.c.l.b16 %v93
    %v160 = vunpack.c.l.b16 %v94
    %v161 = vunpack.c.l.b16 %v95
    %v162 = vunpack.c.l.b16 %v96
    %v163 = vunpack.c.l.b16 %v97
    %v164 = vunpack.c.l.b16 %v98
    %v165 = vunpack.c.l.b16 %v99
    %v166 = vunpack.c.l.b16 %v100
    %v167 = vunpack.c.l.b16 %v101
    %v168 = vpack.c.b16 %v137, %v136
    %v169 = vpack.c.b16 %v139, %v138
    %v170 = vpack.c.b16 %v141, %v140
    %v171 = vpack.c.b16 %v143, %v142
    %v172 = vpack.c.b16 %v145, %v144
    %v173 = vpack.c.b16 %v147, %v146
    %v174 = vpack.c.b16 %v149, %v148
    %v175 = vpack.c.b16 %v151, %v150
    %v176 = vpack.c.b16 %v153, %v152
    %v177 = vpack.c.b16 %v155, %v154
    %v178 = vpack.c.b16 %v157, %v156
    %v179 = vpack.c.b16 %v159, %v158
    %v180 = vpack.c.b16 %v161, %v160
    %v181 = vpack.c.b16 %v163, %v162
    %v182 = vpack.c.b16 %v165, %v164
    %v183 = vpack.c.b16 %v167, %v166
    %v186 = vunpack.c.l.b16 %v102
    %v187 = vunpack.c.l.b16 %v103
    %v188 = vpack.c.b16 %v187, %v186
    %vm189 = vcmask 72704
    %v191 = vsel %vm189, %v168, 0
    %v194 = vsel %vm189, %v169, 0
    %v197 = vsel %vm189, %v170, 0
    %v200 = vsel %vm189, %v171, 0
    %v203 = vsel %vm189, %v172, 0
    %v206 = vsel %vm189, %v173, 0
    %v209 = vsel %vm189, %v174, 0
    %v212 = vsel %vm189, %v175, 0
    %v215 = vsel %vm189, %v176, 0
    %v218 = vsel %vm189, %v177, 0
    %v221 = vsel %vm189, %v178, 0
    %v224 = vsel %vm189, %v179, 0
    %v227 = vsel %vm189, %v180, 0
    %v230 = vsel %vm189, %v181, 0
    %v233 = vsel %vm189, %v182, 0
    %v236 = vsel %vm189, %v183, 0
    %vm238 = vcmask 1043456
    %vm239 = vcmask 1044480
    %v240 = vsel %vm238, 4294967295, 65535
    %v241 = vsel %vm239, %v240, 0
    %v243 = vand.u32 %v188, %v241
    %245 = vmatprep.subr.bf16.mxu0 0
    %246 = vmatpush1.bf16.msra.mxu0 %v243
    %247 = vmatprep.subr.bf16.mxu0 0
    %248 = vmatpush1.bf16.msra.mxu0 0
    %249 = vmatprep.subr.bf16.mxu0 0
    %250 = vmatpush1.bf16.msra.mxu0 0
    %251 = vmatprep.subr.bf16.mxu0 0
    %252 = vmatpush1.bf16.msra.mxu0 0
    %253 = vmatprep.subr.bf16.mxu0 0
    %254 = vmatpush1.bf16.msra.mxu0 0
    %255 = vmatprep.subr.bf16.mxu0 0
    %256 = vmatpush1.bf16.msra.mxu0 0
    %257 = vmatprep.subr.bf16.mxu0 0
    %258 = vmatpush1.bf16.msra.mxu0 0
    %259 = vmatprep.subr.bf16.mxu0 0
    %260 = vmatpush1.bf16.msra.mxu0 0
    %261 = vmatprep.subr.bf16.mxu0 0
    %262 = vmatpush1.bf16.msra.mxu0 0
    %263 = vmatprep.subr.bf16.mxu0 0
    %264 = vmatpush1.bf16.msra.mxu0 0
    %265 = vmatprep.subr.bf16.mxu0 0
    %266 = vmatpush1.bf16.msra.mxu0 0
    %267 = vmatprep.subr.bf16.mxu0 0
    %268 = vmatpush1.bf16.msra.mxu0 0
    %269 = vmatprep.subr.bf16.mxu0 0
    %270 = vmatpush1.bf16.msra.mxu0 0
    %271 = vmatprep.subr.bf16.mxu0 0
    %272 = vmatpush1.bf16.msra.mxu0 0
    %273 = vmatprep.subr.bf16.mxu0 0
    %274 = vmatpush1.bf16.msra.mxu0 0
    %275 = vmatprep.subr.bf16.mxu0 0
    %276 = vmatpush1.bf16.msra.mxu0 0
    %277 = vmatprep.mubr.bf16.mxu0 0
    %278 = vmatmul.mubr.bf16.gmra.mrb[0].mxu0 %v191
    %v279 = vpop.f32.mrb[0].mxu0
    %v280 = vadd.f32 0.0, %v279
    %v281 = vpop.f32.mrb[0].mxu0
    %v282 = vpop.f32.mrb[0].mxu0
    %v283 = vadd.f32 0.0, %v282
    %v284 = vpop.f32.mrb[0].mxu0
    %285 = vmatprep.mubr.bf16.mxu0 0
    %286 = vmatmul.mubr.bf16.gmra.mrb[0].mxu0 %v194
    %v287 = vpop.f32.mrb[0].mxu0
    %v288 = vadd.f32 0.0, %v287
    %v289 = vpop.f32.mrb[0].mxu0
    %v290 = vpop.f32.mrb[0].mxu0
    %v291 = vadd.f32 0.0, %v290
    %v292 = vpop.f32.mrb[0].mxu0
    %293 = vmatprep.mubr.bf16.mxu0 0
    %294 = vmatmul.mubr.bf16.gmra.mrb[0].mxu0 %v197
    %v295 = vpop.f32.mrb[0].mxu0
    %v296 = vadd.f32 0.0, %v295
    %v297 = vpop.f32.mrb[0].mxu0
    %v298 = vpop.f32.mrb[0].mxu0
    %v299 = vadd.f32 0.0, %v298
    %v300 = vpop.f32.mrb[0].mxu0
    %301 = vmatprep.mubr.bf16.mxu0 0
    %302 = vmatmul.mubr.bf16.gmra.mrb[0].mxu0 %v200
    %v303 = vpop.f32.mrb[0].mxu0
    %v304 = vadd.f32 0.0, %v303
    %v305 = vpop.f32.mrb[0].mxu0
    %v306 = vpop.f32.mrb[0].mxu0
    %v307 = vadd.f32 0.0, %v306
    %v308 = vpop.f32.mrb[0].mxu0
    %309 = vmatprep.mubr.bf16.mxu0 0
    %310 = vmatmul.mubr.bf16.gmra.mrb[0].mxu0 %v203
    %v311 = vpop.f32.mrb[0].mxu0
    %v312 = vadd.f32 0.0, %v311
    %v313 = vpop.f32.mrb[0].mxu0
    %v314 = vpop.f32.mrb[0].mxu0
    %v315 = vadd.f32 0.0, %v314
    %v316 = vpop.f32.mrb[0].mxu0
    %317 = vmatprep.mubr.bf16.mxu0 0
    %318 = vmatmul.mubr.bf16.gmra.mrb[0].mxu0 %v206
    %v319 = vpop.f32.mrb[0].mxu0
    %v320 = vadd.f32 0.0, %v319
    %v321 = vpop.f32.mrb[0].mxu0
    %v322 = vpop.f32.mrb[0].mxu0
    %v323 = vadd.f32 0.0, %v322
    %v324 = vpop.f32.mrb[0].mxu0
    %325 = vmatprep.mubr.bf16.mxu0 0
    %326 = vmatmul.mubr.bf16.gmra.mrb[0].mxu0 %v209
    %v327 = vpop.f32.mrb[0].mxu0
    %v328 = vadd.f32 0.0, %v327
    %v329 = vpop.f32.mrb[0].mxu0
    %v330 = vpop.f32.mrb[0].mxu0
    %v331 = vadd.f32 0.0, %v330
    %v332 = vpop.f32.mrb[0].mxu0
    %333 = vmatprep.mubr.bf16.mxu0 0
    %334 = vmatmul.mubr.bf16.gmra.mrb[0].mxu0 %v212
    %v335 = vpop.f32.mrb[0].mxu0
    %v336 = vadd.f32 0.0, %v335
    %v337 = vpop.f32.mrb[0].mxu0
    %v338 = vpop.f32.mrb[0].mxu0
    %v339 = vadd.f32 0.0, %v338
    %v340 = vpop.f32.mrb[0].mxu0
    %341 = vmatprep.mubr.bf16.mxu0 0
    %342 = vmatmul.mubr.bf16.gmra.mrb[0].mxu0 %v215
    %v343 = vpop.f32.mrb[0].mxu0
    %v344 = vadd.f32 0.0, %v343
    %v345 = vpop.f32.mrb[0].mxu0
    %v346 = vpop.f32.mrb[0].mxu0
    %v347 = vadd.f32 0.0, %v346
    %v348 = vpop.f32.mrb[0].mxu0
    %349 = vmatprep.mubr.bf16.mxu0 0
    %350 = vmatmul.mubr.bf16.gmra.mrb[0].mxu0 %v218
    %v351 = vpop.f32.mrb[0].mxu0
    %v352 = vadd.f32 0.0, %v351
    %v353 = vpop.f32.mrb[0].mxu0
    %v354 = vpop.f32.mrb[0].mxu0
    %v355 = vadd.f32 0.0, %v354
    %v356 = vpop.f32.mrb[0].mxu0
    %357 = vmatprep.mubr.bf16.mxu0 0
    %358 = vmatmul.mubr.bf16.gmra.mrb[0].mxu0 %v221
    %v359 = vpop.f32.mrb[0].mxu0
    %v360 = vadd.f32 0.0, %v359
    %v361 = vpop.f32.mrb[0].mxu0
    %v362 = vpop.f32.mrb[0].mxu0
    %v363 = vadd.f32 0.0, %v362
    %v364 = vpop.f32.mrb[0].mxu0
    %365 = vmatprep.mubr.bf16.mxu0 0
    %366 = vmatmul.mubr.bf16.gmra.mrb[0].mxu0 %v224
    %v367 = vpop.f32.mrb[0].mxu0
    %v368 = vadd.f32 0.0, %v367
    %v369 = vpop.f32.mrb[0].mxu0
    %v370 = vpop.f32.mrb[0].mxu0
    %v371 = vadd.f32 0.0, %v370
    %v372 = vpop.f32.mrb[0].mxu0
    %373 = vmatprep.mubr.bf16.mxu0 0
    %374 = vmatmul.mubr.bf16.gmra.mrb[0].mxu0 %v227
    %v375 = vpop.f32.mrb[0].mxu0
    %v376 = vadd.f32 0.0, %v375
    %v377 = vpop.f32.mrb[0].mxu0
    %v378 = vpop.f32.mrb[0].mxu0
    %v379 = vadd.f32 0.0, %v378
    %v380 = vpop.f32.mrb[0].mxu0
    %381 = vmatprep.mubr.bf16.mxu0 0
    %382 = vmatmul.mubr.bf16.gmra.mrb[0].mxu0 %v230
    %v383 = vpop.f32.mrb[0].mxu0
    %v384 = vadd.f32 0.0, %v383
    %v385 = vpop.f32.mrb[0].mxu0
    %v386 = vpop.f32.mrb[0].mxu0
    %v387 = vadd.f32 0.0, %v386
    %v388 = vpop.f32.mrb[0].mxu0
    %389 = vmatprep.mubr.bf16.mxu0 0
    %390 = vmatmul.mubr.bf16.gmra.mrb[0].mxu0 %v233
    %v391 = vpop.f32.mrb[0].mxu0
    %v392 = vadd.f32 0.0, %v391
    %v393 = vpop.f32.mrb[0].mxu0
    %v394 = vpop.f32.mrb[0].mxu0
    %v395 = vadd.f32 0.0, %v394
    %v396 = vpop.f32.mrb[0].mxu0
    %397 = vmatprep.mubr.bf16.mxu0 0
    %398 = vmatmul.mubr.bf16.gmra.mrb[0].mxu0 %v236
    %v399 = vpop.f32.mrb[0].mxu0
    %v400 = vadd.f32 0.0, %v399
    %v401 = vpop.f32.mrb[0].mxu0
    %v402 = vpop.f32.mrb[0].mxu0
    %v403 = vadd.f32 0.0, %v402
    %v404 = vpop.f32.mrb[0].mxu0
    %405 = vdwg.mxu0
    %v406 = vld [vmem:[#allocation7] sm:$0x1]
    %v408 = vlaneseq
    %v409 = vshrl.u32 %v408, 7
    %v410 = vsub.s32 0, %v409
    %v411 = vrot.slane %v406, %v410
    %v413 = vmul.f32 %v280, %v411
    %v414 = vmul.f32 %v283, %v411
    %v415 = vmul.f32 %v288, %v411
    %v416 = vmul.f32 %v291, %v411
    %v417 = vmul.f32 %v296, %v411
    %v418 = vmul.f32 %v299, %v411
    %v419 = vmul.f32 %v304, %v411
    %v420 = vmul.f32 %v307, %v411
    %v421 = vmul.f32 %v312, %v411
    %v422 = vmul.f32 %v315, %v411
    %v423 = vmul.f32 %v320, %v411
    %v424 = vmul.f32 %v323, %v411
    %v425 = vmul.f32 %v328, %v411
    %v426 = vmul.f32 %v331, %v411
    %v427 = vmul.f32 %v336, %v411
    %v428 = vmul.f32 %v339, %v411
    %v429 = vmul.f32 %v344, %v411
    %v430 = vmul.f32 %v347, %v411
    %v431 = vmul.f32 %v352, %v411
    %v432 = vmul.f32 %v355, %v411
    %v433 = vmul.f32 %v360, %v411
    %v434 = vmul.f32 %v363, %v411
    %v435 = vmul.f32 %v368, %v411
    %v436 = vmul.f32 %v371, %v411
    %v437 = vmul.f32 %v376, %v411
    %v438 = vmul.f32 %v379, %v411
    %v439 = vmul.f32 %v384, %v411
    %v440 = vmul.f32 %v387, %v411
    %v441 = vmul.f32 %v392, %v411
    %v442 = vmul.f32 %v395, %v411
    %v443 = vmul.f32 %v400, %v411
    %v444 = vmul.f32 %v403, %v411
    %v445 = vld [vmem:[#allocation8] sm:$0x1]
    %v447 = vlaneseq
    %v448 = vshrl.u32 %v447, 7
    %v449 = vsub.s32 0, %v448
    %v450 = vrot.slane %v445, %v449
    %v452 = vadd.f32 %v413, %v450
    %v453 = vadd.f32 %v414, %v450
    %v454 = vadd.f32 %v415, %v450
    %v455 = vadd.f32 %v416, %v450
    %v456 = vadd.f32 %v417, %v450
    %v457 = vadd.f32 %v418, %v450
    %v458 = vadd.f32 %v419, %v450
    %v459 = vadd.f32 %v420, %v450
    %v460 = vadd.f32 %v421, %v450
    %v461 = vadd.f32 %v422, %v450
    %v462 = vadd.f32 %v423, %v450
    %v463 = vadd.f32 %v424, %v450
    %v464 = vadd.f32 %v425, %v450
    %v465 = vadd.f32 %v426, %v450
    %v466 = vadd.f32 %v427, %v450
    %v467 = vadd.f32 %v428, %v450
    %v468 = vadd.f32 %v429, %v450
    %v469 = vadd.f32 %v430, %v450
    %v470 = vadd.f32 %v431, %v450
    %v471 = vadd.f32 %v432, %v450
    %v472 = vadd.f32 %v433, %v450
    %v473 = vadd.f32 %v434, %v450
    %v474 = vadd.f32 %v435, %v450
    %v475 = vadd.f32 %v436, %v450
    %v476 = vadd.f32 %v437, %v450
    %v477 = vadd.f32 %v438, %v450
    %v478 = vadd.f32 %v439, %v450
    %v479 = vadd.f32 %v440, %v450
    %v480 = vadd.f32 %v441, %v450
    %v481 = vadd.f32 %v442, %v450
    %v482 = vadd.f32 %v443, %v450
    %v483 = vadd.f32 %v444, %v450
    %v484 = vmax.f32 %v452, 0.0
    %v485 = vmax.f32 %v453, 0.0
    %v486 = vmax.f32 %v454, 0.0
    %v487 = vmax.f32 %v455, 0.0
    %v488 = vmax.f32 %v456, 0.0
    %v489 = vmax.f32 %v457, 0.0
    %v490 = vmax.f32 %v458, 0.0
    %v491 = vmax.f32 %v459, 0.0
    %v492 = vmax.f32 %v460, 0.0
    %v493 = vmax.f32 %v461, 0.0
    %v494 = vmax.f32 %v462, 0.0
    %v495 = vmax.f32 %v463, 0.0
    %v496 = vmax.f32 %v464, 0.0
    %v497 = vmax.f32 %v465, 0.0
    %v498 = vmax.f32 %v466, 0.0
    %v499 = vmax.f32 %v467, 0.0
    %v500 = vmax.f32 %v468, 0.0
    %v501 = vmax.f32 %v469, 0.0
    %v502 = vmax.f32 %v470, 0.0
    %v503 = vmax.f32 %v471, 0.0
    %v504 = vmax.f32 %v472, 0.0
    %v505 = vmax.f32 %v473, 0.0
    %v506 = vmax.f32 %v474, 0.0
    %v507 = vmax.f32 %v475, 0.0
    %v508 = vmax.f32 %v476, 0.0
    %v509 = vmax.f32 %v477, 0.0
    %v510 = vmax.f32 %v478, 0.0
    %v511 = vmax.f32 %v479, 0.0
    %v512 = vmax.f32 %v480, 0.0
    %v513 = vmax.f32 %v481, 0.0
    %v514 = vmax.f32 %v482, 0.0
    %v515 = vmax.f32 %v483, 0.0
    %v516 = vpack.c.bf16 %v485, %v484
    %v517 = vpack.c.bf16 %v487, %v486
    %v518 = vpack.c.bf16 %v489, %v488
    %v519 = vpack.c.bf16 %v491, %v490
    %v520 = vpack.c.bf16 %v493, %v492
    %v521 = vpack.c.bf16 %v495, %v494
    %v522 = vpack.c.bf16 %v497, %v496
    %v523 = vpack.c.bf16 %v499, %v498
    %v524 = vpack.c.bf16 %v501, %v500
    %v525 = vpack.c.bf16 %v503, %v502
    %v526 = vpack.c.bf16 %v505, %v504
    %v527 = vpack.c.bf16 %v507, %v506
    %v528 = vpack.c.bf16 %v509, %v508
    %v529 = vpack.c.bf16 %v511, %v510
    %v530 = vpack.c.bf16 %v513, %v512
    %v531 = vpack.c.bf16 %v515, %v514
    %v548 = vunpack.c.l.b16 %v516
    %v549 = vunpack.c.h.b16 %v516
    %v550 = vunpack.c.l.b16 %v517
    %v551 = vunpack.c.h.b16 %v517
    %v552 = vunpack.c.l.b16 %v518
    %v553 = vunpack.c.h.b16 %v518
    %v554 = vunpack.c.l.b16 %v519
    %v555 = vunpack.c.h.b16 %v519
    %v556 = vunpack.c.l.b16 %v520
    %v557 = vunpack.c.h.b16 %v520
    %v558 = vunpack.c.l.b16 %v521
    %v559 = vunpack.c.h.b16 %v521
    %v560 = vunpack.c.l.b16 %v522
    %v561 = vunpack.c.h.b16 %v522
    %v562 = vunpack.c.l.b16 %v523
    %v563 = vunpack.c.h.b16 %v523
    %v564 = vunpack.c.l.b16 %v524
    %v565 = vunpack.c.h.b16 %v524
    %v566 = vunpack.c.l.b16 %v525
    %v567 = vunpack.c.h.b16 %v525
    %v568 = vunpack.c.l.b16 %v526
    %v569 = vunpack.c.h.b16 %v526
    %v570 = vunpack.c.l.b16 %v527
    %v571 = vunpack.c.h.b16 %v527
    %v572 = vunpack.c.l.b16 %v528
    %v573 = vunpack.c.h.b16 %v528
    %v574 = vunpack.c.l.b16 %v529
    %v575 = vunpack.c.h.b16 %v529
    %v576 = vunpack.c.l.b16 %v530
    %v577 = vunpack.c.h.b16 %v530
    %v578 = vunpack.c.l.b16 %v531
    %v579 = vunpack.c.h.b16 %v531
    %v580 = vpack.c.b16 %v548, %v548
    %v581 = vpack.c.b16 %v549, %v549
    %v582 = vpack.c.b16 %v550, %v550
    %v583 = vpack.c.b16 %v551, %v551
    %v584 = vpack.c.b16 %v552, %v552
    %v585 = vpack.c.b16 %v553, %v553
    %v586 = vpack.c.b16 %v554, %v554
    %v587 = vpack.c.b16 %v555, %v555
    %v588 = vpack.c.b16 %v556, %v556
    %v589 = vpack.c.b16 %v557, %v557
    %v590 = vpack.c.b16 %v558, %v558
    %v591 = vpack.c.b16 %v559, %v559
    %v592 = vpack.c.b16 %v560, %v560
    %v593 = vpack.c.b16 %v561, %v561
    %v594 = vpack.c.b16 %v562, %v562
    %v595 = vpack.c.b16 %v563, %v563
    %v596 = vpack.c.b16 %v564, %v564
    %v597 = vpack.c.b16 %v565, %v565
    %v598 = vpack.c.b16 %v566, %v566
    %v599 = vpack.c.b16 %v567, %v567
    %v600 = vpack.c.b16 %v568, %v568
    %v601 = vpack.c.b16 %v569, %v569
    %v602 = vpack.c.b16 %v570, %v570
    %v603 = vpack.c.b16 %v571, %v571
    %v604 = vpack.c.b16 %v572, %v572
    %v605 = vpack.c.b16 %v573, %v573
    %v606 = vpack.c.b16 %v574, %v574
    %v607 = vpack.c.b16 %v575, %v575
    %v608 = vpack.c.b16 %v576, %v576
    %v609 = vpack.c.b16 %v577, %v577
    %v610 = vpack.c.b16 %v578, %v578
    %v611 = vpack.c.b16 %v579, %v579
    %vm644 = vcmask 519168
    %645 = vst.msk [vmem:[#allocation10] sm:$0xf] %vm644, %v580
    %646 = vst.msk [vmem:[#allocation10 + $0x4] sm:$0xf] %vm644, %v581
    %647 = vst.msk [vmem:[#allocation10 + $0x8] sm:$0xf] %vm644, %v582
    %648 = vst.msk [vmem:[#allocation10 + $0xc] sm:$0xf] %vm644, %v583
    %649 = vst.msk [vmem:[#allocation10 + $0x10] sm:$0xf] %vm644, %v584
    %650 = vst.msk [vmem:[#allocation10 + $0x14] sm:$0xf] %vm644, %v585
    %651 = vst.msk [vmem:[#allocation10 + $0x18] sm:$0xf] %vm644, %v586
    %652 = vst.msk [vmem:[#allocation10 + $0x1c] sm:$0xf] %vm644, %v587
    %653 = vst.msk [vmem:[#allocation10 + $0x20] sm:$0xf] %vm644, %v588
    %654 = vst.msk [vmem:[#allocation10 + $0x24] sm:$0xf] %vm644, %v589
    %655 = vst.msk [vmem:[#allocation10 + $0x28] sm:$0xf] %vm644, %v590
    %656 = vst.msk [vmem:[#allocation10 + $0x2c] sm:$0xf] %vm644, %v591
    %657 = vst.msk [vmem:[#allocation10 + $0x30] sm:$0xf] %vm644, %v592
    %658 = vst.msk [vmem:[#allocation10 + $0x34] sm:$0xf] %vm644, %v593
    %659 = vst.msk [vmem:[#allocation10 + $0x38] sm:$0xf] %vm644, %v594
    %660 = vst.msk [vmem:[#allocation10 + $0x3c] sm:$0xf] %vm644, %v595
    %661 = vst.msk [vmem:[#allocation10 + $0x40] sm:$0xf] %vm644, %v596
    %662 = vst.msk [vmem:[#allocation10 + $0x44] sm:$0xf] %vm644, %v597
    %663 = vst.msk [vmem:[#allocation10 + $0x48] sm:$0xf] %vm644, %v598
    %664 = vst.msk [vmem:[#allocation10 + $0x4c] sm:$0xf] %vm644, %v599
    %665 = vst.msk [vmem:[#allocation10 + $0x50] sm:$0xf] %vm644, %v600
    %666 = vst.msk [vmem:[#allocation10 + $0x54] sm:$0xf] %vm644, %v601
    %667 = vst.msk [vmem:[#allocation10 + $0x58] sm:$0xf] %vm644, %v602
    %668 = vst.msk [vmem:[#allocation10 + $0x5c] sm:$0xf] %vm644, %v603
    %669 = vst.msk [vmem:[#allocation10 + $0x60] sm:$0xf] %vm644, %v604
    %670 = vst.msk [vmem:[#allocation10 + $0x64] sm:$0xf] %vm644, %v605
    %671 = vst.msk [vmem:[#allocation10 + $0x68] sm:$0xf] %vm644, %v606
    %672 = vst.msk [vmem:[#allocation10 + $0x6c] sm:$0xf] %vm644, %v607
    %673 = vst.msk [vmem:[#allocation10 + $0x70] sm:$0xf] %vm644, %v608
    %674 = vst.msk [vmem:[#allocation10 + $0x74] sm:$0xf] %vm644, %v609
    %675 = vst.msk [vmem:[#allocation10 + $0x78] sm:$0xf] %vm644, %v610
    %676 = vst.msk [vmem:[#allocation10 + $0x7c] sm:$0xf] %vm644, %v611
    // Predicated region
    $region34: #{tower.6} parent=1 // pred_check
      _
    $region35: #{tower.6} parent=1 // pred_check_branch
      %678 = sbr.rel (0) target = $region37
    $region36: #{tower.6} parent=1 // pred_region
      %s680 = ssub.s32 2048, 2048
      %681 = vsyncadd [#allocation4], %s680
      %s682 = sshll.u32 [#allocation10], 4
      %s683 = int_to_ptr.vmem [resolvable:$true] %s682
      %688 = dma.vmem_to_hbm [thread:$0]  %s683, 2048, %s4, [#allocation4], 64, 64, 4
    $region37: #{tower.6} parent=1 // pred_fallthru
      _
    // Predicated region
    $region38: #{tower.6} parent=1 // pred_check
      _
    $region39: #{tower.6} parent=1 // pred_check_branch
      %690 = sbr.rel (0) target = $region41
    $region40: #{tower.6} parent=1 // pred_region
      %691 = dma.done [#allocation4], 2048
    $region41: #{tower.6} parent=1 // pred_fallthru
      _
    %692 = vsyncpa [#allocation3], 1
    %693 = vsyncpa [#allocation6], 1
    %694 = vsyncpa [#allocation9], 1
    %695 = vsyncpa [#allocation4], 1

// kernel: tower.7
$region0: #{tower.7}
  #allocation0 [shape = 'u32[]', space=smem, size = 0x4, offset = 0x4, fixed_abs, tag = 'smem constant byte address 0x4 - core index']
  #allocation1 [shape = 'u32[144,128]{1,0:T(1,128)}', space=vmem, size = 0x12000, scoped, tag = 'internal scratch']
  %s0 = inlined_call_operand.hbm [shape: bf16[32,10,64], index: 0, kind: input, shape index: {}]
  %s1 = inlined_call_operand.hbm [shape: bf16[32,10,64], index: 1, kind: input, shape index: {}]
  %s2 = inlined_call_operand.hbm [shape: bf16[32,10,64], index: 2, kind: input, shape index: {}]
  %s3 = inlined_call_operand.hbm [shape: bf16[9,64,128], index: 3, kind: input, shape index: {}]
  %s4 = inlined_call_operand.hbm [shape: f32[1,128], index: 4, kind: input, shape index: {}]
  %s5 = inlined_call_operand.hbm [shape: f32[1,128], index: 5, kind: input, shape index: {}]
  %s6 = inlined_call_operand.hbm [shape: bf16[32,8,128], index: 6, kind: output, shape index: {}]
  %s7 = sld [smem:[#allocation0]]
  $region65: #{tower.7} parent=0
    _
  %s9 = ssub.s32 1, %s7
  %s10 = scalar_select 0, %s9, %s7
  $region1: #{tower.7} parent=0
    #allocation2 [shape = 'u8[131072]{0}', space=vmem, size = 0x20000, scoped, tag = 'input window, operand 0, single buffered']
    #allocation3 [shape = 's32[1]{0}', space=sflag, size = 0x4, scoped, tag = 'scoped memory for tower.7']
    #allocation4 [shape = 's32[1]{0}', space=sflag, size = 0x4, scoped, tag = 'scoped memory for tower.7']
    #allocation5 [shape = 'u8[131072]{0}', space=vmem, size = 0x20000, scoped, tag = 'input window, operand 1, single buffered']
    #allocation6 [shape = 's32[1]{0}', space=sflag, size = 0x4, scoped, tag = 'scoped memory for tower.7']
    #allocation7 [shape = 'u8[131072]{0}', space=vmem, size = 0x20000, scoped, tag = 'input window, operand 2, single buffered']
    #allocation8 [shape = 'u8[147456]{0}', space=vmem, size = 0x24000, scoped, tag = 'input window, operand 3, single buffered']
    #allocation9 [shape = 's32[1]{0}', space=sflag, size = 0x4, scoped, tag = 'scoped memory for tower.7']
    #allocation10 [shape = 'u8[512]{0}', space=vmem, size = 0x400, scoped, tag = 'input window, operand 4, single buffered']
    #allocation11 [shape = 'u8[512]{0}', space=vmem, size = 0x400, scoped, tag = 'input window, operand 5, single buffered']
    #allocation12 [shape = 's32[1]{0}', space=sflag, size = 0x4, scoped, tag = 'scoped memory for tower.7']
    #allocation13 [shape = 'u8[65536]{0}', space=vmem, size = 0x10000, scoped, tag = 'output window, operand 0, single buffered']
    %11 = vsyncpa [#allocation3], 0
    %12 = vsyncpa [#allocation6], 0
    %13 = vsyncpa [#allocation9], 0
    %14 = vsyncpa [#allocation12], 0
    %15 = vsyncpa [#allocation4], 0
    // Predicated region
    $region2: #{tower.7} parent=1 // pred_check
      _
    $region3: #{tower.7} parent=1 // pred_check_branch
      %17 = sbr.rel (0) target = $region5
    $region4: #{tower.7} parent=1 // pred_region
      %s19 = ssub.s32 4096, 4096
      %20 = vsyncadd [#allocation3], %s19
      %s21 = sshll.u32 [#allocation2], 4
      %s22 = int_to_ptr.vmem [resolvable:$true] %s21
      %27 = dma.hbm_to_vmem [thread:$0]  %s0, 4096, %s22, [#allocation3], 64, 64, 4
    $region5: #{tower.7} parent=1 // pred_fallthru
      _
    // Predicated region
    $region6: #{tower.7} parent=1 // pred_check
      _
    $region7: #{tower.7} parent=1 // pred_check_branch
      %29 = sbr.rel (0) target = $region9
    $region8: #{tower.7} parent=1 // pred_region
      %s31 = ssub.s32 4096, 4096
      %32 = vsyncadd [#allocation6], %s31
      %s33 = sshll.u32 [#allocation5], 4
      %s34 = int_to_ptr.vmem [resolvable:$true] %s33
      %39 = dma.hbm_to_vmem [thread:$0]  %s1, 4096, %s34, [#allocation6], 64, 64, 4
    $region9: #{tower.7} parent=1 // pred_fallthru
      _
    // Predicated region
    $region10: #{tower.7} parent=1 // pred_check
      _
    $region11: #{tower.7} parent=1 // pred_check_branch
      %41 = sbr.rel (0) target = $region13
    $region12: #{tower.7} parent=1 // pred_region
      %s43 = ssub.s32 4096, 4096
      %44 = vsyncadd [#allocation6], %s43
      %s45 = sshll.u32 [#allocation7], 4
      %s46 = int_to_ptr.vmem [resolvable:$true] %s45
      %51 = dma.hbm_to_vmem [thread:$0]  %s2, 4096, %s46, [#allocation6], 64, 64, 4
    $region13: #{tower.7} parent=1 // pred_fallthru
      _
    // Predicated region
    $region14: #{tower.7} parent=1 // pred_check
      _
    $region15: #{tower.7} parent=1 // pred_check_branch
      %53 = sbr.rel (0) target = $region17
    $region16: #{tower.7} parent=1 // pred_region
      %s55 = ssub.s32 4608, 4608
      %56 = vsyncadd [#allocation9], %s55
      %s57 = sshll.u32 [#allocation8], 4
      %s58 = int_to_ptr.vmem [resolvable:$true] %s57
      %63 = dma.hbm_to_vmem [thread:$0]  %s3, 4608, %s58, [#allocation9], 64, 64, 4
    $region17: #{tower.7} parent=1 // pred_fallthru
      _
    // Predicated region
    $region18: #{tower.7} parent=1 // pred_check
      _
    $region19: #{tower.7} parent=1 // pred_check_branch
      %65 = sbr.rel (0) target = $region21
    $region20: #{tower.7} parent=1 // pred_region
      %s67 = ssub.s32 16, 16
      %68 = vsyncadd [#allocation9], %s67
      %s70 = sshll.u32 [#allocation10], 4
      %s71 = int_to_ptr.vmem [resolvable:$true] %s70
      %73 = dma.hbm_to_vmem [thread:$0]  %s4, 16, %s71, [#allocation9]
    $region21: #{tower.7} parent=1 // pred_fallthru
      _
    // Predicated region
    $region22: #{tower.7} parent=1 // pred_check
      _
    $region23: #{tower.7} parent=1 // pred_check_branch
      %75 = sbr.rel (0) target = $region25
    $region24: #{tower.7} parent=1 // pred_region
      %s77 = ssub.s32 16, 16
      %78 = vsyncadd [#allocation12], %s77
      %s80 = sshll.u32 [#allocation11], 4
      %s81 = int_to_ptr.vmem [resolvable:$true] %s80
      %83 = dma.hbm_to_vmem [thread:$0]  %s5, 16, %s81, [#allocation12]
    $region25: #{tower.7} parent=1 // pred_fallthru
      _
    // Predicated region
    $region26: #{tower.7} parent=1 // pred_check
      _
    $region27: #{tower.7} parent=1 // pred_check_branch
      %85 = sbr.rel (0) target = $region29
    $region28: #{tower.7} parent=1 // pred_region
      %86 = dma.done [#allocation3], 4096
    $region29: #{tower.7} parent=1 // pred_fallthru
      _
    // Predicated region
    $region30: #{tower.7} parent=1 // pred_check
      _
    $region31: #{tower.7} parent=1 // pred_check_branch
      %88 = sbr.rel (0) target = $region33
    $region32: #{tower.7} parent=1 // pred_region
      %89 = dma.done [#allocation6], 4096
    $region33: #{tower.7} parent=1 // pred_fallthru
      _
    // Predicated region
    $region34: #{tower.7} parent=1 // pred_check
      _
    $region35: #{tower.7} parent=1 // pred_check_branch
      %91 = sbr.rel (0) target = $region37
    $region36: #{tower.7} parent=1 // pred_region
      %92 = dma.done [#allocation6], 4096
    $region37: #{tower.7} parent=1 // pred_fallthru
      _
    // Predicated region
    $region38: #{tower.7} parent=1 // pred_check
      _
    $region39: #{tower.7} parent=1 // pred_check_branch
      %94 = sbr.rel (0) target = $region41
    $region40: #{tower.7} parent=1 // pred_region
      %95 = dma.done [#allocation9], 4608
    $region41: #{tower.7} parent=1 // pred_fallthru
      _
    // Predicated region
    $region42: #{tower.7} parent=1 // pred_check
      _
    $region43: #{tower.7} parent=1 // pred_check_branch
      %97 = sbr.rel (0) target = $region45
    $region44: #{tower.7} parent=1 // pred_region
      %98 = dma.done [#allocation9], 16
    $region45: #{tower.7} parent=1 // pred_fallthru
      _
    // Predicated region
    $region46: #{tower.7} parent=1 // pred_check
      _
    $region47: #{tower.7} parent=1 // pred_check_branch
      %100 = sbr.rel (0) target = $region49
    $region48: #{tower.7} parent=1 // pred_region
      %101 = dma.done [#allocation12], 16
    $region49: #{tower.7} parent=1 // pred_fallthru
      _
    %v103 = vld [vmem:[#allocation10] sm:$0x1]
    %v104 = vld [vmem:[#allocation11] sm:$0x1]
    loop: start=0, step=1, limit=32
    $region50: #{tower.7} parent=1 // loop_pre_header
      _
    $region51: #{tower.7} parent=1 // loop_header
      %s106 = sphi 0, %s110
      %p107 = scmp.ge.s32.totalorder %s106, 32
    $region52: #{tower.7} parent=1 // loop_header_branch
      %109 = sbr.rel (%p107) target = $region56
    $region53: #{tower.7} parent=1 // loop_body
      %s111 = smul.u32 %s106, 2
      %s112 = smul.addr %s111, 4
      %s113 = scalar_lea.vmem [#allocation2], %s112
      %v114 = vld [vmem:[%s113] sm:$0xf]
      %v115 = vld [vmem:[#allocation8] sm:$0xf]
      %v116 = vld [vmem:[#allocation8 + $0x4] sm:$0xf]
      %v117 = vld [vmem:[#allocation8 + $0x8] sm:$0xf]
      %v118 = vld [vmem:[#allocation8 + $0xc] sm:$0xf]
      %v119 = vld [vmem:[#allocation8 + $0x10] sm:$0xf]
      %v120 = vld [vmem:[#allocation8 + $0x14] sm:$0xf]
      %v121 = vld [vmem:[#allocation8 + $0x18] sm:$0xf]
      %v122 = vld [vmem:[#allocation8 + $0x1c] sm:$0xf]
      %v123 = vld [vmem:[%s113 + $0x4] sm:$0x1]
      %s124 = scalar_lea.vmem [#allocation8], 32
      %v125 = vld [vmem:[%s124] sm:$0xf]
      %v126 = vld [vmem:[%s124 + $0x4] sm:$0xf]
      %v127 = vld [vmem:[%s124 + $0x8] sm:$0xf]
      %v128 = vld [vmem:[%s124 + $0xc] sm:$0xf]
      %v129 = vld [vmem:[%s124 + $0x10] sm:$0xf]
      %v130 = vld [vmem:[%s124 + $0x14] sm:$0xf]
      %v131 = vld [vmem:[%s124 + $0x18] sm:$0xf]
      %v132 = vld [vmem:[%s124 + $0x1c] sm:$0xf]
      %v135 = vunpack.c.l.b16 %v114
      %v136 = vunpack.c.l.b16 %v123
      %v137 = vpack.c.b16 %v136, %v135
      %v139 = vshrl.u32 %v137, 16
      %v141 = vshll.u32 %v137, 16
      %v143 = vrot.slane %v141, 1
      %v144 = vor.u32 %v139, %v143
      %v153 = vunpack.c.l.b16 %v125
      %v154 = vunpack.c.l.b16 %v126
      %v155 = vunpack.c.l.b16 %v127
      %v156 = vunpack.c.l.b16 %v128
      %v157 = vunpack.c.l.b16 %v129
      %v158 = vunpack.c.l.b16 %v130
      %v159 = vunpack.c.l.b16 %v131
      %v160 = vunpack.c.l.b16 %v132
      %v161 = vpack.c.b16 %v154, %v153
      %v162 = vpack.c.b16 %v156, %v155
      %v163 = vpack.c.b16 %v158, %v157
      %v164 = vpack.c.b16 %v160, %v159
      %vm169 = vcmask 523264
      %v171 = vsel %vm169, %v144, 0
      %173 = vmatprep.subr.bf16.mxu0 0
      %174 = vmatpush1.bf16.msra.mxu0 %v161
      %175 = vmatprep.subr.bf16.mxu0 0
      %176 = vmatpush1.bf16.msra.mxu0 %v162
      %177 = vmatprep.subr.bf16.mxu0 0
      %178 = vmatpush1.bf16.msra.mxu0 %v163
      %179 = vmatprep.subr.bf16.mxu0 0
      %180 = vmatpush1.bf16.msra.mxu0 %v164
      %181 = vmatprep.subr.bf16.mxu0 0
      %182 = vmatpush1.bf16.msra.mxu0 0
      %183 = vmatprep.subr.bf16.mxu0 0
      %184 = vmatpush1.bf16.msra.mxu0 0
      %185 = vmatprep.subr.bf16.mxu0 0
      %186 = vmatpush1.bf16.msra.mxu0 0
      %187 = vmatprep.subr.bf16.mxu0 0
      %188 = vmatpush1.bf16.msra.mxu0 0
      %189 = vmatprep.subr.bf16.mxu0 0
      %190 = vmatpush1.bf16.msra.mxu0 0
      %191 = vmatprep.subr.bf16.mxu0 0
      %192 = vmatpush1.bf16.msra.mxu0 0
      %193 = vmatprep.subr.bf16.mxu0 0
      %194 = vmatpush1.bf16.msra.mxu0 0
      %195 = vmatprep.subr.bf16.mxu0 0
      %196 = vmatpush1.bf16.msra.mxu0 0
      %197 = vmatprep.subr.bf16.mxu0 0
      %198 = vmatpush1.bf16.msra.mxu0 0
      %199 = vmatprep.subr.bf16.mxu0 0
      %200 = vmatpush1.bf16.msra.mxu0 0
      %201 = vmatprep.subr.bf16.mxu0 0
      %202 = vmatpush1.bf16.msra.mxu0 0
      %203 = vmatprep.subr.bf16.mxu0 0
      %204 = vmatpush1.bf16.msra.mxu0 0
      %205 = vmatprep.mubr.bf16.mxu0 0
      %206 = vmatmul.mubr.bf16.gmra.mrb[0].mxu0 %v171
      %v207 = vpop.f32.mrb[0].mxu0
      %v208 = vadd.f32 0.0, %v207
      %v209 = vpop.f32.mrb[0].mxu0
      %v210 = vpop.f32.mrb[0].mxu0
      %v211 = vpop.f32.mrb[0].mxu0
      %212 = vdwg.mxu0
      %v221 = vunpack.c.l.b16 %v115
      %v222 = vunpack.c.l.b16 %v116
      %v223 = vunpack.c.l.b16 %v117
      %v224 = vunpack.c.l.b16 %v118
      %v225 = vunpack.c.l.b16 %v119
      %v226 = vunpack.c.l.b16 %v120
      %v227 = vunpack.c.l.b16 %v121
      %v228 = vunpack.c.l.b16 %v122
      %v229 = vpack.c.b16 %v222, %v221
      %v230 = vpack.c.b16 %v224, %v223
      %v231 = vpack.c.b16 %v226, %v225
      %v232 = vpack.c.b16 %v228, %v227
      %v238 = vsel %vm169, %v114, 0
      %240 = vmatprep.subr.bf16.mxu0 0
      %241 = vmatpush1.bf16.msra.mxu0 %v229
      %242 = vmatprep.subr.bf16.mxu0 0
      %243 = vmatpush1.bf16.msra.mxu0 %v230
      %244 = vmatprep.subr.bf16.mxu0 0
      %245 = vmatpush1.bf16.msra.mxu0 %v231
      %246 = vmatprep.subr.bf16.mxu0 0
      %247 = vmatpush1.bf16.msra.mxu0 %v232
      %248 = vmatprep.subr.bf16.mxu0 0
      %249 = vmatpush1.bf16.msra.mxu0 0
      %250 = vmatprep.subr.bf16.mxu0 0
      %251 = vmatpush1.bf16.msra.mxu0 0
      %252 = vmatprep.subr.bf16.mxu0 0
      %253 = vmatpush1.bf16.msra.mxu0 0
      %254 = vmatprep.subr.bf16.mxu0 0
      %255 = vmatpush1.bf16.msra.mxu0 0
      %256 = vmatprep.subr.bf16.mxu0 0
      %257 = vmatpush1.bf16.msra.mxu0 0
      %258 = vmatprep.subr.bf16.mxu0 0
      %259 = vmatpush1.bf16.msra.mxu0 0
      %260 = vmatprep.subr.bf16.mxu0 0
      %261 = vmatpush1.bf16.msra.mxu0 0
      %262 = vmatprep.subr.bf16.mxu0 0
      %263 = vmatpush1.bf16.msra.mxu0 0
      %264 = vmatprep.subr.bf16.mxu0 0
      %265 = vmatpush1.bf16.msra.mxu0 0
      %266 = vmatprep.subr.bf16.mxu0 0
      %267 = vmatpush1.bf16.msra.mxu0 0
      %268 = vmatprep.subr.bf16.mxu0 0
      %269 = vmatpush1.bf16.msra.mxu0 0
      %270 = vmatprep.subr.bf16.mxu0 0
      %271 = vmatpush1.bf16.msra.mxu0 0
      %272 = vmatprep.mubr.bf16.mxu0 0
      %273 = vmatmul.mubr.bf16.gmra.mrb[0].mxu0 %v238
      %v274 = vpop.f32.mrb[0].mxu0
      %v275 = vadd.f32 %v208, %v274
      %v276 = vpop.f32.mrb[0].mxu0
      %v277 = vpop.f32.mrb[0].mxu0
      %v278 = vpop.f32.mrb[0].mxu0
      %279 = vdwg.mxu0
      %v280 = vld [vmem:[%s113] sm:$0xe]
      %s281 = scalar_lea.vmem [#allocation8], 64
      %v282 = vld [vmem:[%s281] sm:$0xf]
      %v283 = vld [vmem:[%s281 + $0x4] sm:$0xf]
      %v284 = vld [vmem:[%s281 + $0x8] sm:$0xf]
      %v285 = vld [vmem:[%s281 + $0xc] sm:$0xf]
      %v286 = vld [vmem:[%s281 + $0x10] sm:$0xf]
      %v287 = vld [vmem:[%s281 + $0x14] sm:$0xf]
      %v288 = vld [vmem:[%s281 + $0x18] sm:$0xf]
      %v289 = vld [vmem:[%s281 + $0x1c] sm:$0xf]
      %v291 = vunpack.c.l.b16 %v280
      %v292 = vpack.c.b16 %v136, %v291
      %v293 = vrot.slane %v292, 1
      %v302 = vunpack.c.l.b16 %v282
      %v303 = vunpack.c.l.b16 %v283
      %v304 = vunpack.c.l.b16 %v284
      %v305 = vunpack.c.l.b16 %v285
      %v306 = vunpack.c.l.b16 %v286
      %v307 = vunpack.c.l.b16 %v287
      %v308 = vunpack.c.l.b16 %v288
      %v309 = vunpack.c.l.b16 %v289
      %v310 = vpack.c.b16 %v303, %v302
      %v311 = vpack.c.b16 %v305, %v304
      %v312 = vpack.c.b16 %v307, %v306
      %v313 = vpack.c.b16 %v309, %v308
      %v319 = vsel %vm169, %v293, 0
      %321 = vmatprep.subr.bf16.mxu0 0
      %322 = vmatpush1.bf16.msra.mxu0 %v310
      %323 = vmatprep.subr.bf16.mxu0 0
      %324 = vmatpush1.bf16.msra.mxu0 %v311
      %325 = vmatprep.subr.bf16.mxu0 0
      %326 = vmatpush1.bf16.msra.mxu0 %v312
      %327 = vmatprep.subr.bf16.mxu0 0
      %328 = vmatpush1.bf16.msra.mxu0 %v313
      %329 = vmatprep.subr.bf16.mxu0 0
      %330 = vmatpush1.bf16.msra.mxu0 0
      %331 = vmatprep.subr.bf16.mxu0 0
      %332 = vmatpush1.bf16.msra.mxu0 0
      %333 = vmatprep.subr.bf16.mxu0 0
      %334 = vmatpush1.bf16.msra.mxu0 0
      %335 = vmatprep.subr.bf16.mxu0 0
      %336 = vmatpush1.bf16.msra.mxu0 0
      %337 = vmatprep.subr.bf16.mxu0 0
      %338 = vmatpush1.bf16.msra.mxu0 0
      %339 = vmatprep.subr.bf16.mxu0 0
      %340 = vmatpush1.bf16.msra.mxu0 0
      %341 = vmatprep.subr.bf16.mxu0 0
      %342 = vmatpush1.bf16.msra.mxu0 0
      %343 = vmatprep.subr.bf16.mxu0 0
      %344 = vmatpush1.bf16.msra.mxu0 0
      %345 = vmatprep.subr.bf16.mxu0 0
      %346 = vmatpush1.bf16.msra.mxu0 0
      %347 = vmatprep.subr.bf16.mxu0 0
      %348 = vmatpush1.bf16.msra.mxu0 0
      %349 = vmatprep.subr.bf16.mxu0 0
      %350 = vmatpush1.bf16.msra.mxu0 0
      %351 = vmatprep.subr.bf16.mxu0 0
      %352 = vmatpush1.bf16.msra.mxu0 0
      %353 = vmatprep.mubr.bf16.mxu0 0
      %354 = vmatmul.mubr.bf16.gmra.mrb[0].mxu0 %v319
      %v355 = vpop.f32.mrb[0].mxu0
      %v356 = vadd.f32 0.0, %v355
      %v357 = vpop.f32.mrb[0].mxu0
      %v358 = vpop.f32.mrb[0].mxu0
      %v359 = vpop.f32.mrb[0].mxu0
      %360 = vdwg.mxu0
      %v361 = vadd.f32 %v275, %v356
      %s362 = smul.addr %s111, 4
      %s363 = scalar_lea.vmem [#allocation5], %s362
      %v364 = vld [vmem:[%s363] sm:$0xf]
      %s365 = scalar_lea.vmem [#allocation8], 96
      %v366 = vld [vmem:[%s365] sm:$0xf]
      %v367 = vld [vmem:[%s365 + $0x4] sm:$0xf]
      %v368 = vld [vmem:[%s365 + $0x8] sm:$0xf]
      %v369 = vld [vmem:[%s365 + $0xc] sm:$0xf]
      %v370 = vld [vmem:[%s365 + $0x10] sm:$0xf]
      %v371 = vld [vmem:[%s365 + $0x14] sm:$0xf]
      %v372 = vld [vmem:[%s365 + $0x18] sm:$0xf]
      %v373 = vld [vmem:[%s365 + $0x1c] sm:$0xf]
      %v382 = vunpack.c.l.b16 %v366
      %v383 = vunpack.c.l.b16 %v367
      %v384 = vunpack.c.l.b16 %v368
      %v385 = vunpack.c.l.b16 %v369
      %v386 = vunpack.c.l.b16 %v370
      %v387 = vunpack.c.l.b16 %v371
      %v388 = vunpack.c.l.b16 %v372
      %v389 = vunpack.c.l.b16 %v373
      %v390 = vpack.c.b16 %v383, %v382
      %v391 = vpack.c.b16 %v385, %v384
      %v392 = vpack.c.b16 %v387, %v386
      %v393 = vpack.c.b16 %v389, %v388
      %v399 = vsel %vm169, %v364, 0
      %401 = vmatprep.subr.bf16.mxu0 0
      %402 = vmatpush1.bf16.msra.mxu0 %v390
      %403 = vmatprep.subr.bf16.mxu0 0
      %404 = vmatpush1.bf16.msra.mxu0 %v391
      %405 = vmatprep.subr.bf16.mxu0 0
      %406 = vmatpush1.bf16.msra.mxu0 %v392
      %407 = vmatprep.subr.bf16.mxu0 0
      %408 = vmatpush1.bf16.msra.mxu0 %v393
      %409 = vmatprep.subr.bf16.mxu0 0
      %410 = vmatpush1.bf16.msra.mxu0 0
      %411 = vmatprep.subr.bf16.mxu0 0
      %412 = vmatpush1.bf16.msra.mxu0 0
      %413 = vmatprep.subr.bf16.mxu0 0
      %414 = vmatpush1.bf16.msra.mxu0 0
      %415 = vmatprep.subr.bf16.mxu0 0
      %416 = vmatpush1.bf16.msra.mxu0 0
      %417 = vmatprep.subr.bf16.mxu0 0
      %418 = vmatpush1.bf16.msra.mxu0 0
      %419 = vmatprep.subr.bf16.mxu0 0
      %420 = vmatpush1.bf16.msra.mxu0 0
      %421 = vmatprep.subr.bf16.mxu0 0
      %422 = vmatpush1.bf16.msra.mxu0 0
      %423 = vmatprep.subr.bf16.mxu0 0
      %424 = vmatpush1.bf16.msra.mxu0 0
      %425 = vmatprep.subr.bf16.mxu0 0
      %426 = vmatpush1.bf16.msra.mxu0 0
      %427 = vmatprep.subr.bf16.mxu0 0
      %428 = vmatpush1.bf16.msra.mxu0 0
      %429 = vmatprep.subr.bf16.mxu0 0
      %430 = vmatpush1.bf16.msra.mxu0 0
      %431 = vmatprep.subr.bf16.mxu0 0
      %432 = vmatpush1.bf16.msra.mxu0 0
      %433 = vmatprep.mubr.bf16.mxu0 0
      %434 = vmatmul.mubr.bf16.gmra.mrb[0].mxu0 %v399
      %v435 = vpop.f32.mrb[0].mxu0
      %v436 = vadd.f32 0.0, %v435
      %v437 = vpop.f32.mrb[0].mxu0
      %v438 = vpop.f32.mrb[0].mxu0
      %v439 = vpop.f32.mrb[0].mxu0
      %440 = vdwg.mxu0
      %v441 = vadd.f32 %v361, %v436
      %v442 = vld [vmem:[%s363] sm:$0xf]
      %v443 = vld [vmem:[%s363 + $0x4] sm:$0x1]
      %s444 = scalar_lea.vmem [#allocation8], 128
      %v445 = vld [vmem:[%s444] sm:$0xf]
      %v446 = vld [vmem:[%s444 + $0x4] sm:$0xf]
      %v447 = vld [vmem:[%s444 + $0x8] sm:$0xf]
      %v448 = vld [vmem:[%s444 + $0xc] sm:$0xf]
      %v449 = vld [vmem:[%s444 + $0x10] sm:$0xf]
      %v450 = vld [vmem:[%s444 + $0x14] sm:$0xf]
      %v451 = vld [vmem:[%s444 + $0x18] sm:$0xf]
      %v452 = vld [vmem:[%s444 + $0x1c] sm:$0xf]
      %v455 = vunpack.c.l.b16 %v442
      %v456 = vunpack.c.l.b16 %v443
      %v457 = vpack.c.b16 %v456, %v455
      %v459 = vshrl.u32 %v457, 16
      %v461 = vshll.u32 %v457, 16
      %v463 = vrot.slane %v461, 1
      %v464 = vor.u32 %v459, %v463
      %v473 = vunpack.c.l.b16 %v445
      %v474 = vunpack.c.l.b16 %v446
      %v475 = vunpack.c.l.b16 %v447
      %v476 = vunpack.c.l.b16 %v448
      %v477 = vunpack.c.l.b16 %v449
      %v478 = vunpack.c.l.b16 %v450
      %v479 = vunpack.c.l.b16 %v451
      %v480 = vunpack.c.l.b16 %v452
      %v481 = vpack.c.b16 %v474, %v473
      %v482 = vpack.c.b16 %v476, %v475
      %v483 = vpack.c.b16 %v478, %v477
      %v484 = vpack.c.b16 %v480, %v479
      %v490 = vsel %vm169, %v464, 0
      %492 = vmatprep.subr.bf16.mxu0 0
      %493 = vmatpush1.bf16.msra.mxu0 %v481
      %494 = vmatprep.subr.bf16.mxu0 0
      %495 = vmatpush1.bf16.msra.mxu0 %v482
      %496 = vmatprep.subr.bf16.mxu0 0
      %497 = vmatpush1.bf16.msra.mxu0 %v483
      %498 = vmatprep.subr.bf16.mxu0 0
      %499 = vmatpush1.bf16.msra.mxu0 %v484
      %500 = vmatprep.subr.bf16.mxu0 0
      %501 = vmatpush1.bf16.msra.mxu0 0
      %502 = vmatprep.subr.bf16.mxu0 0
      %503 = vmatpush1.bf16.msra.mxu0 0
      %504 = vmatprep.subr.bf16.mxu0 0
      %505 = vmatpush1.bf16.msra.mxu0 0
      %506 = vmatprep.subr.bf16.mxu0 0
      %507 = vmatpush1.bf16.msra.mxu0 0
      %508 = vmatprep.subr.bf16.mxu0 0
      %509 = vmatpush1.bf16.msra.mxu0 0
      %510 = vmatprep.subr.bf16.mxu0 0
      %511 = vmatpush1.bf16.msra.mxu0 0
      %512 = vmatprep.subr.bf16.mxu0 0
      %513 = vmatpush1.bf16.msra.mxu0 0
      %514 = vmatprep.subr.bf16.mxu0 0
      %515 = vmatpush1.bf16.msra.mxu0 0
      %516 = vmatprep.subr.bf16.mxu0 0
      %517 = vmatpush1.bf16.msra.mxu0 0
      %518 = vmatprep.subr.bf16.mxu0 0
      %519 = vmatpush1.bf16.msra.mxu0 0
      %520 = vmatprep.subr.bf16.mxu0 0
      %521 = vmatpush1.bf16.msra.mxu0 0
      %522 = vmatprep.subr.bf16.mxu0 0
      %523 = vmatpush1.bf16.msra.mxu0 0
      %524 = vmatprep.mubr.bf16.mxu0 0
      %525 = vmatmul.mubr.bf16.gmra.mrb[0].mxu0 %v490
      %v526 = vpop.f32.mrb[0].mxu0
      %v527 = vadd.f32 0.0, %v526
      %v528 = vpop.f32.mrb[0].mxu0
      %v529 = vpop.f32.mrb[0].mxu0
      %v530 = vpop.f32.mrb[0].mxu0
      %531 = vdwg.mxu0
      %v532 = vadd.f32 %v441, %v527
      %v533 = vld [vmem:[%s363] sm:$0xe]
      %s534 = scalar_lea.vmem [#allocation8], 160
      %v535 = vld [vmem:[%s534] sm:$0xf]
      %v536 = vld [vmem:[%s534 + $0x4] sm:$0xf]
      %v537 = vld [vmem:[%s534 + $0x8] sm:$0xf]
      %v538 = vld [vmem:[%s534 + $0xc] sm:$0xf]
      %v539 = vld [vmem:[%s534 + $0x10] sm:$0xf]
      %v540 = vld [vmem:[%s534 + $0x14] sm:$0xf]
      %v541 = vld [vmem:[%s534 + $0x18] sm:$0xf]
      %v542 = vld [vmem:[%s534 + $0x1c] sm:$0xf]
      %v544 = vunpack.c.l.b16 %v533
      %v545 = vpack.c.b16 %v456, %v544
      %v546 = vrot.slane %v545, 1
      %v555 = vunpack.c.l.b16 %v535
      %v556 = vunpack.c.l.b16 %v536
      %v557 = vunpack.c.l.b16 %v537
      %v558 = vunpack.c.l.b16 %v538
      %v559 = vunpack.c.l.b16 %v539
      %v560 = vunpack.c.l.b16 %v540
      %v561 = vunpack.c.l.b16 %v541
      %v562 = vunpack.c.l.b16 %v542
      %v563 = vpack.c.b16 %v556, %v555
      %v564 = vpack.c.b16 %v558, %v557
      %v565 = vpack.c.b16 %v560, %v559
      %v566 = vpack.c.b16 %v562, %v561
      %v572 = vsel %vm169, %v546, 0
      %574 = vmatprep.subr.bf16.mxu0 0
      %575 = vmatpush1.bf16.msra.mxu0 %v563
      %576 = vmatprep.subr.bf16.mxu0 0
      %577 = vmatpush1.bf16.msra.mxu0 %v564
      %578 = vmatprep.subr.bf16.mxu0 0
      %579 = vmatpush1.bf16.msra.mxu0 %v565
      %580 = vmatprep.subr.bf16.mxu0 0
      %581 = vmatpush1.bf16.msra.mxu0 %v566
      %582 = vmatprep.subr.bf16.mxu0 0
      %583 = vmatpush1.bf16.msra.mxu0 0
      %584 = vmatprep.subr.bf16.mxu0 0
      %585 = vmatpush1.bf16.msra.mxu0 0
      %586 = vmatprep.subr.bf16.mxu0 0
      %587 = vmatpush1.bf16.msra.mxu0 0
      %588 = vmatprep.subr.bf16.mxu0 0
      %589 = vmatpush1.bf16.msra.mxu0 0
      %590 = vmatprep.subr.bf16.mxu0 0
      %591 = vmatpush1.bf16.msra.mxu0 0
      %592 = vmatprep.subr.bf16.mxu0 0
      %593 = vmatpush1.bf16.msra.mxu0 0
      %594 = vmatprep.subr.bf16.mxu0 0
      %595 = vmatpush1.bf16.msra.mxu0 0
      %596 = vmatprep.subr.bf16.mxu0 0
      %597 = vmatpush1.bf16.msra.mxu0 0
      %598 = vmatprep.subr.bf16.mxu0 0
      %599 = vmatpush1.bf16.msra.mxu0 0
      %600 = vmatprep.subr.bf16.mxu0 0
      %601 = vmatpush1.bf16.msra.mxu0 0
      %602 = vmatprep.subr.bf16.mxu0 0
      %603 = vmatpush1.bf16.msra.mxu0 0
      %604 = vmatprep.subr.bf16.mxu0 0
      %605 = vmatpush1.bf16.msra.mxu0 0
      %606 = vmatprep.mubr.bf16.mxu0 0
      %607 = vmatmul.mubr.bf16.gmra.mrb[0].mxu0 %v572
      %v608 = vpop.f32.mrb[0].mxu0
      %v609 = vadd.f32 0.0, %v608
      %v610 = vpop.f32.mrb[0].mxu0
      %v611 = vpop.f32.mrb[0].mxu0
      %v612 = vpop.f32.mrb[0].mxu0
      %613 = vdwg.mxu0
      %v614 = vadd.f32 %v532, %v609
      %s615 = smul.addr %s111, 4
      %s616 = scalar_lea.vmem [#allocation7], %s615
      %v617 = vld [vmem:[%s616] sm:$0xf]
      %s618 = scalar_lea.vmem [#allocation8], 192
      %v619 = vld [vmem:[%s618] sm:$0xf]
      %v620 = vld [vmem:[%s618 + $0x4] sm:$0xf]
      %v621 = vld [vmem:[%s618 + $0x8] sm:$0xf]
      %v622 = vld [vmem:[%s618 + $0xc] sm:$0xf]
      %v623 = vld [vmem:[%s618 + $0x10] sm:$0xf]
      %v624 = vld [vmem:[%s618 + $0x14] sm:$0xf]
      %v625 = vld [vmem:[%s618 + $0x18] sm:$0xf]
      %v626 = vld [vmem:[%s618 + $0x1c] sm:$0xf]
      %v635 = vunpack.c.l.b16 %v619
      %v636 = vunpack.c.l.b16 %v620
      %v637 = vunpack.c.l.b16 %v621
      %v638 = vunpack.c.l.b16 %v622
      %v639 = vunpack.c.l.b16 %v623
      %v640 = vunpack.c.l.b16 %v624
      %v641 = vunpack.c.l.b16 %v625
      %v642 = vunpack.c.l.b16 %v626
      %v643 = vpack.c.b16 %v636, %v635
      %v644 = vpack.c.b16 %v638, %v637
      %v645 = vpack.c.b16 %v640, %v639
      %v646 = vpack.c.b16 %v642, %v641
      %v652 = vsel %vm169, %v617, 0
      %654 = vmatprep.subr.bf16.mxu0 0
      %655 = vmatpush1.bf16.msra.mxu0 %v643
      %656 = vmatprep.subr.bf16.mxu0 0
      %657 = vmatpush1.bf16.msra.mxu0 %v644
      %658 = vmatprep.subr.bf16.mxu0 0
      %659 = vmatpush1.bf16.msra.mxu0 %v645
      %660 = vmatprep.subr.bf16.mxu0 0
      %661 = vmatpush1.bf16.msra.mxu0 %v646
      %662 = vmatprep.subr.bf16.mxu0 0
      %663 = vmatpush1.bf16.msra.mxu0 0
      %664 = vmatprep.subr.bf16.mxu0 0
      %665 = vmatpush1.bf16.msra.mxu0 0
      %666 = vmatprep.subr.bf16.mxu0 0
      %667 = vmatpush1.bf16.msra.mxu0 0
      %668 = vmatprep.subr.bf16.mxu0 0
      %669 = vmatpush1.bf16.msra.mxu0 0
      %670 = vmatprep.subr.bf16.mxu0 0
      %671 = vmatpush1.bf16.msra.mxu0 0
      %672 = vmatprep.subr.bf16.mxu0 0
      %673 = vmatpush1.bf16.msra.mxu0 0
      %674 = vmatprep.subr.bf16.mxu0 0
      %675 = vmatpush1.bf16.msra.mxu0 0
      %676 = vmatprep.subr.bf16.mxu0 0
      %677 = vmatpush1.bf16.msra.mxu0 0
      %678 = vmatprep.subr.bf16.mxu0 0
      %679 = vmatpush1.bf16.msra.mxu0 0
      %680 = vmatprep.subr.bf16.mxu0 0
      %681 = vmatpush1.bf16.msra.mxu0 0
      %682 = vmatprep.subr.bf16.mxu0 0
      %683 = vmatpush1.bf16.msra.mxu0 0
      %684 = vmatprep.subr.bf16.mxu0 0
      %685 = vmatpush1.bf16.msra.mxu0 0
      %686 = vmatprep.mubr.bf16.mxu0 0
      %687 = vmatmul.mubr.bf16.gmra.mrb[0].mxu0 %v652
      %v688 = vpop.f32.mrb[0].mxu0
      %v689 = vadd.f32 0.0, %v688
      %v690 = vpop.f32.mrb[0].mxu0
      %v691 = vpop.f32.mrb[0].mxu0
      %v692 = vpop.f32.mrb[0].mxu0
      %693 = vdwg.mxu0
      %v694 = vadd.f32 %v614, %v689
      %v695 = vld [vmem:[%s616] sm:$0xf]
      %v696 = vld [vmem:[%s616 + $0x4] sm:$0x1]
      %s697 = scalar_lea.vmem [#allocation8], 224
      %v698 = vld [vmem:[%s697] sm:$0xf]
      %v699 = vld [vmem:[%s697 + $0x4] sm:$0xf]
      %v700 = vld [vmem:[%s697 + $0x8] sm:$0xf]
      %v701 = vld [vmem:[%s697 + $0xc] sm:$0xf]
      %v702 = vld [vmem:[%s697 + $0x10] sm:$0xf]
      %v703 = vld [vmem:[%s697 + $0x14] sm:$0xf]
      %v704 = vld [vmem:[%s697 + $0x18] sm:$0xf]
      %v705 = vld [vmem:[%s697 + $0x1c] sm:$0xf]
      %v708 = vunpack.c.l.b16 %v695
      %v709 = vunpack.c.l.b16 %v696
      %v710 = vpack.c.b16 %v709, %v708
      %v712 = vshrl.u32 %v710, 16
      %v714 = vshll.u32 %v710, 16
      %v716 = vrot.slane %v714, 1
      %v717 = vor.u32 %v712, %v716
      %v726 = vunpack.c.l.b16 %v698
      %v727 = vunpack.c.l.b16 %v699
      %v728 = vunpack.c.l.b16 %v700
      %v729 = vunpack.c.l.b16 %v701
      %v730 = vunpack.c.l.b16 %v702
      %v731 = vunpack.c.l.b16 %v703
      %v732 = vunpack.c.l.b16 %v704
      %v733 = vunpack.c.l.b16 %v705
      %v734 = vpack.c.b16 %v727, %v726
      %v735 = vpack.c.b16 %v729, %v728
      %v736 = vpack.c.b16 %v731, %v730
      %v737 = vpack.c.b16 %v733, %v732
      %v743 = vsel %vm169, %v717, 0
      %745 = vmatprep.subr.bf16.mxu0 0
      %746 = vmatpush1.bf16.msra.mxu0 %v734
      %747 = vmatprep.subr.bf16.mxu0 0
      %748 = vmatpush1.bf16.msra.mxu0 %v735
      %749 = vmatprep.subr.bf16.mxu0 0
      %750 = vmatpush1.bf16.msra.mxu0 %v736
      %751 = vmatprep.subr.bf16.mxu0 0
      %752 = vmatpush1.bf16.msra.mxu0 %v737
      %753 = vmatprep.subr.bf16.mxu0 0
      %754 = vmatpush1.bf16.msra.mxu0 0
      %755 = vmatprep.subr.bf16.mxu0 0
      %756 = vmatpush1.bf16.msra.mxu0 0
      %757 = vmatprep.subr.bf16.mxu0 0
      %758 = vmatpush1.bf16.msra.mxu0 0
      %759 = vmatprep.subr.bf16.mxu0 0
      %760 = vmatpush1.bf16.msra.mxu0 0
      %761 = vmatprep.subr.bf16.mxu0 0
      %762 = vmatpush1.bf16.msra.mxu0 0
      %763 = vmatprep.subr.bf16.mxu0 0
      %764 = vmatpush1.bf16.msra.mxu0 0
      %765 = vmatprep.subr.bf16.mxu0 0
      %766 = vmatpush1.bf16.msra.mxu0 0
      %767 = vmatprep.subr.bf16.mxu0 0
      %768 = vmatpush1.bf16.msra.mxu0 0
      %769 = vmatprep.subr.bf16.mxu0 0
      %770 = vmatpush1.bf16.msra.mxu0 0
      %771 = vmatprep.subr.bf16.mxu0 0
      %772 = vmatpush1.bf16.msra.mxu0 0
      %773 = vmatprep.subr.bf16.mxu0 0
      %774 = vmatpush1.bf16.msra.mxu0 0
      %775 = vmatprep.subr.bf16.mxu0 0
      %776 = vmatpush1.bf16.msra.mxu0 0
      %777 = vmatprep.mubr.bf16.mxu0 0
      %778 = vmatmul.mubr.bf16.gmra.mrb[0].mxu0 %v743
      %v779 = vpop.f32.mrb[0].mxu0
      %v780 = vadd.f32 0.0, %v779
      %v781 = vpop.f32.mrb[0].mxu0
      %v782 = vpop.f32.mrb[0].mxu0
      %v783 = vpop.f32.mrb[0].mxu0
      %784 = vdwg.mxu0
      %v785 = vadd.f32 %v694, %v780
      %v786 = vld [vmem:[%s616] sm:$0xe]
      %s787 = scalar_lea.vmem [#allocation8], 256
      %v788 = vld [vmem:[%s787] sm:$0xf]
      %v789 = vld [vmem:[%s787 + $0x4] sm:$0xf]
      %v790 = vld [vmem:[%s787 + $0x8] sm:$0xf]
      %v791 = vld [vmem:[%s787 + $0xc] sm:$0xf]
      %v792 = vld [vmem:[%s787 + $0x10] sm:$0xf]
      %v793 = vld [vmem:[%s787 + $0x14] sm:$0xf]
      %v794 = vld [vmem:[%s787 + $0x18] sm:$0xf]
      %v795 = vld [vmem:[%s787 + $0x1c] sm:$0xf]
      %v797 = vunpack.c.l.b16 %v786
      %v798 = vpack.c.b16 %v709, %v797
      %v799 = vrot.slane %v798, 1
      %v808 = vunpack.c.l.b16 %v788
      %v809 = vunpack.c.l.b16 %v789
      %v810 = vunpack.c.l.b16 %v790
      %v811 = vunpack.c.l.b16 %v791
      %v812 = vunpack.c.l.b16 %v792
      %v813 = vunpack.c.l.b16 %v793
      %v814 = vunpack.c.l.b16 %v794
      %v815 = vunpack.c.l.b16 %v795
      %v816 = vpack.c.b16 %v809, %v808
      %v817 = vpack.c.b16 %v811, %v810
      %v818 = vpack.c.b16 %v813, %v812
      %v819 = vpack.c.b16 %v815, %v814
      %v825 = vsel %vm169, %v799, 0
      %827 = vmatprep.subr.bf16.mxu0 0
      %828 = vmatpush1.bf16.msra.mxu0 %v816
      %829 = vmatprep.subr.bf16.mxu0 0
      %830 = vmatpush1.bf16.msra.mxu0 %v817
      %831 = vmatprep.subr.bf16.mxu0 0
      %832 = vmatpush1.bf16.msra.mxu0 %v818
      %833 = vmatprep.subr.bf16.mxu0 0
      %834 = vmatpush1.bf16.msra.mxu0 %v819
      %835 = vmatprep.subr.bf16.mxu0 0
      %836 = vmatpush1.bf16.msra.mxu0 0
      %837 = vmatprep.subr.bf16.mxu0 0
      %838 = vmatpush1.bf16.msra.mxu0 0
      %839 = vmatprep.subr.bf16.mxu0 0
      %840 = vmatpush1.bf16.msra.mxu0 0
      %841 = vmatprep.subr.bf16.mxu0 0
      %842 = vmatpush1.bf16.msra.mxu0 0
      %843 = vmatprep.subr.bf16.mxu0 0
      %844 = vmatpush1.bf16.msra.mxu0 0
      %845 = vmatprep.subr.bf16.mxu0 0
      %846 = vmatpush1.bf16.msra.mxu0 0
      %847 = vmatprep.subr.bf16.mxu0 0
      %848 = vmatpush1.bf16.msra.mxu0 0
      %849 = vmatprep.subr.bf16.mxu0 0
      %850 = vmatpush1.bf16.msra.mxu0 0
      %851 = vmatprep.subr.bf16.mxu0 0
      %852 = vmatpush1.bf16.msra.mxu0 0
      %853 = vmatprep.subr.bf16.mxu0 0
      %854 = vmatpush1.bf16.msra.mxu0 0
      %855 = vmatprep.subr.bf16.mxu0 0
      %856 = vmatpush1.bf16.msra.mxu0 0
      %857 = vmatprep.subr.bf16.mxu0 0
      %858 = vmatpush1.bf16.msra.mxu0 0
      %859 = vmatprep.mubr.bf16.mxu0 0
      %860 = vmatmul.mubr.bf16.gmra.mrb[0].mxu0 %v825
      %v861 = vpop.f32.mrb[0].mxu0
      %v862 = vadd.f32 0.0, %v861
      %v863 = vpop.f32.mrb[0].mxu0
      %v864 = vpop.f32.mrb[0].mxu0
      %v865 = vpop.f32.mrb[0].mxu0
      %866 = vdwg.mxu0
      %v867 = vadd.f32 %v785, %v862
      %v869 = vlaneseq
      %v870 = vshrl.u32 %v869, 7
      %v871 = vsub.s32 0, %v870
      %v872 = vrot.slane %v103, %v871
      %v874 = vmul.f32 %v867, %v872
      %v876 = vlaneseq
      %v877 = vshrl.u32 %v876, 7
      %v878 = vsub.s32 0, %v877
      %v879 = vrot.slane %v104, %v878
      %v881 = vadd.f32 %v874, %v879
      %v882 = vmax.f32 %v881, 0.0
      %v883 = vpack.c.bf16 %v882, %v882
      %s884 = smul.addr %s106, 4
      %s885 = scalar_lea.vmem [#allocation13], %s884
      %886 = vst [vmem:[%s885] sm:$0xf] %v883
    $region54: #{tower.7} parent=1 // loop_footer
      %s110 = sadd.s32 1, %s106
    $region55: #{tower.7} parent=1 // loop_footer_branch
      %105 = sbr.rel target = $region51
    $region56: #{tower.7} parent=1 // loop_exit
      _
    // Predicated region
    $region57: #{tower.7} parent=1 // pred_check
      _
    $region58: #{tower.7} parent=1 // pred_check_branch
      %888 = sbr.rel (0) target = $region60
    $region59: #{tower.7} parent=1 // pred_region
      %s890 = ssub.s32 2048, 2048
      %891 = vsyncadd [#allocation4], %s890
      %s892 = sshll.u32 [#allocation13], 4
      %s893 = int_to_ptr.vmem [resolvable:$true] %s892
      %898 = dma.vmem_to_hbm [thread:$0]  %s893, 2048, %s6, [#allocation4], 64, 64, 4
    $region60: #{tower.7} parent=1 // pred_fallthru
      _
    // Predicated region
    $region61: #{tower.7} parent=1 // pred_check
      _
    $region62: #{tower.7} parent=1 // pred_check_branch
      %900 = sbr.rel (0) target = $region64
    $region63: #{tower.7} parent=1 // pred_region
      %901 = dma.done [#allocation4], 2048
    $region64: #{tower.7} parent=1 // pred_fallthru
      _
    %902 = vsyncpa [#allocation3], 1
    %903 = vsyncpa [#allocation6], 1
    %904 = vsyncpa [#allocation9], 1
    %905 = vsyncpa [#allocation12], 1
    %906 = vsyncpa [#allocation4], 1

// kernel: tower.8
$region0: #{tower.8}
  #allocation0 [shape = 'u32[]', space=smem, size = 0x4, offset = 0x4, fixed_abs, tag = 'smem constant byte address 0x4 - core index']
  #allocation1 [shape = 'u32[144,128]{1,0:T(1,128)}', space=vmem, size = 0x12000, scoped, tag = 'internal scratch']
  %s0 = inlined_call_operand.hbm [shape: bf16[16,5,128], index: 0, kind: input, shape index: {}]
  %s1 = inlined_call_operand.hbm [shape: bf16[16,5,128], index: 1, kind: input, shape index: {}]
  %s2 = inlined_call_operand.hbm [shape: bf16[16,5,128], index: 2, kind: input, shape index: {}]
  %s3 = inlined_call_operand.hbm [shape: bf16[16,5,128], index: 3, kind: input, shape index: {}]
  %s4 = inlined_call_operand.hbm [shape: bf16[16,5,128], index: 4, kind: input, shape index: {}]
  %s5 = inlined_call_operand.hbm [shape: bf16[16,5,128], index: 5, kind: input, shape index: {}]
  %s6 = inlined_call_operand.hbm [shape: bf16[9,128,128], index: 6, kind: input, shape index: {}]
  %s7 = inlined_call_operand.hbm [shape: f32[1,128], index: 7, kind: input, shape index: {}]
  %s8 = inlined_call_operand.hbm [shape: f32[1,128], index: 8, kind: input, shape index: {}]
  %s9 = inlined_call_operand.hbm [shape: bf16[16,4,128], index: 9, kind: output, shape index: {}]
  %s10 = sld [smem:[#allocation0]]
  $region89: #{tower.8} parent=0
    _
  %s12 = ssub.s32 1, %s10
  %s13 = scalar_select 0, %s12, %s10
  $region1: #{tower.8} parent=0
    #allocation2 [shape = 'u8[32768]{0}', space=vmem, size = 0x8000, scoped, tag = 'input window, operand 0, single buffered']
    #allocation3 [shape = 's32[1]{0}', space=sflag, size = 0x4, scoped, tag = 'scoped memory for tower.8']
    #allocation4 [shape = 's32[1]{0}', space=sflag, size = 0x4, scoped, tag = 'scoped memory for tower.8']
    #allocation5 [shape = 'u8[32768]{0}', space=vmem, size = 0x8000, scoped, tag = 'input window, operand 1, single buffered']
    #allocation6 [shape = 's32[1]{0}', space=sflag, size = 0x4, scoped, tag = 'scoped memory for tower.8']
    #allocation7 [shape = 'u8[32768]{0}', space=vmem, size = 0x8000, scoped, tag = 'input window, operand 2, single buffered']
    #allocation8 [shape = 'u8[32768]{0}', space=vmem, size = 0x8000, scoped, tag = 'input window, operand 3, single buffered']
    #allocation9 [shape = 's32[1]{0}', space=sflag, size = 0x4, scoped, tag = 'scoped memory for tower.8']
    #allocation10 [shape = 'u8[32768]{0}', space=vmem, size = 0x8000, scoped, tag = 'input window, operand 4, single buffered']
    #allocation11 [shape = 'u8[32768]{0}', space=vmem, size = 0x8000, scoped, tag = 'input window, operand 5, single buffered']
    #allocation12 [shape = 's32[1]{0}', space=sflag, size = 0x4, scoped, tag = 'scoped memory for tower.8']
    #allocation13 [shape = 'u8[294912]{0}', space=vmem, size = 0x48000, scoped, tag = 'input window, operand 6, single buffered']
    #allocation14 [shape = 'u8[512]{0}', space=vmem, size = 0x400, scoped, tag = 'input window, operand 7, single buffered']
    #allocation15 [shape = 's32[1]{0}', space=sflag, size = 0x4, scoped, tag = 'scoped memory for tower.8']
    #allocation16 [shape = 'u8[512]{0}', space=vmem, size = 0x400, scoped, tag = 'input window, operand 8, single buffered']
    #allocation17 [shape = 'u8[16384]{0}', space=vmem, size = 0x4000, scoped, tag = 'output window, operand 0, single buffered']
    %14 = vsyncpa [#allocation3], 0
    %15 = vsyncpa [#allocation6], 0
    %16 = vsyncpa [#allocation9], 0
    %17 = vsyncpa [#allocation12], 0
    %18 = vsyncpa [#allocation15], 0
    %19 = vsyncpa [#allocation4], 0
    // Predicated region
    $region2: #{tower.8} parent=1 // pred_check
      _
    $region3: #{tower.8} parent=1 // pred_check_branch
      %21 = sbr.rel (0) target = $region5
    $region4: #{tower.8} parent=1 // pred_region
      %s23 = ssub.s32 1024, 1024
      %24 = vsyncadd [#allocation3], %s23
      %s25 = sshll.u32 [#allocation2], 4
      %s26 = int_to_ptr.vmem [resolvable:$true] %s25
      %31 = dma.hbm_to_vmem [thread:$0]  %s0, 1024, %s26, [#allocation3], 64, 64, 4
    $region5: #{tower.8} parent=1 // pred_fallthru
      _
    // Predicated region
    $region6: #{tower.8} parent=1 // pred_check
      _
    $region7: #{tower.8} parent=1 // pred_check_branch
      %33 = sbr.rel (0) target = $region9
    $region8: #{tower.8} parent=1 // pred_region
      %s35 = ssub.s32 1024, 1024
      %36 = vsyncadd [#allocation6], %s35
      %s37 = sshll.u32 [#allocation5], 4
      %s38 = int_to_ptr.vmem [resolvable:$true] %s37
      %43 = dma.hbm_to_vmem [thread:$0]  %s1, 1024, %s38, [#allocation6], 64, 64, 4
    $region9: #{tower.8} parent=1 // pred_fallthru
      _
    // Predicated region
    $region10: #{tower.8} parent=1 // pred_check
      _
    $region11: #{tower.8} parent=1 // pred_check_branch
      %45 = sbr.rel (0) target = $region13
    $region12: #{tower.8} parent=1 // pred_region
      %s47 = ssub.s32 1024, 1024
      %48 = vsyncadd [#allocation6], %s47
      %s49 = sshll.u32 [#allocation7], 4
      %s50 = int_to_ptr.vmem [resolvable:$true] %s49
      %55 = dma.hbm_to_vmem [thread:$0]  %s2, 1024, %s50, [#allocation6], 64, 64, 4
    $region13: #{tower.8} parent=1 // pred_fallthru
      _
    // Predicated region
    $region14: #{tower.8} parent=1 // pred_check
      _
    $region15: #{tower.8} parent=1 // pred_check_branch
      %57 = sbr.rel (0) target = $region17
    $region16: #{tower.8} parent=1 // pred_region
      %s59 = ssub.s32 1024, 1024
      %60 = vsyncadd [#allocation9], %s59
      %s61 = sshll.u32 [#allocation8], 4
      %s62 = int_to_ptr.vmem [resolvable:$true] %s61
      %67 = dma.hbm_to_vmem [thread:$0]  %s3, 1024, %s62, [#allocation9], 64, 64, 4
    $region17: #{tower.8} parent=1 // pred_fallthru
      _
    // Predicated region
    $region18: #{tower.8} parent=1 // pred_check
      _
    $region19: #{tower.8} parent=1 // pred_check_branch
      %69 = sbr.rel (0) target = $region21
    $region20: #{tower.8} parent=1 // pred_region
      %s71 = ssub.s32 1024, 1024
      %72 = vsyncadd [#allocation9], %s71
      %s73 = sshll.u32 [#allocation10], 4
      %s74 = int_to_ptr.vmem [resolvable:$true] %s73
      %79 = dma.hbm_to_vmem [thread:$0]  %s4, 1024, %s74, [#allocation9], 64, 64, 4
    $region21: #{tower.8} parent=1 // pred_fallthru
      _
    // Predicated region
    $region22: #{tower.8} parent=1 // pred_check
      _
    $region23: #{tower.8} parent=1 // pred_check_branch
      %81 = sbr.rel (0) target = $region25
    $region24: #{tower.8} parent=1 // pred_region
      %s83 = ssub.s32 1024, 1024
      %84 = vsyncadd [#allocation12], %s83
      %s85 = sshll.u32 [#allocation11], 4
      %s86 = int_to_ptr.vmem [resolvable:$true] %s85
      %91 = dma.hbm_to_vmem [thread:$0]  %s5, 1024, %s86, [#allocation12], 64, 64, 4
    $region25: #{tower.8} parent=1 // pred_fallthru
      _
    // Predicated region
    $region26: #{tower.8} parent=1 // pred_check
      _
    $region27: #{tower.8} parent=1 // pred_check_branch
      %93 = sbr.rel (0) target = $region29
    $region28: #{tower.8} parent=1 // pred_region
      %s95 = ssub.s32 9216, 9216
      %96 = vsyncadd [#allocation12], %s95
      %s97 = sshll.u32 [#allocation13], 4
      %s98 = int_to_ptr.vmem [resolvable:$true] %s97
      %103 = dma.hbm_to_vmem [thread:$0]  %s6, 9216, %s98, [#allocation12], 64, 64, 4
    $region29: #{tower.8} parent=1 // pred_fallthru
      _
    // Predicated region
    $region30: #{tower.8} parent=1 // pred_check
      _
    $region31: #{tower.8} parent=1 // pred_check_branch
      %105 = sbr.rel (0) target = $region33
    $region32: #{tower.8} parent=1 // pred_region
      %s107 = ssub.s32 16, 16
      %108 = vsyncadd [#allocation15], %s107
      %s110 = sshll.u32 [#allocation14], 4
      %s111 = int_to_ptr.vmem [resolvable:$true] %s110
      %113 = dma.hbm_to_vmem [thread:$0]  %s7, 16, %s111, [#allocation15]
    $region33: #{tower.8} parent=1 // pred_fallthru
      _
    // Predicated region
    $region34: #{tower.8} parent=1 // pred_check
      _
    $region35: #{tower.8} parent=1 // pred_check_branch
      %115 = sbr.rel (0) target = $region37
    $region36: #{tower.8} parent=1 // pred_region
      %s117 = ssub.s32 16, 16
      %118 = vsyncadd [#allocation15], %s117
      %s120 = sshll.u32 [#allocation16], 4
      %s121 = int_to_ptr.vmem [resolvable:$true] %s120
      %123 = dma.hbm_to_vmem [thread:$0]  %s8, 16, %s121, [#allocation15]
    $region37: #{tower.8} parent=1 // pred_fallthru
      _
    // Predicated region
    $region38: #{tower.8} parent=1 // pred_check
      _
    $region39: #{tower.8} parent=1 // pred_check_branch
      %125 = sbr.rel (0) target = $region41
    $region40: #{tower.8} parent=1 // pred_region
      %126 = dma.done [#allocation3], 1024
    $region41: #{tower.8} parent=1 // pred_fallthru
      _
    // Predicated region
    $region42: #{tower.8} parent=1 // pred_check
      _
    $region43: #{tower.8} parent=1 // pred_check_branch
      %128 = sbr.rel (0) target = $region45
    $region44: #{tower.8} parent=1 // pred_region
      %129 = dma.done [#allocation6], 1024
    $region45: #{tower.8} parent=1 // pred_fallthru
      _
    // Predicated region
    $region46: #{tower.8} parent=1 // pred_check
      _
    $region47: #{tower.8} parent=1 // pred_check_branch
      %131 = sbr.rel (0) target = $region49
    $region48: #{tower.8} parent=1 // pred_region
      %132 = dma.done [#allocation6], 1024
    $region49: #{tower.8} parent=1 // pred_fallthru
      _
    // Predicated region
    $region50: #{tower.8} parent=1 // pred_check
      _
    $region51: #{tower.8} parent=1 // pred_check_branch
      %134 = sbr.rel (0) target = $region53
    $region52: #{tower.8} parent=1 // pred_region
      %135 = dma.done [#allocation9], 1024
    $region53: #{tower.8} parent=1 // pred_fallthru
      _
    // Predicated region
    $region54: #{tower.8} parent=1 // pred_check
      _
    $region55: #{tower.8} parent=1 // pred_check_branch
      %137 = sbr.rel (0) target = $region57
    $region56: #{tower.8} parent=1 // pred_region
      %138 = dma.done [#allocation9], 1024
    $region57: #{tower.8} parent=1 // pred_fallthru
      _
    // Predicated region
    $region58: #{tower.8} parent=1 // pred_check
      _
    $region59: #{tower.8} parent=1 // pred_check_branch
      %140 = sbr.rel (0) target = $region61
    $region60: #{tower.8} parent=1 // pred_region
      %141 = dma.done [#allocation12], 1024
    $region61: #{tower.8} parent=1 // pred_fallthru
      _
    // Predicated region
    $region62: #{tower.8} parent=1 // pred_check
      _
    $region63: #{tower.8} parent=1 // pred_check_branch
      %143 = sbr.rel (0) target = $region65
    $region64: #{tower.8} parent=1 // pred_region
      %144 = dma.done [#allocation12], 9216
    $region65: #{tower.8} parent=1 // pred_fallthru
      _
    // Predicated region
    $region66: #{tower.8} parent=1 // pred_check
      _
    $region67: #{tower.8} parent=1 // pred_check_branch
      %146 = sbr.rel (0) target = $region69
    $region68: #{tower.8} parent=1 // pred_region
      %147 = dma.done [#allocation15], 16
    $region69: #{tower.8} parent=1 // pred_fallthru
      _
    // Predicated region
    $region70: #{tower.8} parent=1 // pred_check
      _
    $region71: #{tower.8} parent=1 // pred_check_branch
      %149 = sbr.rel (0) target = $region73
    $region72: #{tower.8} parent=1 // pred_region
      %150 = dma.done [#allocation15], 16
    $region73: #{tower.8} parent=1 // pred_fallthru
      _
    %v152 = vld [vmem:[#allocation14] sm:$0x1]
    %v153 = vld [vmem:[#allocation16] sm:$0x1]
    loop: start=0, step=1, limit=16
    $region74: #{tower.8} parent=1 // loop_pre_header
      _
    $region75: #{tower.8} parent=1 // loop_header
      %s155 = sphi 0, %s159
      %p156 = scmp.ge.s32.totalorder %s155, 16
    $region76: #{tower.8} parent=1 // loop_header_branch
      %158 = sbr.rel (%p156) target = $region80
    $region77: #{tower.8} parent=1 // loop_body
      %s160 = smul.addr %s155, 4
      %s161 = scalar_lea.vmem [#allocation2], %s160
      %v162 = vld [vmem:[%s161] sm:$0x3]
      %v163 = vld [vmem:[#allocation13] sm:$0xf]
      %v164 = vld [vmem:[#allocation13 + $0x4] sm:$0xf]
      %v165 = vld [vmem:[#allocation13 + $0x8] sm:$0xf]
      %v166 = vld [vmem:[#allocation13 + $0xc] sm:$0xf]
      %v167 = vld [vmem:[#allocation13 + $0x10] sm:$0xf]
      %v168 = vld [vmem:[#allocation13 + $0x14] sm:$0xf]
      %v169 = vld [vmem:[#allocation13 + $0x18] sm:$0xf]
      %v170 = vld [vmem:[#allocation13 + $0x1c] sm:$0xf]
      %v171 = vld [vmem:[#allocation13 + $0x20] sm:$0xf]
      %v172 = vld [vmem:[#allocation13 + $0x24] sm:$0xf]
      %v173 = vld [vmem:[#allocation13 + $0x28] sm:$0xf]
      %v174 = vld [vmem:[#allocation13 + $0x2c] sm:$0xf]
      %v175 = vld [vmem:[#allocation13 + $0x30] sm:$0xf]
      %v176 = vld [vmem:[#allocation13 + $0x34] sm:$0xf]
      %v177 = vld [vmem:[#allocation13 + $0x38] sm:$0xf]
      %v178 = vld [vmem:[#allocation13 + $0x3c] sm:$0xf]
      %s179 = smul.addr %s155, 4
      %s180 = scalar_lea.vmem [#allocation5], %s179
      %v181 = vld [vmem:[%s180] sm:$0x3]
      %s182 = scalar_lea.vmem [#allocation13], 64
      %v183 = vld [vmem:[%s182] sm:$0xf]
      %v184 = vld [vmem:[%s182 + $0x4] sm:$0xf]
      %v185 = vld [vmem:[%s182 + $0x8] sm:$0xf]
      %v186 = vld [vmem:[%s182 + $0xc] sm:$0xf]
      %v187 = vld [vmem:[%s182 + $0x10] sm:$0xf]
      %v188 = vld [vmem:[%s182 + $0x14] sm:$0xf]
      %v189 = vld [vmem:[%s182 + $0x18] sm:$0xf]
      %v190 = vld [vmem:[%s182 + $0x1c] sm:$0xf]
      %v191 = vld [vmem:[%s182 + $0x20] sm:$0xf]
      %v192 = vld [vmem:[%s182 + $0x24] sm:$0xf]
      %v193 = vld [vmem:[%s182 + $0x28] sm:$0xf]
      %v194 = vld [vmem:[%s182 + $0x2c] sm:$0xf]
      %v195 = vld [vmem:[%s182 + $0x30] sm:$0xf]
      %v196 = vld [vmem:[%s182 + $0x34] sm:$0xf]
      %v197 = vld [vmem:[%s182 + $0x38] sm:$0xf]
      %v198 = vld [vmem:[%s182 + $0x3c] sm:$0xf]
      %v215 = vunpack.c.l.b16 %v183
      %v216 = vunpack.c.l.b16 %v184
      %v217 = vunpack.c.l.b16 %v185
      %v218 = vunpack.c.l.b16 %v186
      %v219 = vunpack.c.l.b16 %v187
      %v220 = vunpack.c.l.b16 %v188
      %v221 = vunpack.c.l.b16 %v189
      %v222 = vunpack.c.l.b16 %v190
      %v223 = vunpack.c.l.b16 %v191
      %v224 = vunpack.c.l.b16 %v192
      %v225 = vunpack.c.l.b16 %v193
      %v226 = vunpack.c.l.b16 %v194
      %v227 = vunpack.c.l.b16 %v195
      %v228 = vunpack.c.l.b16 %v196
      %v229 = vunpack.c.l.b16 %v197
      %v230 = vunpack.c.l.b16 %v198
      %v231 = vpack.c.b16 %v216, %v215
      %v232 = vpack.c.b16 %v218, %v217
      %v233 = vpack.c.b16 %v220, %v219
      %v234 = vpack.c.b16 %v222, %v221
      %v235 = vpack.c.b16 %v224, %v223
      %v236 = vpack.c.b16 %v226, %v225
      %v237 = vpack.c.b16 %v228, %v227
      %v238 = vpack.c.b16 %v230, %v229
      %247 = vmatprep.subr.bf16.mxu0 0
      %248 = vmatpush1.bf16.msra.mxu0 %v231
      %249 = vmatprep.subr.bf16.mxu0 0
      %250 = vmatpush1.bf16.msra.mxu0 %v232
      %251 = vmatprep.subr.bf16.mxu0 0
      %252 = vmatpush1.bf16.msra.mxu0 %v233
      %253 = vmatprep.subr.bf16.mxu0 0
      %254 = vmatpush1.bf16.msra.mxu0 %v234
      %255 = vmatprep.subr.bf16.mxu0 0
      %256 = vmatpush1.bf16.msra.mxu0 %v235
      %257 = vmatprep.subr.bf16.mxu0 0
      %258 = vmatpush1.bf16.msra.mxu0 %v236
      %259 = vmatprep.subr.bf16.mxu0 0
      %260 = vmatpush1.bf16.msra.mxu0 %v237
      %261 = vmatprep.subr.bf16.mxu0 0
      %262 = vmatpush1.bf16.msra.mxu0 %v238
      %263 = vmatprep.subr.bf16.mxu0 0
      %264 = vmatpush1.bf16.msra.mxu0 0
      %265 = vmatprep.subr.bf16.mxu0 0
      %266 = vmatpush1.bf16.msra.mxu0 0
      %267 = vmatprep.subr.bf16.mxu0 0
      %268 = vmatpush1.bf16.msra.mxu0 0
      %269 = vmatprep.subr.bf16.mxu0 0
      %270 = vmatpush1.bf16.msra.mxu0 0
      %271 = vmatprep.subr.bf16.mxu0 0
      %272 = vmatpush1.bf16.msra.mxu0 0
      %273 = vmatprep.subr.bf16.mxu0 0
      %274 = vmatpush1.bf16.msra.mxu0 0
      %275 = vmatprep.subr.bf16.mxu0 0
      %276 = vmatpush1.bf16.msra.mxu0 0
      %277 = vmatprep.subr.bf16.mxu0 0
      %278 = vmatpush1.bf16.msra.mxu0 0
      %279 = vmatprep.mubr.bf16.mxu0 0
      %280 = vmatmul.mubr.bf16.gmra.mrb[0].mxu0 %v181
      %v281 = vpop.f32.mrb[0].mxu0
      %v282 = vadd.f32 0.0, %v281
      %v283 = vpop.f32.mrb[0].mxu0
      %v284 = vpop.f32.mrb[0].mxu0
      %v285 = vpop.f32.mrb[0].mxu0
      %286 = vdwg.mxu0
      %v303 = vunpack.c.l.b16 %v163
      %v304 = vunpack.c.l.b16 %v164
      %v305 = vunpack.c.l.b16 %v165
      %v306 = vunpack.c.l.b16 %v166
      %v307 = vunpack.c.l.b16 %v167
      %v308 = vunpack.c.l.b16 %v168
      %v309 = vunpack.c.l.b16 %v169
      %v310 = vunpack.c.l.b16 %v170
      %v311 = vunpack.c.l.b16 %v171
      %v312 = vunpack.c.l.b16 %v172
      %v313 = vunpack.c.l.b16 %v173
      %v314 = vunpack.c.l.b16 %v174
      %v315 = vunpack.c.l.b16 %v175
      %v316 = vunpack.c.l.b16 %v176
      %v317 = vunpack.c.l.b16 %v177
      %v318 = vunpack.c.l.b16 %v178
      %v319 = vpack.c.b16 %v304, %v303
      %v320 = vpack.c.b16 %v306, %v305
      %v321 = vpack.c.b16 %v308, %v307
      %v322 = vpack.c.b16 %v310, %v309
      %v323 = vpack.c.b16 %v312, %v311
      %v324 = vpack.c.b16 %v314, %v313
      %v325 = vpack.c.b16 %v316, %v315
      %v326 = vpack.c.b16 %v318, %v317
      %335 = vmatprep.subr.bf16.mxu0 0
      %336 = vmatpush1.bf16.msra.mxu0 %v319
      %337 = vmatprep.subr.bf16.mxu0 0
      %338 = vmatpush1.bf16.msra.mxu0 %v320
      %339 = vmatprep.subr.bf16.mxu0 0
      %340 = vmatpush1.bf16.msra.mxu0 %v321
      %341 = vmatprep.subr.bf16.mxu0 0
      %342 = vmatpush1.bf16.msra.mxu0 %v322
      %343 = vmatprep.subr.bf16.mxu0 0
      %344 = vmatpush1.bf16.msra.mxu0 %v323
      %345 = vmatprep.subr.bf16.mxu0 0
      %346 = vmatpush1.bf16.msra.mxu0 %v324
      %347 = vmatprep.subr.bf16.mxu0 0
      %348 = vmatpush1.bf16.msra.mxu0 %v325
      %349 = vmatprep.subr.bf16.mxu0 0
      %350 = vmatpush1.bf16.msra.mxu0 %v326
      %351 = vmatprep.subr.bf16.mxu0 0
      %352 = vmatpush1.bf16.msra.mxu0 0
      %353 = vmatprep.subr.bf16.mxu0 0
      %354 = vmatpush1.bf16.msra.mxu0 0
      %355 = vmatprep.subr.bf16.mxu0 0
      %356 = vmatpush1.bf16.msra.mxu0 0
      %357 = vmatprep.subr.bf16.mxu0 0
      %358 = vmatpush1.bf16.msra.mxu0 0
      %359 = vmatprep.subr.bf16.mxu0 0
      %360 = vmatpush1.bf16.msra.mxu0 0
      %361 = vmatprep.subr.bf16.mxu0 0
      %362 = vmatpush1.bf16.msra.mxu0 0
      %363 = vmatprep.subr.bf16.mxu0 0
      %364 = vmatpush1.bf16.msra.mxu0 0
      %365 = vmatprep.subr.bf16.mxu0 0
      %366 = vmatpush1.bf16.msra.mxu0 0
      %367 = vmatprep.mubr.bf16.mxu0 0
      %368 = vmatmul.mubr.bf16.gmra.mrb[0].mxu0 %v162
      %v369 = vpop.f32.mrb[0].mxu0
      %v370 = vadd.f32 %v282, %v369
      %v371 = vpop.f32.mrb[0].mxu0
      %v372 = vpop.f32.mrb[0].mxu0
      %v373 = vpop.f32.mrb[0].mxu0
      %374 = vdwg.mxu0
      %v375 = vld [vmem:[%s161] sm:$0x7]
      %s376 = scalar_lea.vmem [#allocation13], 128
      %v377 = vld [vmem:[%s376] sm:$0xf]
      %v378 = vld [vmem:[%s376 + $0x4] sm:$0xf]
      %v379 = vld [vmem:[%s376 + $0x8] sm:$0xf]
      %v380 = vld [vmem:[%s376 + $0xc] sm:$0xf]
      %v381 = vld [vmem:[%s376 + $0x10] sm:$0xf]
      %v382 = vld [vmem:[%s376 + $0x14] sm:$0xf]
      %v383 = vld [vmem:[%s376 + $0x18] sm:$0xf]
      %v384 = vld [vmem:[%s376 + $0x1c] sm:$0xf]
      %v385 = vld [vmem:[%s376 + $0x20] sm:$0xf]
      %v386 = vld [vmem:[%s376 + $0x24] sm:$0xf]
      %v387 = vld [vmem:[%s376 + $0x28] sm:$0xf]
      %v388 = vld [vmem:[%s376 + $0x2c] sm:$0xf]
      %v389 = vld [vmem:[%s376 + $0x30] sm:$0xf]
      %v390 = vld [vmem:[%s376 + $0x34] sm:$0xf]
      %v391 = vld [vmem:[%s376 + $0x38] sm:$0xf]
      %v392 = vld [vmem:[%s376 + $0x3c] sm:$0xf]
      %v394 = vunpack.c.l.b16 %v375
      %v395 = vpack.c.b16 %v394, %v394
      %v397 = vshrl.u32 %v395, 16
      %v399 = vshll.u32 %v395, 16
      %v401 = vrot.slane %v399, 1
      %v402 = vor.u32 %v397, %v401
      %v420 = vunpack.c.l.b16 %v377
      %v421 = vunpack.c.l.b16 %v378
      %v422 = vunpack.c.l.b16 %v379
      %v423 = vunpack.c.l.b16 %v380
      %v424 = vunpack.c.l.b16 %v381
      %v425 = vunpack.c.l.b16 %v382
      %v426 = vunpack.c.l.b16 %v383
      %v427 = vunpack.c.l.b16 %v384
      %v428 = vunpack.c.l.b16 %v385
      %v429 = vunpack.c.l.b16 %v386
      %v430 = vunpack.c.l.b16 %v387
      %v431 = vunpack.c.l.b16 %v388
      %v432 = vunpack.c.l.b16 %v389
      %v433 = vunpack.c.l.b16 %v390
      %v434 = vunpack.c.l.b16 %v391
      %v435 = vunpack.c.l.b16 %v392
      %v436 = vpack.c.b16 %v421, %v420
      %v437 = vpack.c.b16 %v423, %v422
      %v438 = vpack.c.b16 %v425, %v424
      %v439 = vpack.c.b16 %v427, %v426
      %v440 = vpack.c.b16 %v429, %v428
      %v441 = vpack.c.b16 %v431, %v430
      %v442 = vpack.c.b16 %v433, %v432
      %v443 = vpack.c.b16 %v435, %v434
      %452 = vmatprep.subr.bf16.mxu0 0
      %453 = vmatpush1.bf16.msra.mxu0 %v436
      %454 = vmatprep.subr.bf16.mxu0 0
      %455 = vmatpush1.bf16.msra.mxu0 %v437
      %456 = vmatprep.subr.bf16.mxu0 0
      %457 = vmatpush1.bf16.msra.mxu0 %v438
      %458 = vmatprep.subr.bf16.mxu0 0
      %459 = vmatpush1.bf16.msra.mxu0 %v439
      %460 = vmatprep.subr.bf16.mxu0 0
      %461 = vmatpush1.bf16.msra.mxu0 %v440
      %462 = vmatprep.subr.bf16.mxu0 0
      %463 = vmatpush1.bf16.msra.mxu0 %v441
      %464 = vmatprep.subr.bf16.mxu0 0
      %465 = vmatpush1.bf16.msra.mxu0 %v442
      %466 = vmatprep.subr.bf16.mxu0 0
      %467 = vmatpush1.bf16.msra.mxu0 %v443
      %468 = vmatprep.subr.bf16.mxu0 0
      %469 = vmatpush1.bf16.msra.mxu0 0
      %470 = vmatprep.subr.bf16.mxu0 0
      %471 = vmatpush1.bf16.msra.mxu0 0
      %472 = vmatprep.subr.bf16.mxu0 0
      %473 = vmatpush1.bf16.msra.mxu0 0
      %474 = vmatprep.subr.bf16.mxu0 0
      %475 = vmatpush1.bf16.msra.mxu0 0
      %476 = vmatprep.subr.bf16.mxu0 0
      %477 = vmatpush1.bf16.msra.mxu0 0
      %478 = vmatprep.subr.bf16.mxu0 0
      %479 = vmatpush1.bf16.msra.mxu0 0
      %480 = vmatprep.subr.bf16.mxu0 0
      %481 = vmatpush1.bf16.msra.mxu0 0
      %482 = vmatprep.subr.bf16.mxu0 0
      %483 = vmatpush1.bf16.msra.mxu0 0
      %484 = vmatprep.mubr.bf16.mxu0 0
      %485 = vmatmul.mubr.bf16.gmra.mrb[0].mxu0 %v402
      %v486 = vpop.f32.mrb[0].mxu0
      %v487 = vadd.f32 0.0, %v486
      %v488 = vpop.f32.mrb[0].mxu0
      %v489 = vpop.f32.mrb[0].mxu0
      %v490 = vpop.f32.mrb[0].mxu0
      %491 = vdwg.mxu0
      %v492 = vadd.f32 %v370, %v487
      %s493 = smul.addr %s155, 4
      %s494 = scalar_lea.vmem [#allocation7], %s493
      %v495 = vld [vmem:[%s494] sm:$0x3]
      %s496 = scalar_lea.vmem [#allocation13], 192
      %v497 = vld [vmem:[%s496] sm:$0xf]
      %v498 = vld [vmem:[%s496 + $0x4] sm:$0xf]
      %v499 = vld [vmem:[%s496 + $0x8] sm:$0xf]
      %v500 = vld [vmem:[%s496 + $0xc] sm:$0xf]
      %v501 = vld [vmem:[%s496 + $0x10] sm:$0xf]
      %v502 = vld [vmem:[%s496 + $0x14] sm:$0xf]
      %v503 = vld [vmem:[%s496 + $0x18] sm:$0xf]
      %v504 = vld [vmem:[%s496 + $0x1c] sm:$0xf]
      %v505 = vld [vmem:[%s496 + $0x20] sm:$0xf]
      %v506 = vld [vmem:[%s496 + $0x24] sm:$0xf]
      %v507 = vld [vmem:[%s496 + $0x28] sm:$0xf]
      %v508 = vld [vmem:[%s496 + $0x2c] sm:$0xf]
      %v509 = vld [vmem:[%s496 + $0x30] sm:$0xf]
      %v510 = vld [vmem:[%s496 + $0x34] sm:$0xf]
      %v511 = vld [vmem:[%s496 + $0x38] sm:$0xf]
      %v512 = vld [vmem:[%s496 + $0x3c] sm:$0xf]
      %v529 = vunpack.c.l.b16 %v497
      %v530 = vunpack.c.l.b16 %v498
      %v531 = vunpack.c.l.b16 %v499
      %v532 = vunpack.c.l.b16 %v500
      %v533 = vunpack.c.l.b16 %v501
      %v534 = vunpack.c.l.b16 %v502
      %v535 = vunpack.c.l.b16 %v503
      %v536 = vunpack.c.l.b16 %v504
      %v537 = vunpack.c.l.b16 %v505
      %v538 = vunpack.c.l.b16 %v506
      %v539 = vunpack.c.l.b16 %v507
      %v540 = vunpack.c.l.b16 %v508
      %v541 = vunpack.c.l.b16 %v509
      %v542 = vunpack.c.l.b16 %v510
      %v543 = vunpack.c.l.b16 %v511
      %v544 = vunpack.c.l.b16 %v512
      %v545 = vpack.c.b16 %v530, %v529
      %v546 = vpack.c.b16 %v532, %v531
      %v547 = vpack.c.b16 %v534, %v533
      %v548 = vpack.c.b16 %v536, %v535
      %v549 = vpack.c.b16 %v538, %v537
      %v550 = vpack.c.b16 %v540, %v539
      %v551 = vpack.c.b16 %v542, %v541
      %v552 = vpack.c.b16 %v544, %v543
      %561 = vmatprep.subr.bf16.mxu0 0
      %562 = vmatpush1.bf16.msra.mxu0 %v545
      %563 = vmatprep.subr.bf16.mxu0 0
      %564 = vmatpush1.bf16.msra.mxu0 %v546
      %565 = vmatprep.subr.bf16.mxu0 0
      %566 = vmatpush1.bf16.msra.mxu0 %v547
      %567 = vmatprep.subr.bf16.mxu0 0
      %568 = vmatpush1.bf16.msra.mxu0 %v548
      %569 = vmatprep.subr.bf16.mxu0 0
      %570 = vmatpush1.bf16.msra.mxu0 %v549
      %571 = vmatprep.subr.bf16.mxu0 0
      %572 = vmatpush1.bf16.msra.mxu0 %v550
      %573 = vmatprep.subr.bf16.mxu0 0
      %574 = vmatpush1.bf16.msra.mxu0 %v551
      %575 = vmatprep.subr.bf16.mxu0 0
      %576 = vmatpush1.bf16.msra.mxu0 %v552
      %577 = vmatprep.subr.bf16.mxu0 0
      %578 = vmatpush1.bf16.msra.mxu0 0
      %579 = vmatprep.subr.bf16.mxu0 0
      %580 = vmatpush1.bf16.msra.mxu0 0
      %581 = vmatprep.subr.bf16.mxu0 0
      %582 = vmatpush1.bf16.msra.mxu0 0
      %583 = vmatprep.subr.bf16.mxu0 0
      %584 = vmatpush1.bf16.msra.mxu0 0
      %585 = vmatprep.subr.bf16.mxu0 0
      %586 = vmatpush1.bf16.msra.mxu0 0
      %587 = vmatprep.subr.bf16.mxu0 0
      %588 = vmatpush1.bf16.msra.mxu0 0
      %589 = vmatprep.subr.bf16.mxu0 0
      %590 = vmatpush1.bf16.msra.mxu0 0
      %591 = vmatprep.subr.bf16.mxu0 0
      %592 = vmatpush1.bf16.msra.mxu0 0
      %593 = vmatprep.mubr.bf16.mxu0 0
      %594 = vmatmul.mubr.bf16.gmra.mrb[0].mxu0 %v495
      %v595 = vpop.f32.mrb[0].mxu0
      %v596 = vadd.f32 0.0, %v595
      %v597 = vpop.f32.mrb[0].mxu0
      %v598 = vpop.f32.mrb[0].mxu0
      %v599 = vpop.f32.mrb[0].mxu0
      %600 = vdwg.mxu0
      %v601 = vadd.f32 %v492, %v596
      %s602 = smul.addr %s155, 4
      %s603 = scalar_lea.vmem [#allocation8], %s602
      %v604 = vld [vmem:[%s603] sm:$0x3]
      %s605 = scalar_lea.vmem [#allocation13], 256
      %v606 = vld [vmem:[%s605] sm:$0xf]
      %v607 = vld [vmem:[%s605 + $0x4] sm:$0xf]
      %v608 = vld [vmem:[%s605 + $0x8] sm:$0xf]
      %v609 = vld [vmem:[%s605 + $0xc] sm:$0xf]
      %v610 = vld [vmem:[%s605 + $0x10] sm:$0xf]
      %v611 = vld [vmem:[%s605 + $0x14] sm:$0xf]
      %v612 = vld [vmem:[%s605 + $0x18] sm:$0xf]
      %v613 = vld [vmem:[%s605 + $0x1c] sm:$0xf]
      %v614 = vld [vmem:[%s605 + $0x20] sm:$0xf]
      %v615 = vld [vmem:[%s605 + $0x24] sm:$0xf]
      %v616 = vld [vmem:[%s605 + $0x28] sm:$0xf]
      %v617 = vld [vmem:[%s605 + $0x2c] sm:$0xf]
      %v618 = vld [vmem:[%s605 + $0x30] sm:$0xf]
      %v619 = vld [vmem:[%s605 + $0x34] sm:$0xf]
      %v620 = vld [vmem:[%s605 + $0x38] sm:$0xf]
      %v621 = vld [vmem:[%s605 + $0x3c] sm:$0xf]
      %v638 = vunpack.c.l.b16 %v606
      %v639 = vunpack.c.l.b16 %v607
      %v640 = vunpack.c.l.b16 %v608
      %v641 = vunpack.c.l.b16 %v609
      %v642 = vunpack.c.l.b16 %v610
      %v643 = vunpack.c.l.b16 %v611
      %v644 = vunpack.c.l.b16 %v612
      %v645 = vunpack.c.l.b16 %v613
      %v646 = vunpack.c.l.b16 %v614
      %v647 = vunpack.c.l.b16 %v615
      %v648 = vunpack.c.l.b16 %v616
      %v649 = vunpack.c.l.b16 %v617
      %v650 = vunpack.c.l.b16 %v618
      %v651 = vunpack.c.l.b16 %v619
      %v652 = vunpack.c.l.b16 %v620
      %v653 = vunpack.c.l.b16 %v621
      %v654 = vpack.c.b16 %v639, %v638
      %v655 = vpack.c.b16 %v641, %v640
      %v656 = vpack.c.b16 %v643, %v642
      %v657 = vpack.c.b16 %v645, %v644
      %v658 = vpack.c.b16 %v647, %v646
      %v659 = vpack.c.b16 %v649, %v648
      %v660 = vpack.c.b16 %v651, %v650
      %v661 = vpack.c.b16 %v653, %v652
      %670 = vmatprep.subr.bf16.mxu0 0
      %671 = vmatpush1.bf16.msra.mxu0 %v654
      %672 = vmatprep.subr.bf16.mxu0 0
      %673 = vmatpush1.bf16.msra.mxu0 %v655
      %674 = vmatprep.subr.bf16.mxu0 0
      %675 = vmatpush1.bf16.msra.mxu0 %v656
      %676 = vmatprep.subr.bf16.mxu0 0
      %677 = vmatpush1.bf16.msra.mxu0 %v657
      %678 = vmatprep.subr.bf16.mxu0 0
      %679 = vmatpush1.bf16.msra.mxu0 %v658
      %680 = vmatprep.subr.bf16.mxu0 0
      %681 = vmatpush1.bf16.msra.mxu0 %v659
      %682 = vmatprep.subr.bf16.mxu0 0
      %683 = vmatpush1.bf16.msra.mxu0 %v660
      %684 = vmatprep.subr.bf16.mxu0 0
      %685 = vmatpush1.bf16.msra.mxu0 %v661
      %686 = vmatprep.subr.bf16.mxu0 0
      %687 = vmatpush1.bf16.msra.mxu0 0
      %688 = vmatprep.subr.bf16.mxu0 0
      %689 = vmatpush1.bf16.msra.mxu0 0
      %690 = vmatprep.subr.bf16.mxu0 0
      %691 = vmatpush1.bf16.msra.mxu0 0
      %692 = vmatprep.subr.bf16.mxu0 0
      %693 = vmatpush1.bf16.msra.mxu0 0
      %694 = vmatprep.subr.bf16.mxu0 0
      %695 = vmatpush1.bf16.msra.mxu0 0
      %696 = vmatprep.subr.bf16.mxu0 0
      %697 = vmatpush1.bf16.msra.mxu0 0
      %698 = vmatprep.subr.bf16.mxu0 0
      %699 = vmatpush1.bf16.msra.mxu0 0
      %700 = vmatprep.subr.bf16.mxu0 0
      %701 = vmatpush1.bf16.msra.mxu0 0
      %702 = vmatprep.mubr.bf16.mxu0 0
      %703 = vmatmul.mubr.bf16.gmra.mrb[0].mxu0 %v604
      %v704 = vpop.f32.mrb[0].mxu0
      %v705 = vadd.f32 0.0, %v704
      %v706 = vpop.f32.mrb[0].mxu0
      %v707 = vpop.f32.mrb[0].mxu0
      %v708 = vpop.f32.mrb[0].mxu0
      %709 = vdwg.mxu0
      %v710 = vadd.f32 %v601, %v705
      %v711 = vld [vmem:[%s494] sm:$0x7]
      %s712 = scalar_lea.vmem [#allocation13], 320
      %v713 = vld [vmem:[%s712] sm:$0xf]
      %v714 = vld [vmem:[%s712 + $0x4] sm:$0xf]
      %v715 = vld [vmem:[%s712 + $0x8] sm:$0xf]
      %v716 = vld [vmem:[%s712 + $0xc] sm:$0xf]
      %v717 = vld [vmem:[%s712 + $0x10] sm:$0xf]
      %v718 = vld [vmem:[%s712 + $0x14] sm:$0xf]
      %v719 = vld [vmem:[%s712 + $0x18] sm:$0xf]
      %v720 = vld [vmem:[%s712 + $0x1c] sm:$0xf]
      %v721 = vld [vmem:[%s712 + $0x20] sm:$0xf]
      %v722 = vld [vmem:[%s712 + $0x24] sm:$0xf]
      %v723 = vld [vmem:[%s712 + $0x28] sm:$0xf]
      %v724 = vld [vmem:[%s712 + $0x2c] sm:$0xf]
      %v725 = vld [vmem:[%s712 + $0x30] sm:$0xf]
      %v726 = vld [vmem:[%s712 + $0x34] sm:$0xf]
      %v727 = vld [vmem:[%s712 + $0x38] sm:$0xf]
      %v728 = vld [vmem:[%s712 + $0x3c] sm:$0xf]
      %v730 = vunpack.c.l.b16 %v711
      %v731 = vpack.c.b16 %v730, %v730
      %v733 = vshrl.u32 %v731, 16
      %v735 = vshll.u32 %v731, 16
      %v737 = vrot.slane %v735, 1
      %v738 = vor.u32 %v733, %v737
      %v756 = vunpack.c.l.b16 %v713
      %v757 = vunpack.c.l.b16 %v714
      %v758 = vunpack.c.l.b16 %v715
      %v759 = vunpack.c.l.b16 %v716
      %v760 = vunpack.c.l.b16 %v717
      %v761 = vunpack.c.l.b16 %v718
      %v762 = vunpack.c.l.b16 %v719
      %v763 = vunpack.c.l.b16 %v720
      %v764 = vunpack.c.l.b16 %v721
      %v765 = vunpack.c.l.b16 %v722
      %v766 = vunpack.c.l.b16 %v723
      %v767 = vunpack.c.l.b16 %v724
      %v768 = vunpack.c.l.b16 %v725
      %v769 = vunpack.c.l.b16 %v726
      %v770 = vunpack.c.l.b16 %v727
      %v771 = vunpack.c.l.b16 %v728
      %v772 = vpack.c.b16 %v757, %v756
      %v773 = vpack.c.b16 %v759, %v758
      %v774 = vpack.c.b16 %v761, %v760
      %v775 = vpack.c.b16 %v763, %v762
      %v776 = vpack.c.b16 %v765, %v764
      %v777 = vpack.c.b16 %v767, %v766
      %v778 = vpack.c.b16 %v769, %v768
      %v779 = vpack.c.b16 %v771, %v770
      %788 = vmatprep.subr.bf16.mxu0 0
      %789 = vmatpush1.bf16.msra.mxu0 %v772
      %790 = vmatprep.subr.bf16.mxu0 0
      %791 = vmatpush1.bf16.msra.mxu0 %v773
      %792 = vmatprep.subr.bf16.mxu0 0
      %793 = vmatpush1.bf16.msra.mxu0 %v774
      %794 = vmatprep.subr.bf16.mxu0 0
      %795 = vmatpush1.bf16.msra.mxu0 %v775
      %796 = vmatprep.subr.bf16.mxu0 0
      %797 = vmatpush1.bf16.msra.mxu0 %v776
      %798 = vmatprep.subr.bf16.mxu0 0
      %799 = vmatpush1.bf16.msra.mxu0 %v777
      %800 = vmatprep.subr.bf16.mxu0 0
      %801 = vmatpush1.bf16.msra.mxu0 %v778
      %802 = vmatprep.subr.bf16.mxu0 0
      %803 = vmatpush1.bf16.msra.mxu0 %v779
      %804 = vmatprep.subr.bf16.mxu0 0
      %805 = vmatpush1.bf16.msra.mxu0 0
      %806 = vmatprep.subr.bf16.mxu0 0
      %807 = vmatpush1.bf16.msra.mxu0 0
      %808 = vmatprep.subr.bf16.mxu0 0
      %809 = vmatpush1.bf16.msra.mxu0 0
      %810 = vmatprep.subr.bf16.mxu0 0
      %811 = vmatpush1.bf16.msra.mxu0 0
      %812 = vmatprep.subr.bf16.mxu0 0
      %813 = vmatpush1.bf16.msra.mxu0 0
      %814 = vmatprep.subr.bf16.mxu0 0
      %815 = vmatpush1.bf16.msra.mxu0 0
      %816 = vmatprep.subr.bf16.mxu0 0
      %817 = vmatpush1.bf16.msra.mxu0 0
      %818 = vmatprep.subr.bf16.mxu0 0
      %819 = vmatpush1.bf16.msra.mxu0 0
      %820 = vmatprep.mubr.bf16.mxu0 0
      %821 = vmatmul.mubr.bf16.gmra.mrb[0].mxu0 %v738
      %v822 = vpop.f32.mrb[0].mxu0
      %v823 = vadd.f32 0.0, %v822
      %v824 = vpop.f32.mrb[0].mxu0
      %v825 = vpop.f32.mrb[0].mxu0
      %v826 = vpop.f32.mrb[0].mxu0
      %827 = vdwg.mxu0
      %v828 = vadd.f32 %v710, %v823
      %s829 = smul.addr %s155, 4
      %s830 = scalar_lea.vmem [#allocation10], %s829
      %v831 = vld [vmem:[%s830] sm:$0x3]
      %s832 = scalar_lea.vmem [#allocation13], 384
      %v833 = vld [vmem:[%s832] sm:$0xf]
      %v834 = vld [vmem:[%s832 + $0x4] sm:$0xf]
      %v835 = vld [vmem:[%s832 + $0x8] sm:$0xf]
      %v836 = vld [vmem:[%s832 + $0xc] sm:$0xf]
      %v837 = vld [vmem:[%s832 + $0x10] sm:$0xf]
      %v838 = vld [vmem:[%s832 + $0x14] sm:$0xf]
      %v839 = vld [vmem:[%s832 + $0x18] sm:$0xf]
      %v840 = vld [vmem:[%s832 + $0x1c] sm:$0xf]
      %v841 = vld [vmem:[%s832 + $0x20] sm:$0xf]
      %v842 = vld [vmem:[%s832 + $0x24] sm:$0xf]
      %v843 = vld [vmem:[%s832 + $0x28] sm:$0xf]
      %v844 = vld [vmem:[%s832 + $0x2c] sm:$0xf]
      %v845 = vld [vmem:[%s832 + $0x30] sm:$0xf]
      %v846 = vld [vmem:[%s832 + $0x34] sm:$0xf]
      %v847 = vld [vmem:[%s832 + $0x38] sm:$0xf]
      %v848 = vld [vmem:[%s832 + $0x3c] sm:$0xf]
      %v865 = vunpack.c.l.b16 %v833
      %v866 = vunpack.c.l.b16 %v834
      %v867 = vunpack.c.l.b16 %v835
      %v868 = vunpack.c.l.b16 %v836
      %v869 = vunpack.c.l.b16 %v837
      %v870 = vunpack.c.l.b16 %v838
      %v871 = vunpack.c.l.b16 %v839
      %v872 = vunpack.c.l.b16 %v840
      %v873 = vunpack.c.l.b16 %v841
      %v874 = vunpack.c.l.b16 %v842
      %v875 = vunpack.c.l.b16 %v843
      %v876 = vunpack.c.l.b16 %v844
      %v877 = vunpack.c.l.b16 %v845
      %v878 = vunpack.c.l.b16 %v846
      %v879 = vunpack.c.l.b16 %v847
      %v880 = vunpack.c.l.b16 %v848
      %v881 = vpack.c.b16 %v866, %v865
      %v882 = vpack.c.b16 %v868, %v867
      %v883 = vpack.c.b16 %v870, %v869
      %v884 = vpack.c.b16 %v872, %v871
      %v885 = vpack.c.b16 %v874, %v873
      %v886 = vpack.c.b16 %v876, %v875
      %v887 = vpack.c.b16 %v878, %v877
      %v888 = vpack.c.b16 %v880, %v879
      %897 = vmatprep.subr.bf16.mxu0 0
      %898 = vmatpush1.bf16.msra.mxu0 %v881
      %899 = vmatprep.subr.bf16.mxu0 0
      %900 = vmatpush1.bf16.msra.mxu0 %v882
      %901 = vmatprep.subr.bf16.mxu0 0
      %902 = vmatpush1.bf16.msra.mxu0 %v883
      %903 = vmatprep.subr.bf16.mxu0 0
      %904 = vmatpush1.bf16.msra.mxu0 %v884
      %905 = vmatprep.subr.bf16.mxu0 0
      %906 = vmatpush1.bf16.msra.mxu0 %v885
      %907 = vmatprep.subr.bf16.mxu0 0
      %908 = vmatpush1.bf16.msra.mxu0 %v886
      %909 = vmatprep.subr.bf16.mxu0 0
      %910 = vmatpush1.bf16.msra.mxu0 %v887
      %911 = vmatprep.subr.bf16.mxu0 0
      %912 = vmatpush1.bf16.msra.mxu0 %v888
      %913 = vmatprep.subr.bf16.mxu0 0
      %914 = vmatpush1.bf16.msra.mxu0 0
      %915 = vmatprep.subr.bf16.mxu0 0
      %916 = vmatpush1.bf16.msra.mxu0 0
      %917 = vmatprep.subr.bf16.mxu0 0
      %918 = vmatpush1.bf16.msra.mxu0 0
      %919 = vmatprep.subr.bf16.mxu0 0
      %920 = vmatpush1.bf16.msra.mxu0 0
      %921 = vmatprep.subr.bf16.mxu0 0
      %922 = vmatpush1.bf16.msra.mxu0 0
      %923 = vmatprep.subr.bf16.mxu0 0
      %924 = vmatpush1.bf16.msra.mxu0 0
      %925 = vmatprep.subr.bf16.mxu0 0
      %926 = vmatpush1.bf16.msra.mxu0 0
      %927 = vmatprep.subr.bf16.mxu0 0
      %928 = vmatpush1.bf16.msra.mxu0 0
      %929 = vmatprep.mubr.bf16.mxu0 0
      %930 = vmatmul.mubr.bf16.gmra.mrb[0].mxu0 %v831
      %v931 = vpop.f32.mrb[0].mxu0
      %v932 = vadd.f32 0.0, %v931
      %v933 = vpop.f32.mrb[0].mxu0
      %v934 = vpop.f32.mrb[0].mxu0
      %v935 = vpop.f32.mrb[0].mxu0
      %936 = vdwg.mxu0
      %v937 = vadd.f32 %v828, %v932
      %s938 = smul.addr %s155, 4
      %s939 = scalar_lea.vmem [#allocation11], %s938
      %v940 = vld [vmem:[%s939] sm:$0x3]
      %s941 = scalar_lea.vmem [#allocation13], 448
      %v942 = vld [vmem:[%s941] sm:$0xf]
      %v943 = vld [vmem:[%s941 + $0x4] sm:$0xf]
      %v944 = vld [vmem:[%s941 + $0x8] sm:$0xf]
      %v945 = vld [vmem:[%s941 + $0xc] sm:$0xf]
      %v946 = vld [vmem:[%s941 + $0x10] sm:$0xf]
      %v947 = vld [vmem:[%s941 + $0x14] sm:$0xf]
      %v948 = vld [vmem:[%s941 + $0x18] sm:$0xf]
      %v949 = vld [vmem:[%s941 + $0x1c] sm:$0xf]
      %v950 = vld [vmem:[%s941 + $0x20] sm:$0xf]
      %v951 = vld [vmem:[%s941 + $0x24] sm:$0xf]
      %v952 = vld [vmem:[%s941 + $0x28] sm:$0xf]
      %v953 = vld [vmem:[%s941 + $0x2c] sm:$0xf]
      %v954 = vld [vmem:[%s941 + $0x30] sm:$0xf]
      %v955 = vld [vmem:[%s941 + $0x34] sm:$0xf]
      %v956 = vld [vmem:[%s941 + $0x38] sm:$0xf]
      %v957 = vld [vmem:[%s941 + $0x3c] sm:$0xf]
      %v974 = vunpack.c.l.b16 %v942
      %v975 = vunpack.c.l.b16 %v943
      %v976 = vunpack.c.l.b16 %v944
      %v977 = vunpack.c.l.b16 %v945
      %v978 = vunpack.c.l.b16 %v946
      %v979 = vunpack.c.l.b16 %v947
      %v980 = vunpack.c.l.b16 %v948
      %v981 = vunpack.c.l.b16 %v949
      %v982 = vunpack.c.l.b16 %v950
      %v983 = vunpack.c.l.b16 %v951
      %v984 = vunpack.c.l.b16 %v952
      %v985 = vunpack.c.l.b16 %v953
      %v986 = vunpack.c.l.b16 %v954
      %v987 = vunpack.c.l.b16 %v955
      %v988 = vunpack.c.l.b16 %v956
      %v989 = vunpack.c.l.b16 %v957
      %v990 = vpack.c.b16 %v975, %v974
      %v991 = vpack.c.b16 %v977, %v976
      %v992 = vpack.c.b16 %v979, %v978
      %v993 = vpack.c.b16 %v981, %v980
      %v994 = vpack.c.b16 %v983, %v982
      %v995 = vpack.c.b16 %v985, %v984
      %v996 = vpack.c.b16 %v987, %v986
      %v997 = vpack.c.b16 %v989, %v988
      %1006 = vmatprep.subr.bf16.mxu0 0
      %1007 = vmatpush1.bf16.msra.mxu0 %v990
      %1008 = vmatprep.subr.bf16.mxu0 0
      %1009 = vmatpush1.bf16.msra.mxu0 %v991
      %1010 = vmatprep.subr.bf16.mxu0 0
      %1011 = vmatpush1.bf16.msra.mxu0 %v992
      %1012 = vmatprep.subr.bf16.mxu0 0
      %1013 = vmatpush1.bf16.msra.mxu0 %v993
      %1014 = vmatprep.subr.bf16.mxu0 0
      %1015 = vmatpush1.bf16.msra.mxu0 %v994
      %1016 = vmatprep.subr.bf16.mxu0 0
      %1017 = vmatpush1.bf16.msra.mxu0 %v995
      %1018 = vmatprep.subr.bf16.mxu0 0
      %1019 = vmatpush1.bf16.msra.mxu0 %v996
      %1020 = vmatprep.subr.bf16.mxu0 0
      %1021 = vmatpush1.bf16.msra.mxu0 %v997
      %1022 = vmatprep.subr.bf16.mxu0 0
      %1023 = vmatpush1.bf16.msra.mxu0 0
      %1024 = vmatprep.subr.bf16.mxu0 0
      %1025 = vmatpush1.bf16.msra.mxu0 0
      %1026 = vmatprep.subr.bf16.mxu0 0
      %1027 = vmatpush1.bf16.msra.mxu0 0
      %1028 = vmatprep.subr.bf16.mxu0 0
      %1029 = vmatpush1.bf16.msra.mxu0 0
      %1030 = vmatprep.subr.bf16.mxu0 0
      %1031 = vmatpush1.bf16.msra.mxu0 0
      %1032 = vmatprep.subr.bf16.mxu0 0
      %1033 = vmatpush1.bf16.msra.mxu0 0
      %1034 = vmatprep.subr.bf16.mxu0 0
      %1035 = vmatpush1.bf16.msra.mxu0 0
      %1036 = vmatprep.subr.bf16.mxu0 0
      %1037 = vmatpush1.bf16.msra.mxu0 0
      %1038 = vmatprep.mubr.bf16.mxu0 0
      %1039 = vmatmul.mubr.bf16.gmra.mrb[0].mxu0 %v940
      %v1040 = vpop.f32.mrb[0].mxu0
      %v1041 = vadd.f32 0.0, %v1040
      %v1042 = vpop.f32.mrb[0].mxu0
      %v1043 = vpop.f32.mrb[0].mxu0
      %v1044 = vpop.f32.mrb[0].mxu0
      %1045 = vdwg.mxu0
      %v1046 = vadd.f32 %v937, %v1041
      %v1047 = vld [vmem:[%s830] sm:$0x7]
      %s1048 = scalar_lea.vmem [#allocation13], 512
      %v1049 = vld [vmem:[%s1048] sm:$0xf]
      %v1050 = vld [vmem:[%s1048 + $0x4] sm:$0xf]
      %v1051 = vld [vmem:[%s1048 + $0x8] sm:$0xf]
      %v1052 = vld [vmem:[%s1048 + $0xc] sm:$0xf]
      %v1053 = vld [vmem:[%s1048 + $0x10] sm:$0xf]
      %v1054 = vld [vmem:[%s1048 + $0x14] sm:$0xf]
      %v1055 = vld [vmem:[%s1048 + $0x18] sm:$0xf]
      %v1056 = vld [vmem:[%s1048 + $0x1c] sm:$0xf]
      %v1057 = vld [vmem:[%s1048 + $0x20] sm:$0xf]
      %v1058 = vld [vmem:[%s1048 + $0x24] sm:$0xf]
      %v1059 = vld [vmem:[%s1048 + $0x28] sm:$0xf]
      %v1060 = vld [vmem:[%s1048 + $0x2c] sm:$0xf]
      %v1061 = vld [vmem:[%s1048 + $0x30] sm:$0xf]
      %v1062 = vld [vmem:[%s1048 + $0x34] sm:$0xf]
      %v1063 = vld [vmem:[%s1048 + $0x38] sm:$0xf]
      %v1064 = vld [vmem:[%s1048 + $0x3c] sm:$0xf]
      %v1066 = vunpack.c.l.b16 %v1047
      %v1067 = vpack.c.b16 %v1066, %v1066
      %v1069 = vshrl.u32 %v1067, 16
      %v1071 = vshll.u32 %v1067, 16
      %v1073 = vrot.slane %v1071, 1
      %v1074 = vor.u32 %v1069, %v1073
      %v1092 = vunpack.c.l.b16 %v1049
      %v1093 = vunpack.c.l.b16 %v1050
      %v1094 = vunpack.c.l.b16 %v1051
      %v1095 = vunpack.c.l.b16 %v1052
      %v1096 = vunpack.c.l.b16 %v1053
      %v1097 = vunpack.c.l.b16 %v1054
      %v1098 = vunpack.c.l.b16 %v1055
      %v1099 = vunpack.c.l.b16 %v1056
      %v1100 = vunpack.c.l.b16 %v1057
      %v1101 = vunpack.c.l.b16 %v1058
      %v1102 = vunpack.c.l.b16 %v1059
      %v1103 = vunpack.c.l.b16 %v1060
      %v1104 = vunpack.c.l.b16 %v1061
      %v1105 = vunpack.c.l.b16 %v1062
      %v1106 = vunpack.c.l.b16 %v1063
      %v1107 = vunpack.c.l.b16 %v1064
      %v1108 = vpack.c.b16 %v1093, %v1092
      %v1109 = vpack.c.b16 %v1095, %v1094
      %v1110 = vpack.c.b16 %v1097, %v1096
      %v1111 = vpack.c.b16 %v1099, %v1098
      %v1112 = vpack.c.b16 %v1101, %v1100
      %v1113 = vpack.c.b16 %v1103, %v1102
      %v1114 = vpack.c.b16 %v1105, %v1104
      %v1115 = vpack.c.b16 %v1107, %v1106
      %1124 = vmatprep.subr.bf16.mxu0 0
      %1125 = vmatpush1.bf16.msra.mxu0 %v1108
      %1126 = vmatprep.subr.bf16.mxu0 0
      %1127 = vmatpush1.bf16.msra.mxu0 %v1109
      %1128 = vmatprep.subr.bf16.mxu0 0
      %1129 = vmatpush1.bf16.msra.mxu0 %v1110
      %1130 = vmatprep.subr.bf16.mxu0 0
      %1131 = vmatpush1.bf16.msra.mxu0 %v1111
      %1132 = vmatprep.subr.bf16.mxu0 0
      %1133 = vmatpush1.bf16.msra.mxu0 %v1112
      %1134 = vmatprep.subr.bf16.mxu0 0
      %1135 = vmatpush1.bf16.msra.mxu0 %v1113
      %1136 = vmatprep.subr.bf16.mxu0 0
      %1137 = vmatpush1.bf16.msra.mxu0 %v1114
      %1138 = vmatprep.subr.bf16.mxu0 0
      %1139 = vmatpush1.bf16.msra.mxu0 %v1115
      %1140 = vmatprep.subr.bf16.mxu0 0
      %1141 = vmatpush1.bf16.msra.mxu0 0
      %1142 = vmatprep.subr.bf16.mxu0 0
      %1143 = vmatpush1.bf16.msra.mxu0 0
      %1144 = vmatprep.subr.bf16.mxu0 0
      %1145 = vmatpush1.bf16.msra.mxu0 0
      %1146 = vmatprep.subr.bf16.mxu0 0
      %1147 = vmatpush1.bf16.msra.mxu0 0
      %1148 = vmatprep.subr.bf16.mxu0 0
      %1149 = vmatpush1.bf16.msra.mxu0 0
      %1150 = vmatprep.subr.bf16.mxu0 0
      %1151 = vmatpush1.bf16.msra.mxu0 0
      %1152 = vmatprep.subr.bf16.mxu0 0
      %1153 = vmatpush1.bf16.msra.mxu0 0
      %1154 = vmatprep.subr.bf16.mxu0 0
      %1155 = vmatpush1.bf16.msra.mxu0 0
      %1156 = vmatprep.mubr.bf16.mxu0 0
      %1157 = vmatmul.mubr.bf16.gmra.mrb[0].mxu0 %v1074
      %v1158 = vpop.f32.mrb[0].mxu0
      %v1159 = vadd.f32 0.0, %v1158
      %v1160 = vpop.f32.mrb[0].mxu0
      %v1161 = vpop.f32.mrb[0].mxu0
      %v1162 = vpop.f32.mrb[0].mxu0
      %1163 = vdwg.mxu0
      %v1164 = vadd.f32 %v1046, %v1159
      %v1166 = vlaneseq
      %v1167 = vshrl.u32 %v1166, 7
      %v1168 = vsub.s32 0, %v1167
      %v1169 = vrot.slane %v152, %v1168
      %v1171 = vmul.f32 %v1164, %v1169
      %v1173 = vlaneseq
      %v1174 = vshrl.u32 %v1173, 7
      %v1175 = vsub.s32 0, %v1174
      %v1176 = vrot.slane %v153, %v1175
      %v1178 = vadd.f32 %v1171, %v1176
      %v1179 = vmax.f32 %v1178, 0.0
      %v1180 = vpack.c.bf16 %v1179, %v1179
      %s1181 = smul.addr %s155, 2
      %s1182 = scalar_lea.vmem [#allocation17], %s1181
      %1183 = vst [vmem:[%s1182] sm:$0x3] %v1180
    $region78: #{tower.8} parent=1 // loop_footer
      %s159 = sadd.s32 1, %s155
    $region79: #{tower.8} parent=1 // loop_footer_branch
      %154 = sbr.rel target = $region75
    $region80: #{tower.8} parent=1 // loop_exit
      _
    // Predicated region
    $region81: #{tower.8} parent=1 // pred_check
      _
    $region82: #{tower.8} parent=1 // pred_check_branch
      %1185 = sbr.rel (0) target = $region84
    $region83: #{tower.8} parent=1 // pred_region
      %s1187 = ssub.s32 512, 512
      %1188 = vsyncadd [#allocation4], %s1187
      %s1189 = sshll.u32 [#allocation17], 4
      %s1190 = int_to_ptr.vmem [resolvable:$true] %s1189
      %1195 = dma.vmem_to_hbm [thread:$0]  %s1190, 512, %s9, [#allocation4], 32, 32, 2
    $region84: #{tower.8} parent=1 // pred_fallthru
      _
    // Predicated region
    $region85: #{tower.8} parent=1 // pred_check
      _
    $region86: #{tower.8} parent=1 // pred_check_branch
      %1197 = sbr.rel (0) target = $region88
    $region87: #{tower.8} parent=1 // pred_region
      %1198 = dma.done [#allocation4], 512
    $region88: #{tower.8} parent=1 // pred_fallthru
      _
    %1199 = vsyncpa [#allocation3], 1
    %1200 = vsyncpa [#allocation6], 1
    %1201 = vsyncpa [#allocation9], 1
    %1202 = vsyncpa [#allocation12], 1
    %1203 = vsyncpa [#allocation15], 1
    %1204 = vsyncpa [#allocation4], 1

// kernel: tower.9
$region0: #{tower.9}
  #allocation0 [shape = 'u32[]', space=smem, size = 0x4, offset = 0x4, fixed_abs, tag = 'smem constant byte address 0x4 - core index']
  #allocation1 [shape = 'u32[144,128]{1,0:T(1,128)}', space=vmem, size = 0x12000, scoped, tag = 'internal scratch']
  %s0 = inlined_call_operand.hbm [shape: bf16[16,6,128], index: 0, kind: input, shape index: {}]
  %s1 = inlined_call_operand.hbm [shape: bf16[16,6,128], index: 1, kind: input, shape index: {}]
  %s2 = inlined_call_operand.hbm [shape: bf16[16,6,128], index: 2, kind: input, shape index: {}]
  %s3 = inlined_call_operand.hbm [shape: bf16[9,128,256], index: 3, kind: input, shape index: {}]
  %s4 = inlined_call_operand.hbm [shape: f32[1,256], index: 4, kind: input, shape index: {}]
  %s5 = inlined_call_operand.hbm [shape: f32[1,256], index: 5, kind: input, shape index: {}]
  %s6 = inlined_call_operand.hbm [shape: bf16[16,4,256], index: 6, kind: output, shape index: {}]
  %s7 = sld [smem:[#allocation0]]
  $region88: #{tower.9} parent=0
    _
  %s9 = ssub.s32 1, %s7
  %s10 = scalar_select 0, %s9, %s7
  $region1: #{tower.9} parent=0
    #allocation2 [shape = 'u8[32768]{0}', space=vmem, size = 0x8000, scoped, tag = 'input window, operand 0, single buffered']
    #allocation3 [shape = 's32[2]{0}', space=sflag, size = 0x8, scoped, tag = 'scoped memory for tower.9']
    #allocation4 [shape = 's32[2]{0}', space=sflag, size = 0x8, scoped, tag = 'scoped memory for tower.9']
    #allocation5 [shape = 'u8[32768]{0}', space=vmem, size = 0x8000, scoped, tag = 'input window, operand 1, single buffered']
    #allocation6 [shape = 's32[1]{0}', space=sflag, size = 0x4, scoped, tag = 'scoped memory for tower.9']
    #allocation7 [shape = 'u8[32768]{0}', space=vmem, size = 0x8000, scoped, tag = 'input window, operand 2, single buffered']
    #allocation8 [shape = 'u8[589824]{0}', space=vmem, size = 0x90000, scoped, tag = 'input window, operand 3']
    #allocation9 [shape = 's32[2]{0}', space=sflag, size = 0x8, scoped, tag = 'scoped memory for tower.9']
    #allocation10 [shape = 'u8[1024]{0}', space=vmem, size = 0x400, scoped, tag = 'input window, operand 4']
    #allocation11 [shape = 'u8[1024]{0}', space=vmem, size = 0x400, scoped, tag = 'input window, operand 5']
    #allocation12 [shape = 's32[2]{0}', space=sflag, size = 0x8, scoped, tag = 'scoped memory for tower.9']
    #allocation13 [shape = 'u8[32768]{0}', space=vmem, size = 0x8000, scoped, tag = 'output window, operand 0']
    %11 = vsyncpa [#allocation3], 0
    %12 = vsyncpa [#allocation6], 0
    %13 = vsyncpa [#allocation9], 0
    %s14 = scalar_lea.sflag [#allocation9], 1
    %15 = vsyncpa %s14, 0
    %16 = vsyncpa [#allocation12], 0
    %s17 = scalar_lea.sflag [#allocation12], 1
    %18 = vsyncpa %s17, 0
    %19 = vsyncpa [#allocation4], 0
    %s20 = scalar_lea.sflag [#allocation4], 1
    %21 = vsyncpa %s20, 0
    loop: start=0, step=1, limit=4
    $region2: #{tower.9} parent=1 // loop_pre_header
      _
    $region3: #{tower.9} parent=1 // loop_header
      %s23 = sphi 0, %s27
      %p24 = scmp.ge.s32.totalorder %s23, 4
      %s30 = sphi 0, %s42
      %s31 = sphi 0, %s38
      %s32 = sphi 0, %s30
      %s33 = sphi 0, %s31
      %s34 = sphi 0, %s32
      %s35 = sphi 0, %s33
      %s45 = sphi 0, %s47
      %s48 = sphi 0, %s45
      %s49 = sphi 0, %s48
      %s65 = sphi 0, %s49
      %s71 = sphi 0, %s73
      %s74 = sphi 0, %s71
      %s75 = sphi 0, %s74
      %s91 = sphi 0, %s75
      %s97 = sphi 0, %s99
      %s100 = sphi 0, %s97
      %s101 = sphi 0, %s100
      %s117 = sphi 0, %s101
      %s123 = sphi 0, %s125
      %s126 = sphi 0, %s123
      %s127 = sphi 0, %s126
      %s143 = sphi 0, %s127
      %s149 = sphi 0, %s151
      %s152 = sphi 0, %s149
      %s153 = sphi 0, %s152
      %s169 = sphi 0, %s153
      %s175 = sphi 0, %s177
      %s178 = sphi 0, %s175
      %s179 = sphi 0, %s178
      %s195 = sphi 0, %s179
      %s203 = sphi 0, %s205
      %s206 = sphi 0, %s203
      %s207 = sphi 0, %s206
      %s223 = sphi 0, %s207
    $region4: #{tower.9} parent=1 // loop_header_branch
      %26 = sbr.rel (%p24) target = $region8
    $region5: #{tower.9} parent=1 // loop_body
      %s28 = ssub.s32 %s23, 1
      %s29 = ssub.s32 %s23, 2
      %s36 = sadd.s32 1, %s31
      %p37 = scmp.ge.s32.totalorder %s36, 1
      %s38 = scalar_select %p37, 0, %s36
      %s39 = sadd.s32 1, %s30
      %s40 = scalar_select %p37, %s39, %s30
      %p41 = scmp.ge.s32.totalorder %s40, 2
      %s42 = scalar_select %p41, 0, %s40
      %s43 = ssub.s32 %s31, %s38
      %p44 = scmp.eq.s32.totalorder %s43, 0
      %s46 = sadd.s32 %s45, 1
      %s47 = scalar_select %p44, %s45, %s46
      %p50 = pneg %p44
      %p51 = scmp.eq.s32.totalorder %s23, 1
      %p52 = por %p50, %p51
      %p53 = scmp.ne.s32.totalorder %s45, %s48
      %p54 = scmp.eq.s32.totalorder %s23, 0
      %p55 = por %p53, %p54
      %p56 = scmp.ne.s32.totalorder %s45, %s48
      %p57 = scmp.eq.s32.totalorder %s28, 1
      %p58 = por %p56, %p57
      %p59 = scmp.ne.s32.totalorder %s48, %s49
      %p60 = scmp.eq.s32.totalorder %s28, 0
      %p61 = por %p59, %p60
      %p62 = scmp.ne.s32.totalorder %s48, %s49
      %p63 = scmp.eq.s32.totalorder %s29, 1
      %p64 = por %p62, %p63
      %p66 = scmp.ne.s32.totalorder %s49, %s65
      %p67 = scmp.eq.s32.totalorder %s29, 0
      %p68 = por %p66, %p67
      %s69 = ssub.s32 %s31, %s38
      %p70 = scmp.eq.s32.totalorder %s69, 0
      %s72 = sadd.s32 %s71, 1
      %s73 = scalar_select %p70, %s71, %s72
      %p76 = pneg %p70
      %p77 = scmp.eq.s32.totalorder %s23, 1
      %p78 = por %p76, %p77
      %p79 = scmp.ne.s32.totalorder %s71, %s74
      %p80 = scmp.eq.s32.totalorder %s23, 0
      %p81 = por %p79, %p80
      %p82 = scmp.ne.s32.totalorder %s71, %s74
      %p83 = scmp.eq.s32.totalorder %s28, 1
      %p84 = por %p82, %p83
      %p85 = scmp.ne.s32.totalorder %s74, %s75
      %p86 = scmp.eq.s32.totalorder %s28, 0
      %p87 = por %p85, %p86
      %p88 = scmp.ne.s32.totalorder %s74, %s75
      %p89 = scmp.eq.s32.totalorder %s29, 1
      %p90 = por %p88, %p89
      %p92 = scmp.ne.s32.totalorder %s75, %s91
      %p93 = scmp.eq.s32.totalorder %s29, 0
      %p94 = por %p92, %p93
      %s95 = ssub.s32 %s31, %s38
      %p96 = scmp.eq.s32.totalorder %s95, 0
      %s98 = sadd.s32 %s97, 1
      %s99 = scalar_select %p96, %s97, %s98
      %p102 = pneg %p96
      %p103 = scmp.eq.s32.totalorder %s23, 1
      %p104 = por %p102, %p103
      %p105 = scmp.ne.s32.totalorder %s97, %s100
      %p106 = scmp.eq.s32.totalorder %s23, 0
      %p107 = por %p105, %p106
      %p108 = scmp.ne.s32.totalorder %s97, %s100
      %p109 = scmp.eq.s32.totalorder %s28, 1
      %p110 = por %p108, %p109
      %p111 = scmp.ne.s32.totalorder %s100, %s101
      %p112 = scmp.eq.s32.totalorder %s28, 0
      %p113 = por %p111, %p112
      %p114 = scmp.ne.s32.totalorder %s100, %s101
      %p115 = scmp.eq.s32.totalorder %s29, 1
      %p116 = por %p114, %p115
      %p118 = scmp.ne.s32.totalorder %s101, %s117
      %p119 = scmp.eq.s32.totalorder %s29, 0
      %p120 = por %p118, %p119
      %s121 = ssub.s32 %s30, %s42
      %p122 = scmp.eq.s32.totalorder %s121, 0
      %s124 = sadd.s32 %s123, 1
      %s125 = scalar_select %p122, %s123, %s124
      %p128 = pneg %p122
      %p129 = scmp.eq.s32.totalorder %s23, 1
      %p130 = por %p128, %p129
      %p131 = scmp.ne.s32.totalorder %s123, %s126
      %p132 = scmp.eq.s32.totalorder %s23, 0
      %p133 = por %p131, %p132
      %p134 = scmp.ne.s32.totalorder %s123, %s126
      %p135 = scmp.eq.s32.totalorder %s28, 1
      %p136 = por %p134, %p135
      %p137 = scmp.ne.s32.totalorder %s126, %s127
      %p138 = scmp.eq.s32.totalorder %s28, 0
      %p139 = por %p137, %p138
      %p140 = scmp.ne.s32.totalorder %s126, %s127
      %p141 = scmp.eq.s32.totalorder %s29, 1
      %p142 = por %p140, %p141
      %p144 = scmp.ne.s32.totalorder %s127, %s143
      %p145 = scmp.eq.s32.totalorder %s29, 0
      %p146 = por %p144, %p145
      %s147 = ssub.s32 %s30, %s42
      %p148 = scmp.eq.s32.totalorder %s147, 0
      %s150 = sadd.s32 %s149, 1
      %s151 = scalar_select %p148, %s149, %s150
      %p154 = pneg %p148
      %p155 = scmp.eq.s32.totalorder %s23, 1
      %p156 = por %p154, %p155
      %p157 = scmp.ne.s32.totalorder %s149, %s152
      %p158 = scmp.eq.s32.totalorder %s23, 0
      %p159 = por %p157, %p158
      %p160 = scmp.ne.s32.totalorder %s149, %s152
      %p161 = scmp.eq.s32.totalorder %s28, 1
      %p162 = por %p160, %p161
      %p163 = scmp.ne.s32.totalorder %s152, %s153
      %p164 = scmp.eq.s32.totalorder %s28, 0
      %p165 = por %p163, %p164
      %p166 = scmp.ne.s32.totalorder %s152, %s153
      %p167 = scmp.eq.s32.totalorder %s29, 1
      %p168 = por %p166, %p167
      %p170 = scmp.ne.s32.totalorder %s153, %s169
      %p171 = scmp.eq.s32.totalorder %s29, 0
      %p172 = por %p170, %p171
      %s173 = ssub.s32 %s30, %s42
      %p174 = scmp.eq.s32.totalorder %s173, 0
      %s176 = sadd.s32 %s175, 1
      %s177 = scalar_select %p174, %s175, %s176
      %p180 = pneg %p174
      %p181 = scmp.eq.s32.totalorder %s23, 1
      %p182 = por %p180, %p181
      %p183 = scmp.ne.s32.totalorder %s175, %s178
      %p184 = scmp.eq.s32.totalorder %s23, 0
      %p185 = por %p183, %p184
      %p186 = scmp.ne.s32.totalorder %s175, %s178
      %p187 = scmp.eq.s32.totalorder %s28, 1
      %p188 = por %p186, %p187
      %p189 = scmp.ne.s32.totalorder %s178, %s179
      %p190 = scmp.eq.s32.totalorder %s28, 0
      %p191 = por %p189, %p190
      %p192 = scmp.ne.s32.totalorder %s178, %s179
      %p193 = scmp.eq.s32.totalorder %s29, 1
      %p194 = por %p192, %p193
      %p196 = scmp.ne.s32.totalorder %s179, %s195
      %p197 = scmp.eq.s32.totalorder %s29, 0
      %p198 = por %p196, %p197
      %s199 = ssub.s32 %s31, %s38
      %s200 = ssub.s32 %s30, %s42
      %s201 = sor.u32 %s199, %s200
      %p202 = scmp.eq.s32.totalorder %s201, 0
      %s204 = sadd.s32 %s203, 1
      %s205 = scalar_select %p202, %s203, %s204
      %p208 = pneg %p202
      %p209 = scmp.eq.s32.totalorder %s23, 1
      %p210 = por %p208, %p209
      %p211 = scmp.ne.s32.totalorder %s203, %s206
      %p212 = scmp.eq.s32.totalorder %s23, 0
      %p213 = por %p211, %p212
      %p214 = scmp.ne.s32.totalorder %s203, %s206
      %p215 = scmp.eq.s32.totalorder %s28, 1
      %p216 = por %p214, %p215
      %p217 = scmp.ne.s32.totalorder %s206, %s207
      %p218 = scmp.eq.s32.totalorder %s28, 0
      %p219 = por %p217, %p218
      %p220 = scmp.ne.s32.totalorder %s206, %s207
      %p221 = scmp.eq.s32.totalorder %s29, 1
      %p222 = por %p220, %p221
      %p224 = scmp.ne.s32.totalorder %s207, %s223
      %p225 = scmp.eq.s32.totalorder %s29, 0
      %p226 = por %p224, %p225
      %p227 = scmp.le.s32.totalorder 1, %s23
      %p228 = scmp.lt.s32.totalorder %s23, 3
      %p229 = pnand %p227, %p228
      %p230 = pneg %p229
      // Predicated region
      $region9: #{tower.9} parent=5 // pred_check
        _
      $region10: #{tower.9} parent=5 // pred_check_branch
        %232 = sbr.rel (%p229) target = $region12
      $region11: #{tower.9} parent=5 // pred_region
        %s233 = ssub.s32 %s23, 1
        // Predicated region
        $region13: #{tower.9} parent=11 // pred_check
          %p234 = pneg %p61
        $region14: #{tower.9} parent=11 // pred_check_branch
          %236 = sbr.rel (%p234) target = $region16
        $region15: #{tower.9} parent=11 // pred_region
          %s237 = smul.u32 16, %s33
          %s239 = ssub.s32 1024, 1024
          %240 = vsyncadd [#allocation3], %s239
          %s241 = smul.addr %s237, 64
          %s242 = scalar_lea.hbm %s0, %s241
          %s243 = sshll.u32 [#allocation2], 4
          %s244 = int_to_ptr.vmem [resolvable:$true] %s243
          %249 = dma.hbm_to_vmem [thread:$0]  %s242, 1024, %s244, [#allocation3], 64, 64, 4
        $region16: #{tower.9} parent=11 // pred_fallthru
          _
        // Predicated region
        $region17: #{tower.9} parent=11 // pred_check
          %p250 = pneg %p87
        $region18: #{tower.9} parent=11 // pred_check_branch
          %252 = sbr.rel (%p250) target = $region20
        $region19: #{tower.9} parent=11 // pred_region
          %s253 = smul.u32 16, %s33
          %s255 = ssub.s32 1024, 1024
          %256 = vsyncadd [#allocation6], %s255
          %s257 = smul.addr %s253, 64
          %s258 = scalar_lea.hbm %s1, %s257
          %s259 = sshll.u32 [#allocation5], 4
          %s260 = int_to_ptr.vmem [resolvable:$true] %s259
          %265 = dma.hbm_to_vmem [thread:$0]  %s258, 1024, %s260, [#allocation6], 64, 64, 4
        $region20: #{tower.9} parent=11 // pred_fallthru
          _
        // Predicated region
        $region21: #{tower.9} parent=11 // pred_check
          %p266 = pneg %p113
        $region22: #{tower.9} parent=11 // pred_check_branch
          %268 = sbr.rel (%p266) target = $region24
        $region23: #{tower.9} parent=11 // pred_region
          %s269 = smul.u32 16, %s33
          %s271 = ssub.s32 1024, 1024
          %272 = vsyncadd [#allocation6], %s271
          %s273 = smul.addr %s269, 64
          %s274 = scalar_lea.hbm %s2, %s273
          %s275 = sshll.u32 [#allocation7], 4
          %s276 = int_to_ptr.vmem [resolvable:$true] %s275
          %281 = dma.hbm_to_vmem [thread:$0]  %s274, 1024, %s276, [#allocation6], 64, 64, 4
        $region24: #{tower.9} parent=11 // pred_fallthru
          _
      $region12: #{tower.9} parent=5 // pred_fallthru
        _
      %p282 = scmp.lt.s32.totalorder %s23, 2
      // Predicated region
      $region25: #{tower.9} parent=5 // pred_check
        %p283 = pneg %p282
      $region26: #{tower.9} parent=5 // pred_check_branch
        %285 = sbr.rel (%p283) target = $region28
      $region27: #{tower.9} parent=5 // pred_region
        // Predicated region
        $region29: #{tower.9} parent=27 // pred_check
          %p286 = pneg %p133
        $region30: #{tower.9} parent=27 // pred_check_branch
          %288 = sbr.rel (%p286) target = $region32
        $region31: #{tower.9} parent=27 // pred_region
          %s289 = sand.u32 %s23, 1
          %s290 = scalar_lea.sflag [#allocation9], %s289
          %s291 = sand.u32 %s123, 1
          %s292 = smul.addr %s291, 576
          %s293 = scalar_lea.vmem [#allocation8], %s292
          %s295 = ssub.s32 9216, 9216
          %296 = vsyncadd %s290, %s295
          %s297 = smul.addr %s30, 64
          %s298 = scalar_lea.hbm %s3, %s297
          %s299 = sshll.u32 %s293, 4
          %s300 = int_to_ptr.vmem [resolvable:$true] %s299
          %305 = dma.hbm_to_vmem [thread:$0]  %s298, 9216, %s300, %s290, 128, 64, 4
        $region32: #{tower.9} parent=27 // pred_fallthru
          _
        // Predicated region
        $region33: #{tower.9} parent=27 // pred_check
          %p306 = pneg %p159
        $region34: #{tower.9} parent=27 // pred_check_branch
          %308 = sbr.rel (%p306) target = $region36
        $region35: #{tower.9} parent=27 // pred_region
          %s309 = sand.u32 %s23, 1
          %s310 = scalar_lea.sflag [#allocation9], %s309
          %s311 = sand.u32 %s149, 1
          %s312 = scalar_lea.vmem [#allocation10], %s311
          %s314 = ssub.s32 16, 16
          %315 = vsyncadd %s310, %s314
          %s316 = smul.addr %s30, 16
          %s317 = scalar_lea.hbm %s4, %s316
          %s319 = sshll.u32 %s312, 4
          %s320 = int_to_ptr.vmem [resolvable:$true] %s319
          %322 = dma.hbm_to_vmem [thread:$0]  %s317, 16, %s320, %s310
        $region36: #{tower.9} parent=27 // pred_fallthru
          _
        // Predicated region
        $region37: #{tower.9} parent=27 // pred_check
          %p323 = pneg %p185
        $region38: #{tower.9} parent=27 // pred_check_branch
          %325 = sbr.rel (%p323) target = $region40
        $region39: #{tower.9} parent=27 // pred_region
          %s326 = sand.u32 %s175, 1
          %s327 = scalar_lea.sflag [#allocation12], %s326
          %s328 = sand.u32 %s175, 1
          %s329 = scalar_lea.vmem [#allocation11], %s328
          %s331 = ssub.s32 16, 16
          %332 = vsyncadd %s327, %s331
          %s333 = smul.addr %s30, 16
          %s334 = scalar_lea.hbm %s5, %s333
          %s336 = sshll.u32 %s329, 4
          %s337 = int_to_ptr.vmem [resolvable:$true] %s336
          %339 = dma.hbm_to_vmem [thread:$0]  %s334, 16, %s337, %s327
        $region40: #{tower.9} parent=27 // pred_fallthru
          _
      $region28: #{tower.9} parent=5 // pred_fallthru
        _
      %p340 = scmp.le.s32.totalorder 1, %s23
      %p341 = scmp.lt.s32.totalorder %s23, 3
      %p342 = pnand %p340, %p341
      %p343 = pneg %p342
      // Predicated region
      $region41: #{tower.9} parent=5 // pred_check
        _
      $region42: #{tower.9} parent=5 // pred_check_branch
        %345 = sbr.rel (%p342) target = $region44
      $region43: #{tower.9} parent=5 // pred_region
        %s346 = ssub.s32 %s23, 1
        // Predicated region
        $region45: #{tower.9} parent=43 // pred_check
          %p347 = pneg %p61
        $region46: #{tower.9} parent=43 // pred_check_branch
          %349 = sbr.rel (%p347) target = $region48
        $region47: #{tower.9} parent=43 // pred_region
          %350 = dma.done [#allocation3], 1024
        $region48: #{tower.9} parent=43 // pred_fallthru
          _
        // Predicated region
        $region49: #{tower.9} parent=43 // pred_check
          %p351 = pneg %p87
        $region50: #{tower.9} parent=43 // pred_check_branch
          %353 = sbr.rel (%p351) target = $region52
        $region51: #{tower.9} parent=43 // pred_region
          %354 = dma.done [#allocation6], 1024
        $region52: #{tower.9} parent=43 // pred_fallthru
          _
        // Predicated region
        $region53: #{tower.9} parent=43 // pred_check
          %p355 = pneg %p113
        $region54: #{tower.9} parent=43 // pred_check_branch
          %357 = sbr.rel (%p355) target = $region56
        $region55: #{tower.9} parent=43 // pred_region
          %358 = dma.done [#allocation6], 1024
        $region56: #{tower.9} parent=43 // pred_fallthru
          _
        %s359 = sand.u32 %s28, 1
        %s360 = scalar_lea.sflag [#allocation9], %s359
        %s361 = sand.u32 %s126, 1
        %s362 = smul.addr %s361, 576
        %s363 = scalar_lea.vmem [#allocation8], %s362
        // Predicated region
        $region57: #{tower.9} parent=43 // pred_check
          %p364 = pneg %p139
        $region58: #{tower.9} parent=43 // pred_check_branch
          %366 = sbr.rel (%p364) target = $region60
        $region59: #{tower.9} parent=43 // pred_region
          %367 = dma.done %s360, 9216
        $region60: #{tower.9} parent=43 // pred_fallthru
          _
        %s368 = sand.u32 %s28, 1
        %s369 = scalar_lea.sflag [#allocation9], %s368
        %s370 = sand.u32 %s152, 1
        %s371 = scalar_lea.vmem [#allocation10], %s370
        // Predicated region
        $region61: #{tower.9} parent=43 // pred_check
          %p372 = pneg %p165
        $region62: #{tower.9} parent=43 // pred_check_branch
          %374 = sbr.rel (%p372) target = $region64
        $region63: #{tower.9} parent=43 // pred_region
          %375 = dma.done %s369, 16
        $region64: #{tower.9} parent=43 // pred_fallthru
          _
        %s376 = sand.u32 %s178, 1
        %s377 = scalar_lea.sflag [#allocation12], %s376
        %s378 = sand.u32 %s178, 1
        %s379 = scalar_lea.vmem [#allocation11], %s378
        // Predicated region
        $region65: #{tower.9} parent=43 // pred_check
          %p380 = pneg %p191
        $region66: #{tower.9} parent=43 // pred_check_branch
          %382 = sbr.rel (%p380) target = $region68
        $region67: #{tower.9} parent=43 // pred_region
          %383 = dma.done %s377, 16
        $region68: #{tower.9} parent=43 // pred_fallthru
          _
        %p384 = pneg %p61
        %p385 = pneg %p58
        %p386 = pneg %p87
        %p387 = pneg %p84
        %p388 = pneg %p113
        %p389 = pneg %p110
        %s390 = sand.u32 %s28, 1
        %s391 = scalar_lea.sflag [#allocation9], %s390
        %s392 = sand.u32 %s126, 1
        %s393 = smul.addr %s392, 576
        %s394 = scalar_lea.vmem [#allocation8], %s393
        %p395 = pneg %p139
        %p396 = pneg %p136
        %s397 = sand.u32 %s28, 1
        %s398 = scalar_lea.sflag [#allocation9], %s397
        %s399 = sand.u32 %s152, 1
        %s400 = scalar_lea.vmem [#allocation10], %s399
        %p401 = pneg %p165
        %p402 = pneg %p162
        %s403 = sand.u32 %s178, 1
        %s404 = scalar_lea.sflag [#allocation12], %s403
        %s405 = sand.u32 %s178, 1
        %s406 = scalar_lea.vmem [#allocation11], %s405
        %p407 = pneg %p191
        %p408 = pneg %p188
        %p409 = pneg %p219
        %p410 = pneg %p216
        %s411 = sand.u32 %s206, 1
        %s412 = scalar_lea.sflag [#allocation4], %s411
        %s413 = sand.u32 %s206, 1
        %s414 = smul.addr %s413, 32
        %s415 = scalar_lea.vmem [#allocation13], %s414
        %s416 = smul.u32 16, %s33
        %s417 = smul.u32 16, %s33
        %s418 = smul.u32 16, %s33
        %s419 = smul.u32 16, %s33
        %v421 = vld [vmem:[%s371] sm:$0x1]
        %v422 = vld [vmem:[%s379] sm:$0x1]
        loop: start=0, step=1, limit=16
        $region69: #{tower.9} parent=43 // loop_pre_header
          _
        $region70: #{tower.9} parent=43 // loop_header
          %s424 = sphi 0, %s428
          %p425 = scmp.ge.s32.totalorder %s424, 16
        $region71: #{tower.9} parent=43 // loop_header_branch
          %427 = sbr.rel (%p425) target = $region75
        $region72: #{tower.9} parent=43 // loop_body
          %s429 = smul.addr %s424, 4
          %s430 = scalar_lea.vmem [#allocation2], %s429
          %v431 = vld [vmem:[%s430] sm:$0x3]
          %v432 = vld [vmem:[%s363] sm:$0xf]
          %v433 = vld [vmem:[%s363 + $0x4] sm:$0xf]
          %v434 = vld [vmem:[%s363 + $0x8] sm:$0xf]
          %v435 = vld [vmem:[%s363 + $0xc] sm:$0xf]
          %v436 = vld [vmem:[%s363 + $0x10] sm:$0xf]
          %v437 = vld [vmem:[%s363 + $0x14] sm:$0xf]
          %v438 = vld [vmem:[%s363 + $0x18] sm:$0xf]
          %v439 = vld [vmem:[%s363 + $0x1c] sm:$0xf]
          %v440 = vld [vmem:[%s363 + $0x20] sm:$0xf]
          %v441 = vld [vmem:[%s363 + $0x24] sm:$0xf]
          %v442 = vld [vmem:[%s363 + $0x28] sm:$0xf]
          %v443 = vld [vmem:[%s363 + $0x2c] sm:$0xf]
          %v444 = vld [vmem:[%s363 + $0x30] sm:$0xf]
          %v445 = vld [vmem:[%s363 + $0x34] sm:$0xf]
          %v446 = vld [vmem:[%s363 + $0x38] sm:$0xf]
          %v447 = vld [vmem:[%s363 + $0x3c] sm:$0xf]
          %v448 = vld [vmem:[%s430] sm:$0x7]
          %s449 = scalar_lea.vmem %s363, 64 [#allocation8]
          %v450 = vld [vmem:[%s449] sm:$0xf]
          %v451 = vld [vmem:[%s449 + $0x4] sm:$0xf]
          %v452 = vld [vmem:[%s449 + $0x8] sm:$0xf]
          %v453 = vld [vmem:[%s449 + $0xc] sm:$0xf]
          %v454 = vld [vmem:[%s449 + $0x10] sm:$0xf]
          %v455 = vld [vmem:[%s449 + $0x14] sm:$0xf]
          %v456 = vld [vmem:[%s449 + $0x18] sm:$0xf]
          %v457 = vld [vmem:[%s449 + $0x1c] sm:$0xf]
          %v458 = vld [vmem:[%s449 + $0x20] sm:$0xf]
          %v459 = vld [vmem:[%s449 + $0x24] sm:$0xf]
          %v460 = vld [vmem:[%s449 + $0x28] sm:$0xf]
          %v461 = vld [vmem:[%s449 + $0x2c] sm:$0xf]
          %v462 = vld [vmem:[%s449 + $0x30] sm:$0xf]
          %v463 = vld [vmem:[%s449 + $0x34] sm:$0xf]
          %v464 = vld [vmem:[%s449 + $0x38] sm:$0xf]
          %v465 = vld [vmem:[%s449 + $0x3c] sm:$0xf]
          %v467 = vunpack.c.l.b16 %v448
          %v468 = vpack.c.b16 %v467, %v467
          %v470 = vshrl.u32 %v468, 16
          %v472 = vshll.u32 %v468, 16
          %v474 = vrot.slane %v472, 1
          %v475 = vor.u32 %v470, %v474
          %v493 = vunpack.c.l.b16 %v450
          %v494 = vunpack.c.l.b16 %v451
          %v495 = vunpack.c.l.b16 %v452
          %v496 = vunpack.c.l.b16 %v453
          %v497 = vunpack.c.l.b16 %v454
          %v498 = vunpack.c.l.b16 %v455
          %v499 = vunpack.c.l.b16 %v456
          %v500 = vunpack.c.l.b16 %v457
          %v501 = vunpack.c.l.b16 %v458
          %v502 = vunpack.c.l.b16 %v459
          %v503 = vunpack.c.l.b16 %v460
          %v504 = vunpack.c.l.b16 %v461
          %v505 = vunpack.c.l.b16 %v462
          %v506 = vunpack.c.l.b16 %v463
          %v507 = vunpack.c.l.b16 %v464
          %v508 = vunpack.c.l.b16 %v465
          %v509 = vpack.c.b16 %v494, %v493
          %v510 = vpack.c.b16 %v496, %v495
          %v511 = vpack.c.b16 %v498, %v497
          %v512 = vpack.c.b16 %v500, %v499
          %v513 = vpack.c.b16 %v502, %v501
          %v514 = vpack.c.b16 %v504, %v503
          %v515 = vpack.c.b16 %v506, %v505
          %v516 = vpack.c.b16 %v508, %v507
          %525 = vmatprep.subr.bf16.mxu0 0
          %526 = vmatpush1.bf16.msra.mxu0 %v509
          %527 = vmatprep.subr.bf16.mxu0 0
          %528 = vmatpush1.bf16.msra.mxu0 %v510
          %529 = vmatprep.subr.bf16.mxu0 0
          %530 = vmatpush1.bf16.msra.mxu0 %v511
          %531 = vmatprep.subr.bf16.mxu0 0
          %532 = vmatpush1.bf16.msra.mxu0 %v512
          %533 = vmatprep.subr.bf16.mxu0 0
          %534 = vmatpush1.bf16.msra.mxu0 %v513
          %535 = vmatprep.subr.bf16.mxu0 0
          %536 = vmatpush1.bf16.msra.mxu0 %v514
          %537 = vmatprep.subr.bf16.mxu0 0
          %538 = vmatpush1.bf16.msra.mxu0 %v515
          %539 = vmatprep.subr.bf16.mxu0 0
          %540 = vmatpush1.bf16.msra.mxu0 %v516
          %541 = vmatprep.subr.bf16.mxu0 0
          %542 = vmatpush1.bf16.msra.mxu0 0
          %543 = vmatprep.subr.bf16.mxu0 0
          %544 = vmatpush1.bf16.msra.mxu0 0
          %545 = vmatprep.subr.bf16.mxu0 0
          %546 = vmatpush1.bf16.msra.mxu0 0
          %547 = vmatprep.subr.bf16.mxu0 0
          %548 = vmatpush1.bf16.msra.mxu0 0
          %549 = vmatprep.subr.bf16.mxu0 0
          %550 = vmatpush1.bf16.msra.mxu0 0
          %551 = vmatprep.subr.bf16.mxu0 0
          %552 = vmatpush1.bf16.msra.mxu0 0
          %553 = vmatprep.subr.bf16.mxu0 0
          %554 = vmatpush1.bf16.msra.mxu0 0
          %555 = vmatprep.subr.bf16.mxu0 0
          %556 = vmatpush1.bf16.msra.mxu0 0
          %557 = vmatprep.mubr.bf16.mxu0 0
          %558 = vmatmul.mubr.bf16.gmra.mrb[0].mxu0 %v475
          %v559 = vpop.f32.mrb[0].mxu0
          %v560 = vadd.f32 0.0, %v559
          %v561 = vpop.f32.mrb[0].mxu0
          %v562 = vpop.f32.mrb[0].mxu0
          %v563 = vpop.f32.mrb[0].mxu0
          %564 = vdwg.mxu0
          %v581 = vunpack.c.l.b16 %v432
          %v582 = vunpack.c.l.b16 %v433
          %v583 = vunpack.c.l.b16 %v434
          %v584 = vunpack.c.l.b16 %v435
          %v585 = vunpack.c.l.b16 %v436
          %v586 = vunpack.c.l.b16 %v437
          %v587 = vunpack.c.l.b16 %v438
          %v588 = vunpack.c.l.b16 %v439
          %v589 = vunpack.c.l.b16 %v440
          %v590 = vunpack.c.l.b16 %v441
          %v591 = vunpack.c.l.b16 %v442
          %v592 = vunpack.c.l.b16 %v443
          %v593 = vunpack.c.l.b16 %v444
          %v594 = vunpack.c.l.b16 %v445
          %v595 = vunpack.c.l.b16 %v446
          %v596 = vunpack.c.l.b16 %v447
          %v597 = vpack.c.b16 %v582, %v581
          %v598 = vpack.c.b16 %v584, %v583
          %v599 = vpack.c.b16 %v586, %v585
          %v600 = vpack.c.b16 %v588, %v587
          %v601 = vpack.c.b16 %v590, %v589
          %v602 = vpack.c.b16 %v592, %v591
          %v603 = vpack.c.b16 %v594, %v593
          %v604 = vpack.c.b16 %v596, %v595
          %613 = vmatprep.subr.bf16.mxu0 0
          %614 = vmatpush1.bf16.msra.mxu0 %v597
          %615 = vmatprep.subr.bf16.mxu0 0
          %616 = vmatpush1.bf16.msra.mxu0 %v598
          %617 = vmatprep.subr.bf16.mxu0 0
          %618 = vmatpush1.bf16.msra.mxu0 %v599
          %619 = vmatprep.subr.bf16.mxu0 0
          %620 = vmatpush1.bf16.msra.mxu0 %v600
          %621 = vmatprep.subr.bf16.mxu0 0
          %622 = vmatpush1.bf16.msra.mxu0 %v601
          %623 = vmatprep.subr.bf16.mxu0 0
          %624 = vmatpush1.bf16.msra.mxu0 %v602
          %625 = vmatprep.subr.bf16.mxu0 0
          %626 = vmatpush1.bf16.msra.mxu0 %v603
          %627 = vmatprep.subr.bf16.mxu0 0
          %628 = vmatpush1.bf16.msra.mxu0 %v604
          %629 = vmatprep.subr.bf16.mxu0 0
          %630 = vmatpush1.bf16.msra.mxu0 0
          %631 = vmatprep.subr.bf16.mxu0 0
          %632 = vmatpush1.bf16.msra.mxu0 0
          %633 = vmatprep.subr.bf16.mxu0 0
          %634 = vmatpush1.bf16.msra.mxu0 0
          %635 = vmatprep.subr.bf16.mxu0 0
          %636 = vmatpush1.bf16.msra.mxu0 0
          %637 = vmatprep.subr.bf16.mxu0 0
          %638 = vmatpush1.bf16.msra.mxu0 0
          %639 = vmatprep.subr.bf16.mxu0 0
          %640 = vmatpush1.bf16.msra.mxu0 0
          %641 = vmatprep.subr.bf16.mxu0 0
          %642 = vmatpush1.bf16.msra.mxu0 0
          %643 = vmatprep.subr.bf16.mxu0 0
          %644 = vmatpush1.bf16.msra.mxu0 0
          %645 = vmatprep.mubr.bf16.mxu0 0
          %646 = vmatmul.mubr.bf16.gmra.mrb[0].mxu0 %v431
          %v647 = vpop.f32.mrb[0].mxu0
          %v648 = vadd.f32 %v560, %v647
          %v649 = vpop.f32.mrb[0].mxu0
          %v650 = vpop.f32.mrb[0].mxu0
          %v651 = vpop.f32.mrb[0].mxu0
          %652 = vdwg.mxu0
          %v653 = vld [vmem:[%s430] sm:$0x6]
          %s654 = scalar_lea.vmem %s363, 128 [#allocation8]
          %v655 = vld [vmem:[%s654] sm:$0xf]
          %v656 = vld [vmem:[%s654 + $0x4] sm:$0xf]
          %v657 = vld [vmem:[%s654 + $0x8] sm:$0xf]
          %v658 = vld [vmem:[%s654 + $0xc] sm:$0xf]
          %v659 = vld [vmem:[%s654 + $0x10] sm:$0xf]
          %v660 = vld [vmem:[%s654 + $0x14] sm:$0xf]
          %v661 = vld [vmem:[%s654 + $0x18] sm:$0xf]
          %v662 = vld [vmem:[%s654 + $0x1c] sm:$0xf]
          %v663 = vld [vmem:[%s654 + $0x20] sm:$0xf]
          %v664 = vld [vmem:[%s654 + $0x24] sm:$0xf]
          %v665 = vld [vmem:[%s654 + $0x28] sm:$0xf]
          %v666 = vld [vmem:[%s654 + $0x2c] sm:$0xf]
          %v667 = vld [vmem:[%s654 + $0x30] sm:$0xf]
          %v668 = vld [vmem:[%s654 + $0x34] sm:$0xf]
          %v669 = vld [vmem:[%s654 + $0x38] sm:$0xf]
          %v670 = vld [vmem:[%s654 + $0x3c] sm:$0xf]
          %v672 = vunpack.c.l.b16 %v653
          %v673 = vpack.c.b16 %v672, %v672
          %v674 = vrot.slane %v673, 1
          %v692 = vunpack.c.l.b16 %v655
          %v693 = vunpack.c.l.b16 %v656
          %v694 = vunpack.c.l.b16 %v657
          %v695 = vunpack.c.l.b16 %v658
          %v696 = vunpack.c.l.b16 %v659
          %v697 = vunpack.c.l.b16 %v660
          %v698 = vunpack.c.l.b16 %v661
          %v699 = vunpack.c.l.b16 %v662
          %v700 = vunpack.c.l.b16 %v663
          %v701 = vunpack.c.l.b16 %v664
          %v702 = vunpack.c.l.b16 %v665
          %v703 = vunpack.c.l.b16 %v666
          %v704 = vunpack.c.l.b16 %v667
          %v705 = vunpack.c.l.b16 %v668
          %v706 = vunpack.c.l.b16 %v669
          %v707 = vunpack.c.l.b16 %v670
          %v708 = vpack.c.b16 %v693, %v692
          %v709 = vpack.c.b16 %v695, %v694
          %v710 = vpack.c.b16 %v697, %v696
          %v711 = vpack.c.b16 %v699, %v698
          %v712 = vpack.c.b16 %v701, %v700
          %v713 = vpack.c.b16 %v703, %v702
          %v714 = vpack.c.b16 %v705, %v704
          %v715 = vpack.c.b16 %v707, %v706
          %724 = vmatprep.subr.bf16.mxu0 0
          %725 = vmatpush1.bf16.msra.mxu0 %v708
          %726 = vmatprep.subr.bf16.mxu0 0
          %727 = vmatpush1.bf16.msra.mxu0 %v709
          %728 = vmatprep.subr.bf16.mxu0 0
          %729 = vmatpush1.bf16.msra.mxu0 %v710
          %730 = vmatprep.subr.bf16.mxu0 0
          %731 = vmatpush1.bf16.msra.mxu0 %v711
          %732 = vmatprep.subr.bf16.mxu0 0
          %733 = vmatpush1.bf16.msra.mxu0 %v712
          %734 = vmatprep.subr.bf16.mxu0 0
          %735 = vmatpush1.bf16.msra.mxu0 %v713
          %736 = vmatprep.subr.bf16.mxu0 0
          %737 = vmatpush1.bf16.msra.mxu0 %v714
          %738 = vmatprep.subr.bf16.mxu0 0
          %739 = vmatpush1.bf16.msra.mxu0 %v715
          %740 = vmatprep.subr.bf16.mxu0 0
          %741 = vmatpush1.bf16.msra.mxu0 0
          %742 = vmatprep.subr.bf16.mxu0 0
          %743 = vmatpush1.bf16.msra.mxu0 0
          %744 = vmatprep.subr.bf16.mxu0 0
          %745 = vmatpush1.bf16.msra.mxu0 0
          %746 = vmatprep.subr.bf16.mxu0 0
          %747 = vmatpush1.bf16.msra.mxu0 0
          %748 = vmatprep.subr.bf16.mxu0 0
          %749 = vmatpush1.bf16.msra.mxu0 0
          %750 = vmatprep.subr.bf16.mxu0 0
          %751 = vmatpush1.bf16.msra.mxu0 0
          %752 = vmatprep.subr.bf16.mxu0 0
          %753 = vmatpush1.bf16.msra.mxu0 0
          %754 = vmatprep.subr.bf16.mxu0 0
          %755 = vmatpush1.bf16.msra.mxu0 0
          %756 = vmatprep.mubr.bf16.mxu0 0
          %757 = vmatmul.mubr.bf16.gmra.mrb[0].mxu0 %v674
          %v758 = vpop.f32.mrb[0].mxu0
          %v759 = vadd.f32 0.0, %v758
          %v760 = vpop.f32.mrb[0].mxu0
          %v761 = vpop.f32.mrb[0].mxu0
          %v762 = vpop.f32.mrb[0].mxu0
          %763 = vdwg.mxu0
          %v764 = vadd.f32 %v648, %v759
          %s765 = smul.addr %s424, 4
          %s766 = scalar_lea.vmem [#allocation5], %s765
          %v767 = vld [vmem:[%s766] sm:$0x3]
          %s768 = scalar_lea.vmem %s363, 192 [#allocation8]
          %v769 = vld [vmem:[%s768] sm:$0xf]
          %v770 = vld [vmem:[%s768 + $0x4] sm:$0xf]
          %v771 = vld [vmem:[%s768 + $0x8] sm:$0xf]
          %v772 = vld [vmem:[%s768 + $0xc] sm:$0xf]
          %v773 = vld [vmem:[%s768 + $0x10] sm:$0xf]
          %v774 = vld [vmem:[%s768 + $0x14] sm:$0xf]
          %v775 = vld [vmem:[%s768 + $0x18] sm:$0xf]
          %v776 = vld [vmem:[%s768 + $0x1c] sm:$0xf]
          %v777 = vld [vmem:[%s768 + $0x20] sm:$0xf]
          %v778 = vld [vmem:[%s768 + $0x24] sm:$0xf]
          %v779 = vld [vmem:[%s768 + $0x28] sm:$0xf]
          %v780 = vld [vmem:[%s768 + $0x2c] sm:$0xf]
          %v781 = vld [vmem:[%s768 + $0x30] sm:$0xf]
          %v782 = vld [vmem:[%s768 + $0x34] sm:$0xf]
          %v783 = vld [vmem:[%s768 + $0x38] sm:$0xf]
          %v784 = vld [vmem:[%s768 + $0x3c] sm:$0xf]
          %v801 = vunpack.c.l.b16 %v769
          %v802 = vunpack.c.l.b16 %v770
          %v803 = vunpack.c.l.b16 %v771
          %v804 = vunpack.c.l.b16 %v772
          %v805 = vunpack.c.l.b16 %v773
          %v806 = vunpack.c.l.b16 %v774
          %v807 = vunpack.c.l.b16 %v775
          %v808 = vunpack.c.l.b16 %v776
          %v809 = vunpack.c.l.b16 %v777
          %v810 = vunpack.c.l.b16 %v778
          %v811 = vunpack.c.l.b16 %v779
          %v812 = vunpack.c.l.b16 %v780
          %v813 = vunpack.c.l.b16 %v781
          %v814 = vunpack.c.l.b16 %v782
          %v815 = vunpack.c.l.b16 %v783
          %v816 = vunpack.c.l.b16 %v784
          %v817 = vpack.c.b16 %v802, %v801
          %v818 = vpack.c.b16 %v804, %v803
          %v819 = vpack.c.b16 %v806, %v805
          %v820 = vpack.c.b16 %v808, %v807
          %v821 = vpack.c.b16 %v810, %v809
          %v822 = vpack.c.b16 %v812, %v811
          %v823 = vpack.c.b16 %v814, %v813
          %v824 = vpack.c.b16 %v816, %v815
          %833 = vmatprep.subr.bf16.mxu0 0
          %834 = vmatpush1.bf16.msra.mxu0 %v817
          %835 = vmatprep.subr.bf16.mxu0 0
          %836 = vmatpush1.bf16.msra.mxu0 %v818
          %837 = vmatprep.subr.bf16.mxu0 0
          %838 = vmatpush1.bf16.msra.mxu0 %v819
          %839 = vmatprep.subr.bf16.mxu0 0
          %840 = vmatpush1.bf16.msra.mxu0 %v820
          %841 = vmatprep.subr.bf16.mxu0 0
          %842 = vmatpush1.bf16.msra.mxu0 %v821
          %843 = vmatprep.subr.bf16.mxu0 0
          %844 = vmatpush1.bf16.msra.mxu0 %v822
          %845 = vmatprep.subr.bf16.mxu0 0
          %846 = vmatpush1.bf16.msra.mxu0 %v823
          %847 = vmatprep.subr.bf16.mxu0 0
          %848 = vmatpush1.bf16.msra.mxu0 %v824
          %849 = vmatprep.subr.bf16.mxu0 0
          %850 = vmatpush1.bf16.msra.mxu0 0
          %851 = vmatprep.subr.bf16.mxu0 0
          %852 = vmatpush1.bf16.msra.mxu0 0
          %853 = vmatprep.subr.bf16.mxu0 0
          %854 = vmatpush1.bf16.msra.mxu0 0
          %855 = vmatprep.subr.bf16.mxu0 0
          %856 = vmatpush1.bf16.msra.mxu0 0
          %857 = vmatprep.subr.bf16.mxu0 0
          %858 = vmatpush1.bf16.msra.mxu0 0
          %859 = vmatprep.subr.bf16.mxu0 0
          %860 = vmatpush1.bf16.msra.mxu0 0
          %861 = vmatprep.subr.bf16.mxu0 0
          %862 = vmatpush1.bf16.msra.mxu0 0
          %863 = vmatprep.subr.bf16.mxu0 0
          %864 = vmatpush1.bf16.msra.mxu0 0
          %865 = vmatprep.mubr.bf16.mxu0 0
          %866 = vmatmul.mubr.bf16.gmra.mrb[0].mxu0 %v767
          %v867 = vpop.f32.mrb[0].mxu0
          %v868 = vadd.f32 0.0, %v867
          %v869 = vpop.f32.mrb[0].mxu0
          %v870 = vpop.f32.mrb[0].mxu0
          %v871 = vpop.f32.mrb[0].mxu0
          %872 = vdwg.mxu0
          %v873 = vadd.f32 %v764, %v868
          %v874 = vld [vmem:[%s766] sm:$0x7]
          %s875 = scalar_lea.vmem %s363, 256 [#allocation8]
          %v876 = vld [vmem:[%s875] sm:$0xf]
          %v877 = vld [vmem:[%s875 + $0x4] sm:$0xf]
          %v878 = vld [vmem:[%s875 + $0x8] sm:$0xf]
          %v879 = vld [vmem:[%s875 + $0xc] sm:$0xf]
          %v880 = vld [vmem:[%s875 + $0x10] sm:$0xf]
          %v881 = vld [vmem:[%s875 + $0x14] sm:$0xf]
          %v882 = vld [vmem:[%s875 + $0x18] sm:$0xf]
          %v883 = vld [vmem:[%s875 + $0x1c] sm:$0xf]
          %v884 = vld [vmem:[%s875 + $0x20] sm:$0xf]
          %v885 = vld [vmem:[%s875 + $0x24] sm:$0xf]
          %v886 = vld [vmem:[%s875 + $0x28] sm:$0xf]
          %v887 = vld [vmem:[%s875 + $0x2c] sm:$0xf]
          %v888 = vld [vmem:[%s875 + $0x30] sm:$0xf]
          %v889 = vld [vmem:[%s875 + $0x34] sm:$0xf]
          %v890 = vld [vmem:[%s875 + $0x38] sm:$0xf]
          %v891 = vld [vmem:[%s875 + $0x3c] sm:$0xf]
          %v893 = vunpack.c.l.b16 %v874
          %v894 = vpack.c.b16 %v893, %v893
          %v896 = vshrl.u32 %v894, 16
          %v898 = vshll.u32 %v894, 16
          %v900 = vrot.slane %v898, 1
          %v901 = vor.u32 %v896, %v900
          %v919 = vunpack.c.l.b16 %v876
          %v920 = vunpack.c.l.b16 %v877
          %v921 = vunpack.c.l.b16 %v878
          %v922 = vunpack.c.l.b16 %v879
          %v923 = vunpack.c.l.b16 %v880
          %v924 = vunpack.c.l.b16 %v881
          %v925 = vunpack.c.l.b16 %v882
          %v926 = vunpack.c.l.b16 %v883
          %v927 = vunpack.c.l.b16 %v884
          %v928 = vunpack.c.l.b16 %v885
          %v929 = vunpack.c.l.b16 %v886
          %v930 = vunpack.c.l.b16 %v887
          %v931 = vunpack.c.l.b16 %v888
          %v932 = vunpack.c.l.b16 %v889
          %v933 = vunpack.c.l.b16 %v890
          %v934 = vunpack.c.l.b16 %v891
          %v935 = vpack.c.b16 %v920, %v919
          %v936 = vpack.c.b16 %v922, %v921
          %v937 = vpack.c.b16 %v924, %v923
          %v938 = vpack.c.b16 %v926, %v925
          %v939 = vpack.c.b16 %v928, %v927
          %v940 = vpack.c.b16 %v930, %v929
          %v941 = vpack.c.b16 %v932, %v931
          %v942 = vpack.c.b16 %v934, %v933
          %951 = vmatprep.subr.bf16.mxu0 0
          %952 = vmatpush1.bf16.msra.mxu0 %v935
          %953 = vmatprep.subr.bf16.mxu0 0
          %954 = vmatpush1.bf16.msra.mxu0 %v936
          %955 = vmatprep.subr.bf16.mxu0 0
          %956 = vmatpush1.bf16.msra.mxu0 %v937
          %957 = vmatprep.subr.bf16.mxu0 0
          %958 = vmatpush1.bf16.msra.mxu0 %v938
          %959 = vmatprep.subr.bf16.mxu0 0
          %960 = vmatpush1.bf16.msra.mxu0 %v939
          %961 = vmatprep.subr.bf16.mxu0 0
          %962 = vmatpush1.bf16.msra.mxu0 %v940
          %963 = vmatprep.subr.bf16.mxu0 0
          %964 = vmatpush1.bf16.msra.mxu0 %v941
          %965 = vmatprep.subr.bf16.mxu0 0
          %966 = vmatpush1.bf16.msra.mxu0 %v942
          %967 = vmatprep.subr.bf16.mxu0 0
          %968 = vmatpush1.bf16.msra.mxu0 0
          %969 = vmatprep.subr.bf16.mxu0 0
          %970 = vmatpush1.bf16.msra.mxu0 0
          %971 = vmatprep.subr.bf16.mxu0 0
          %972 = vmatpush1.bf16.msra.mxu0 0
          %973 = vmatprep.subr.bf16.mxu0 0
          %974 = vmatpush1.bf16.msra.mxu0 0
          %975 = vmatprep.subr.bf16.mxu0 0
          %976 = vmatpush1.bf16.msra.mxu0 0
          %977 = vmatprep.subr.bf16.mxu0 0
          %978 = vmatpush1.bf16.msra.mxu0 0
          %979 = vmatprep.subr.bf16.mxu0 0
          %980 = vmatpush1.bf16.msra.mxu0 0
          %981 = vmatprep.subr.bf16.mxu0 0
          %982 = vmatpush1.bf16.msra.mxu0 0
          %983 = vmatprep.mubr.bf16.mxu0 0
          %984 = vmatmul.mubr.bf16.gmra.mrb[0].mxu0 %v901
          %v985 = vpop.f32.mrb[0].mxu0
          %v986 = vadd.f32 0.0, %v985
          %v987 = vpop.f32.mrb[0].mxu0
          %v988 = vpop.f32.mrb[0].mxu0
          %v989 = vpop.f32.mrb[0].mxu0
          %990 = vdwg.mxu0
          %v991 = vadd.f32 %v873, %v986
          %v992 = vld [vmem:[%s766] sm:$0x6]
          %s993 = scalar_lea.vmem %s363, 320 [#allocation8]
          %v994 = vld [vmem:[%s993] sm:$0xf]
          %v995 = vld [vmem:[%s993 + $0x4] sm:$0xf]
          %v996 = vld [vmem:[%s993 + $0x8] sm:$0xf]
          %v997 = vld [vmem:[%s993 + $0xc] sm:$0xf]
          %v998 = vld [vmem:[%s993 + $0x10] sm:$0xf]
          %v999 = vld [vmem:[%s993 + $0x14] sm:$0xf]
          %v1000 = vld [vmem:[%s993 + $0x18] sm:$0xf]
          %v1001 = vld [vmem:[%s993 + $0x1c] sm:$0xf]
          %v1002 = vld [vmem:[%s993 + $0x20] sm:$0xf]
          %v1003 = vld [vmem:[%s993 + $0x24] sm:$0xf]
          %v1004 = vld [vmem:[%s993 + $0x28] sm:$0xf]
          %v1005 = vld [vmem:[%s993 + $0x2c] sm:$0xf]
          %v1006 = vld [vmem:[%s993 + $0x30] sm:$0xf]
          %v1007 = vld [vmem:[%s993 + $0x34] sm:$0xf]
          %v1008 = vld [vmem:[%s993 + $0x38] sm:$0xf]
          %v1009 = vld [vmem:[%s993 + $0x3c] sm:$0xf]
          %v1011 = vunpack.c.l.b16 %v992
          %v1012 = vpack.c.b16 %v1011, %v1011
          %v1013 = vrot.slane %v1012, 1
          %v1031 = vunpack.c.l.b16 %v994
          %v1032 = vunpack.c.l.b16 %v995
          %v1033 = vunpack.c.l.b16 %v996
          %v1034 = vunpack.c.l.b16 %v997
          %v1035 = vunpack.c.l.b16 %v998
          %v1036 = vunpack.c.l.b16 %v999
          %v1037 = vunpack.c.l.b16 %v1000
          %v1038 = vunpack.c.l.b16 %v1001
          %v1039 = vunpack.c.l.b16 %v1002
          %v1040 = vunpack.c.l.b16 %v1003
          %v1041 = vunpack.c.l.b16 %v1004
          %v1042 = vunpack.c.l.b16 %v1005
          %v1043 = vunpack.c.l.b16 %v1006
          %v1044 = vunpack.c.l.b16 %v1007
          %v1045 = vunpack.c.l.b16 %v1008
          %v1046 = vunpack.c.l.b16 %v1009
          %v1047 = vpack.c.b16 %v1032, %v1031
          %v1048 = vpack.c.b16 %v1034, %v1033
          %v1049 = vpack.c.b16 %v1036, %v1035
          %v1050 = vpack.c.b16 %v1038, %v1037
          %v1051 = vpack.c.b16 %v1040, %v1039
          %v1052 = vpack.c.b16 %v1042, %v1041
          %v1053 = vpack.c.b16 %v1044, %v1043
          %v1054 = vpack.c.b16 %v1046, %v1045
          %1063 = vmatprep.subr.bf16.mxu0 0
          %1064 = vmatpush1.bf16.msra.mxu0 %v1047
          %1065 = vmatprep.subr.bf16.mxu0 0
          %1066 = vmatpush1.bf16.msra.mxu0 %v1048
          %1067 = vmatprep.subr.bf16.mxu0 0
          %1068 = vmatpush1.bf16.msra.mxu0 %v1049
          %1069 = vmatprep.subr.bf16.mxu0 0
          %1070 = vmatpush1.bf16.msra.mxu0 %v1050
          %1071 = vmatprep.subr.bf16.mxu0 0
          %1072 = vmatpush1.bf16.msra.mxu0 %v1051
          %1073 = vmatprep.subr.bf16.mxu0 0
          %1074 = vmatpush1.bf16.msra.mxu0 %v1052
          %1075 = vmatprep.subr.bf16.mxu0 0
          %1076 = vmatpush1.bf16.msra.mxu0 %v1053
          %1077 = vmatprep.subr.bf16.mxu0 0
          %1078 = vmatpush1.bf16.msra.mxu0 %v1054
          %1079 = vmatprep.subr.bf16.mxu0 0
          %1080 = vmatpush1.bf16.msra.mxu0 0
          %1081 = vmatprep.subr.bf16.mxu0 0
          %1082 = vmatpush1.bf16.msra.mxu0 0
          %1083 = vmatprep.subr.bf16.mxu0 0
          %1084 = vmatpush1.bf16.msra.mxu0 0
          %1085 = vmatprep.subr.bf16.mxu0 0
          %1086 = vmatpush1.bf16.msra.mxu0 0
          %1087 = vmatprep.subr.bf16.mxu0 0
          %1088 = vmatpush1.bf16.msra.mxu0 0
          %1089 = vmatprep.subr.bf16.mxu0 0
          %1090 = vmatpush1.bf16.msra.mxu0 0
          %1091 = vmatprep.subr.bf16.mxu0 0
          %1092 = vmatpush1.bf16.msra.mxu0 0
          %1093 = vmatprep.subr.bf16.mxu0 0
          %1094 = vmatpush1.bf16.msra.mxu0 0
          %1095 = vmatprep.mubr.bf16.mxu0 0
          %1096 = vmatmul.mubr.bf16.gmra.mrb[0].mxu0 %v1013
          %v1097 = vpop.f32.mrb[0].mxu0
          %v1098 = vadd.f32 0.0, %v1097
          %v1099 = vpop.f32.mrb[0].mxu0
          %v1100 = vpop.f32.mrb[0].mxu0
          %v1101 = vpop.f32.mrb[0].mxu0
          %1102 = vdwg.mxu0
          %v1103 = vadd.f32 %v991, %v1098
          %s1104 = smul.addr %s424, 4
          %s1105 = scalar_lea.vmem [#allocation7], %s1104
          %v1106 = vld [vmem:[%s1105] sm:$0x3]
          %s1107 = scalar_lea.vmem %s363, 384 [#allocation8]
          %v1108 = vld [vmem:[%s1107] sm:$0xf]
          %v1109 = vld [vmem:[%s1107 + $0x4] sm:$0xf]
          %v1110 = vld [vmem:[%s1107 + $0x8] sm:$0xf]
          %v1111 = vld [vmem:[%s1107 + $0xc] sm:$0xf]
          %v1112 = vld [vmem:[%s1107 + $0x10] sm:$0xf]
          %v1113 = vld [vmem:[%s1107 + $0x14] sm:$0xf]
          %v1114 = vld [vmem:[%s1107 + $0x18] sm:$0xf]
          %v1115 = vld [vmem:[%s1107 + $0x1c] sm:$0xf]
          %v1116 = vld [vmem:[%s1107 + $0x20] sm:$0xf]
          %v1117 = vld [vmem:[%s1107 + $0x24] sm:$0xf]
          %v1118 = vld [vmem:[%s1107 + $0x28] sm:$0xf]
          %v1119 = vld [vmem:[%s1107 + $0x2c] sm:$0xf]
          %v1120 = vld [vmem:[%s1107 + $0x30] sm:$0xf]
          %v1121 = vld [vmem:[%s1107 + $0x34] sm:$0xf]
          %v1122 = vld [vmem:[%s1107 + $0x38] sm:$0xf]
          %v1123 = vld [vmem:[%s1107 + $0x3c] sm:$0xf]
          %v1140 = vunpack.c.l.b16 %v1108
          %v1141 = vunpack.c.l.b16 %v1109
          %v1142 = vunpack.c.l.b16 %v1110
          %v1143 = vunpack.c.l.b16 %v1111
          %v1144 = vunpack.c.l.b16 %v1112
          %v1145 = vunpack.c.l.b16 %v1113
          %v1146 = vunpack.c.l.b16 %v1114
          %v1147 = vunpack.c.l.b16 %v1115
          %v1148 = vunpack.c.l.b16 %v1116
          %v1149 = vunpack.c.l.b16 %v1117
          %v1150 = vunpack.c.l.b16 %v1118
          %v1151 = vunpack.c.l.b16 %v1119
          %v1152 = vunpack.c.l.b16 %v1120
          %v1153 = vunpack.c.l.b16 %v1121
          %v1154 = vunpack.c.l.b16 %v1122
          %v1155 = vunpack.c.l.b16 %v1123
          %v1156 = vpack.c.b16 %v1141, %v1140
          %v1157 = vpack.c.b16 %v1143, %v1142
          %v1158 = vpack.c.b16 %v1145, %v1144
          %v1159 = vpack.c.b16 %v1147, %v1146
          %v1160 = vpack.c.b16 %v1149, %v1148
          %v1161 = vpack.c.b16 %v1151, %v1150
          %v1162 = vpack.c.b16 %v1153, %v1152
          %v1163 = vpack.c.b16 %v1155, %v1154
          %1172 = vmatprep.subr.bf16.mxu0 0
          %1173 = vmatpush1.bf16.msra.mxu0 %v1156
          %1174 = vmatprep.subr.bf16.mxu0 0
          %1175 = vmatpush1.bf16.msra.mxu0 %v1157
          %1176 = vmatprep.subr.bf16.mxu0 0
          %1177 = vmatpush1.bf16.msra.mxu0 %v1158
          %1178 = vmatprep.subr.bf16.mxu0 0
          %1179 = vmatpush1.bf16.msra.mxu0 %v1159
          %1180 = vmatprep.subr.bf16.mxu0 0
          %1181 = vmatpush1.bf16.msra.mxu0 %v1160
          %1182 = vmatprep.subr.bf16.mxu0 0
          %1183 = vmatpush1.bf16.msra.mxu0 %v1161
          %1184 = vmatprep.subr.bf16.mxu0 0
          %1185 = vmatpush1.bf16.msra.mxu0 %v1162
          %1186 = vmatprep.subr.bf16.mxu0 0
          %1187 = vmatpush1.bf16.msra.mxu0 %v1163
          %1188 = vmatprep.subr.bf16.mxu0 0
          %1189 = vmatpush1.bf16.msra.mxu0 0
          %1190 = vmatprep.subr.bf16.mxu0 0
          %1191 = vmatpush1.bf16.msra.mxu0 0
          %1192 = vmatprep.subr.bf16.mxu0 0
          %1193 = vmatpush1.bf16.msra.mxu0 0
          %1194 = vmatprep.subr.bf16.mxu0 0
          %1195 = vmatpush1.bf16.msra.mxu0 0
          %1196 = vmatprep.subr.bf16.mxu0 0
          %1197 = vmatpush1.bf16.msra.mxu0 0
          %1198 = vmatprep.subr.bf16.mxu0 0
          %1199 = vmatpush1.bf16.msra.mxu0 0
          %1200 = vmatprep.subr.bf16.mxu0 0
          %1201 = vmatpush1.bf16.msra.mxu0 0
          %1202 = vmatprep.subr.bf16.mxu0 0
          %1203 = vmatpush1.bf16.msra.mxu0 0
          %1204 = vmatprep.mubr.bf16.mxu0 0
          %1205 = vmatmul.mubr.bf16.gmra.mrb[0].mxu0 %v1106
          %v1206 = vpop.f32.mrb[0].mxu0
          %v1207 = vadd.f32 0.0, %v1206
          %v1208 = vpop.f32.mrb[0].mxu0
          %v1209 = vpop.f32.mrb[0].mxu0
          %v1210 = vpop.f32.mrb[0].mxu0
          %1211 = vdwg.mxu0
          %v1212 = vadd.f32 %v1103, %v1207
          %v1213 = vld [vmem:[%s1105] sm:$0x7]
          %s1214 = scalar_lea.vmem %s363, 448 [#allocation8]
          %v1215 = vld [vmem:[%s1214] sm:$0xf]
          %v1216 = vld [vmem:[%s1214 + $0x4] sm:$0xf]
          %v1217 = vld [vmem:[%s1214 + $0x8] sm:$0xf]
          %v1218 = vld [vmem:[%s1214 + $0xc] sm:$0xf]
          %v1219 = vld [vmem:[%s1214 + $0x10] sm:$0xf]
          %v1220 = vld [vmem:[%s1214 + $0x14] sm:$0xf]
          %v1221 = vld [vmem:[%s1214 + $0x18] sm:$0xf]
          %v1222 = vld [vmem:[%s1214 + $0x1c] sm:$0xf]
          %v1223 = vld [vmem:[%s1214 + $0x20] sm:$0xf]
          %v1224 = vld [vmem:[%s1214 + $0x24] sm:$0xf]
          %v1225 = vld [vmem:[%s1214 + $0x28] sm:$0xf]
          %v1226 = vld [vmem:[%s1214 + $0x2c] sm:$0xf]
          %v1227 = vld [vmem:[%s1214 + $0x30] sm:$0xf]
          %v1228 = vld [vmem:[%s1214 + $0x34] sm:$0xf]
          %v1229 = vld [vmem:[%s1214 + $0x38] sm:$0xf]
          %v1230 = vld [vmem:[%s1214 + $0x3c] sm:$0xf]
          %v1232 = vunpack.c.l.b16 %v1213
          %v1233 = vpack.c.b16 %v1232, %v1232
          %v1235 = vshrl.u32 %v1233, 16
          %v1237 = vshll.u32 %v1233, 16
          %v1239 = vrot.slane %v1237, 1
          %v1240 = vor.u32 %v1235, %v1239
          %v1258 = vunpack.c.l.b16 %v1215
          %v1259 = vunpack.c.l.b16 %v1216
          %v1260 = vunpack.c.l.b16 %v1217
          %v1261 = vunpack.c.l.b16 %v1218
          %v1262 = vunpack.c.l.b16 %v1219
          %v1263 = vunpack.c.l.b16 %v1220
          %v1264 = vunpack.c.l.b16 %v1221
          %v1265 = vunpack.c.l.b16 %v1222
          %v1266 = vunpack.c.l.b16 %v1223
          %v1267 = vunpack.c.l.b16 %v1224
          %v1268 = vunpack.c.l.b16 %v1225
          %v1269 = vunpack.c.l.b16 %v1226
          %v1270 = vunpack.c.l.b16 %v1227
          %v1271 = vunpack.c.l.b16 %v1228
          %v1272 = vunpack.c.l.b16 %v1229
          %v1273 = vunpack.c.l.b16 %v1230
          %v1274 = vpack.c.b16 %v1259, %v1258
          %v1275 = vpack.c.b16 %v1261, %v1260
          %v1276 = vpack.c.b16 %v1263, %v1262
          %v1277 = vpack.c.b16 %v1265, %v1264
          %v1278 = vpack.c.b16 %v1267, %v1266
          %v1279 = vpack.c.b16 %v1269, %v1268
          %v1280 = vpack.c.b16 %v1271, %v1270
          %v1281 = vpack.c.b16 %v1273, %v1272
          %1290 = vmatprep.subr.bf16.mxu0 0
          %1291 = vmatpush1.bf16.msra.mxu0 %v1274
          %1292 = vmatprep.subr.bf16.mxu0 0
          %1293 = vmatpush1.bf16.msra.mxu0 %v1275
          %1294 = vmatprep.subr.bf16.mxu0 0
          %1295 = vmatpush1.bf16.msra.mxu0 %v1276
          %1296 = vmatprep.subr.bf16.mxu0 0
          %1297 = vmatpush1.bf16.msra.mxu0 %v1277
          %1298 = vmatprep.subr.bf16.mxu0 0
          %1299 = vmatpush1.bf16.msra.mxu0 %v1278
          %1300 = vmatprep.subr.bf16.mxu0 0
          %1301 = vmatpush1.bf16.msra.mxu0 %v1279
          %1302 = vmatprep.subr.bf16.mxu0 0
          %1303 = vmatpush1.bf16.msra.mxu0 %v1280
          %1304 = vmatprep.subr.bf16.mxu0 0
          %1305 = vmatpush1.bf16.msra.mxu0 %v1281
          %1306 = vmatprep.subr.bf16.mxu0 0
          %1307 = vmatpush1.bf16.msra.mxu0 0
          %1308 = vmatprep.subr.bf16.mxu0 0
          %1309 = vmatpush1.bf16.msra.mxu0 0
          %1310 = vmatprep.subr.bf16.mxu0 0
          %1311 = vmatpush1.bf16.msra.mxu0 0
          %1312 = vmatprep.subr.bf16.mxu0 0
          %1313 = vmatpush1.bf16.msra.mxu0 0
          %1314 = vmatprep.subr.bf16.mxu0 0
          %1315 = vmatpush1.bf16.msra.mxu0 0
          %1316 = vmatprep.subr.bf16.mxu0 0
          %1317 = vmatpush1.bf16.msra.mxu0 0
          %1318 = vmatprep.subr.bf16.mxu0 0
          %1319 = vmatpush1.bf16.msra.mxu0 0
          %1320 = vmatprep.subr.bf16.mxu0 0
          %1321 = vmatpush1.bf16.msra.mxu0 0
          %1322 = vmatprep.mubr.bf16.mxu0 0
          %1323 = vmatmul.mubr.bf16.gmra.mrb[0].mxu0 %v1240
          %v1324 = vpop.f32.mrb[0].mxu0
          %v1325 = vadd.f32 0.0, %v1324
          %v1326 = vpop.f32.mrb[0].mxu0
          %v1327 = vpop.f32.mrb[0].mxu0
          %v1328 = vpop.f32.mrb[0].mxu0
          %1329 = vdwg.mxu0
          %v1330 = vadd.f32 %v1212, %v1325
          %v1331 = vld [vmem:[%s1105] sm:$0x6]
          %s1332 = scalar_lea.vmem %s363, 512 [#allocation8]
          %v1333 = vld [vmem:[%s1332] sm:$0xf]
          %v1334 = vld [vmem:[%s1332 + $0x4] sm:$0xf]
          %v1335 = vld [vmem:[%s1332 + $0x8] sm:$0xf]
          %v1336 = vld [vmem:[%s1332 + $0xc] sm:$0xf]
          %v1337 = vld [vmem:[%s1332 + $0x10] sm:$0xf]
          %v1338 = vld [vmem:[%s1332 + $0x14] sm:$0xf]
          %v1339 = vld [vmem:[%s1332 + $0x18] sm:$0xf]
          %v1340 = vld [vmem:[%s1332 + $0x1c] sm:$0xf]
          %v1341 = vld [vmem:[%s1332 + $0x20] sm:$0xf]
          %v1342 = vld [vmem:[%s1332 + $0x24] sm:$0xf]
          %v1343 = vld [vmem:[%s1332 + $0x28] sm:$0xf]
          %v1344 = vld [vmem:[%s1332 + $0x2c] sm:$0xf]
          %v1345 = vld [vmem:[%s1332 + $0x30] sm:$0xf]
          %v1346 = vld [vmem:[%s1332 + $0x34] sm:$0xf]
          %v1347 = vld [vmem:[%s1332 + $0x38] sm:$0xf]
          %v1348 = vld [vmem:[%s1332 + $0x3c] sm:$0xf]
          %v1350 = vunpack.c.l.b16 %v1331
          %v1351 = vpack.c.b16 %v1350, %v1350
          %v1352 = vrot.slane %v1351, 1
          %v1370 = vunpack.c.l.b16 %v1333
          %v1371 = vunpack.c.l.b16 %v1334
          %v1372 = vunpack.c.l.b16 %v1335
          %v1373 = vunpack.c.l.b16 %v1336
          %v1374 = vunpack.c.l.b16 %v1337
          %v1375 = vunpack.c.l.b16 %v1338
          %v1376 = vunpack.c.l.b16 %v1339
          %v1377 = vunpack.c.l.b16 %v1340
          %v1378 = vunpack.c.l.b16 %v1341
          %v1379 = vunpack.c.l.b16 %v1342
          %v1380 = vunpack.c.l.b16 %v1343
          %v1381 = vunpack.c.l.b16 %v1344
          %v1382 = vunpack.c.l.b16 %v1345
          %v1383 = vunpack.c.l.b16 %v1346
          %v1384 = vunpack.c.l.b16 %v1347
          %v1385 = vunpack.c.l.b16 %v1348
          %v1386 = vpack.c.b16 %v1371, %v1370
          %v1387 = vpack.c.b16 %v1373, %v1372
          %v1388 = vpack.c.b16 %v1375, %v1374
          %v1389 = vpack.c.b16 %v1377, %v1376
          %v1390 = vpack.c.b16 %v1379, %v1378
          %v1391 = vpack.c.b16 %v1381, %v1380
          %v1392 = vpack.c.b16 %v1383, %v1382
          %v1393 = vpack.c.b16 %v1385, %v1384
          %1402 = vmatprep.subr.bf16.mxu0 0
          %1403 = vmatpush1.bf16.msra.mxu0 %v1386
          %1404 = vmatprep.subr.bf16.mxu0 0
          %1405 = vmatpush1.bf16.msra.mxu0 %v1387
          %1406 = vmatprep.subr.bf16.mxu0 0
          %1407 = vmatpush1.bf16.msra.mxu0 %v1388
          %1408 = vmatprep.subr.bf16.mxu0 0
          %1409 = vmatpush1.bf16.msra.mxu0 %v1389
          %1410 = vmatprep.subr.bf16.mxu0 0
          %1411 = vmatpush1.bf16.msra.mxu0 %v1390
          %1412 = vmatprep.subr.bf16.mxu0 0
          %1413 = vmatpush1.bf16.msra.mxu0 %v1391
          %1414 = vmatprep.subr.bf16.mxu0 0
          %1415 = vmatpush1.bf16.msra.mxu0 %v1392
          %1416 = vmatprep.subr.bf16.mxu0 0
          %1417 = vmatpush1.bf16.msra.mxu0 %v1393
          %1418 = vmatprep.subr.bf16.mxu0 0
          %1419 = vmatpush1.bf16.msra.mxu0 0
          %1420 = vmatprep.subr.bf16.mxu0 0
          %1421 = vmatpush1.bf16.msra.mxu0 0
          %1422 = vmatprep.subr.bf16.mxu0 0
          %1423 = vmatpush1.bf16.msra.mxu0 0
          %1424 = vmatprep.subr.bf16.mxu0 0
          %1425 = vmatpush1.bf16.msra.mxu0 0
          %1426 = vmatprep.subr.bf16.mxu0 0
          %1427 = vmatpush1.bf16.msra.mxu0 0
          %1428 = vmatprep.subr.bf16.mxu0 0
          %1429 = vmatpush1.bf16.msra.mxu0 0
          %1430 = vmatprep.subr.bf16.mxu0 0
          %1431 = vmatpush1.bf16.msra.mxu0 0
          %1432 = vmatprep.subr.bf16.mxu0 0
          %1433 = vmatpush1.bf16.msra.mxu0 0
          %1434 = vmatprep.mubr.bf16.mxu0 0
          %1435 = vmatmul.mubr.bf16.gmra.mrb[0].mxu0 %v1352
          %v1436 = vpop.f32.mrb[0].mxu0
          %v1437 = vadd.f32 0.0, %v1436
          %v1438 = vpop.f32.mrb[0].mxu0
          %v1439 = vpop.f32.mrb[0].mxu0
          %v1440 = vpop.f32.mrb[0].mxu0
          %1441 = vdwg.mxu0
          %v1442 = vadd.f32 %v1330, %v1437
          %v1444 = vlaneseq
          %v1445 = vshrl.u32 %v1444, 7
          %v1446 = vsub.s32 0, %v1445
          %v1447 = vrot.slane %v421, %v1446
          %v1449 = vmul.f32 %v1442, %v1447
          %v1451 = vlaneseq
          %v1452 = vshrl.u32 %v1451, 7
          %v1453 = vsub.s32 0, %v1452
          %v1454 = vrot.slane %v422, %v1453
          %v1456 = vadd.f32 %v1449, %v1454
          %v1457 = vmax.f32 %v1456, 0.0
          %v1458 = vpack.c.bf16 %v1457, %v1457
          %s1459 = smul.addr %s424, 2
          %s1460 = scalar_lea.vmem %s415, %s1459 [#allocation13]
          %1461 = vst [vmem:[%s1460] sm:$0x3] %v1458
        $region73: #{tower.9} parent=43 // loop_footer
          %s428 = sadd.s32 1, %s424
        $region74: #{tower.9} parent=43 // loop_footer_branch
          %423 = sbr.rel target = $region70
        $region75: #{tower.9} parent=43 // loop_exit
          _
        %s1462 = sand.u32 %s206, 1
        %s1463 = scalar_lea.sflag [#allocation4], %s1462
        %s1464 = sand.u32 %s206, 1
        %s1465 = smul.addr %s1464, 32
        %s1466 = scalar_lea.vmem [#allocation13], %s1465
        // Predicated region
        $region76: #{tower.9} parent=43 // pred_check
          %p1467 = pneg %p216
        $region77: #{tower.9} parent=43 // pred_check_branch
          %1469 = sbr.rel (%p1467) target = $region79
        $region78: #{tower.9} parent=43 // pred_region
          %s1470 = smul.u32 16, %s33
          %s1472 = ssub.s32 512, 512
          %1473 = vsyncadd %s1463, %s1472
          %s1474 = smul.addr %s1470, 2
          %s1475 = sadd.s32 %s32, %s1474
          %s1476 = smul.addr %s1475, 32
          %s1477 = scalar_lea.hbm %s6, %s1476
          %s1478 = sshll.u32 %s1466, 4
          %s1479 = int_to_ptr.vmem [resolvable:$true] %s1478
          %1484 = dma.vmem_to_hbm [thread:$0]  %s1479, 512, %s1477, %s1463, 32, 64, 2
        $region79: #{tower.9} parent=43 // pred_fallthru
          _
      $region44: #{tower.9} parent=5 // pred_fallthru
        _
      %p1485 = scmp.le.s32.totalorder 2, %s23
      // Predicated region
      $region80: #{tower.9} parent=5 // pred_check
        %p1486 = pneg %p1485
      $region81: #{tower.9} parent=5 // pred_check_branch
        %1488 = sbr.rel (%p1486) target = $region83
      $region82: #{tower.9} parent=5 // pred_region
        %s1489 = ssub.s32 %s23, 2
        // Predicated region
        $region84: #{tower.9} parent=82 // pred_check
          %p1490 = pneg %p222
        $region85: #{tower.9} parent=82 // pred_check_branch
          %1492 = sbr.rel (%p1490) target = $region87
        $region86: #{tower.9} parent=82 // pred_region
          %s1493 = sand.u32 %s207, 1
          %s1494 = scalar_lea.sflag [#allocation4], %s1493
          %s1495 = sand.u32 %s207, 1
          %s1496 = smul.addr %s1495, 32
          %s1497 = scalar_lea.vmem [#allocation13], %s1496
          %1498 = dma.done %s1494, 512
        $region87: #{tower.9} parent=82 // pred_fallthru
          _
      $region83: #{tower.9} parent=5 // pred_fallthru
        _
    $region6: #{tower.9} parent=1 // loop_footer
      %s27 = sadd.s32 1, %s23
    $region7: #{tower.9} parent=1 // loop_footer_branch
      %22 = sbr.rel target = $region3
    $region8: #{tower.9} parent=1 // loop_exit
      _
    %1499 = vsyncpa [#allocation3], 1
    %s1500 = scalar_lea.sflag [#allocation3], 1
    %1501 = vsyncpa %s1500, 1
    %1502 = vsyncpa [#allocation6], 1
    %1503 = vsyncpa [#allocation9], 1
    %s1504 = scalar_lea.sflag [#allocation9], 1
    %1505 = vsyncpa %s1504, 1
    %1506 = vsyncpa [#allocation12], 1
    %s1507 = scalar_lea.sflag [#allocation12], 1
    %1508 = vsyncpa %s1507, 1
    %1509 = vsyncpa [#allocation4], 1
    %s1510 = scalar_lea.sflag [#allocation4], 1
    %1511 = vsyncpa %s1510, 1

// kernel: tower.10
$region0: #{tower.10}
  #allocation0 [shape = 'u32[]', space=smem, size = 0x4, offset = 0x4, fixed_abs, tag = 'smem constant byte address 0x4 - core index']
  #allocation1 [shape = 'u32[144,128]{1,0:T(1,128)}', space=vmem, size = 0x12000, scoped, tag = 'internal scratch']
  %s0 = inlined_call_operand.hbm [shape: bf16[8,3,256], index: 0, kind: input, shape index: {}]
  %s1 = inlined_call_operand.hbm [shape: bf16[8,3,256], index: 1, kind: input, shape index: {}]
  %s2 = inlined_call_operand.hbm [shape: bf16[8,3,256], index: 2, kind: input, shape index: {}]
  %s3 = inlined_call_operand.hbm [shape: bf16[8,3,256], index: 3, kind: input, shape index: {}]
  %s4 = inlined_call_operand.hbm [shape: bf16[8,3,256], index: 4, kind: input, shape index: {}]
  %s5 = inlined_call_operand.hbm [shape: bf16[8,3,256], index: 5, kind: input, shape index: {}]
  %s6 = inlined_call_operand.hbm [shape: bf16[9,256,256], index: 6, kind: input, shape index: {}]
  %s7 = inlined_call_operand.hbm [shape: f32[1,256], index: 7, kind: input, shape index: {}]
  %s8 = inlined_call_operand.hbm [shape: f32[1,256], index: 8, kind: input, shape index: {}]
  %s9 = inlined_call_operand.hbm [shape: bf16[8,2,256], index: 9, kind: output, shape index: {}]
  %s10 = sld [smem:[#allocation0]]
  $region112: #{tower.10} parent=0
    _
  %s12 = ssub.s32 1, %s10
  %s13 = scalar_select 0, %s12, %s10
  $region1: #{tower.10} parent=0
    #allocation2 [shape = 'u8[16384]{0}', space=vmem, size = 0x4000, scoped, tag = 'input window, operand 0, single buffered']
    #allocation3 [shape = 's32[2]{0}', space=sflag, size = 0x8, scoped, tag = 'scoped memory for tower.10']
    #allocation4 [shape = 's32[2]{0}', space=sflag, size = 0x8, scoped, tag = 'scoped memory for tower.10']
    #allocation5 [shape = 'u8[16384]{0}', space=vmem, size = 0x4000, scoped, tag = 'input window, operand 1, single buffered']
    #allocation6 [shape = 's32[1]{0}', space=sflag, size = 0x4, scoped, tag = 'scoped memory for tower.10']
    #allocation7 [shape = 'u8[16384]{0}', space=vmem, size = 0x4000, scoped, tag = 'input window, operand 2, single buffered']
    #allocation8 [shape = 'u8[16384]{0}', space=vmem, size = 0x4000, scoped, tag = 'input window, operand 3, single buffered']
    #allocation9 [shape = 's32[1]{0}', space=sflag, size = 0x4, scoped, tag = 'scoped memory for tower.10']
    #allocation10 [shape = 'u8[16384]{0}', space=vmem, size = 0x4000, scoped, tag = 'input window, operand 4, single buffered']
    #allocation11 [shape = 'u8[16384]{0}', space=vmem, size = 0x4000, scoped, tag = 'input window, operand 5, single buffered']
    #allocation12 [shape = 's32[1]{0}', space=sflag, size = 0x4, scoped, tag = 'scoped memory for tower.10']
    #allocation13 [shape = 'u8[1179648]{0}', space=vmem, size = 0x120000, scoped, tag = 'input window, operand 6']
    #allocation14 [shape = 'u8[1024]{0}', space=vmem, size = 0x400, scoped, tag = 'input window, operand 7']
    #allocation15 [shape = 'u8[1024]{0}', space=vmem, size = 0x400, scoped, tag = 'input window, operand 8']
    #allocation16 [shape = 'u8[8192]{0}', space=vmem, size = 0x2000, scoped, tag = 'output window, operand 0']
    %14 = vsyncpa [#allocation3], 0
    %15 = vsyncpa [#allocation6], 0
    %16 = vsyncpa [#allocation9], 0
    %17 = vsyncpa [#allocation12], 0
    %18 = vsyncpa [#allocation4], 0
    %s19 = scalar_lea.sflag [#allocation4], 1
    %20 = vsyncpa %s19, 0
    loop: start=0, step=1, limit=4
    $region2: #{tower.10} parent=1 // loop_pre_header
      _
    $region3: #{tower.10} parent=1 // loop_header
      %s22 = sphi 0, %s26
      %p23 = scmp.ge.s32.totalorder %s22, 4
      %s29 = sphi 0, %s41
      %s30 = sphi 0, %s37
      %s31 = sphi 0, %s29
      %s32 = sphi 0, %s30
      %s33 = sphi 0, %s31
      %s34 = sphi 0, %s32
      %s44 = sphi 0, %s46
      %s47 = sphi 0, %s44
      %s48 = sphi 0, %s47
      %s64 = sphi 0, %s48
      %s70 = sphi 0, %s72
      %s73 = sphi 0, %s70
      %s74 = sphi 0, %s73
      %s90 = sphi 0, %s74
      %s96 = sphi 0, %s98
      %s99 = sphi 0, %s96
      %s100 = sphi 0, %s99
      %s116 = sphi 0, %s100
      %s122 = sphi 0, %s124
      %s125 = sphi 0, %s122
      %s126 = sphi 0, %s125
      %s142 = sphi 0, %s126
      %s148 = sphi 0, %s150
      %s151 = sphi 0, %s148
      %s152 = sphi 0, %s151
      %s168 = sphi 0, %s152
      %s174 = sphi 0, %s176
      %s177 = sphi 0, %s174
      %s178 = sphi 0, %s177
      %s194 = sphi 0, %s178
      %s200 = sphi 0, %s202
      %s203 = sphi 0, %s200
      %s204 = sphi 0, %s203
      %s220 = sphi 0, %s204
      %s226 = sphi 0, %s228
      %s229 = sphi 0, %s226
      %s230 = sphi 0, %s229
      %s246 = sphi 0, %s230
      %s252 = sphi 0, %s254
      %s255 = sphi 0, %s252
      %s256 = sphi 0, %s255
      %s272 = sphi 0, %s256
      %s280 = sphi 0, %s282
      %s283 = sphi 0, %s280
      %s284 = sphi 0, %s283
      %s300 = sphi 0, %s284
    $region4: #{tower.10} parent=1 // loop_header_branch
      %25 = sbr.rel (%p23) target = $region8
    $region5: #{tower.10} parent=1 // loop_body
      %s27 = ssub.s32 %s22, 1
      %s28 = ssub.s32 %s22, 2
      %s35 = sadd.s32 1, %s30
      %p36 = scmp.ge.s32.totalorder %s35, 1
      %s37 = scalar_select %p36, 0, %s35
      %s38 = sadd.s32 1, %s29
      %s39 = scalar_select %p36, %s38, %s29
      %p40 = scmp.ge.s32.totalorder %s39, 2
      %s41 = scalar_select %p40, 0, %s39
      %s42 = ssub.s32 %s30, %s37
      %p43 = scmp.eq.s32.totalorder %s42, 0
      %s45 = sadd.s32 %s44, 1
      %s46 = scalar_select %p43, %s44, %s45
      %p49 = pneg %p43
      %p50 = scmp.eq.s32.totalorder %s22, 1
      %p51 = por %p49, %p50
      %p52 = scmp.ne.s32.totalorder %s44, %s47
      %p53 = scmp.eq.s32.totalorder %s22, 0
      %p54 = por %p52, %p53
      %p55 = scmp.ne.s32.totalorder %s44, %s47
      %p56 = scmp.eq.s32.totalorder %s27, 1
      %p57 = por %p55, %p56
      %p58 = scmp.ne.s32.totalorder %s47, %s48
      %p59 = scmp.eq.s32.totalorder %s27, 0
      %p60 = por %p58, %p59
      %p61 = scmp.ne.s32.totalorder %s47, %s48
      %p62 = scmp.eq.s32.totalorder %s28, 1
      %p63 = por %p61, %p62
      %p65 = scmp.ne.s32.totalorder %s48, %s64
      %p66 = scmp.eq.s32.totalorder %s28, 0
      %p67 = por %p65, %p66
      %s68 = ssub.s32 %s30, %s37
      %p69 = scmp.eq.s32.totalorder %s68, 0
      %s71 = sadd.s32 %s70, 1
      %s72 = scalar_select %p69, %s70, %s71
      %p75 = pneg %p69
      %p76 = scmp.eq.s32.totalorder %s22, 1
      %p77 = por %p75, %p76
      %p78 = scmp.ne.s32.totalorder %s70, %s73
      %p79 = scmp.eq.s32.totalorder %s22, 0
      %p80 = por %p78, %p79
      %p81 = scmp.ne.s32.totalorder %s70, %s73
      %p82 = scmp.eq.s32.totalorder %s27, 1
      %p83 = por %p81, %p82
      %p84 = scmp.ne.s32.totalorder %s73, %s74
      %p85 = scmp.eq.s32.totalorder %s27, 0
      %p86 = por %p84, %p85
      %p87 = scmp.ne.s32.totalorder %s73, %s74
      %p88 = scmp.eq.s32.totalorder %s28, 1
      %p89 = por %p87, %p88
      %p91 = scmp.ne.s32.totalorder %s74, %s90
      %p92 = scmp.eq.s32.totalorder %s28, 0
      %p93 = por %p91, %p92
      %s94 = ssub.s32 %s30, %s37
      %p95 = scmp.eq.s32.totalorder %s94, 0
      %s97 = sadd.s32 %s96, 1
      %s98 = scalar_select %p95, %s96, %s97
      %p101 = pneg %p95
      %p102 = scmp.eq.s32.totalorder %s22, 1
      %p103 = por %p101, %p102
      %p104 = scmp.ne.s32.totalorder %s96, %s99
      %p105 = scmp.eq.s32.totalorder %s22, 0
      %p106 = por %p104, %p105
      %p107 = scmp.ne.s32.totalorder %s96, %s99
      %p108 = scmp.eq.s32.totalorder %s27, 1
      %p109 = por %p107, %p108
      %p110 = scmp.ne.s32.totalorder %s99, %s100
      %p111 = scmp.eq.s32.totalorder %s27, 0
      %p112 = por %p110, %p111
      %p113 = scmp.ne.s32.totalorder %s99, %s100
      %p114 = scmp.eq.s32.totalorder %s28, 1
      %p115 = por %p113, %p114
      %p117 = scmp.ne.s32.totalorder %s100, %s116
      %p118 = scmp.eq.s32.totalorder %s28, 0
      %p119 = por %p117, %p118
      %s120 = ssub.s32 %s30, %s37
      %p121 = scmp.eq.s32.totalorder %s120, 0
      %s123 = sadd.s32 %s122, 1
      %s124 = scalar_select %p121, %s122, %s123
      %p127 = pneg %p121
      %p128 = scmp.eq.s32.totalorder %s22, 1
      %p129 = por %p127, %p128
      %p130 = scmp.ne.s32.totalorder %s122, %s125
      %p131 = scmp.eq.s32.totalorder %s22, 0
      %p132 = por %p130, %p131
      %p133 = scmp.ne.s32.totalorder %s122, %s125
      %p134 = scmp.eq.s32.totalorder %s27, 1
      %p135 = por %p133, %p134
      %p136 = scmp.ne.s32.totalorder %s125, %s126
      %p137 = scmp.eq.s32.totalorder %s27, 0
      %p138 = por %p136, %p137
      %p139 = scmp.ne.s32.totalorder %s125, %s126
      %p140 = scmp.eq.s32.totalorder %s28, 1
      %p141 = por %p139, %p140
      %p143 = scmp.ne.s32.totalorder %s126, %s142
      %p144 = scmp.eq.s32.totalorder %s28, 0
      %p145 = por %p143, %p144
      %s146 = ssub.s32 %s30, %s37
      %p147 = scmp.eq.s32.totalorder %s146, 0
      %s149 = sadd.s32 %s148, 1
      %s150 = scalar_select %p147, %s148, %s149
      %p153 = pneg %p147
      %p154 = scmp.eq.s32.totalorder %s22, 1
      %p155 = por %p153, %p154
      %p156 = scmp.ne.s32.totalorder %s148, %s151
      %p157 = scmp.eq.s32.totalorder %s22, 0
      %p158 = por %p156, %p157
      %p159 = scmp.ne.s32.totalorder %s148, %s151
      %p160 = scmp.eq.s32.totalorder %s27, 1
      %p161 = por %p159, %p160
      %p162 = scmp.ne.s32.totalorder %s151, %s152
      %p163 = scmp.eq.s32.totalorder %s27, 0
      %p164 = por %p162, %p163
      %p165 = scmp.ne.s32.totalorder %s151, %s152
      %p166 = scmp.eq.s32.totalorder %s28, 1
      %p167 = por %p165, %p166
      %p169 = scmp.ne.s32.totalorder %s152, %s168
      %p170 = scmp.eq.s32.totalorder %s28, 0
      %p171 = por %p169, %p170
      %s172 = ssub.s32 %s30, %s37
      %p173 = scmp.eq.s32.totalorder %s172, 0
      %s175 = sadd.s32 %s174, 1
      %s176 = scalar_select %p173, %s174, %s175
      %p179 = pneg %p173
      %p180 = scmp.eq.s32.totalorder %s22, 1
      %p181 = por %p179, %p180
      %p182 = scmp.ne.s32.totalorder %s174, %s177
      %p183 = scmp.eq.s32.totalorder %s22, 0
      %p184 = por %p182, %p183
      %p185 = scmp.ne.s32.totalorder %s174, %s177
      %p186 = scmp.eq.s32.totalorder %s27, 1
      %p187 = por %p185, %p186
      %p188 = scmp.ne.s32.totalorder %s177, %s178
      %p189 = scmp.eq.s32.totalorder %s27, 0
      %p190 = por %p188, %p189
      %p191 = scmp.ne.s32.totalorder %s177, %s178
      %p192 = scmp.eq.s32.totalorder %s28, 1
      %p193 = por %p191, %p192
      %p195 = scmp.ne.s32.totalorder %s178, %s194
      %p196 = scmp.eq.s32.totalorder %s28, 0
      %p197 = por %p195, %p196
      %s198 = ssub.s32 %s29, %s41
      %p199 = scmp.eq.s32.totalorder %s198, 0
      %s201 = sadd.s32 %s200, 1
      %s202 = scalar_select %p199, %s200, %s201
      %p205 = pneg %p199
      %p206 = scmp.eq.s32.totalorder %s22, 1
      %p207 = por %p205, %p206
      %p208 = scmp.ne.s32.totalorder %s200, %s203
      %p209 = scmp.eq.s32.totalorder %s22, 0
      %p210 = por %p208, %p209
      %p211 = scmp.ne.s32.totalorder %s200, %s203
      %p212 = scmp.eq.s32.totalorder %s27, 1
      %p213 = por %p211, %p212
      %p214 = scmp.ne.s32.totalorder %s203, %s204
      %p215 = scmp.eq.s32.totalorder %s27, 0
      %p216 = por %p214, %p215
      %p217 = scmp.ne.s32.totalorder %s203, %s204
      %p218 = scmp.eq.s32.totalorder %s28, 1
      %p219 = por %p217, %p218
      %p221 = scmp.ne.s32.totalorder %s204, %s220
      %p222 = scmp.eq.s32.totalorder %s28, 0
      %p223 = por %p221, %p222
      %s224 = ssub.s32 %s29, %s41
      %p225 = scmp.eq.s32.totalorder %s224, 0
      %s227 = sadd.s32 %s226, 1
      %s228 = scalar_select %p225, %s226, %s227
      %p231 = pneg %p225
      %p232 = scmp.eq.s32.totalorder %s22, 1
      %p233 = por %p231, %p232
      %p234 = scmp.ne.s32.totalorder %s226, %s229
      %p235 = scmp.eq.s32.totalorder %s22, 0
      %p236 = por %p234, %p235
      %p237 = scmp.ne.s32.totalorder %s226, %s229
      %p238 = scmp.eq.s32.totalorder %s27, 1
      %p239 = por %p237, %p238
      %p240 = scmp.ne.s32.totalorder %s229, %s230
      %p241 = scmp.eq.s32.totalorder %s27, 0
      %p242 = por %p240, %p241
      %p243 = scmp.ne.s32.totalorder %s229, %s230
      %p244 = scmp.eq.s32.totalorder %s28, 1
      %p245 = por %p243, %p244
      %p247 = scmp.ne.s32.totalorder %s230, %s246
      %p248 = scmp.eq.s32.totalorder %s28, 0
      %p249 = por %p247, %p248
      %s250 = ssub.s32 %s29, %s41
      %p251 = scmp.eq.s32.totalorder %s250, 0
      %s253 = sadd.s32 %s252, 1
      %s254 = scalar_select %p251, %s252, %s253
      %p257 = pneg %p251
      %p258 = scmp.eq.s32.totalorder %s22, 1
      %p259 = por %p257, %p258
      %p260 = scmp.ne.s32.totalorder %s252, %s255
      %p261 = scmp.eq.s32.totalorder %s22, 0
      %p262 = por %p260, %p261
      %p263 = scmp.ne.s32.totalorder %s252, %s255
      %p264 = scmp.eq.s32.totalorder %s27, 1
      %p265 = por %p263, %p264
      %p266 = scmp.ne.s32.totalorder %s255, %s256
      %p267 = scmp.eq.s32.totalorder %s27, 0
      %p268 = por %p266, %p267
      %p269 = scmp.ne.s32.totalorder %s255, %s256
      %p270 = scmp.eq.s32.totalorder %s28, 1
      %p271 = por %p269, %p270
      %p273 = scmp.ne.s32.totalorder %s256, %s272
      %p274 = scmp.eq.s32.totalorder %s28, 0
      %p275 = por %p273, %p274
      %s276 = ssub.s32 %s30, %s37
      %s277 = ssub.s32 %s29, %s41
      %s278 = sor.u32 %s276, %s277
      %p279 = scmp.eq.s32.totalorder %s278, 0
      %s281 = sadd.s32 %s280, 1
      %s282 = scalar_select %p279, %s280, %s281
      %p285 = pneg %p279
      %p286 = scmp.eq.s32.totalorder %s22, 1
      %p287 = por %p285, %p286
      %p288 = scmp.ne.s32.totalorder %s280, %s283
      %p289 = scmp.eq.s32.totalorder %s22, 0
      %p290 = por %p288, %p289
      %p291 = scmp.ne.s32.totalorder %s280, %s283
      %p292 = scmp.eq.s32.totalorder %s27, 1
      %p293 = por %p291, %p292
      %p294 = scmp.ne.s32.totalorder %s283, %s284
      %p295 = scmp.eq.s32.totalorder %s27, 0
      %p296 = por %p294, %p295
      %p297 = scmp.ne.s32.totalorder %s283, %s284
      %p298 = scmp.eq.s32.totalorder %s28, 1
      %p299 = por %p297, %p298
      %p301 = scmp.ne.s32.totalorder %s284, %s300
      %p302 = scmp.eq.s32.totalorder %s28, 0
      %p303 = por %p301, %p302
      %p304 = scmp.le.s32.totalorder 1, %s22
      %p305 = scmp.lt.s32.totalorder %s22, 3
      %p306 = pnand %p304, %p305
      %p307 = pneg %p306
      // Predicated region
      $region9: #{tower.10} parent=5 // pred_check
        _
      $region10: #{tower.10} parent=5 // pred_check_branch
        %309 = sbr.rel (%p306) target = $region12
      $region11: #{tower.10} parent=5 // pred_region
        %s310 = ssub.s32 %s22, 1
        // Predicated region
        $region13: #{tower.10} parent=11 // pred_check
          %p311 = pneg %p60
        $region14: #{tower.10} parent=11 // pred_check_branch
          %313 = sbr.rel (%p311) target = $region16
        $region15: #{tower.10} parent=11 // pred_region
          %s314 = smul.u32 8, %s32
          %s316 = ssub.s32 512, 512
          %317 = vsyncadd [#allocation3], %s316
          %s318 = smul.addr %s314, 2
          %s319 = smul.addr %s318, 32
          %s320 = scalar_lea.hbm %s0, %s319
          %s321 = sshll.u32 [#allocation2], 4
          %s322 = int_to_ptr.vmem [resolvable:$true] %s321
          %327 = dma.hbm_to_vmem [thread:$0]  %s320, 512, %s322, [#allocation3], 64, 64, 4
        $region16: #{tower.10} parent=11 // pred_fallthru
          _
        // Predicated region
        $region17: #{tower.10} parent=11 // pred_check
          %p328 = pneg %p86
        $region18: #{tower.10} parent=11 // pred_check_branch
          %330 = sbr.rel (%p328) target = $region20
        $region19: #{tower.10} parent=11 // pred_region
          %s331 = smul.u32 8, %s32
          %s333 = ssub.s32 512, 512
          %334 = vsyncadd [#allocation6], %s333
          %s335 = smul.addr %s331, 2
          %s336 = smul.addr %s335, 32
          %s337 = scalar_lea.hbm %s1, %s336
          %s338 = sshll.u32 [#allocation5], 4
          %s339 = int_to_ptr.vmem [resolvable:$true] %s338
          %344 = dma.hbm_to_vmem [thread:$0]  %s337, 512, %s339, [#allocation6], 64, 64, 4
        $region20: #{tower.10} parent=11 // pred_fallthru
          _
        // Predicated region
        $region21: #{tower.10} parent=11 // pred_check
          %p345 = pneg %p112
        $region22: #{tower.10} parent=11 // pred_check_branch
          %347 = sbr.rel (%p345) target = $region24
        $region23: #{tower.10} parent=11 // pred_region
          %s348 = smul.u32 8, %s32
          %s350 = ssub.s32 512, 512
          %351 = vsyncadd [#allocation6], %s350
          %s352 = smul.addr %s348, 2
          %s353 = smul.addr %s352, 32
          %s354 = scalar_lea.hbm %s2, %s353
          %s355 = sshll.u32 [#allocation7], 4
          %s356 = int_to_ptr.vmem [resolvable:$true] %s355
          %361 = dma.hbm_to_vmem [thread:$0]  %s354, 512, %s356, [#allocation6], 64, 64, 4
        $region24: #{tower.10} parent=11 // pred_fallthru
          _
        // Predicated region
        $region25: #{tower.10} parent=11 // pred_check
          %p362 = pneg %p138
        $region26: #{tower.10} parent=11 // pred_check_branch
          %364 = sbr.rel (%p362) target = $region28
        $region27: #{tower.10} parent=11 // pred_region
          %s365 = smul.u32 8, %s32
          %s367 = ssub.s32 512, 512
          %368 = vsyncadd [#allocation9], %s367
          %s369 = smul.addr %s365, 2
          %s370 = smul.addr %s369, 32
          %s371 = scalar_lea.hbm %s3, %s370
          %s372 = sshll.u32 [#allocation8], 4
          %s373 = int_to_ptr.vmem [resolvable:$true] %s372
          %378 = dma.hbm_to_vmem [thread:$0]  %s371, 512, %s373, [#allocation9], 64, 64, 4
        $region28: #{tower.10} parent=11 // pred_fallthru
          _
        // Predicated region
        $region29: #{tower.10} parent=11 // pred_check
          %p379 = pneg %p164
        $region30: #{tower.10} parent=11 // pred_check_branch
          %381 = sbr.rel (%p379) target = $region32
        $region31: #{tower.10} parent=11 // pred_region
          %s382 = smul.u32 8, %s32
          %s384 = ssub.s32 512, 512
          %385 = vsyncadd [#allocation9], %s384
          %s386 = smul.addr %s382, 2
          %s387 = smul.addr %s386, 32
          %s388 = scalar_lea.hbm %s4, %s387
          %s389 = sshll.u32 [#allocation10], 4
          %s390 = int_to_ptr.vmem [resolvable:$true] %s389
          %395 = dma.hbm_to_vmem [thread:$0]  %s388, 512, %s390, [#allocation9], 64, 64, 4
        $region32: #{tower.10} parent=11 // pred_fallthru
          _
        // Predicated region
        $region33: #{tower.10} parent=11 // pred_check
          %p396 = pneg %p190
        $region34: #{tower.10} parent=11 // pred_check_branch
          %398 = sbr.rel (%p396) target = $region36
        $region35: #{tower.10} parent=11 // pred_region
          %s399 = smul.u32 8, %s32
          %s401 = ssub.s32 512, 512
          %402 = vsyncadd [#allocation12], %s401
          %s403 = smul.addr %s399, 2
          %s404 = smul.addr %s403, 32
          %s405 = scalar_lea.hbm %s5, %s404
          %s406 = sshll.u32 [#allocation11], 4
          %s407 = int_to_ptr.vmem [resolvable:$true] %s406
          %412 = dma.hbm_to_vmem [thread:$0]  %s405, 512, %s407, [#allocation12], 64, 64, 4
        $region36: #{tower.10} parent=11 // pred_fallthru
          _
      $region12: #{tower.10} parent=5 // pred_fallthru
        _
      %p413 = scmp.lt.s32.totalorder %s22, 2
      // Predicated region
      $region37: #{tower.10} parent=5 // pred_check
        %p414 = pneg %p413
      $region38: #{tower.10} parent=5 // pred_check_branch
        %416 = sbr.rel (%p414) target = $region40
      $region39: #{tower.10} parent=5 // pred_region
        // Predicated region
        $region41: #{tower.10} parent=39 // pred_check
          %p417 = pneg %p210
        $region42: #{tower.10} parent=39 // pred_check_branch
          %419 = sbr.rel (%p417) target = $region44
        $region43: #{tower.10} parent=39 // pred_region
          %s420 = sand.u32 %s22, 1
          %s421 = scalar_lea.sflag [#allocation3], %s420
          %s422 = sand.u32 %s200, 1
          %s423 = smul.addr %s422, 1152
          %s424 = scalar_lea.vmem [#allocation13], %s423
          %s426 = ssub.s32 18432, 18432
          %427 = vsyncadd %s421, %s426
          %s428 = smul.addr %s29, 64
          %s429 = scalar_lea.hbm %s6, %s428
          %s430 = sshll.u32 %s424, 4
          %s431 = int_to_ptr.vmem [resolvable:$true] %s430
          %436 = dma.hbm_to_vmem [thread:$0]  %s429, 18432, %s431, %s421, 128, 64, 4
        $region44: #{tower.10} parent=39 // pred_fallthru
          _
        // Predicated region
        $region45: #{tower.10} parent=39 // pred_check
          %p437 = pneg %p236
        $region46: #{tower.10} parent=39 // pred_check_branch
          %439 = sbr.rel (%p437) target = $region48
        $region47: #{tower.10} parent=39 // pred_region
          %s440 = sand.u32 %s22, 1
          %s441 = scalar_lea.sflag [#allocation3], %s440
          %s442 = sand.u32 %s226, 1
          %s443 = scalar_lea.vmem [#allocation14], %s442
          %s445 = ssub.s32 16, 16
          %446 = vsyncadd %s441, %s445
          %s447 = smul.addr %s29, 16
          %s448 = scalar_lea.hbm %s7, %s447
          %s450 = sshll.u32 %s443, 4
          %s451 = int_to_ptr.vmem [resolvable:$true] %s450
          %453 = dma.hbm_to_vmem [thread:$0]  %s448, 16, %s451, %s441
        $region48: #{tower.10} parent=39 // pred_fallthru
          _
        // Predicated region
        $region49: #{tower.10} parent=39 // pred_check
          %p454 = pneg %p262
        $region50: #{tower.10} parent=39 // pred_check_branch
          %456 = sbr.rel (%p454) target = $region52
        $region51: #{tower.10} parent=39 // pred_region
          %s457 = sand.u32 %s22, 1
          %s458 = scalar_lea.sflag [#allocation3], %s457
          %s459 = sand.u32 %s252, 1
          %s460 = scalar_lea.vmem [#allocation15], %s459
          %s462 = ssub.s32 16, 16
          %463 = vsyncadd %s458, %s462
          %s464 = smul.addr %s29, 16
          %s465 = scalar_lea.hbm %s8, %s464
          %s467 = sshll.u32 %s460, 4
          %s468 = int_to_ptr.vmem [resolvable:$true] %s467
          %470 = dma.hbm_to_vmem [thread:$0]  %s465, 16, %s468, %s458
        $region52: #{tower.10} parent=39 // pred_fallthru
          _
      $region40: #{tower.10} parent=5 // pred_fallthru
        _
      %p471 = scmp.le.s32.totalorder 1, %s22
      %p472 = scmp.lt.s32.totalorder %s22, 3
      %p473 = pnand %p471, %p472
      %p474 = pneg %p473
      // Predicated region
      $region53: #{tower.10} parent=5 // pred_check
        _
      $region54: #{tower.10} parent=5 // pred_check_branch
        %476 = sbr.rel (%p473) target = $region56
      $region55: #{tower.10} parent=5 // pred_region
        %s477 = ssub.s32 %s22, 1
        // Predicated region
        $region57: #{tower.10} parent=55 // pred_check
          %p478 = pneg %p60
        $region58: #{tower.10} parent=55 // pred_check_branch
          %480 = sbr.rel (%p478) target = $region60
        $region59: #{tower.10} parent=55 // pred_region
          %481 = dma.done [#allocation3], 512
        $region60: #{tower.10} parent=55 // pred_fallthru
          _
        // Predicated region
        $region61: #{tower.10} parent=55 // pred_check
          %p482 = pneg %p86
        $region62: #{tower.10} parent=55 // pred_check_branch
          %484 = sbr.rel (%p482) target = $region64
        $region63: #{tower.10} parent=55 // pred_region
          %485 = dma.done [#allocation6], 512
        $region64: #{tower.10} parent=55 // pred_fallthru
          _
        // Predicated region
        $region65: #{tower.10} parent=55 // pred_check
          %p486 = pneg %p112
        $region66: #{tower.10} parent=55 // pred_check_branch
          %488 = sbr.rel (%p486) target = $region68
        $region67: #{tower.10} parent=55 // pred_region
          %489 = dma.done [#allocation6], 512
        $region68: #{tower.10} parent=55 // pred_fallthru
          _
        // Predicated region
        $region69: #{tower.10} parent=55 // pred_check
          %p490 = pneg %p138
        $region70: #{tower.10} parent=55 // pred_check_branch
          %492 = sbr.rel (%p490) target = $region72
        $region71: #{tower.10} parent=55 // pred_region
          %493 = dma.done [#allocation9], 512
        $region72: #{tower.10} parent=55 // pred_fallthru
          _
        // Predicated region
        $region73: #{tower.10} parent=55 // pred_check
          %p494 = pneg %p164
        $region74: #{tower.10} parent=55 // pred_check_branch
          %496 = sbr.rel (%p494) target = $region76
        $region75: #{tower.10} parent=55 // pred_region
          %497 = dma.done [#allocation9], 512
        $region76: #{tower.10} parent=55 // pred_fallthru
          _
        // Predicated region
        $region77: #{tower.10} parent=55 // pred_check
          %p498 = pneg %p190
        $region78: #{tower.10} parent=55 // pred_check_branch
          %500 = sbr.rel (%p498) target = $region80
        $region79: #{tower.10} parent=55 // pred_region
          %501 = dma.done [#allocation12], 512
        $region80: #{tower.10} parent=55 // pred_fallthru
          _
        %s502 = sand.u32 %s27, 1
        %s503 = scalar_lea.sflag [#allocation3], %s502
        %s504 = sand.u32 %s203, 1
        %s505 = smul.addr %s504, 1152
        %s506 = scalar_lea.vmem [#allocation13], %s505
        // Predicated region
        $region81: #{tower.10} parent=55 // pred_check
          %p507 = pneg %p216
        $region82: #{tower.10} parent=55 // pred_check_branch
          %509 = sbr.rel (%p507) target = $region84
        $region83: #{tower.10} parent=55 // pred_region
          %510 = dma.done %s503, 18432
        $region84: #{tower.10} parent=55 // pred_fallthru
          _
        %s511 = sand.u32 %s27, 1
        %s512 = scalar_lea.sflag [#allocation3], %s511
        %s513 = sand.u32 %s229, 1
        %s514 = scalar_lea.vmem [#allocation14], %s513
        // Predicated region
        $region85: #{tower.10} parent=55 // pred_check
          %p515 = pneg %p242
        $region86: #{tower.10} parent=55 // pred_check_branch
          %517 = sbr.rel (%p515) target = $region88
        $region87: #{tower.10} parent=55 // pred_region
          %518 = dma.done %s512, 16
        $region88: #{tower.10} parent=55 // pred_fallthru
          _
        %s519 = sand.u32 %s27, 1
        %s520 = scalar_lea.sflag [#allocation3], %s519
        %s521 = sand.u32 %s255, 1
        %s522 = scalar_lea.vmem [#allocation15], %s521
        // Predicated region
        $region89: #{tower.10} parent=55 // pred_check
          %p523 = pneg %p268
        $region90: #{tower.10} parent=55 // pred_check_branch
          %525 = sbr.rel (%p523) target = $region92
        $region91: #{tower.10} parent=55 // pred_region
          %526 = dma.done %s520, 16
        $region92: #{tower.10} parent=55 // pred_fallthru
          _
        %p527 = pneg %p60
        %p528 = pneg %p57
        %p529 = pneg %p86
        %p530 = pneg %p83
        %p531 = pneg %p112
        %p532 = pneg %p109
        %p533 = pneg %p138
        %p534 = pneg %p135
        %p535 = pneg %p164
        %p536 = pneg %p161
        %p537 = pneg %p190
        %p538 = pneg %p187
        %s539 = sand.u32 %s27, 1
        %s540 = scalar_lea.sflag [#allocation3], %s539
        %s541 = sand.u32 %s203, 1
        %s542 = smul.addr %s541, 1152
        %s543 = scalar_lea.vmem [#allocation13], %s542
        %p544 = pneg %p216
        %p545 = pneg %p213
        %s546 = sand.u32 %s27, 1
        %s547 = scalar_lea.sflag [#allocation3], %s546
        %s548 = sand.u32 %s229, 1
        %s549 = scalar_lea.vmem [#allocation14], %s548
        %p550 = pneg %p242
        %p551 = pneg %p239
        %s552 = sand.u32 %s27, 1
        %s553 = scalar_lea.sflag [#allocation3], %s552
        %s554 = sand.u32 %s255, 1
        %s555 = scalar_lea.vmem [#allocation15], %s554
        %p556 = pneg %p268
        %p557 = pneg %p265
        %p558 = pneg %p296
        %p559 = pneg %p293
        %s560 = sand.u32 %s283, 1
        %s561 = scalar_lea.sflag [#allocation4], %s560
        %s562 = sand.u32 %s283, 1
        %s563 = smul.addr %s562, 8
        %s564 = scalar_lea.vmem [#allocation16], %s563
        %s565 = smul.u32 8, %s32
        %s566 = smul.u32 8, %s32
        %s567 = smul.u32 8, %s32
        %s568 = smul.u32 8, %s32
        %s569 = smul.u32 8, %s32
        %s570 = smul.u32 8, %s32
        %s571 = smul.u32 8, %s32
        %v573 = vld [vmem:[%s514] sm:$0x1]
        %v574 = vld [vmem:[%s522] sm:$0x1]
        loop: start=0, step=1, limit=8
        $region93: #{tower.10} parent=55 // loop_pre_header
          _
        $region94: #{tower.10} parent=55 // loop_header
          %s576 = sphi 0, %s580
          %p577 = scmp.ge.s32.totalorder %s576, 8
        $region95: #{tower.10} parent=55 // loop_header_branch
          %579 = sbr.rel (%p577) target = $region99
        $region96: #{tower.10} parent=55 // loop_body
          %s581 = smul.u32 %s576, 2
          %s582 = smul.addr %s581, 2
          %s583 = scalar_lea.vmem [#allocation2], %s582
          %v584 = vld [vmem:[%s583] sm:$0x5]
          %v585 = vld [vmem:[%s506] sm:$0xf]
          %v586 = vld [vmem:[%s506 + $0x4] sm:$0xf]
          %v587 = vld [vmem:[%s506 + $0x8] sm:$0xf]
          %v588 = vld [vmem:[%s506 + $0xc] sm:$0xf]
          %v589 = vld [vmem:[%s506 + $0x10] sm:$0xf]
          %v590 = vld [vmem:[%s506 + $0x14] sm:$0xf]
          %v591 = vld [vmem:[%s506 + $0x18] sm:$0xf]
          %v592 = vld [vmem:[%s506 + $0x1c] sm:$0xf]
          %v593 = vld [vmem:[%s506 + $0x20] sm:$0xf]
          %v594 = vld [vmem:[%s506 + $0x24] sm:$0xf]
          %v595 = vld [vmem:[%s506 + $0x28] sm:$0xf]
          %v596 = vld [vmem:[%s506 + $0x2c] sm:$0xf]
          %v597 = vld [vmem:[%s506 + $0x30] sm:$0xf]
          %v598 = vld [vmem:[%s506 + $0x34] sm:$0xf]
          %v599 = vld [vmem:[%s506 + $0x38] sm:$0xf]
          %v600 = vld [vmem:[%s506 + $0x3c] sm:$0xf]
          %v601 = vld [vmem:[%s506 + $0x40] sm:$0xf]
          %v602 = vld [vmem:[%s506 + $0x44] sm:$0xf]
          %v603 = vld [vmem:[%s506 + $0x48] sm:$0xf]
          %v604 = vld [vmem:[%s506 + $0x4c] sm:$0xf]
          %v605 = vld [vmem:[%s506 + $0x50] sm:$0xf]
          %v606 = vld [vmem:[%s506 + $0x54] sm:$0xf]
          %v607 = vld [vmem:[%s506 + $0x58] sm:$0xf]
          %v608 = vld [vmem:[%s506 + $0x5c] sm:$0xf]
          %v609 = vld [vmem:[%s506 + $0x60] sm:$0xf]
          %v610 = vld [vmem:[%s506 + $0x64] sm:$0xf]
          %v611 = vld [vmem:[%s506 + $0x68] sm:$0xf]
          %v612 = vld [vmem:[%s506 + $0x6c] sm:$0xf]
          %v613 = vld [vmem:[%s506 + $0x70] sm:$0xf]
          %v614 = vld [vmem:[%s506 + $0x74] sm:$0xf]
          %v615 = vld [vmem:[%s506 + $0x78] sm:$0xf]
          %v616 = vld [vmem:[%s506 + $0x7c] sm:$0xf]
          %s617 = smul.addr %s581, 2
          %s618 = scalar_lea.vmem [#allocation5], %s617
          %v619 = vld [vmem:[%s618] sm:$0x5]
          %s620 = scalar_lea.vmem %s506, 128 [#allocation13]
          %v621 = vld [vmem:[%s620] sm:$0xf]
          %v622 = vld [vmem:[%s620 + $0x4] sm:$0xf]
          %v623 = vld [vmem:[%s620 + $0x8] sm:$0xf]
          %v624 = vld [vmem:[%s620 + $0xc] sm:$0xf]
          %v625 = vld [vmem:[%s620 + $0x10] sm:$0xf]
          %v626 = vld [vmem:[%s620 + $0x14] sm:$0xf]
          %v627 = vld [vmem:[%s620 + $0x18] sm:$0xf]
          %v628 = vld [vmem:[%s620 + $0x1c] sm:$0xf]
          %v629 = vld [vmem:[%s620 + $0x20] sm:$0xf]
          %v630 = vld [vmem:[%s620 + $0x24] sm:$0xf]
          %v631 = vld [vmem:[%s620 + $0x28] sm:$0xf]
          %v632 = vld [vmem:[%s620 + $0x2c] sm:$0xf]
          %v633 = vld [vmem:[%s620 + $0x30] sm:$0xf]
          %v634 = vld [vmem:[%s620 + $0x34] sm:$0xf]
          %v635 = vld [vmem:[%s620 + $0x38] sm:$0xf]
          %v636 = vld [vmem:[%s620 + $0x3c] sm:$0xf]
          %v637 = vld [vmem:[%s620 + $0x40] sm:$0xf]
          %v638 = vld [vmem:[%s620 + $0x44] sm:$0xf]
          %v639 = vld [vmem:[%s620 + $0x48] sm:$0xf]
          %v640 = vld [vmem:[%s620 + $0x4c] sm:$0xf]
          %v641 = vld [vmem:[%s620 + $0x50] sm:$0xf]
          %v642 = vld [vmem:[%s620 + $0x54] sm:$0xf]
          %v643 = vld [vmem:[%s620 + $0x58] sm:$0xf]
          %v644 = vld [vmem:[%s620 + $0x5c] sm:$0xf]
          %v645 = vld [vmem:[%s620 + $0x60] sm:$0xf]
          %v646 = vld [vmem:[%s620 + $0x64] sm:$0xf]
          %v647 = vld [vmem:[%s620 + $0x68] sm:$0xf]
          %v648 = vld [vmem:[%s620 + $0x6c] sm:$0xf]
          %v649 = vld [vmem:[%s620 + $0x70] sm:$0xf]
          %v650 = vld [vmem:[%s620 + $0x74] sm:$0xf]
          %v651 = vld [vmem:[%s620 + $0x78] sm:$0xf]
          %v652 = vld [vmem:[%s620 + $0x7c] sm:$0xf]
          %v655 = vunpack.c.l.s4 1983009808
          %v656 = vunpack.c.0.s8 %v655
          %v657 = vlaneseq
          %v658 = vshrl.u32 %v657, 7
          %v659 = vsub.s32 %v656, %v658
          %v660 = vrot.slane %v619, %v659
          %v661 = vcombine.high %v660, %v660
          %v696 = vunpack.c.l.b16 %v621
          %v697 = vunpack.c.l.b16 %v622
          %v698 = vunpack.c.l.b16 %v623
          %v699 = vunpack.c.l.b16 %v624
          %v700 = vunpack.c.l.b16 %v625
          %v701 = vunpack.c.l.b16 %v626
          %v702 = vunpack.c.l.b16 %v627
          %v703 = vunpack.c.l.b16 %v628
          %v704 = vunpack.c.l.b16 %v629
          %v705 = vunpack.c.l.b16 %v630
          %v706 = vunpack.c.l.b16 %v631
          %v707 = vunpack.c.l.b16 %v632
          %v708 = vunpack.c.l.b16 %v633
          %v709 = vunpack.c.l.b16 %v634
          %v710 = vunpack.c.l.b16 %v635
          %v711 = vunpack.c.l.b16 %v636
          %v712 = vunpack.c.l.b16 %v637
          %v713 = vunpack.c.l.b16 %v638
          %v714 = vunpack.c.l.b16 %v639
          %v715 = vunpack.c.l.b16 %v640
          %v716 = vunpack.c.l.b16 %v641
          %v717 = vunpack.c.l.b16 %v642
          %v718 = vunpack.c.l.b16 %v643
          %v719 = vunpack.c.l.b16 %v644
          %v720 = vunpack.c.l.b16 %v645
          %v721 = vunpack.c.l.b16 %v646
          %v722 = vunpack.c.l.b16 %v647
          %v723 = vunpack.c.l.b16 %v648
          %v724 = vunpack.c.l.b16 %v649
          %v725 = vunpack.c.l.b16 %v650
          %v726 = vunpack.c.l.b16 %v651
          %v727 = vunpack.c.l.b16 %v652
          %v728 = vpack.c.b16 %v697, %v696
          %v729 = vpack.c.b16 %v699, %v698
          %v730 = vpack.c.b16 %v701, %v700
          %v731 = vpack.c.b16 %v703, %v702
          %v732 = vpack.c.b16 %v705, %v704
          %v733 = vpack.c.b16 %v707, %v706
          %v734 = vpack.c.b16 %v709, %v708
          %v735 = vpack.c.b16 %v711, %v710
          %v736 = vpack.c.b16 %v713, %v712
          %v737 = vpack.c.b16 %v715, %v714
          %v738 = vpack.c.b16 %v717, %v716
          %v739 = vpack.c.b16 %v719, %v718
          %v740 = vpack.c.b16 %v721, %v720
          %v741 = vpack.c.b16 %v723, %v722
          %v742 = vpack.c.b16 %v725, %v724
          %v743 = vpack.c.b16 %v727, %v726
          %760 = vmatprep.subr.bf16.mxu0 0
          %761 = vmatpush1.bf16.msra.mxu0 %v728
          %762 = vmatprep.subr.bf16.mxu0 0
          %763 = vmatpush1.bf16.msra.mxu0 %v729
          %764 = vmatprep.subr.bf16.mxu0 0
          %765 = vmatpush1.bf16.msra.mxu0 %v730
          %766 = vmatprep.subr.bf16.mxu0 0
          %767 = vmatpush1.bf16.msra.mxu0 %v731
          %768 = vmatprep.subr.bf16.mxu0 0
          %769 = vmatpush1.bf16.msra.mxu0 %v732
          %770 = vmatprep.subr.bf16.mxu0 0
          %771 = vmatpush1.bf16.msra.mxu0 %v733
          %772 = vmatprep.subr.bf16.mxu0 0
          %773 = vmatpush1.bf16.msra.mxu0 %v734
          %774 = vmatprep.subr.bf16.mxu0 0
          %775 = vmatpush1.bf16.msra.mxu0 %v735
          %776 = vmatprep.subr.bf16.mxu0 0
          %777 = vmatpush1.bf16.msra.mxu0 %v736
          %778 = vmatprep.subr.bf16.mxu0 0
          %779 = vmatpush1.bf16.msra.mxu0 %v737
          %780 = vmatprep.subr.bf16.mxu0 0
          %781 = vmatpush1.bf16.msra.mxu0 %v738
          %782 = vmatprep.subr.bf16.mxu0 0
          %783 = vmatpush1.bf16.msra.mxu0 %v739
          %784 = vmatprep.subr.bf16.mxu0 0
          %785 = vmatpush1.bf16.msra.mxu0 %v740
          %786 = vmatprep.subr.bf16.mxu0 0
          %787 = vmatpush1.bf16.msra.mxu0 %v741
          %788 = vmatprep.subr.bf16.mxu0 0
          %789 = vmatpush1.bf16.msra.mxu0 %v742
          %790 = vmatprep.subr.bf16.mxu0 0
          %791 = vmatpush1.bf16.msra.mxu0 %v743
          %792 = vmatprep.mubr.bf16.mxu0 %v661
          %793 = vmatmul.mubr.bf16.gmra.mrb[0].mxu0 %v660
          %v794 = vpop.f32.mrb[0].mxu0
          %v795 = vadd.f32 0.0, %v794
          %v796 = vpop.f32.mrb[0].mxu0
          %v797 = vpop.f32.mrb[0].mxu0
          %v798 = vpop.f32.mrb[0].mxu0
          %799 = vdwg.mxu0
          %v802 = vunpack.c.l.s4 1983009808
          %v803 = vunpack.c.0.s8 %v802
          %v804 = vlaneseq
          %v805 = vshrl.u32 %v804, 7
          %v806 = vsub.s32 %v803, %v805
          %v807 = vrot.slane %v584, %v806
          %v808 = vcombine.high %v807, %v807
          %v843 = vunpack.c.l.b16 %v585
          %v844 = vunpack.c.l.b16 %v586
          %v845 = vunpack.c.l.b16 %v587
          %v846 = vunpack.c.l.b16 %v588
          %v847 = vunpack.c.l.b16 %v589
          %v848 = vunpack.c.l.b16 %v590
          %v849 = vunpack.c.l.b16 %v591
          %v850 = vunpack.c.l.b16 %v592
          %v851 = vunpack.c.l.b16 %v593
          %v852 = vunpack.c.l.b16 %v594
          %v853 = vunpack.c.l.b16 %v595
          %v854 = vunpack.c.l.b16 %v596
          %v855 = vunpack.c.l.b16 %v597
          %v856 = vunpack.c.l.b16 %v598
          %v857 = vunpack.c.l.b16 %v599
          %v858 = vunpack.c.l.b16 %v600
          %v859 = vunpack.c.l.b16 %v601
          %v860 = vunpack.c.l.b16 %v602
          %v861 = vunpack.c.l.b16 %v603
          %v862 = vunpack.c.l.b16 %v604
          %v863 = vunpack.c.l.b16 %v605
          %v864 = vunpack.c.l.b16 %v606
          %v865 = vunpack.c.l.b16 %v607
          %v866 = vunpack.c.l.b16 %v608
          %v867 = vunpack.c.l.b16 %v609
          %v868 = vunpack.c.l.b16 %v610
          %v869 = vunpack.c.l.b16 %v611
          %v870 = vunpack.c.l.b16 %v612
          %v871 = vunpack.c.l.b16 %v613
          %v872 = vunpack.c.l.b16 %v614
          %v873 = vunpack.c.l.b16 %v615
          %v874 = vunpack.c.l.b16 %v616
          %v875 = vpack.c.b16 %v844, %v843
          %v876 = vpack.c.b16 %v846, %v845
          %v877 = vpack.c.b16 %v848, %v847
          %v878 = vpack.c.b16 %v850, %v849
          %v879 = vpack.c.b16 %v852, %v851
          %v880 = vpack.c.b16 %v854, %v853
          %v881 = vpack.c.b16 %v856, %v855
          %v882 = vpack.c.b16 %v858, %v857
          %v883 = vpack.c.b16 %v860, %v859
          %v884 = vpack.c.b16 %v862, %v861
          %v885 = vpack.c.b16 %v864, %v863
          %v886 = vpack.c.b16 %v866, %v865
          %v887 = vpack.c.b16 %v868, %v867
          %v888 = vpack.c.b16 %v870, %v869
          %v889 = vpack.c.b16 %v872, %v871
          %v890 = vpack.c.b16 %v874, %v873
          %907 = vmatprep.subr.bf16.mxu0 0
          %908 = vmatpush1.bf16.msra.mxu0 %v875
          %909 = vmatprep.subr.bf16.mxu0 0
          %910 = vmatpush1.bf16.msra.mxu0 %v876
          %911 = vmatprep.subr.bf16.mxu0 0
          %912 = vmatpush1.bf16.msra.mxu0 %v877
          %913 = vmatprep.subr.bf16.mxu0 0
          %914 = vmatpush1.bf16.msra.mxu0 %v878
          %915 = vmatprep.subr.bf16.mxu0 0
          %916 = vmatpush1.bf16.msra.mxu0 %v879
          %917 = vmatprep.subr.bf16.mxu0 0
          %918 = vmatpush1.bf16.msra.mxu0 %v880
          %919 = vmatprep.subr.bf16.mxu0 0
          %920 = vmatpush1.bf16.msra.mxu0 %v881
          %921 = vmatprep.subr.bf16.mxu0 0
          %922 = vmatpush1.bf16.msra.mxu0 %v882
          %923 = vmatprep.subr.bf16.mxu0 0
          %924 = vmatpush1.bf16.msra.mxu0 %v883
          %925 = vmatprep.subr.bf16.mxu0 0
          %926 = vmatpush1.bf16.msra.mxu0 %v884
          %927 = vmatprep.subr.bf16.mxu0 0
          %928 = vmatpush1.bf16.msra.mxu0 %v885
          %929 = vmatprep.subr.bf16.mxu0 0
          %930 = vmatpush1.bf16.msra.mxu0 %v886
          %931 = vmatprep.subr.bf16.mxu0 0
          %932 = vmatpush1.bf16.msra.mxu0 %v887
          %933 = vmatprep.subr.bf16.mxu0 0
          %934 = vmatpush1.bf16.msra.mxu0 %v888
          %935 = vmatprep.subr.bf16.mxu0 0
          %936 = vmatpush1.bf16.msra.mxu0 %v889
          %937 = vmatprep.subr.bf16.mxu0 0
          %938 = vmatpush1.bf16.msra.mxu0 %v890
          %939 = vmatprep.mubr.bf16.mxu0 %v808
          %940 = vmatmul.mubr.bf16.gmra.mrb[0].mxu0 %v807
          %v941 = vpop.f32.mrb[0].mxu0
          %v942 = vadd.f32 %v795, %v941
          %v943 = vpop.f32.mrb[0].mxu0
          %v944 = vpop.f32.mrb[0].mxu0
          %v945 = vpop.f32.mrb[0].mxu0
          %946 = vdwg.mxu0
          %v947 = vld [vmem:[%s583] sm:$0xf]
          %s948 = scalar_lea.vmem %s506, 256 [#allocation13]
          %v949 = vld [vmem:[%s948] sm:$0xf]
          %v950 = vld [vmem:[%s948 + $0x4] sm:$0xf]
          %v951 = vld [vmem:[%s948 + $0x8] sm:$0xf]
          %v952 = vld [vmem:[%s948 + $0xc] sm:$0xf]
          %v953 = vld [vmem:[%s948 + $0x10] sm:$0xf]
          %v954 = vld [vmem:[%s948 + $0x14] sm:$0xf]
          %v955 = vld [vmem:[%s948 + $0x18] sm:$0xf]
          %v956 = vld [vmem:[%s948 + $0x1c] sm:$0xf]
          %v957 = vld [vmem:[%s948 + $0x20] sm:$0xf]
          %v958 = vld [vmem:[%s948 + $0x24] sm:$0xf]
          %v959 = vld [vmem:[%s948 + $0x28] sm:$0xf]
          %v960 = vld [vmem:[%s948 + $0x2c] sm:$0xf]
          %v961 = vld [vmem:[%s948 + $0x30] sm:$0xf]
          %v962 = vld [vmem:[%s948 + $0x34] sm:$0xf]
          %v963 = vld [vmem:[%s948 + $0x38] sm:$0xf]
          %v964 = vld [vmem:[%s948 + $0x3c] sm:$0xf]
          %v965 = vld [vmem:[%s948 + $0x40] sm:$0xf]
          %v966 = vld [vmem:[%s948 + $0x44] sm:$0xf]
          %v967 = vld [vmem:[%s948 + $0x48] sm:$0xf]
          %v968 = vld [vmem:[%s948 + $0x4c] sm:$0xf]
          %v969 = vld [vmem:[%s948 + $0x50] sm:$0xf]
          %v970 = vld [vmem:[%s948 + $0x54] sm:$0xf]
          %v971 = vld [vmem:[%s948 + $0x58] sm:$0xf]
          %v972 = vld [vmem:[%s948 + $0x5c] sm:$0xf]
          %v973 = vld [vmem:[%s948 + $0x60] sm:$0xf]
          %v974 = vld [vmem:[%s948 + $0x64] sm:$0xf]
          %v975 = vld [vmem:[%s948 + $0x68] sm:$0xf]
          %v976 = vld [vmem:[%s948 + $0x6c] sm:$0xf]
          %v977 = vld [vmem:[%s948 + $0x70] sm:$0xf]
          %v978 = vld [vmem:[%s948 + $0x74] sm:$0xf]
          %v979 = vld [vmem:[%s948 + $0x78] sm:$0xf]
          %v980 = vld [vmem:[%s948 + $0x7c] sm:$0xf]
          %v983 = vunpack.c.l.s4 1983009808
          %v984 = vunpack.c.0.s8 %v983
          %v985 = vlaneseq
          %v986 = vshrl.u32 %v985, 7
          %v987 = vsub.s32 %v984, %v986
          %v988 = vrot.slane %v947, %v987
          %v989 = vcombine.high %v988, %v988
          %v991 = vshrl.u32 %v988, 16
          %v993 = vshll.u32 %v988, 16
          %v995 = vrot.slane %v993, 1
          %v996 = vor.u32 %v991, %v995
          %v998 = vshrl.u32 %v989, 16
          %v1000 = vshll.u32 %v989, 16
          %v1002 = vrot.slane %v1000, 1
          %v1003 = vor.u32 %v998, %v1002
          %v1038 = vunpack.c.l.b16 %v949
          %v1039 = vunpack.c.l.b16 %v950
          %v1040 = vunpack.c.l.b16 %v951
          %v1041 = vunpack.c.l.b16 %v952
          %v1042 = vunpack.c.l.b16 %v953
          %v1043 = vunpack.c.l.b16 %v954
          %v1044 = vunpack.c.l.b16 %v955
          %v1045 = vunpack.c.l.b16 %v956
          %v1046 = vunpack.c.l.b16 %v957
          %v1047 = vunpack.c.l.b16 %v958
          %v1048 = vunpack.c.l.b16 %v959
          %v1049 = vunpack.c.l.b16 %v960
          %v1050 = vunpack.c.l.b16 %v961
          %v1051 = vunpack.c.l.b16 %v962
          %v1052 = vunpack.c.l.b16 %v963
          %v1053 = vunpack.c.l.b16 %v964
          %v1054 = vunpack.c.l.b16 %v965
          %v1055 = vunpack.c.l.b16 %v966
          %v1056 = vunpack.c.l.b16 %v967
          %v1057 = vunpack.c.l.b16 %v968
          %v1058 = vunpack.c.l.b16 %v969
          %v1059 = vunpack.c.l.b16 %v970
          %v1060 = vunpack.c.l.b16 %v971
          %v1061 = vunpack.c.l.b16 %v972
          %v1062 = vunpack.c.l.b16 %v973
          %v1063 = vunpack.c.l.b16 %v974
          %v1064 = vunpack.c.l.b16 %v975
          %v1065 = vunpack.c.l.b16 %v976
          %v1066 = vunpack.c.l.b16 %v977
          %v1067 = vunpack.c.l.b16 %v978
          %v1068 = vunpack.c.l.b16 %v979
          %v1069 = vunpack.c.l.b16 %v980
          %v1070 = vpack.c.b16 %v1039, %v1038
          %v1071 = vpack.c.b16 %v1041, %v1040
          %v1072 = vpack.c.b16 %v1043, %v1042
          %v1073 = vpack.c.b16 %v1045, %v1044
          %v1074 = vpack.c.b16 %v1047, %v1046
          %v1075 = vpack.c.b16 %v1049, %v1048
          %v1076 = vpack.c.b16 %v1051, %v1050
          %v1077 = vpack.c.b16 %v1053, %v1052
          %v1078 = vpack.c.b16 %v1055, %v1054
          %v1079 = vpack.c.b16 %v1057, %v1056
          %v1080 = vpack.c.b16 %v1059, %v1058
          %v1081 = vpack.c.b16 %v1061, %v1060
          %v1082 = vpack.c.b16 %v1063, %v1062
          %v1083 = vpack.c.b16 %v1065, %v1064
          %v1084 = vpack.c.b16 %v1067, %v1066
          %v1085 = vpack.c.b16 %v1069, %v1068
          %1102 = vmatprep.subr.bf16.mxu0 0
          %1103 = vmatpush1.bf16.msra.mxu0 %v1070
          %1104 = vmatprep.subr.bf16.mxu0 0
          %1105 = vmatpush1.bf16.msra.mxu0 %v1071
          %1106 = vmatprep.subr.bf16.mxu0 0
          %1107 = vmatpush1.bf16.msra.mxu0 %v1072
          %1108 = vmatprep.subr.bf16.mxu0 0
          %1109 = vmatpush1.bf16.msra.mxu0 %v1073
          %1110 = vmatprep.subr.bf16.mxu0 0
          %1111 = vmatpush1.bf16.msra.mxu0 %v1074
          %1112 = vmatprep.subr.bf16.mxu0 0
          %1113 = vmatpush1.bf16.msra.mxu0 %v1075
          %1114 = vmatprep.subr.bf16.mxu0 0
          %1115 = vmatpush1.bf16.msra.mxu0 %v1076
          %1116 = vmatprep.subr.bf16.mxu0 0
          %1117 = vmatpush1.bf16.msra.mxu0 %v1077
          %1118 = vmatprep.subr.bf16.mxu0 0
          %1119 = vmatpush1.bf16.msra.mxu0 %v1078
          %1120 = vmatprep.subr.bf16.mxu0 0
          %1121 = vmatpush1.bf16.msra.mxu0 %v1079
          %1122 = vmatprep.subr.bf16.mxu0 0
          %1123 = vmatpush1.bf16.msra.mxu0 %v1080
          %1124 = vmatprep.subr.bf16.mxu0 0
          %1125 = vmatpush1.bf16.msra.mxu0 %v1081
          %1126 = vmatprep.subr.bf16.mxu0 0
          %1127 = vmatpush1.bf16.msra.mxu0 %v1082
          %1128 = vmatprep.subr.bf16.mxu0 0
          %1129 = vmatpush1.bf16.msra.mxu0 %v1083
          %1130 = vmatprep.subr.bf16.mxu0 0
          %1131 = vmatpush1.bf16.msra.mxu0 %v1084
          %1132 = vmatprep.subr.bf16.mxu0 0
          %1133 = vmatpush1.bf16.msra.mxu0 %v1085
          %1134 = vmatprep.mubr.bf16.mxu0 %v1003
          %1135 = vmatmul.mubr.bf16.gmra.mrb[0].mxu0 %v996
          %v1136 = vpop.f32.mrb[0].mxu0
          %v1137 = vadd.f32 0.0, %v1136
          %v1138 = vpop.f32.mrb[0].mxu0
          %v1139 = vpop.f32.mrb[0].mxu0
          %v1140 = vpop.f32.mrb[0].mxu0
          %1141 = vdwg.mxu0
          %v1142 = vadd.f32 %v942, %v1137
          %s1143 = smul.addr %s581, 2
          %s1144 = scalar_lea.vmem [#allocation7], %s1143
          %v1145 = vld [vmem:[%s1144] sm:$0x5]
          %s1146 = scalar_lea.vmem %s506, 384 [#allocation13]
          %v1147 = vld [vmem:[%s1146] sm:$0xf]
          %v1148 = vld [vmem:[%s1146 + $0x4] sm:$0xf]
          %v1149 = vld [vmem:[%s1146 + $0x8] sm:$0xf]
          %v1150 = vld [vmem:[%s1146 + $0xc] sm:$0xf]
          %v1151 = vld [vmem:[%s1146 + $0x10] sm:$0xf]
          %v1152 = vld [vmem:[%s1146 + $0x14] sm:$0xf]
          %v1153 = vld [vmem:[%s1146 + $0x18] sm:$0xf]
          %v1154 = vld [vmem:[%s1146 + $0x1c] sm:$0xf]
          %v1155 = vld [vmem:[%s1146 + $0x20] sm:$0xf]
          %v1156 = vld [vmem:[%s1146 + $0x24] sm:$0xf]
          %v1157 = vld [vmem:[%s1146 + $0x28] sm:$0xf]
          %v1158 = vld [vmem:[%s1146 + $0x2c] sm:$0xf]
          %v1159 = vld [vmem:[%s1146 + $0x30] sm:$0xf]
          %v1160 = vld [vmem:[%s1146 + $0x34] sm:$0xf]
          %v1161 = vld [vmem:[%s1146 + $0x38] sm:$0xf]
          %v1162 = vld [vmem:[%s1146 + $0x3c] sm:$0xf]
          %v1163 = vld [vmem:[%s1146 + $0x40] sm:$0xf]
          %v1164 = vld [vmem:[%s1146 + $0x44] sm:$0xf]
          %v1165 = vld [vmem:[%s1146 + $0x48] sm:$0xf]
          %v1166 = vld [vmem:[%s1146 + $0x4c] sm:$0xf]
          %v1167 = vld [vmem:[%s1146 + $0x50] sm:$0xf]
          %v1168 = vld [vmem:[%s1146 + $0x54] sm:$0xf]
          %v1169 = vld [vmem:[%s1146 + $0x58] sm:$0xf]
          %v1170 = vld [vmem:[%s1146 + $0x5c] sm:$0xf]
          %v1171 = vld [vmem:[%s1146 + $0x60] sm:$0xf]
          %v1172 = vld [vmem:[%s1146 + $0x64] sm:$0xf]
          %v1173 = vld [vmem:[%s1146 + $0x68] sm:$0xf]
          %v1174 = vld [vmem:[%s1146 + $0x6c] sm:$0xf]
          %v1175 = vld [vmem:[%s1146 + $0x70] sm:$0xf]
          %v1176 = vld [vmem:[%s1146 + $0x74] sm:$0xf]
          %v1177 = vld [vmem:[%s1146 + $0x78] sm:$0xf]
          %v1178 = vld [vmem:[%s1146 + $0x7c] sm:$0xf]
          %v1181 = vunpack.c.l.s4 1983009808
          %v1182 = vunpack.c.0.s8 %v1181
          %v1183 = vlaneseq
          %v1184 = vshrl.u32 %v1183, 7
          %v1185 = vsub.s32 %v1182, %v1184
          %v1186 = vrot.slane %v1145, %v1185
          %v1187 = vcombine.high %v1186, %v1186
          %v1222 = vunpack.c.l.b16 %v1147
          %v1223 = vunpack.c.l.b16 %v1148
          %v1224 = vunpack.c.l.b16 %v1149
          %v1225 = vunpack.c.l.b16 %v1150
          %v1226 = vunpack.c.l.b16 %v1151
          %v1227 = vunpack.c.l.b16 %v1152
          %v1228 = vunpack.c.l.b16 %v1153
          %v1229 = vunpack.c.l.b16 %v1154
          %v1230 = vunpack.c.l.b16 %v1155
          %v1231 = vunpack.c.l.b16 %v1156
          %v1232 = vunpack.c.l.b16 %v1157
          %v1233 = vunpack.c.l.b16 %v1158
          %v1234 = vunpack.c.l.b16 %v1159
          %v1235 = vunpack.c.l.b16 %v1160
          %v1236 = vunpack.c.l.b16 %v1161
          %v1237 = vunpack.c.l.b16 %v1162
          %v1238 = vunpack.c.l.b16 %v1163
          %v1239 = vunpack.c.l.b16 %v1164
          %v1240 = vunpack.c.l.b16 %v1165
          %v1241 = vunpack.c.l.b16 %v1166
          %v1242 = vunpack.c.l.b16 %v1167
          %v1243 = vunpack.c.l.b16 %v1168
          %v1244 = vunpack.c.l.b16 %v1169
          %v1245 = vunpack.c.l.b16 %v1170
          %v1246 = vunpack.c.l.b16 %v1171
          %v1247 = vunpack.c.l.b16 %v1172
          %v1248 = vunpack.c.l.b16 %v1173
          %v1249 = vunpack.c.l.b16 %v1174
          %v1250 = vunpack.c.l.b16 %v1175
          %v1251 = vunpack.c.l.b16 %v1176
          %v1252 = vunpack.c.l.b16 %v1177
          %v1253 = vunpack.c.l.b16 %v1178
          %v1254 = vpack.c.b16 %v1223, %v1222
          %v1255 = vpack.c.b16 %v1225, %v1224
          %v1256 = vpack.c.b16 %v1227, %v1226
          %v1257 = vpack.c.b16 %v1229, %v1228
          %v1258 = vpack.c.b16 %v1231, %v1230
          %v1259 = vpack.c.b16 %v1233, %v1232
          %v1260 = vpack.c.b16 %v1235, %v1234
          %v1261 = vpack.c.b16 %v1237, %v1236
          %v1262 = vpack.c.b16 %v1239, %v1238
          %v1263 = vpack.c.b16 %v1241, %v1240
          %v1264 = vpack.c.b16 %v1243, %v1242
          %v1265 = vpack.c.b16 %v1245, %v1244
          %v1266 = vpack.c.b16 %v1247, %v1246
          %v1267 = vpack.c.b16 %v1249, %v1248
          %v1268 = vpack.c.b16 %v1251, %v1250
          %v1269 = vpack.c.b16 %v1253, %v1252
          %1286 = vmatprep.subr.bf16.mxu0 0
          %1287 = vmatpush1.bf16.msra.mxu0 %v1254
          %1288 = vmatprep.subr.bf16.mxu0 0
          %1289 = vmatpush1.bf16.msra.mxu0 %v1255
          %1290 = vmatprep.subr.bf16.mxu0 0
          %1291 = vmatpush1.bf16.msra.mxu0 %v1256
          %1292 = vmatprep.subr.bf16.mxu0 0
          %1293 = vmatpush1.bf16.msra.mxu0 %v1257
          %1294 = vmatprep.subr.bf16.mxu0 0
          %1295 = vmatpush1.bf16.msra.mxu0 %v1258
          %1296 = vmatprep.subr.bf16.mxu0 0
          %1297 = vmatpush1.bf16.msra.mxu0 %v1259
          %1298 = vmatprep.subr.bf16.mxu0 0
          %1299 = vmatpush1.bf16.msra.mxu0 %v1260
          %1300 = vmatprep.subr.bf16.mxu0 0
          %1301 = vmatpush1.bf16.msra.mxu0 %v1261
          %1302 = vmatprep.subr.bf16.mxu0 0
          %1303 = vmatpush1.bf16.msra.mxu0 %v1262
          %1304 = vmatprep.subr.bf16.mxu0 0
          %1305 = vmatpush1.bf16.msra.mxu0 %v1263
          %1306 = vmatprep.subr.bf16.mxu0 0
          %1307 = vmatpush1.bf16.msra.mxu0 %v1264
          %1308 = vmatprep.subr.bf16.mxu0 0
          %1309 = vmatpush1.bf16.msra.mxu0 %v1265
          %1310 = vmatprep.subr.bf16.mxu0 0
          %1311 = vmatpush1.bf16.msra.mxu0 %v1266
          %1312 = vmatprep.subr.bf16.mxu0 0
          %1313 = vmatpush1.bf16.msra.mxu0 %v1267
          %1314 = vmatprep.subr.bf16.mxu0 0
          %1315 = vmatpush1.bf16.msra.mxu0 %v1268
          %1316 = vmatprep.subr.bf16.mxu0 0
          %1317 = vmatpush1.bf16.msra.mxu0 %v1269
          %1318 = vmatprep.mubr.bf16.mxu0 %v1187
          %1319 = vmatmul.mubr.bf16.gmra.mrb[0].mxu0 %v1186
          %v1320 = vpop.f32.mrb[0].mxu0
          %v1321 = vadd.f32 0.0, %v1320
          %v1322 = vpop.f32.mrb[0].mxu0
          %v1323 = vpop.f32.mrb[0].mxu0
          %v1324 = vpop.f32.mrb[0].mxu0
          %1325 = vdwg.mxu0
          %v1326 = vadd.f32 %v1142, %v1321
          %s1327 = smul.addr %s581, 2
          %s1328 = scalar_lea.vmem [#allocation8], %s1327
          %v1329 = vld [vmem:[%s1328] sm:$0x5]
          %s1330 = scalar_lea.vmem %s506, 512 [#allocation13]
          %v1331 = vld [vmem:[%s1330] sm:$0xf]
          %v1332 = vld [vmem:[%s1330 + $0x4] sm:$0xf]
          %v1333 = vld [vmem:[%s1330 + $0x8] sm:$0xf]
          %v1334 = vld [vmem:[%s1330 + $0xc] sm:$0xf]
          %v1335 = vld [vmem:[%s1330 + $0x10] sm:$0xf]
          %v1336 = vld [vmem:[%s1330 + $0x14] sm:$0xf]
          %v1337 = vld [vmem:[%s1330 + $0x18] sm:$0xf]
          %v1338 = vld [vmem:[%s1330 + $0x1c] sm:$0xf]
          %v1339 = vld [vmem:[%s1330 + $0x20] sm:$0xf]
          %v1340 = vld [vmem:[%s1330 + $0x24] sm:$0xf]
          %v1341 = vld [vmem:[%s1330 + $0x28] sm:$0xf]
          %v1342 = vld [vmem:[%s1330 + $0x2c] sm:$0xf]
          %v1343 = vld [vmem:[%s1330 + $0x30] sm:$0xf]
          %v1344 = vld [vmem:[%s1330 + $0x34] sm:$0xf]
          %v1345 = vld [vmem:[%s1330 + $0x38] sm:$0xf]
          %v1346 = vld [vmem:[%s1330 + $0x3c] sm:$0xf]
          %v1347 = vld [vmem:[%s1330 + $0x40] sm:$0xf]
          %v1348 = vld [vmem:[%s1330 + $0x44] sm:$0xf]
          %v1349 = vld [vmem:[%s1330 + $0x48] sm:$0xf]
          %v1350 = vld [vmem:[%s1330 + $0x4c] sm:$0xf]
          %v1351 = vld [vmem:[%s1330 + $0x50] sm:$0xf]
          %v1352 = vld [vmem:[%s1330 + $0x54] sm:$0xf]
          %v1353 = vld [vmem:[%s1330 + $0x58] sm:$0xf]
          %v1354 = vld [vmem:[%s1330 + $0x5c] sm:$0xf]
          %v1355 = vld [vmem:[%s1330 + $0x60] sm:$0xf]
          %v1356 = vld [vmem:[%s1330 + $0x64] sm:$0xf]
          %v1357 = vld [vmem:[%s1330 + $0x68] sm:$0xf]
          %v1358 = vld [vmem:[%s1330 + $0x6c] sm:$0xf]
          %v1359 = vld [vmem:[%s1330 + $0x70] sm:$0xf]
          %v1360 = vld [vmem:[%s1330 + $0x74] sm:$0xf]
          %v1361 = vld [vmem:[%s1330 + $0x78] sm:$0xf]
          %v1362 = vld [vmem:[%s1330 + $0x7c] sm:$0xf]
          %v1365 = vunpack.c.l.s4 1983009808
          %v1366 = vunpack.c.0.s8 %v1365
          %v1367 = vlaneseq
          %v1368 = vshrl.u32 %v1367, 7
          %v1369 = vsub.s32 %v1366, %v1368
          %v1370 = vrot.slane %v1329, %v1369
          %v1371 = vcombine.high %v1370, %v1370
          %v1406 = vunpack.c.l.b16 %v1331
          %v1407 = vunpack.c.l.b16 %v1332
          %v1408 = vunpack.c.l.b16 %v1333
          %v1409 = vunpack.c.l.b16 %v1334
          %v1410 = vunpack.c.l.b16 %v1335
          %v1411 = vunpack.c.l.b16 %v1336
          %v1412 = vunpack.c.l.b16 %v1337
          %v1413 = vunpack.c.l.b16 %v1338
          %v1414 = vunpack.c.l.b16 %v1339
          %v1415 = vunpack.c.l.b16 %v1340
          %v1416 = vunpack.c.l.b16 %v1341
          %v1417 = vunpack.c.l.b16 %v1342
          %v1418 = vunpack.c.l.b16 %v1343
          %v1419 = vunpack.c.l.b16 %v1344
          %v1420 = vunpack.c.l.b16 %v1345
          %v1421 = vunpack.c.l.b16 %v1346
          %v1422 = vunpack.c.l.b16 %v1347
          %v1423 = vunpack.c.l.b16 %v1348
          %v1424 = vunpack.c.l.b16 %v1349
          %v1425 = vunpack.c.l.b16 %v1350
          %v1426 = vunpack.c.l.b16 %v1351
          %v1427 = vunpack.c.l.b16 %v1352
          %v1428 = vunpack.c.l.b16 %v1353
          %v1429 = vunpack.c.l.b16 %v1354
          %v1430 = vunpack.c.l.b16 %v1355
          %v1431 = vunpack.c.l.b16 %v1356
          %v1432 = vunpack.c.l.b16 %v1357
          %v1433 = vunpack.c.l.b16 %v1358
          %v1434 = vunpack.c.l.b16 %v1359
          %v1435 = vunpack.c.l.b16 %v1360
          %v1436 = vunpack.c.l.b16 %v1361
          %v1437 = vunpack.c.l.b16 %v1362
          %v1438 = vpack.c.b16 %v1407, %v1406
          %v1439 = vpack.c.b16 %v1409, %v1408
          %v1440 = vpack.c.b16 %v1411, %v1410
          %v1441 = vpack.c.b16 %v1413, %v1412
          %v1442 = vpack.c.b16 %v1415, %v1414
          %v1443 = vpack.c.b16 %v1417, %v1416
          %v1444 = vpack.c.b16 %v1419, %v1418
          %v1445 = vpack.c.b16 %v1421, %v1420
          %v1446 = vpack.c.b16 %v1423, %v1422
          %v1447 = vpack.c.b16 %v1425, %v1424
          %v1448 = vpack.c.b16 %v1427, %v1426
          %v1449 = vpack.c.b16 %v1429, %v1428
          %v1450 = vpack.c.b16 %v1431, %v1430
          %v1451 = vpack.c.b16 %v1433, %v1432
          %v1452 = vpack.c.b16 %v1435, %v1434
          %v1453 = vpack.c.b16 %v1437, %v1436
          %1470 = vmatprep.subr.bf16.mxu0 0
          %1471 = vmatpush1.bf16.msra.mxu0 %v1438
          %1472 = vmatprep.subr.bf16.mxu0 0
          %1473 = vmatpush1.bf16.msra.mxu0 %v1439
          %1474 = vmatprep.subr.bf16.mxu0 0
          %1475 = vmatpush1.bf16.msra.mxu0 %v1440
          %1476 = vmatprep.subr.bf16.mxu0 0
          %1477 = vmatpush1.bf16.msra.mxu0 %v1441
          %1478 = vmatprep.subr.bf16.mxu0 0
          %1479 = vmatpush1.bf16.msra.mxu0 %v1442
          %1480 = vmatprep.subr.bf16.mxu0 0
          %1481 = vmatpush1.bf16.msra.mxu0 %v1443
          %1482 = vmatprep.subr.bf16.mxu0 0
          %1483 = vmatpush1.bf16.msra.mxu0 %v1444
          %1484 = vmatprep.subr.bf16.mxu0 0
          %1485 = vmatpush1.bf16.msra.mxu0 %v1445
          %1486 = vmatprep.subr.bf16.mxu0 0
          %1487 = vmatpush1.bf16.msra.mxu0 %v1446
          %1488 = vmatprep.subr.bf16.mxu0 0
          %1489 = vmatpush1.bf16.msra.mxu0 %v1447
          %1490 = vmatprep.subr.bf16.mxu0 0
          %1491 = vmatpush1.bf16.msra.mxu0 %v1448
          %1492 = vmatprep.subr.bf16.mxu0 0
          %1493 = vmatpush1.bf16.msra.mxu0 %v1449
          %1494 = vmatprep.subr.bf16.mxu0 0
          %1495 = vmatpush1.bf16.msra.mxu0 %v1450
          %1496 = vmatprep.subr.bf16.mxu0 0
          %1497 = vmatpush1.bf16.msra.mxu0 %v1451
          %1498 = vmatprep.subr.bf16.mxu0 0
          %1499 = vmatpush1.bf16.msra.mxu0 %v1452
          %1500 = vmatprep.subr.bf16.mxu0 0
          %1501 = vmatpush1.bf16.msra.mxu0 %v1453
          %1502 = vmatprep.mubr.bf16.mxu0 %v1371
          %1503 = vmatmul.mubr.bf16.gmra.mrb[0].mxu0 %v1370
          %v1504 = vpop.f32.mrb[0].mxu0
          %v1505 = vadd.f32 0.0, %v1504
          %v1506 = vpop.f32.mrb[0].mxu0
          %v1507 = vpop.f32.mrb[0].mxu0
          %v1508 = vpop.f32.mrb[0].mxu0
          %1509 = vdwg.mxu0
          %v1510 = vadd.f32 %v1326, %v1505
          %v1511 = vld [vmem:[%s1144] sm:$0xf]
          %s1512 = scalar_lea.vmem %s506, 640 [#allocation13]
          %v1513 = vld [vmem:[%s1512] sm:$0xf]
          %v1514 = vld [vmem:[%s1512 + $0x4] sm:$0xf]
          %v1515 = vld [vmem:[%s1512 + $0x8] sm:$0xf]
          %v1516 = vld [vmem:[%s1512 + $0xc] sm:$0xf]
          %v1517 = vld [vmem:[%s1512 + $0x10] sm:$0xf]
          %v1518 = vld [vmem:[%s1512 + $0x14] sm:$0xf]
          %v1519 = vld [vmem:[%s1512 + $0x18] sm:$0xf]
          %v1520 = vld [vmem:[%s1512 + $0x1c] sm:$0xf]
          %v1521 = vld [vmem:[%s1512 + $0x20] sm:$0xf]
          %v1522 = vld [vmem:[%s1512 + $0x24] sm:$0xf]
          %v1523 = vld [vmem:[%s1512 + $0x28] sm:$0xf]
          %v1524 = vld [vmem:[%s1512 + $0x2c] sm:$0xf]
          %v1525 = vld [vmem:[%s1512 + $0x30] sm:$0xf]
          %v1526 = vld [vmem:[%s1512 + $0x34] sm:$0xf]
          %v1527 = vld [vmem:[%s1512 + $0x38] sm:$0xf]
          %v1528 = vld [vmem:[%s1512 + $0x3c] sm:$0xf]
          %v1529 = vld [vmem:[%s1512 + $0x40] sm:$0xf]
          %v1530 = vld [vmem:[%s1512 + $0x44] sm:$0xf]
          %v1531 = vld [vmem:[%s1512 + $0x48] sm:$0xf]
          %v1532 = vld [vmem:[%s1512 + $0x4c] sm:$0xf]
          %v1533 = vld [vmem:[%s1512 + $0x50] sm:$0xf]
          %v1534 = vld [vmem:[%s1512 + $0x54] sm:$0xf]
          %v1535 = vld [vmem:[%s1512 + $0x58] sm:$0xf]
          %v1536 = vld [vmem:[%s1512 + $0x5c] sm:$0xf]
          %v1537 = vld [vmem:[%s1512 + $0x60] sm:$0xf]
          %v1538 = vld [vmem:[%s1512 + $0x64] sm:$0xf]
          %v1539 = vld [vmem:[%s1512 + $0x68] sm:$0xf]
          %v1540 = vld [vmem:[%s1512 + $0x6c] sm:$0xf]
          %v1541 = vld [vmem:[%s1512 + $0x70] sm:$0xf]
          %v1542 = vld [vmem:[%s1512 + $0x74] sm:$0xf]
          %v1543 = vld [vmem:[%s1512 + $0x78] sm:$0xf]
          %v1544 = vld [vmem:[%s1512 + $0x7c] sm:$0xf]
          %v1547 = vunpack.c.l.s4 1983009808
          %v1548 = vunpack.c.0.s8 %v1547
          %v1549 = vlaneseq
          %v1550 = vshrl.u32 %v1549, 7
          %v1551 = vsub.s32 %v1548, %v1550
          %v1552 = vrot.slane %v1511, %v1551
          %v1553 = vcombine.high %v1552, %v1552
          %v1555 = vshrl.u32 %v1552, 16
          %v1557 = vshll.u32 %v1552, 16
          %v1559 = vrot.slane %v1557, 1
          %v1560 = vor.u32 %v1555, %v1559
          %v1562 = vshrl.u32 %v1553, 16
          %v1564 = vshll.u32 %v1553, 16
          %v1566 = vrot.slane %v1564, 1
          %v1567 = vor.u32 %v1562, %v1566
          %v1602 = vunpack.c.l.b16 %v1513
          %v1603 = vunpack.c.l.b16 %v1514
          %v1604 = vunpack.c.l.b16 %v1515
          %v1605 = vunpack.c.l.b16 %v1516
          %v1606 = vunpack.c.l.b16 %v1517
          %v1607 = vunpack.c.l.b16 %v1518
          %v1608 = vunpack.c.l.b16 %v1519
          %v1609 = vunpack.c.l.b16 %v1520
          %v1610 = vunpack.c.l.b16 %v1521
          %v1611 = vunpack.c.l.b16 %v1522
          %v1612 = vunpack.c.l.b16 %v1523
          %v1613 = vunpack.c.l.b16 %v1524
          %v1614 = vunpack.c.l.b16 %v1525
          %v1615 = vunpack.c.l.b16 %v1526
          %v1616 = vunpack.c.l.b16 %v1527
          %v1617 = vunpack.c.l.b16 %v1528
          %v1618 = vunpack.c.l.b16 %v1529
          %v1619 = vunpack.c.l.b16 %v1530
          %v1620 = vunpack.c.l.b16 %v1531
          %v1621 = vunpack.c.l.b16 %v1532
          %v1622 = vunpack.c.l.b16 %v1533
          %v1623 = vunpack.c.l.b16 %v1534
          %v1624 = vunpack.c.l.b16 %v1535
          %v1625 = vunpack.c.l.b16 %v1536
          %v1626 = vunpack.c.l.b16 %v1537
          %v1627 = vunpack.c.l.b16 %v1538
          %v1628 = vunpack.c.l.b16 %v1539
          %v1629 = vunpack.c.l.b16 %v1540
          %v1630 = vunpack.c.l.b16 %v1541
          %v1631 = vunpack.c.l.b16 %v1542
          %v1632 = vunpack.c.l.b16 %v1543
          %v1633 = vunpack.c.l.b16 %v1544
          %v1634 = vpack.c.b16 %v1603, %v1602
          %v1635 = vpack.c.b16 %v1605, %v1604
          %v1636 = vpack.c.b16 %v1607, %v1606
          %v1637 = vpack.c.b16 %v1609, %v1608
          %v1638 = vpack.c.b16 %v1611, %v1610
          %v1639 = vpack.c.b16 %v1613, %v1612
          %v1640 = vpack.c.b16 %v1615, %v1614
          %v1641 = vpack.c.b16 %v1617, %v1616
          %v1642 = vpack.c.b16 %v1619, %v1618
          %v1643 = vpack.c.b16 %v1621, %v1620
          %v1644 = vpack.c.b16 %v1623, %v1622
          %v1645 = vpack.c.b16 %v1625, %v1624
          %v1646 = vpack.c.b16 %v1627, %v1626
          %v1647 = vpack.c.b16 %v1629, %v1628
          %v1648 = vpack.c.b16 %v1631, %v1630
          %v1649 = vpack.c.b16 %v1633, %v1632
          %1666 = vmatprep.subr.bf16.mxu0 0
          %1667 = vmatpush1.bf16.msra.mxu0 %v1634
          %1668 = vmatprep.subr.bf16.mxu0 0
          %1669 = vmatpush1.bf16.msra.mxu0 %v1635
          %1670 = vmatprep.subr.bf16.mxu0 0
          %1671 = vmatpush1.bf16.msra.mxu0 %v1636
          %1672 = vmatprep.subr.bf16.mxu0 0
          %1673 = vmatpush1.bf16.msra.mxu0 %v1637
          %1674 = vmatprep.subr.bf16.mxu0 0
          %1675 = vmatpush1.bf16.msra.mxu0 %v1638
          %1676 = vmatprep.subr.bf16.mxu0 0
          %1677 = vmatpush1.bf16.msra.mxu0 %v1639
          %1678 = vmatprep.subr.bf16.mxu0 0
          %1679 = vmatpush1.bf16.msra.mxu0 %v1640
          %1680 = vmatprep.subr.bf16.mxu0 0
          %1681 = vmatpush1.bf16.msra.mxu0 %v1641
          %1682 = vmatprep.subr.bf16.mxu0 0
          %1683 = vmatpush1.bf16.msra.mxu0 %v1642
          %1684 = vmatprep.subr.bf16.mxu0 0
          %1685 = vmatpush1.bf16.msra.mxu0 %v1643
          %1686 = vmatprep.subr.bf16.mxu0 0
          %1687 = vmatpush1.bf16.msra.mxu0 %v1644
          %1688 = vmatprep.subr.bf16.mxu0 0
          %1689 = vmatpush1.bf16.msra.mxu0 %v1645
          %1690 = vmatprep.subr.bf16.mxu0 0
          %1691 = vmatpush1.bf16.msra.mxu0 %v1646
          %1692 = vmatprep.subr.bf16.mxu0 0
          %1693 = vmatpush1.bf16.msra.mxu0 %v1647
          %1694 = vmatprep.subr.bf16.mxu0 0
          %1695 = vmatpush1.bf16.msra.mxu0 %v1648
          %1696 = vmatprep.subr.bf16.mxu0 0
          %1697 = vmatpush1.bf16.msra.mxu0 %v1649
          %1698 = vmatprep.mubr.bf16.mxu0 %v1567
          %1699 = vmatmul.mubr.bf16.gmra.mrb[0].mxu0 %v1560
          %v1700 = vpop.f32.mrb[0].mxu0
          %v1701 = vadd.f32 0.0, %v1700
          %v1702 = vpop.f32.mrb[0].mxu0
          %v1703 = vpop.f32.mrb[0].mxu0
          %v1704 = vpop.f32.mrb[0].mxu0
          %1705 = vdwg.mxu0
          %v1706 = vadd.f32 %v1510, %v1701
          %s1707 = smul.addr %s581, 2
          %s1708 = scalar_lea.vmem [#allocation10], %s1707
          %v1709 = vld [vmem:[%s1708] sm:$0x5]
          %s1710 = scalar_lea.vmem %s506, 768 [#allocation13]
          %v1711 = vld [vmem:[%s1710] sm:$0xf]
          %v1712 = vld [vmem:[%s1710 + $0x4] sm:$0xf]
          %v1713 = vld [vmem:[%s1710 + $0x8] sm:$0xf]
          %v1714 = vld [vmem:[%s1710 + $0xc] sm:$0xf]
          %v1715 = vld [vmem:[%s1710 + $0x10] sm:$0xf]
          %v1716 = vld [vmem:[%s1710 + $0x14] sm:$0xf]
          %v1717 = vld [vmem:[%s1710 + $0x18] sm:$0xf]
          %v1718 = vld [vmem:[%s1710 + $0x1c] sm:$0xf]
          %v1719 = vld [vmem:[%s1710 + $0x20] sm:$0xf]
          %v1720 = vld [vmem:[%s1710 + $0x24] sm:$0xf]
          %v1721 = vld [vmem:[%s1710 + $0x28] sm:$0xf]
          %v1722 = vld [vmem:[%s1710 + $0x2c] sm:$0xf]
          %v1723 = vld [vmem:[%s1710 + $0x30] sm:$0xf]
          %v1724 = vld [vmem:[%s1710 + $0x34] sm:$0xf]
          %v1725 = vld [vmem:[%s1710 + $0x38] sm:$0xf]
          %v1726 = vld [vmem:[%s1710 + $0x3c] sm:$0xf]
          %v1727 = vld [vmem:[%s1710 + $0x40] sm:$0xf]
          %v1728 = vld [vmem:[%s1710 + $0x44] sm:$0xf]
          %v1729 = vld [vmem:[%s1710 + $0x48] sm:$0xf]
          %v1730 = vld [vmem:[%s1710 + $0x4c] sm:$0xf]
          %v1731 = vld [vmem:[%s1710 + $0x50] sm:$0xf]
          %v1732 = vld [vmem:[%s1710 + $0x54] sm:$0xf]
          %v1733 = vld [vmem:[%s1710 + $0x58] sm:$0xf]
          %v1734 = vld [vmem:[%s1710 + $0x5c] sm:$0xf]
          %v1735 = vld [vmem:[%s1710 + $0x60] sm:$0xf]
          %v1736 = vld [vmem:[%s1710 + $0x64] sm:$0xf]
          %v1737 = vld [vmem:[%s1710 + $0x68] sm:$0xf]
          %v1738 = vld [vmem:[%s1710 + $0x6c] sm:$0xf]
          %v1739 = vld [vmem:[%s1710 + $0x70] sm:$0xf]
          %v1740 = vld [vmem:[%s1710 + $0x74] sm:$0xf]
          %v1741 = vld [vmem:[%s1710 + $0x78] sm:$0xf]
          %v1742 = vld [vmem:[%s1710 + $0x7c] sm:$0xf]
          %v1745 = vunpack.c.l.s4 1983009808
          %v1746 = vunpack.c.0.s8 %v1745
          %v1747 = vlaneseq
          %v1748 = vshrl.u32 %v1747, 7
          %v1749 = vsub.s32 %v1746, %v1748
          %v1750 = vrot.slane %v1709, %v1749
          %v1751 = vcombine.high %v1750, %v1750
          %v1786 = vunpack.c.l.b16 %v1711
          %v1787 = vunpack.c.l.b16 %v1712
          %v1788 = vunpack.c.l.b16 %v1713
          %v1789 = vunpack.c.l.b16 %v1714
          %v1790 = vunpack.c.l.b16 %v1715
          %v1791 = vunpack.c.l.b16 %v1716
          %v1792 = vunpack.c.l.b16 %v1717
          %v1793 = vunpack.c.l.b16 %v1718
          %v1794 = vunpack.c.l.b16 %v1719
          %v1795 = vunpack.c.l.b16 %v1720
          %v1796 = vunpack.c.l.b16 %v1721
          %v1797 = vunpack.c.l.b16 %v1722
          %v1798 = vunpack.c.l.b16 %v1723
          %v1799 = vunpack.c.l.b16 %v1724
          %v1800 = vunpack.c.l.b16 %v1725
          %v1801 = vunpack.c.l.b16 %v1726
          %v1802 = vunpack.c.l.b16 %v1727
          %v1803 = vunpack.c.l.b16 %v1728
          %v1804 = vunpack.c.l.b16 %v1729
          %v1805 = vunpack.c.l.b16 %v1730
          %v1806 = vunpack.c.l.b16 %v1731
          %v1807 = vunpack.c.l.b16 %v1732
          %v1808 = vunpack.c.l.b16 %v1733
          %v1809 = vunpack.c.l.b16 %v1734
          %v1810 = vunpack.c.l.b16 %v1735
          %v1811 = vunpack.c.l.b16 %v1736
          %v1812 = vunpack.c.l.b16 %v1737
          %v1813 = vunpack.c.l.b16 %v1738
          %v1814 = vunpack.c.l.b16 %v1739
          %v1815 = vunpack.c.l.b16 %v1740
          %v1816 = vunpack.c.l.b16 %v1741
          %v1817 = vunpack.c.l.b16 %v1742
          %v1818 = vpack.c.b16 %v1787, %v1786
          %v1819 = vpack.c.b16 %v1789, %v1788
          %v1820 = vpack.c.b16 %v1791, %v1790
          %v1821 = vpack.c.b16 %v1793, %v1792
          %v1822 = vpack.c.b16 %v1795, %v1794
          %v1823 = vpack.c.b16 %v1797, %v1796
          %v1824 = vpack.c.b16 %v1799, %v1798
          %v1825 = vpack.c.b16 %v1801, %v1800
          %v1826 = vpack.c.b16 %v1803, %v1802
          %v1827 = vpack.c.b16 %v1805, %v1804
          %v1828 = vpack.c.b16 %v1807, %v1806
          %v1829 = vpack.c.b16 %v1809, %v1808
          %v1830 = vpack.c.b16 %v1811, %v1810
          %v1831 = vpack.c.b16 %v1813, %v1812
          %v1832 = vpack.c.b16 %v1815, %v1814
          %v1833 = vpack.c.b16 %v1817, %v1816
          %1850 = vmatprep.subr.bf16.mxu0 0
          %1851 = vmatpush1.bf16.msra.mxu0 %v1818
          %1852 = vmatprep.subr.bf16.mxu0 0
          %1853 = vmatpush1.bf16.msra.mxu0 %v1819
          %1854 = vmatprep.subr.bf16.mxu0 0
          %1855 = vmatpush1.bf16.msra.mxu0 %v1820
          %1856 = vmatprep.subr.bf16.mxu0 0
          %1857 = vmatpush1.bf16.msra.mxu0 %v1821
          %1858 = vmatprep.subr.bf16.mxu0 0
          %1859 = vmatpush1.bf16.msra.mxu0 %v1822
          %1860 = vmatprep.subr.bf16.mxu0 0
          %1861 = vmatpush1.bf16.msra.mxu0 %v1823
          %1862 = vmatprep.subr.bf16.mxu0 0
          %1863 = vmatpush1.bf16.msra.mxu0 %v1824
          %1864 = vmatprep.subr.bf16.mxu0 0
          %1865 = vmatpush1.bf16.msra.mxu0 %v1825
          %1866 = vmatprep.subr.bf16.mxu0 0
          %1867 = vmatpush1.bf16.msra.mxu0 %v1826
          %1868 = vmatprep.subr.bf16.mxu0 0
          %1869 = vmatpush1.bf16.msra.mxu0 %v1827
          %1870 = vmatprep.subr.bf16.mxu0 0
          %1871 = vmatpush1.bf16.msra.mxu0 %v1828
          %1872 = vmatprep.subr.bf16.mxu0 0
          %1873 = vmatpush1.bf16.msra.mxu0 %v1829
          %1874 = vmatprep.subr.bf16.mxu0 0
          %1875 = vmatpush1.bf16.msra.mxu0 %v1830
          %1876 = vmatprep.subr.bf16.mxu0 0
          %1877 = vmatpush1.bf16.msra.mxu0 %v1831
          %1878 = vmatprep.subr.bf16.mxu0 0
          %1879 = vmatpush1.bf16.msra.mxu0 %v1832
          %1880 = vmatprep.subr.bf16.mxu0 0
          %1881 = vmatpush1.bf16.msra.mxu0 %v1833
          %1882 = vmatprep.mubr.bf16.mxu0 %v1751
          %1883 = vmatmul.mubr.bf16.gmra.mrb[0].mxu0 %v1750
          %v1884 = vpop.f32.mrb[0].mxu0
          %v1885 = vadd.f32 0.0, %v1884
          %v1886 = vpop.f32.mrb[0].mxu0
          %v1887 = vpop.f32.mrb[0].mxu0
          %v1888 = vpop.f32.mrb[0].mxu0
          %1889 = vdwg.mxu0
          %v1890 = vadd.f32 %v1706, %v1885
          %s1891 = smul.addr %s581, 2
          %s1892 = scalar_lea.vmem [#allocation11], %s1891
          %v1893 = vld [vmem:[%s1892] sm:$0x5]
          %s1894 = scalar_lea.vmem %s506, 896 [#allocation13]
          %v1895 = vld [vmem:[%s1894] sm:$0xf]
          %v1896 = vld [vmem:[%s1894 + $0x4] sm:$0xf]
          %v1897 = vld [vmem:[%s1894 + $0x8] sm:$0xf]
          %v1898 = vld [vmem:[%s1894 + $0xc] sm:$0xf]
          %v1899 = vld [vmem:[%s1894 + $0x10] sm:$0xf]
          %v1900 = vld [vmem:[%s1894 + $0x14] sm:$0xf]
          %v1901 = vld [vmem:[%s1894 + $0x18] sm:$0xf]
          %v1902 = vld [vmem:[%s1894 + $0x1c] sm:$0xf]
          %v1903 = vld [vmem:[%s1894 + $0x20] sm:$0xf]
          %v1904 = vld [vmem:[%s1894 + $0x24] sm:$0xf]
          %v1905 = vld [vmem:[%s1894 + $0x28] sm:$0xf]
          %v1906 = vld [vmem:[%s1894 + $0x2c] sm:$0xf]
          %v1907 = vld [vmem:[%s1894 + $0x30] sm:$0xf]
          %v1908 = vld [vmem:[%s1894 + $0x34] sm:$0xf]
          %v1909 = vld [vmem:[%s1894 + $0x38] sm:$0xf]
          %v1910 = vld [vmem:[%s1894 + $0x3c] sm:$0xf]
          %v1911 = vld [vmem:[%s1894 + $0x40] sm:$0xf]
          %v1912 = vld [vmem:[%s1894 + $0x44] sm:$0xf]
          %v1913 = vld [vmem:[%s1894 + $0x48] sm:$0xf]
          %v1914 = vld [vmem:[%s1894 + $0x4c] sm:$0xf]
          %v1915 = vld [vmem:[%s1894 + $0x50] sm:$0xf]
          %v1916 = vld [vmem:[%s1894 + $0x54] sm:$0xf]
          %v1917 = vld [vmem:[%s1894 + $0x58] sm:$0xf]
          %v1918 = vld [vmem:[%s1894 + $0x5c] sm:$0xf]
          %v1919 = vld [vmem:[%s1894 + $0x60] sm:$0xf]
          %v1920 = vld [vmem:[%s1894 + $0x64] sm:$0xf]
          %v1921 = vld [vmem:[%s1894 + $0x68] sm:$0xf]
          %v1922 = vld [vmem:[%s1894 + $0x6c] sm:$0xf]
          %v1923 = vld [vmem:[%s1894 + $0x70] sm:$0xf]
          %v1924 = vld [vmem:[%s1894 + $0x74] sm:$0xf]
          %v1925 = vld [vmem:[%s1894 + $0x78] sm:$0xf]
          %v1926 = vld [vmem:[%s1894 + $0x7c] sm:$0xf]
          %v1929 = vunpack.c.l.s4 1983009808
          %v1930 = vunpack.c.0.s8 %v1929
          %v1931 = vlaneseq
          %v1932 = vshrl.u32 %v1931, 7
          %v1933 = vsub.s32 %v1930, %v1932
          %v1934 = vrot.slane %v1893, %v1933
          %v1935 = vcombine.high %v1934, %v1934
          %v1970 = vunpack.c.l.b16 %v1895
          %v1971 = vunpack.c.l.b16 %v1896
          %v1972 = vunpack.c.l.b16 %v1897
          %v1973 = vunpack.c.l.b16 %v1898
          %v1974 = vunpack.c.l.b16 %v1899
          %v1975 = vunpack.c.l.b16 %v1900
          %v1976 = vunpack.c.l.b16 %v1901
          %v1977 = vunpack.c.l.b16 %v1902
          %v1978 = vunpack.c.l.b16 %v1903
          %v1979 = vunpack.c.l.b16 %v1904
          %v1980 = vunpack.c.l.b16 %v1905
          %v1981 = vunpack.c.l.b16 %v1906
          %v1982 = vunpack.c.l.b16 %v1907
          %v1983 = vunpack.c.l.b16 %v1908
          %v1984 = vunpack.c.l.b16 %v1909
          %v1985 = vunpack.c.l.b16 %v1910
          %v1986 = vunpack.c.l.b16 %v1911
          %v1987 = vunpack.c.l.b16 %v1912
          %v1988 = vunpack.c.l.b16 %v1913
          %v1989 = vunpack.c.l.b16 %v1914
          %v1990 = vunpack.c.l.b16 %v1915
          %v1991 = vunpack.c.l.b16 %v1916
          %v1992 = vunpack.c.l.b16 %v1917
          %v1993 = vunpack.c.l.b16 %v1918
          %v1994 = vunpack.c.l.b16 %v1919
          %v1995 = vunpack.c.l.b16 %v1920
          %v1996 = vunpack.c.l.b16 %v1921
          %v1997 = vunpack.c.l.b16 %v1922
          %v1998 = vunpack.c.l.b16 %v1923
          %v1999 = vunpack.c.l.b16 %v1924
          %v2000 = vunpack.c.l.b16 %v1925
          %v2001 = vunpack.c.l.b16 %v1926
          %v2002 = vpack.c.b16 %v1971, %v1970
          %v2003 = vpack.c.b16 %v1973, %v1972
          %v2004 = vpack.c.b16 %v1975, %v1974
          %v2005 = vpack.c.b16 %v1977, %v1976
          %v2006 = vpack.c.b16 %v1979, %v1978
          %v2007 = vpack.c.b16 %v1981, %v1980
          %v2008 = vpack.c.b16 %v1983, %v1982
          %v2009 = vpack.c.b16 %v1985, %v1984
          %v2010 = vpack.c.b16 %v1987, %v1986
          %v2011 = vpack.c.b16 %v1989, %v1988
          %v2012 = vpack.c.b16 %v1991, %v1990
          %v2013 = vpack.c.b16 %v1993, %v1992
          %v2014 = vpack.c.b16 %v1995, %v1994
          %v2015 = vpack.c.b16 %v1997, %v1996
          %v2016 = vpack.c.b16 %v1999, %v1998
          %v2017 = vpack.c.b16 %v2001, %v2000
          %2034 = vmatprep.subr.bf16.mxu0 0
          %2035 = vmatpush1.bf16.msra.mxu0 %v2002
          %2036 = vmatprep.subr.bf16.mxu0 0
          %2037 = vmatpush1.bf16.msra.mxu0 %v2003
          %2038 = vmatprep.subr.bf16.mxu0 0
          %2039 = vmatpush1.bf16.msra.mxu0 %v2004
          %2040 = vmatprep.subr.bf16.mxu0 0
          %2041 = vmatpush1.bf16.msra.mxu0 %v2005
          %2042 = vmatprep.subr.bf16.mxu0 0
          %2043 = vmatpush1.bf16.msra.mxu0 %v2006
          %2044 = vmatprep.subr.bf16.mxu0 0
          %2045 = vmatpush1.bf16.msra.mxu0 %v2007
          %2046 = vmatprep.subr.bf16.mxu0 0
          %2047 = vmatpush1.bf16.msra.mxu0 %v2008
          %2048 = vmatprep.subr.bf16.mxu0 0
          %2049 = vmatpush1.bf16.msra.mxu0 %v2009
          %2050 = vmatprep.subr.bf16.mxu0 0
          %2051 = vmatpush1.bf16.msra.mxu0 %v2010
          %2052 = vmatprep.subr.bf16.mxu0 0
          %2053 = vmatpush1.bf16.msra.mxu0 %v2011
          %2054 = vmatprep.subr.bf16.mxu0 0
          %2055 = vmatpush1.bf16.msra.mxu0 %v2012
          %2056 = vmatprep.subr.bf16.mxu0 0
          %2057 = vmatpush1.bf16.msra.mxu0 %v2013
          %2058 = vmatprep.subr.bf16.mxu0 0
          %2059 = vmatpush1.bf16.msra.mxu0 %v2014
          %2060 = vmatprep.subr.bf16.mxu0 0
          %2061 = vmatpush1.bf16.msra.mxu0 %v2015
          %2062 = vmatprep.subr.bf16.mxu0 0
          %2063 = vmatpush1.bf16.msra.mxu0 %v2016
          %2064 = vmatprep.subr.bf16.mxu0 0
          %2065 = vmatpush1.bf16.msra.mxu0 %v2017
          %2066 = vmatprep.mubr.bf16.mxu0 %v1935
          %2067 = vmatmul.mubr.bf16.gmra.mrb[0].mxu0 %v1934
          %v2068 = vpop.f32.mrb[0].mxu0
          %v2069 = vadd.f32 0.0, %v2068
          %v2070 = vpop.f32.mrb[0].mxu0
          %v2071 = vpop.f32.mrb[0].mxu0
          %v2072 = vpop.f32.mrb[0].mxu0
          %2073 = vdwg.mxu0
          %v2074 = vadd.f32 %v1890, %v2069
          %v2075 = vld [vmem:[%s1708] sm:$0xf]
          %s2076 = scalar_lea.vmem %s506, 1024 [#allocation13]
          %v2077 = vld [vmem:[%s2076] sm:$0xf]
          %v2078 = vld [vmem:[%s2076 + $0x4] sm:$0xf]
          %v2079 = vld [vmem:[%s2076 + $0x8] sm:$0xf]
          %v2080 = vld [vmem:[%s2076 + $0xc] sm:$0xf]
          %v2081 = vld [vmem:[%s2076 + $0x10] sm:$0xf]
          %v2082 = vld [vmem:[%s2076 + $0x14] sm:$0xf]
          %v2083 = vld [vmem:[%s2076 + $0x18] sm:$0xf]
          %v2084 = vld [vmem:[%s2076 + $0x1c] sm:$0xf]
          %v2085 = vld [vmem:[%s2076 + $0x20] sm:$0xf]
          %v2086 = vld [vmem:[%s2076 + $0x24] sm:$0xf]
          %v2087 = vld [vmem:[%s2076 + $0x28] sm:$0xf]
          %v2088 = vld [vmem:[%s2076 + $0x2c] sm:$0xf]
          %v2089 = vld [vmem:[%s2076 + $0x30] sm:$0xf]
          %v2090 = vld [vmem:[%s2076 + $0x34] sm:$0xf]
          %v2091 = vld [vmem:[%s2076 + $0x38] sm:$0xf]
          %v2092 = vld [vmem:[%s2076 + $0x3c] sm:$0xf]
          %v2093 = vld [vmem:[%s2076 + $0x40] sm:$0xf]
          %v2094 = vld [vmem:[%s2076 + $0x44] sm:$0xf]
          %v2095 = vld [vmem:[%s2076 + $0x48] sm:$0xf]
          %v2096 = vld [vmem:[%s2076 + $0x4c] sm:$0xf]
          %v2097 = vld [vmem:[%s2076 + $0x50] sm:$0xf]
          %v2098 = vld [vmem:[%s2076 + $0x54] sm:$0xf]
          %v2099 = vld [vmem:[%s2076 + $0x58] sm:$0xf]
          %v2100 = vld [vmem:[%s2076 + $0x5c] sm:$0xf]
          %v2101 = vld [vmem:[%s2076 + $0x60] sm:$0xf]
          %v2102 = vld [vmem:[%s2076 + $0x64] sm:$0xf]
          %v2103 = vld [vmem:[%s2076 + $0x68] sm:$0xf]
          %v2104 = vld [vmem:[%s2076 + $0x6c] sm:$0xf]
          %v2105 = vld [vmem:[%s2076 + $0x70] sm:$0xf]
          %v2106 = vld [vmem:[%s2076 + $0x74] sm:$0xf]
          %v2107 = vld [vmem:[%s2076 + $0x78] sm:$0xf]
          %v2108 = vld [vmem:[%s2076 + $0x7c] sm:$0xf]
          %v2111 = vunpack.c.l.s4 1983009808
          %v2112 = vunpack.c.0.s8 %v2111
          %v2113 = vlaneseq
          %v2114 = vshrl.u32 %v2113, 7
          %v2115 = vsub.s32 %v2112, %v2114
          %v2116 = vrot.slane %v2075, %v2115
          %v2117 = vcombine.high %v2116, %v2116
          %v2119 = vshrl.u32 %v2116, 16
          %v2121 = vshll.u32 %v2116, 16
          %v2123 = vrot.slane %v2121, 1
          %v2124 = vor.u32 %v2119, %v2123
          %v2126 = vshrl.u32 %v2117, 16
          %v2128 = vshll.u32 %v2117, 16
          %v2130 = vrot.slane %v2128, 1
          %v2131 = vor.u32 %v2126, %v2130
          %v2166 = vunpack.c.l.b16 %v2077
          %v2167 = vunpack.c.l.b16 %v2078
          %v2168 = vunpack.c.l.b16 %v2079
          %v2169 = vunpack.c.l.b16 %v2080
          %v2170 = vunpack.c.l.b16 %v2081
          %v2171 = vunpack.c.l.b16 %v2082
          %v2172 = vunpack.c.l.b16 %v2083
          %v2173 = vunpack.c.l.b16 %v2084
          %v2174 = vunpack.c.l.b16 %v2085
          %v2175 = vunpack.c.l.b16 %v2086
          %v2176 = vunpack.c.l.b16 %v2087
          %v2177 = vunpack.c.l.b16 %v2088
          %v2178 = vunpack.c.l.b16 %v2089
          %v2179 = vunpack.c.l.b16 %v2090
          %v2180 = vunpack.c.l.b16 %v2091
          %v2181 = vunpack.c.l.b16 %v2092
          %v2182 = vunpack.c.l.b16 %v2093
          %v2183 = vunpack.c.l.b16 %v2094
          %v2184 = vunpack.c.l.b16 %v2095
          %v2185 = vunpack.c.l.b16 %v2096
          %v2186 = vunpack.c.l.b16 %v2097
          %v2187 = vunpack.c.l.b16 %v2098
          %v2188 = vunpack.c.l.b16 %v2099
          %v2189 = vunpack.c.l.b16 %v2100
          %v2190 = vunpack.c.l.b16 %v2101
          %v2191 = vunpack.c.l.b16 %v2102
          %v2192 = vunpack.c.l.b16 %v2103
          %v2193 = vunpack.c.l.b16 %v2104
          %v2194 = vunpack.c.l.b16 %v2105
          %v2195 = vunpack.c.l.b16 %v2106
          %v2196 = vunpack.c.l.b16 %v2107
          %v2197 = vunpack.c.l.b16 %v2108
          %v2198 = vpack.c.b16 %v2167, %v2166
          %v2199 = vpack.c.b16 %v2169, %v2168
          %v2200 = vpack.c.b16 %v2171, %v2170
          %v2201 = vpack.c.b16 %v2173, %v2172
          %v2202 = vpack.c.b16 %v2175, %v2174
          %v2203 = vpack.c.b16 %v2177, %v2176
          %v2204 = vpack.c.b16 %v2179, %v2178
          %v2205 = vpack.c.b16 %v2181, %v2180
          %v2206 = vpack.c.b16 %v2183, %v2182
          %v2207 = vpack.c.b16 %v2185, %v2184
          %v2208 = vpack.c.b16 %v2187, %v2186
          %v2209 = vpack.c.b16 %v2189, %v2188
          %v2210 = vpack.c.b16 %v2191, %v2190
          %v2211 = vpack.c.b16 %v2193, %v2192
          %v2212 = vpack.c.b16 %v2195, %v2194
          %v2213 = vpack.c.b16 %v2197, %v2196
          %2230 = vmatprep.subr.bf16.mxu0 0
          %2231 = vmatpush1.bf16.msra.mxu0 %v2198
          %2232 = vmatprep.subr.bf16.mxu0 0
          %2233 = vmatpush1.bf16.msra.mxu0 %v2199
          %2234 = vmatprep.subr.bf16.mxu0 0
          %2235 = vmatpush1.bf16.msra.mxu0 %v2200
          %2236 = vmatprep.subr.bf16.mxu0 0
          %2237 = vmatpush1.bf16.msra.mxu0 %v2201
          %2238 = vmatprep.subr.bf16.mxu0 0
          %2239 = vmatpush1.bf16.msra.mxu0 %v2202
          %2240 = vmatprep.subr.bf16.mxu0 0
          %2241 = vmatpush1.bf16.msra.mxu0 %v2203
          %2242 = vmatprep.subr.bf16.mxu0 0
          %2243 = vmatpush1.bf16.msra.mxu0 %v2204
          %2244 = vmatprep.subr.bf16.mxu0 0
          %2245 = vmatpush1.bf16.msra.mxu0 %v2205
          %2246 = vmatprep.subr.bf16.mxu0 0
          %2247 = vmatpush1.bf16.msra.mxu0 %v2206
          %2248 = vmatprep.subr.bf16.mxu0 0
          %2249 = vmatpush1.bf16.msra.mxu0 %v2207
          %2250 = vmatprep.subr.bf16.mxu0 0
          %2251 = vmatpush1.bf16.msra.mxu0 %v2208
          %2252 = vmatprep.subr.bf16.mxu0 0
          %2253 = vmatpush1.bf16.msra.mxu0 %v2209
          %2254 = vmatprep.subr.bf16.mxu0 0
          %2255 = vmatpush1.bf16.msra.mxu0 %v2210
          %2256 = vmatprep.subr.bf16.mxu0 0
          %2257 = vmatpush1.bf16.msra.mxu0 %v2211
          %2258 = vmatprep.subr.bf16.mxu0 0
          %2259 = vmatpush1.bf16.msra.mxu0 %v2212
          %2260 = vmatprep.subr.bf16.mxu0 0
          %2261 = vmatpush1.bf16.msra.mxu0 %v2213
          %2262 = vmatprep.mubr.bf16.mxu0 %v2131
          %2263 = vmatmul.mubr.bf16.gmra.mrb[0].mxu0 %v2124
          %v2264 = vpop.f32.mrb[0].mxu0
          %v2265 = vadd.f32 0.0, %v2264
          %v2266 = vpop.f32.mrb[0].mxu0
          %v2267 = vpop.f32.mrb[0].mxu0
          %v2268 = vpop.f32.mrb[0].mxu0
          %2269 = vdwg.mxu0
          %v2270 = vadd.f32 %v2074, %v2265
          %v2272 = vlaneseq
          %v2273 = vshrl.u32 %v2272, 7
          %v2274 = vsub.s32 0, %v2273
          %v2275 = vrot.slane %v573, %v2274
          %v2277 = vmul.f32 %v2270, %v2275
          %v2279 = vlaneseq
          %v2280 = vshrl.u32 %v2279, 7
          %v2281 = vsub.s32 0, %v2280
          %v2282 = vrot.slane %v574, %v2281
          %v2284 = vadd.f32 %v2277, %v2282
          %v2285 = vmax.f32 %v2284, 0.0
          %v2286 = vpack.c.bf16 %v2285, %v2285
          %s2287 = scalar_lea.vmem %s564, %s576 [#allocation16]
          %2288 = vst [vmem:[%s2287] sm:$0x1] %v2286
        $region97: #{tower.10} parent=55 // loop_footer
          %s580 = sadd.s32 1, %s576
        $region98: #{tower.10} parent=55 // loop_footer_branch
          %575 = sbr.rel target = $region94
        $region99: #{tower.10} parent=55 // loop_exit
          _
        %s2289 = sand.u32 %s283, 1
        %s2290 = scalar_lea.sflag [#allocation4], %s2289
        %s2291 = sand.u32 %s283, 1
        %s2292 = smul.addr %s2291, 8
        %s2293 = scalar_lea.vmem [#allocation16], %s2292
        // Predicated region
        $region100: #{tower.10} parent=55 // pred_check
          %p2294 = pneg %p293
        $region101: #{tower.10} parent=55 // pred_check_branch
          %2296 = sbr.rel (%p2294) target = $region103
        $region102: #{tower.10} parent=55 // pred_region
          %s2297 = smul.u32 8, %s32
          %s2299 = ssub.s32 128, 128
          %2300 = vsyncadd %s2290, %s2299
          %s2301 = smul.addr %s2297, 2
          %s2302 = sadd.s32 %s31, %s2301
          %s2303 = smul.addr %s2302, 16
          %s2304 = scalar_lea.hbm %s9, %s2303
          %s2305 = sshll.u32 %s2293, 4
          %s2306 = int_to_ptr.vmem [resolvable:$true] %s2305
          %2311 = dma.vmem_to_hbm [thread:$0]  %s2306, 128, %s2304, %s2290, 16, 32, 1
        $region103: #{tower.10} parent=55 // pred_fallthru
          _
      $region56: #{tower.10} parent=5 // pred_fallthru
        _
      %p2312 = scmp.le.s32.totalorder 2, %s22
      // Predicated region
      $region104: #{tower.10} parent=5 // pred_check
        %p2313 = pneg %p2312
      $region105: #{tower.10} parent=5 // pred_check_branch
        %2315 = sbr.rel (%p2313) target = $region107
      $region106: #{tower.10} parent=5 // pred_region
        %s2316 = ssub.s32 %s22, 2
        // Predicated region
        $region108: #{tower.10} parent=106 // pred_check
          %p2317 = pneg %p299
        $region109: #{tower.10} parent=106 // pred_check_branch
          %2319 = sbr.rel (%p2317) target = $region111
        $region110: #{tower.10} parent=106 // pred_region
          %s2320 = sand.u32 %s284, 1
          %s2321 = scalar_lea.sflag [#allocation4], %s2320
          %s2322 = sand.u32 %s284, 1
          %s2323 = smul.addr %s2322, 8
          %s2324 = scalar_lea.vmem [#allocation16], %s2323
          %2325 = dma.done %s2321, 128
        $region111: #{tower.10} parent=106 // pred_fallthru
          _
      $region107: #{tower.10} parent=5 // pred_fallthru
        _
    $region6: #{tower.10} parent=1 // loop_footer
      %s26 = sadd.s32 1, %s22
    $region7: #{tower.10} parent=1 // loop_footer_branch
      %21 = sbr.rel target = $region3
    $region8: #{tower.10} parent=1 // loop_exit
      _
    %2326 = vsyncpa [#allocation3], 1
    %s2327 = scalar_lea.sflag [#allocation3], 1
    %2328 = vsyncpa %s2327, 1
    %2329 = vsyncpa [#allocation6], 1
    %2330 = vsyncpa [#allocation9], 1
    %2331 = vsyncpa [#allocation12], 1
    %2332 = vsyncpa [#allocation4], 1
    %s2333 = scalar_lea.sflag [#allocation4], 1
    %2334 = vsyncpa %s2333, 1

// kernel: tower.11
$region0: #{tower.11}
  #allocation0 [shape = 'u32[]', space=smem, size = 0x4, offset = 0x4, fixed_abs, tag = 'smem constant byte address 0x4 - core index']
  #allocation1 [shape = 'u32[144,128]{1,0:T(1,128)}', space=vmem, size = 0x12000, scoped, tag = 'internal scratch']
  %s0 = inlined_call_operand.hbm [shape: bf16[8,4,256], index: 0, kind: input, shape index: {}]
  %s1 = inlined_call_operand.hbm [shape: bf16[8,4,256], index: 1, kind: input, shape index: {}]
  %s2 = inlined_call_operand.hbm [shape: bf16[8,4,256], index: 2, kind: input, shape index: {}]
  %s3 = inlined_call_operand.hbm [shape: bf16[9,256,512], index: 3, kind: input, shape index: {}]
  %s4 = inlined_call_operand.hbm [shape: f32[1,512], index: 4, kind: input, shape index: {}]
  %s5 = inlined_call_operand.hbm [shape: f32[1,512], index: 5, kind: input, shape index: {}]
  %s6 = inlined_call_operand.hbm [shape: f32[8,2,512], index: 6, kind: output, shape index: {}]
  %s7 = sld [smem:[#allocation0]]
  $region88: #{tower.11} parent=0
    _
  %s9 = ssub.s32 1, %s7
  %s10 = scalar_select 0, %s9, %s7
  $region1: #{tower.11} parent=0
    #allocation2 [shape = 'u8[16384]{0}', space=vmem, size = 0x4000, scoped, tag = 'input window, operand 0, single buffered']
    #allocation3 [shape = 's32[2]{0}', space=sflag, size = 0x8, scoped, tag = 'scoped memory for tower.11']
    #allocation4 [shape = 's32[2]{0}', space=sflag, size = 0x8, scoped, tag = 'scoped memory for tower.11']
    #allocation5 [shape = 'u8[16384]{0}', space=vmem, size = 0x4000, scoped, tag = 'input window, operand 1, single buffered']
    #allocation6 [shape = 's32[1]{0}', space=sflag, size = 0x4, scoped, tag = 'scoped memory for tower.11']
    #allocation7 [shape = 'u8[16384]{0}', space=vmem, size = 0x4000, scoped, tag = 'input window, operand 2, single buffered']
    #allocation8 [shape = 'u8[2359296]{0}', space=vmem, size = 0x240000, scoped, tag = 'input window, operand 3']
    #allocation9 [shape = 's32[2]{0}', space=sflag, size = 0x8, scoped, tag = 'scoped memory for tower.11']
    #allocation10 [shape = 'u8[2048]{0}', space=vmem, size = 0x800, scoped, tag = 'input window, operand 4']
    #allocation11 [shape = 'u8[2048]{0}', space=vmem, size = 0x800, scoped, tag = 'input window, operand 5']
    #allocation12 [shape = 's32[2]{0}', space=sflag, size = 0x8, scoped, tag = 'scoped memory for tower.11']
    #allocation13 [shape = 'u8[32768]{0}', space=vmem, size = 0x8000, scoped, tag = 'output window, operand 0']
    %11 = vsyncpa [#allocation3], 0
    %12 = vsyncpa [#allocation6], 0
    %13 = vsyncpa [#allocation9], 0
    %s14 = scalar_lea.sflag [#allocation9], 1
    %15 = vsyncpa %s14, 0
    %16 = vsyncpa [#allocation12], 0
    %s17 = scalar_lea.sflag [#allocation12], 1
    %18 = vsyncpa %s17, 0
    %19 = vsyncpa [#allocation4], 0
    %s20 = scalar_lea.sflag [#allocation4], 1
    %21 = vsyncpa %s20, 0
    loop: start=0, step=1, limit=4
    $region2: #{tower.11} parent=1 // loop_pre_header
      _
    $region3: #{tower.11} parent=1 // loop_header
      %s23 = sphi 0, %s27
      %p24 = scmp.ge.s32.totalorder %s23, 4
      %s30 = sphi 0, %s42
      %s31 = sphi 0, %s38
      %s32 = sphi 0, %s30
      %s33 = sphi 0, %s31
      %s34 = sphi 0, %s32
      %s35 = sphi 0, %s33
      %s45 = sphi 0, %s47
      %s48 = sphi 0, %s45
      %s49 = sphi 0, %s48
      %s65 = sphi 0, %s49
      %s71 = sphi 0, %s73
      %s74 = sphi 0, %s71
      %s75 = sphi 0, %s74
      %s91 = sphi 0, %s75
      %s97 = sphi 0, %s99
      %s100 = sphi 0, %s97
      %s101 = sphi 0, %s100
      %s117 = sphi 0, %s101
      %s123 = sphi 0, %s125
      %s126 = sphi 0, %s123
      %s127 = sphi 0, %s126
      %s143 = sphi 0, %s127
      %s149 = sphi 0, %s151
      %s152 = sphi 0, %s149
      %s153 = sphi 0, %s152
      %s169 = sphi 0, %s153
      %s175 = sphi 0, %s177
      %s178 = sphi 0, %s175
      %s179 = sphi 0, %s178
      %s195 = sphi 0, %s179
      %s203 = sphi 0, %s205
      %s206 = sphi 0, %s203
      %s207 = sphi 0, %s206
      %s223 = sphi 0, %s207
    $region4: #{tower.11} parent=1 // loop_header_branch
      %26 = sbr.rel (%p24) target = $region8
    $region5: #{tower.11} parent=1 // loop_body
      %s28 = ssub.s32 %s23, 1
      %s29 = ssub.s32 %s23, 2
      %s36 = sadd.s32 1, %s31
      %p37 = scmp.ge.s32.totalorder %s36, 1
      %s38 = scalar_select %p37, 0, %s36
      %s39 = sadd.s32 1, %s30
      %s40 = scalar_select %p37, %s39, %s30
      %p41 = scmp.ge.s32.totalorder %s40, 2
      %s42 = scalar_select %p41, 0, %s40
      %s43 = ssub.s32 %s31, %s38
      %p44 = scmp.eq.s32.totalorder %s43, 0
      %s46 = sadd.s32 %s45, 1
      %s47 = scalar_select %p44, %s45, %s46
      %p50 = pneg %p44
      %p51 = scmp.eq.s32.totalorder %s23, 1
      %p52 = por %p50, %p51
      %p53 = scmp.ne.s32.totalorder %s45, %s48
      %p54 = scmp.eq.s32.totalorder %s23, 0
      %p55 = por %p53, %p54
      %p56 = scmp.ne.s32.totalorder %s45, %s48
      %p57 = scmp.eq.s32.totalorder %s28, 1
      %p58 = por %p56, %p57
      %p59 = scmp.ne.s32.totalorder %s48, %s49
      %p60 = scmp.eq.s32.totalorder %s28, 0
      %p61 = por %p59, %p60
      %p62 = scmp.ne.s32.totalorder %s48, %s49
      %p63 = scmp.eq.s32.totalorder %s29, 1
      %p64 = por %p62, %p63
      %p66 = scmp.ne.s32.totalorder %s49, %s65
      %p67 = scmp.eq.s32.totalorder %s29, 0
      %p68 = por %p66, %p67
      %s69 = ssub.s32 %s31, %s38
      %p70 = scmp.eq.s32.totalorder %s69, 0
      %s72 = sadd.s32 %s71, 1
      %s73 = scalar_select %p70, %s71, %s72
      %p76 = pneg %p70
      %p77 = scmp.eq.s32.totalorder %s23, 1
      %p78 = por %p76, %p77
      %p79 = scmp.ne.s32.totalorder %s71, %s74
      %p80 = scmp.eq.s32.totalorder %s23, 0
      %p81 = por %p79, %p80
      %p82 = scmp.ne.s32.totalorder %s71, %s74
      %p83 = scmp.eq.s32.totalorder %s28, 1
      %p84 = por %p82, %p83
      %p85 = scmp.ne.s32.totalorder %s74, %s75
      %p86 = scmp.eq.s32.totalorder %s28, 0
      %p87 = por %p85, %p86
      %p88 = scmp.ne.s32.totalorder %s74, %s75
      %p89 = scmp.eq.s32.totalorder %s29, 1
      %p90 = por %p88, %p89
      %p92 = scmp.ne.s32.totalorder %s75, %s91
      %p93 = scmp.eq.s32.totalorder %s29, 0
      %p94 = por %p92, %p93
      %s95 = ssub.s32 %s31, %s38
      %p96 = scmp.eq.s32.totalorder %s95, 0
      %s98 = sadd.s32 %s97, 1
      %s99 = scalar_select %p96, %s97, %s98
      %p102 = pneg %p96
      %p103 = scmp.eq.s32.totalorder %s23, 1
      %p104 = por %p102, %p103
      %p105 = scmp.ne.s32.totalorder %s97, %s100
      %p106 = scmp.eq.s32.totalorder %s23, 0
      %p107 = por %p105, %p106
      %p108 = scmp.ne.s32.totalorder %s97, %s100
      %p109 = scmp.eq.s32.totalorder %s28, 1
      %p110 = por %p108, %p109
      %p111 = scmp.ne.s32.totalorder %s100, %s101
      %p112 = scmp.eq.s32.totalorder %s28, 0
      %p113 = por %p111, %p112
      %p114 = scmp.ne.s32.totalorder %s100, %s101
      %p115 = scmp.eq.s32.totalorder %s29, 1
      %p116 = por %p114, %p115
      %p118 = scmp.ne.s32.totalorder %s101, %s117
      %p119 = scmp.eq.s32.totalorder %s29, 0
      %p120 = por %p118, %p119
      %s121 = ssub.s32 %s30, %s42
      %p122 = scmp.eq.s32.totalorder %s121, 0
      %s124 = sadd.s32 %s123, 1
      %s125 = scalar_select %p122, %s123, %s124
      %p128 = pneg %p122
      %p129 = scmp.eq.s32.totalorder %s23, 1
      %p130 = por %p128, %p129
      %p131 = scmp.ne.s32.totalorder %s123, %s126
      %p132 = scmp.eq.s32.totalorder %s23, 0
      %p133 = por %p131, %p132
      %p134 = scmp.ne.s32.totalorder %s123, %s126
      %p135 = scmp.eq.s32.totalorder %s28, 1
      %p136 = por %p134, %p135
      %p137 = scmp.ne.s32.totalorder %s126, %s127
      %p138 = scmp.eq.s32.totalorder %s28, 0
      %p139 = por %p137, %p138
      %p140 = scmp.ne.s32.totalorder %s126, %s127
      %p141 = scmp.eq.s32.totalorder %s29, 1
      %p142 = por %p140, %p141
      %p144 = scmp.ne.s32.totalorder %s127, %s143
      %p145 = scmp.eq.s32.totalorder %s29, 0
      %p146 = por %p144, %p145
      %s147 = ssub.s32 %s30, %s42
      %p148 = scmp.eq.s32.totalorder %s147, 0
      %s150 = sadd.s32 %s149, 1
      %s151 = scalar_select %p148, %s149, %s150
      %p154 = pneg %p148
      %p155 = scmp.eq.s32.totalorder %s23, 1
      %p156 = por %p154, %p155
      %p157 = scmp.ne.s32.totalorder %s149, %s152
      %p158 = scmp.eq.s32.totalorder %s23, 0
      %p159 = por %p157, %p158
      %p160 = scmp.ne.s32.totalorder %s149, %s152
      %p161 = scmp.eq.s32.totalorder %s28, 1
      %p162 = por %p160, %p161
      %p163 = scmp.ne.s32.totalorder %s152, %s153
      %p164 = scmp.eq.s32.totalorder %s28, 0
      %p165 = por %p163, %p164
      %p166 = scmp.ne.s32.totalorder %s152, %s153
      %p167 = scmp.eq.s32.totalorder %s29, 1
      %p168 = por %p166, %p167
      %p170 = scmp.ne.s32.totalorder %s153, %s169
      %p171 = scmp.eq.s32.totalorder %s29, 0
      %p172 = por %p170, %p171
      %s173 = ssub.s32 %s30, %s42
      %p174 = scmp.eq.s32.totalorder %s173, 0
      %s176 = sadd.s32 %s175, 1
      %s177 = scalar_select %p174, %s175, %s176
      %p180 = pneg %p174
      %p181 = scmp.eq.s32.totalorder %s23, 1
      %p182 = por %p180, %p181
      %p183 = scmp.ne.s32.totalorder %s175, %s178
      %p184 = scmp.eq.s32.totalorder %s23, 0
      %p185 = por %p183, %p184
      %p186 = scmp.ne.s32.totalorder %s175, %s178
      %p187 = scmp.eq.s32.totalorder %s28, 1
      %p188 = por %p186, %p187
      %p189 = scmp.ne.s32.totalorder %s178, %s179
      %p190 = scmp.eq.s32.totalorder %s28, 0
      %p191 = por %p189, %p190
      %p192 = scmp.ne.s32.totalorder %s178, %s179
      %p193 = scmp.eq.s32.totalorder %s29, 1
      %p194 = por %p192, %p193
      %p196 = scmp.ne.s32.totalorder %s179, %s195
      %p197 = scmp.eq.s32.totalorder %s29, 0
      %p198 = por %p196, %p197
      %s199 = ssub.s32 %s31, %s38
      %s200 = ssub.s32 %s30, %s42
      %s201 = sor.u32 %s199, %s200
      %p202 = scmp.eq.s32.totalorder %s201, 0
      %s204 = sadd.s32 %s203, 1
      %s205 = scalar_select %p202, %s203, %s204
      %p208 = pneg %p202
      %p209 = scmp.eq.s32.totalorder %s23, 1
      %p210 = por %p208, %p209
      %p211 = scmp.ne.s32.totalorder %s203, %s206
      %p212 = scmp.eq.s32.totalorder %s23, 0
      %p213 = por %p211, %p212
      %p214 = scmp.ne.s32.totalorder %s203, %s206
      %p215 = scmp.eq.s32.totalorder %s28, 1
      %p216 = por %p214, %p215
      %p217 = scmp.ne.s32.totalorder %s206, %s207
      %p218 = scmp.eq.s32.totalorder %s28, 0
      %p219 = por %p217, %p218
      %p220 = scmp.ne.s32.totalorder %s206, %s207
      %p221 = scmp.eq.s32.totalorder %s29, 1
      %p222 = por %p220, %p221
      %p224 = scmp.ne.s32.totalorder %s207, %s223
      %p225 = scmp.eq.s32.totalorder %s29, 0
      %p226 = por %p224, %p225
      %p227 = scmp.le.s32.totalorder 1, %s23
      %p228 = scmp.lt.s32.totalorder %s23, 3
      %p229 = pnand %p227, %p228
      %p230 = pneg %p229
      // Predicated region
      $region9: #{tower.11} parent=5 // pred_check
        _
      $region10: #{tower.11} parent=5 // pred_check_branch
        %232 = sbr.rel (%p229) target = $region12
      $region11: #{tower.11} parent=5 // pred_region
        %s233 = ssub.s32 %s23, 1
        // Predicated region
        $region13: #{tower.11} parent=11 // pred_check
          %p234 = pneg %p61
        $region14: #{tower.11} parent=11 // pred_check_branch
          %236 = sbr.rel (%p234) target = $region16
        $region15: #{tower.11} parent=11 // pred_region
          %s237 = smul.u32 8, %s33
          %s239 = ssub.s32 512, 512
          %240 = vsyncadd [#allocation3], %s239
          %s241 = smul.addr %s237, 2
          %s242 = smul.addr %s241, 32
          %s243 = scalar_lea.hbm %s0, %s242
          %s244 = sshll.u32 [#allocation2], 4
          %s245 = int_to_ptr.vmem [resolvable:$true] %s244
          %250 = dma.hbm_to_vmem [thread:$0]  %s243, 512, %s245, [#allocation3], 64, 64, 4
        $region16: #{tower.11} parent=11 // pred_fallthru
          _
        // Predicated region
        $region17: #{tower.11} parent=11 // pred_check
          %p251 = pneg %p87
        $region18: #{tower.11} parent=11 // pred_check_branch
          %253 = sbr.rel (%p251) target = $region20
        $region19: #{tower.11} parent=11 // pred_region
          %s254 = smul.u32 8, %s33
          %s256 = ssub.s32 512, 512
          %257 = vsyncadd [#allocation6], %s256
          %s258 = smul.addr %s254, 2
          %s259 = smul.addr %s258, 32
          %s260 = scalar_lea.hbm %s1, %s259
          %s261 = sshll.u32 [#allocation5], 4
          %s262 = int_to_ptr.vmem [resolvable:$true] %s261
          %267 = dma.hbm_to_vmem [thread:$0]  %s260, 512, %s262, [#allocation6], 64, 64, 4
        $region20: #{tower.11} parent=11 // pred_fallthru
          _
        // Predicated region
        $region21: #{tower.11} parent=11 // pred_check
          %p268 = pneg %p113
        $region22: #{tower.11} parent=11 // pred_check_branch
          %270 = sbr.rel (%p268) target = $region24
        $region23: #{tower.11} parent=11 // pred_region
          %s271 = smul.u32 8, %s33
          %s273 = ssub.s32 512, 512
          %274 = vsyncadd [#allocation6], %s273
          %s275 = smul.addr %s271, 2
          %s276 = smul.addr %s275, 32
          %s277 = scalar_lea.hbm %s2, %s276
          %s278 = sshll.u32 [#allocation7], 4
          %s279 = int_to_ptr.vmem [resolvable:$true] %s278
          %284 = dma.hbm_to_vmem [thread:$0]  %s277, 512, %s279, [#allocation6], 64, 64, 4
        $region24: #{tower.11} parent=11 // pred_fallthru
          _
      $region12: #{tower.11} parent=5 // pred_fallthru
        _
      %p285 = scmp.lt.s32.totalorder %s23, 2
      // Predicated region
      $region25: #{tower.11} parent=5 // pred_check
        %p286 = pneg %p285
      $region26: #{tower.11} parent=5 // pred_check_branch
        %288 = sbr.rel (%p286) target = $region28
      $region27: #{tower.11} parent=5 // pred_region
        // Predicated region
        $region29: #{tower.11} parent=27 // pred_check
          %p289 = pneg %p133
        $region30: #{tower.11} parent=27 // pred_check_branch
          %291 = sbr.rel (%p289) target = $region32
        $region31: #{tower.11} parent=27 // pred_region
          %s292 = sand.u32 %s23, 1
          %s293 = scalar_lea.sflag [#allocation9], %s292
          %s294 = sand.u32 %s123, 1
          %s295 = smul.addr %s294, 2304
          %s296 = scalar_lea.vmem [#allocation8], %s295
          %s297 = smul.u32 2, %s30
          %s299 = ssub.s32 36864, 36864
          %300 = vsyncadd %s293, %s299
          %s301 = smul.addr %s297, 64
          %s302 = scalar_lea.hbm %s3, %s301
          %s303 = sshll.u32 %s296, 4
          %s304 = int_to_ptr.vmem [resolvable:$true] %s303
          %309 = dma.hbm_to_vmem [thread:$0]  %s302, 36864, %s304, %s293, 256, 128, 8
        $region32: #{tower.11} parent=27 // pred_fallthru
          _
        // Predicated region
        $region33: #{tower.11} parent=27 // pred_check
          %p310 = pneg %p159
        $region34: #{tower.11} parent=27 // pred_check_branch
          %312 = sbr.rel (%p310) target = $region36
        $region35: #{tower.11} parent=27 // pred_region
          %s313 = sand.u32 %s23, 1
          %s314 = scalar_lea.sflag [#allocation9], %s313
          %s315 = sand.u32 %s149, 1
          %s316 = smul.addr %s315, 2
          %s317 = scalar_lea.vmem [#allocation10], %s316
          %s318 = smul.u32 2, %s30
          %s320 = ssub.s32 32, 32
          %321 = vsyncadd %s314, %s320
          %s322 = smul.addr %s318, 16
          %s323 = scalar_lea.hbm %s4, %s322
          %s325 = sshll.u32 %s317, 4
          %s326 = int_to_ptr.vmem [resolvable:$true] %s325
          %328 = dma.hbm_to_vmem [thread:$0]  %s323, 32, %s326, %s314
        $region36: #{tower.11} parent=27 // pred_fallthru
          _
        // Predicated region
        $region37: #{tower.11} parent=27 // pred_check
          %p329 = pneg %p185
        $region38: #{tower.11} parent=27 // pred_check_branch
          %331 = sbr.rel (%p329) target = $region40
        $region39: #{tower.11} parent=27 // pred_region
          %s332 = sand.u32 %s175, 1
          %s333 = scalar_lea.sflag [#allocation12], %s332
          %s334 = sand.u32 %s175, 1
          %s335 = smul.addr %s334, 2
          %s336 = scalar_lea.vmem [#allocation11], %s335
          %s337 = smul.u32 2, %s30
          %s339 = ssub.s32 32, 32
          %340 = vsyncadd %s333, %s339
          %s341 = smul.addr %s337, 16
          %s342 = scalar_lea.hbm %s5, %s341
          %s344 = sshll.u32 %s336, 4
          %s345 = int_to_ptr.vmem [resolvable:$true] %s344
          %347 = dma.hbm_to_vmem [thread:$0]  %s342, 32, %s345, %s333
        $region40: #{tower.11} parent=27 // pred_fallthru
          _
      $region28: #{tower.11} parent=5 // pred_fallthru
        _
      %p348 = scmp.le.s32.totalorder 1, %s23
      %p349 = scmp.lt.s32.totalorder %s23, 3
      %p350 = pnand %p348, %p349
      %p351 = pneg %p350
      // Predicated region
      $region41: #{tower.11} parent=5 // pred_check
        _
      $region42: #{tower.11} parent=5 // pred_check_branch
        %353 = sbr.rel (%p350) target = $region44
      $region43: #{tower.11} parent=5 // pred_region
        %s354 = ssub.s32 %s23, 1
        // Predicated region
        $region45: #{tower.11} parent=43 // pred_check
          %p355 = pneg %p61
        $region46: #{tower.11} parent=43 // pred_check_branch
          %357 = sbr.rel (%p355) target = $region48
        $region47: #{tower.11} parent=43 // pred_region
          %358 = dma.done [#allocation3], 512
        $region48: #{tower.11} parent=43 // pred_fallthru
          _
        // Predicated region
        $region49: #{tower.11} parent=43 // pred_check
          %p359 = pneg %p87
        $region50: #{tower.11} parent=43 // pred_check_branch
          %361 = sbr.rel (%p359) target = $region52
        $region51: #{tower.11} parent=43 // pred_region
          %362 = dma.done [#allocation6], 512
        $region52: #{tower.11} parent=43 // pred_fallthru
          _
        // Predicated region
        $region53: #{tower.11} parent=43 // pred_check
          %p363 = pneg %p113
        $region54: #{tower.11} parent=43 // pred_check_branch
          %365 = sbr.rel (%p363) target = $region56
        $region55: #{tower.11} parent=43 // pred_region
          %366 = dma.done [#allocation6], 512
        $region56: #{tower.11} parent=43 // pred_fallthru
          _
        %s367 = sand.u32 %s28, 1
        %s368 = scalar_lea.sflag [#allocation9], %s367
        %s369 = sand.u32 %s126, 1
        %s370 = smul.addr %s369, 2304
        %s371 = scalar_lea.vmem [#allocation8], %s370
        // Predicated region
        $region57: #{tower.11} parent=43 // pred_check
          %p372 = pneg %p139
        $region58: #{tower.11} parent=43 // pred_check_branch
          %374 = sbr.rel (%p372) target = $region60
        $region59: #{tower.11} parent=43 // pred_region
          %375 = dma.done %s368, 36864
        $region60: #{tower.11} parent=43 // pred_fallthru
          _
        %s376 = sand.u32 %s28, 1
        %s377 = scalar_lea.sflag [#allocation9], %s376
        %s378 = sand.u32 %s152, 1
        %s379 = smul.addr %s378, 2
        %s380 = scalar_lea.vmem [#allocation10], %s379
        // Predicated region
        $region61: #{tower.11} parent=43 // pred_check
          %p381 = pneg %p165
        $region62: #{tower.11} parent=43 // pred_check_branch
          %383 = sbr.rel (%p381) target = $region64
        $region63: #{tower.11} parent=43 // pred_region
          %384 = dma.done %s377, 32
        $region64: #{tower.11} parent=43 // pred_fallthru
          _
        %s385 = sand.u32 %s178, 1
        %s386 = scalar_lea.sflag [#allocation12], %s385
        %s387 = sand.u32 %s178, 1
        %s388 = smul.addr %s387, 2
        %s389 = scalar_lea.vmem [#allocation11], %s388
        // Predicated region
        $region65: #{tower.11} parent=43 // pred_check
          %p390 = pneg %p191
        $region66: #{tower.11} parent=43 // pred_check_branch
          %392 = sbr.rel (%p390) target = $region68
        $region67: #{tower.11} parent=43 // pred_region
          %393 = dma.done %s386, 32
        $region68: #{tower.11} parent=43 // pred_fallthru
          _
        %p394 = pneg %p61
        %p395 = pneg %p58
        %p396 = pneg %p87
        %p397 = pneg %p84
        %p398 = pneg %p113
        %p399 = pneg %p110
        %s400 = sand.u32 %s28, 1
        %s401 = scalar_lea.sflag [#allocation9], %s400
        %s402 = sand.u32 %s126, 1
        %s403 = smul.addr %s402, 2304
        %s404 = scalar_lea.vmem [#allocation8], %s403
        %p405 = pneg %p139
        %p406 = pneg %p136
        %s407 = sand.u32 %s28, 1
        %s408 = scalar_lea.sflag [#allocation9], %s407
        %s409 = sand.u32 %s152, 1
        %s410 = smul.addr %s409, 2
        %s411 = scalar_lea.vmem [#allocation10], %s410
        %p412 = pneg %p165
        %p413 = pneg %p162
        %s414 = sand.u32 %s178, 1
        %s415 = scalar_lea.sflag [#allocation12], %s414
        %s416 = sand.u32 %s178, 1
        %s417 = smul.addr %s416, 2
        %s418 = scalar_lea.vmem [#allocation11], %s417
        %p419 = pneg %p191
        %p420 = pneg %p188
        %p421 = pneg %p219
        %p422 = pneg %p216
        %s423 = sand.u32 %s206, 1
        %s424 = scalar_lea.sflag [#allocation4], %s423
        %s425 = sand.u32 %s206, 1
        %s426 = smul.addr %s425, 32
        %s427 = scalar_lea.vmem [#allocation13], %s426
        %s428 = smul.u32 8, %s33
        %s429 = smul.u32 8, %s33
        %s430 = smul.u32 8, %s33
        %s431 = smul.u32 2, %s32
        %s432 = smul.u32 2, %s32
        %s433 = smul.u32 2, %s32
        %s434 = smul.u32 8, %s33
        %s435 = smul.u32 2, %s32
        %v436 = vld [vmem:[%s380] sm:$0x3]
        %v437 = vld [vmem:[%s389] sm:$0x3]
        loop: start=0, step=1, limit=8
        $region69: #{tower.11} parent=43 // loop_pre_header
          _
        $region70: #{tower.11} parent=43 // loop_header
          %s439 = sphi 0, %s443
          %p440 = scmp.ge.s32.totalorder %s439, 8
        $region71: #{tower.11} parent=43 // loop_header_branch
          %442 = sbr.rel (%p440) target = $region75
        $region72: #{tower.11} parent=43 // loop_body
          %s444 = smul.u32 %s439, 2
          %s445 = smul.addr %s444, 2
          %s446 = scalar_lea.vmem [#allocation2], %s445
          %v447 = vld [vmem:[%s446] sm:$0x5]
          %v448 = vld [vmem:[%s371] sm:$0xff]
          %v449 = vld [vmem:[%s371 + $0x8] sm:$0xff]
          %v450 = vld [vmem:[%s371 + $0x10] sm:$0xff]
          %v451 = vld [vmem:[%s371 + $0x18] sm:$0xff]
          %v452 = vld [vmem:[%s371 + $0x20] sm:$0xff]
          %v453 = vld [vmem:[%s371 + $0x28] sm:$0xff]
          %v454 = vld [vmem:[%s371 + $0x30] sm:$0xff]
          %v455 = vld [vmem:[%s371 + $0x38] sm:$0xff]
          %v456 = vld [vmem:[%s371 + $0x40] sm:$0xff]
          %v457 = vld [vmem:[%s371 + $0x48] sm:$0xff]
          %v458 = vld [vmem:[%s371 + $0x50] sm:$0xff]
          %v459 = vld [vmem:[%s371 + $0x58] sm:$0xff]
          %v460 = vld [vmem:[%s371 + $0x60] sm:$0xff]
          %v461 = vld [vmem:[%s371 + $0x68] sm:$0xff]
          %v462 = vld [vmem:[%s371 + $0x70] sm:$0xff]
          %v463 = vld [vmem:[%s371 + $0x78] sm:$0xff]
          %v464 = vld [vmem:[%s371 + $0x80] sm:$0xff]
          %v465 = vld [vmem:[%s371 + $0x88] sm:$0xff]
          %v466 = vld [vmem:[%s371 + $0x90] sm:$0xff]
          %v467 = vld [vmem:[%s371 + $0x98] sm:$0xff]
          %v468 = vld [vmem:[%s371 + $0xa0] sm:$0xff]
          %v469 = vld [vmem:[%s371 + $0xa8] sm:$0xff]
          %v470 = vld [vmem:[%s371 + $0xb0] sm:$0xff]
          %v471 = vld [vmem:[%s371 + $0xb8] sm:$0xff]
          %v472 = vld [vmem:[%s371 + $0xc0] sm:$0xff]
          %v473 = vld [vmem:[%s371 + $0xc8] sm:$0xff]
          %v474 = vld [vmem:[%s371 + $0xd0] sm:$0xff]
          %v475 = vld [vmem:[%s371 + $0xd8] sm:$0xff]
          %v476 = vld [vmem:[%s371 + $0xe0] sm:$0xff]
          %v477 = vld [vmem:[%s371 + $0xe8] sm:$0xff]
          %v478 = vld [vmem:[%s371 + $0xf0] sm:$0xff]
          %v479 = vld [vmem:[%s371 + $0xf8] sm:$0xff]
          %v480 = vld [vmem:[%s446] sm:$0xf]
          %s481 = scalar_lea.vmem %s371, 256 [#allocation8]
          %v482 = vld [vmem:[%s481] sm:$0xff]
          %v483 = vld [vmem:[%s481 + $0x8] sm:$0xff]
          %v484 = vld [vmem:[%s481 + $0x10] sm:$0xff]
          %v485 = vld [vmem:[%s481 + $0x18] sm:$0xff]
          %v486 = vld [vmem:[%s481 + $0x20] sm:$0xff]
          %v487 = vld [vmem:[%s481 + $0x28] sm:$0xff]
          %v488 = vld [vmem:[%s481 + $0x30] sm:$0xff]
          %v489 = vld [vmem:[%s481 + $0x38] sm:$0xff]
          %v490 = vld [vmem:[%s481 + $0x40] sm:$0xff]
          %v491 = vld [vmem:[%s481 + $0x48] sm:$0xff]
          %v492 = vld [vmem:[%s481 + $0x50] sm:$0xff]
          %v493 = vld [vmem:[%s481 + $0x58] sm:$0xff]
          %v494 = vld [vmem:[%s481 + $0x60] sm:$0xff]
          %v495 = vld [vmem:[%s481 + $0x68] sm:$0xff]
          %v496 = vld [vmem:[%s481 + $0x70] sm:$0xff]
          %v497 = vld [vmem:[%s481 + $0x78] sm:$0xff]
          %v498 = vld [vmem:[%s481 + $0x80] sm:$0xff]
          %v499 = vld [vmem:[%s481 + $0x88] sm:$0xff]
          %v500 = vld [vmem:[%s481 + $0x90] sm:$0xff]
          %v501 = vld [vmem:[%s481 + $0x98] sm:$0xff]
          %v502 = vld [vmem:[%s481 + $0xa0] sm:$0xff]
          %v503 = vld [vmem:[%s481 + $0xa8] sm:$0xff]
          %v504 = vld [vmem:[%s481 + $0xb0] sm:$0xff]
          %v505 = vld [vmem:[%s481 + $0xb8] sm:$0xff]
          %v506 = vld [vmem:[%s481 + $0xc0] sm:$0xff]
          %v507 = vld [vmem:[%s481 + $0xc8] sm:$0xff]
          %v508 = vld [vmem:[%s481 + $0xd0] sm:$0xff]
          %v509 = vld [vmem:[%s481 + $0xd8] sm:$0xff]
          %v510 = vld [vmem:[%s481 + $0xe0] sm:$0xff]
          %v511 = vld [vmem:[%s481 + $0xe8] sm:$0xff]
          %v512 = vld [vmem:[%s481 + $0xf0] sm:$0xff]
          %v513 = vld [vmem:[%s481 + $0xf8] sm:$0xff]
          %v516 = vunpack.c.l.s4 1983009808
          %v517 = vunpack.c.0.s8 %v516
          %v518 = vlaneseq
          %v519 = vshrl.u32 %v518, 7
          %v520 = vsub.s32 %v517, %v519
          %v521 = vrot.slane %v480, %v520
          %v522 = vcombine.high %v521, %v521
          %v524 = vshrl.u32 %v521, 16
          %v526 = vshll.u32 %v521, 16
          %v528 = vrot.slane %v526, 1
          %v529 = vor.u32 %v524, %v528
          %v531 = vshrl.u32 %v522, 16
          %v533 = vshll.u32 %v522, 16
          %v535 = vrot.slane %v533, 1
          %v536 = vor.u32 %v531, %v535
          %v571 = vunpack.c.l.b16 %v482
          %v572 = vunpack.c.h.b16 %v482
          %v573 = vunpack.c.l.b16 %v483
          %v574 = vunpack.c.h.b16 %v483
          %v575 = vunpack.c.l.b16 %v484
          %v576 = vunpack.c.h.b16 %v484
          %v577 = vunpack.c.l.b16 %v485
          %v578 = vunpack.c.h.b16 %v485
          %v579 = vunpack.c.l.b16 %v486
          %v580 = vunpack.c.h.b16 %v486
          %v581 = vunpack.c.l.b16 %v487
          %v582 = vunpack.c.h.b16 %v487
          %v583 = vunpack.c.l.b16 %v488
          %v584 = vunpack.c.h.b16 %v488
          %v585 = vunpack.c.l.b16 %v489
          %v586 = vunpack.c.h.b16 %v489
          %v587 = vunpack.c.l.b16 %v490
          %v588 = vunpack.c.h.b16 %v490
          %v589 = vunpack.c.l.b16 %v491
          %v590 = vunpack.c.h.b16 %v491
          %v591 = vunpack.c.l.b16 %v492
          %v592 = vunpack.c.h.b16 %v492
          %v593 = vunpack.c.l.b16 %v493
          %v594 = vunpack.c.h.b16 %v493
          %v595 = vunpack.c.l.b16 %v494
          %v596 = vunpack.c.h.b16 %v494
          %v597 = vunpack.c.l.b16 %v495
          %v598 = vunpack.c.h.b16 %v495
          %v599 = vunpack.c.l.b16 %v496
          %v600 = vunpack.c.h.b16 %v496
          %v601 = vunpack.c.l.b16 %v497
          %v602 = vunpack.c.h.b16 %v497
          %v603 = vunpack.c.l.b16 %v498
          %v604 = vunpack.c.h.b16 %v498
          %v605 = vunpack.c.l.b16 %v499
          %v606 = vunpack.c.h.b16 %v499
          %v607 = vunpack.c.l.b16 %v500
          %v608 = vunpack.c.h.b16 %v500
          %v609 = vunpack.c.l.b16 %v501
          %v610 = vunpack.c.h.b16 %v501
          %v611 = vunpack.c.l.b16 %v502
          %v612 = vunpack.c.h.b16 %v502
          %v613 = vunpack.c.l.b16 %v503
          %v614 = vunpack.c.h.b16 %v503
          %v615 = vunpack.c.l.b16 %v504
          %v616 = vunpack.c.h.b16 %v504
          %v617 = vunpack.c.l.b16 %v505
          %v618 = vunpack.c.h.b16 %v505
          %v619 = vunpack.c.l.b16 %v506
          %v620 = vunpack.c.h.b16 %v506
          %v621 = vunpack.c.l.b16 %v507
          %v622 = vunpack.c.h.b16 %v507
          %v623 = vunpack.c.l.b16 %v508
          %v624 = vunpack.c.h.b16 %v508
          %v625 = vunpack.c.l.b16 %v509
          %v626 = vunpack.c.h.b16 %v509
          %v627 = vunpack.c.l.b16 %v510
          %v628 = vunpack.c.h.b16 %v510
          %v629 = vunpack.c.l.b16 %v511
          %v630 = vunpack.c.h.b16 %v511
          %v631 = vunpack.c.l.b16 %v512
          %v632 = vunpack.c.h.b16 %v512
          %v633 = vunpack.c.l.b16 %v513
          %v634 = vunpack.c.h.b16 %v513
          %v635 = vpack.c.b16 %v573, %v571
          %v636 = vpack.c.b16 %v574, %v572
          %v637 = vpack.c.b16 %v577, %v575
          %v638 = vpack.c.b16 %v578, %v576
          %v639 = vpack.c.b16 %v581, %v579
          %v640 = vpack.c.b16 %v582, %v580
          %v641 = vpack.c.b16 %v585, %v583
          %v642 = vpack.c.b16 %v586, %v584
          %v643 = vpack.c.b16 %v589, %v587
          %v644 = vpack.c.b16 %v590, %v588
          %v645 = vpack.c.b16 %v593, %v591
          %v646 = vpack.c.b16 %v594, %v592
          %v647 = vpack.c.b16 %v597, %v595
          %v648 = vpack.c.b16 %v598, %v596
          %v649 = vpack.c.b16 %v601, %v599
          %v650 = vpack.c.b16 %v602, %v600
          %v651 = vpack.c.b16 %v605, %v603
          %v652 = vpack.c.b16 %v606, %v604
          %v653 = vpack.c.b16 %v609, %v607
          %v654 = vpack.c.b16 %v610, %v608
          %v655 = vpack.c.b16 %v613, %v611
          %v656 = vpack.c.b16 %v614, %v612
          %v657 = vpack.c.b16 %v617, %v615
          %v658 = vpack.c.b16 %v618, %v616
          %v659 = vpack.c.b16 %v621, %v619
          %v660 = vpack.c.b16 %v622, %v620
          %v661 = vpack.c.b16 %v625, %v623
          %v662 = vpack.c.b16 %v626, %v624
          %v663 = vpack.c.b16 %v629, %v627
          %v664 = vpack.c.b16 %v630, %v628
          %v665 = vpack.c.b16 %v633, %v631
          %v666 = vpack.c.b16 %v634, %v632
          %699 = vmatprep.subr.bf16.mxu0 %v636
          %700 = vmatpush1.bf16.msra.mxu0 %v635
          %701 = vmatprep.subr.bf16.mxu0 %v638
          %702 = vmatpush1.bf16.msra.mxu0 %v637
          %703 = vmatprep.subr.bf16.mxu0 %v640
          %704 = vmatpush1.bf16.msra.mxu0 %v639
          %705 = vmatprep.subr.bf16.mxu0 %v642
          %706 = vmatpush1.bf16.msra.mxu0 %v641
          %707 = vmatprep.subr.bf16.mxu0 %v644
          %708 = vmatpush1.bf16.msra.mxu0 %v643
          %709 = vmatprep.subr.bf16.mxu0 %v646
          %710 = vmatpush1.bf16.msra.mxu0 %v645
          %711 = vmatprep.subr.bf16.mxu0 %v648
          %712 = vmatpush1.bf16.msra.mxu0 %v647
          %713 = vmatprep.subr.bf16.mxu0 %v650
          %714 = vmatpush1.bf16.msra.mxu0 %v649
          %715 = vmatprep.subr.bf16.mxu0 %v652
          %716 = vmatpush1.bf16.msra.mxu0 %v651
          %717 = vmatprep.subr.bf16.mxu0 %v654
          %718 = vmatpush1.bf16.msra.mxu0 %v653
          %719 = vmatprep.subr.bf16.mxu0 %v656
          %720 = vmatpush1.bf16.msra.mxu0 %v655
          %721 = vmatprep.subr.bf16.mxu0 %v658
          %722 = vmatpush1.bf16.msra.mxu0 %v657
          %723 = vmatprep.subr.bf16.mxu0 %v660
          %724 = vmatpush1.bf16.msra.mxu0 %v659
          %725 = vmatprep.subr.bf16.mxu0 %v662
          %726 = vmatpush1.bf16.msra.mxu0 %v661
          %727 = vmatprep.subr.bf16.mxu0 %v664
          %728 = vmatpush1.bf16.msra.mxu0 %v663
          %729 = vmatprep.subr.bf16.mxu0 %v666
          %730 = vmatpush1.bf16.msra.mxu0 %v665
          %731 = vmatprep.mubr.bf16.mxu0 %v536
          %732 = vmatmul.mubr.bf16.gmra.mrb[0].mxu0 %v529
          %v733 = vpop.f32.mrb[0].mxu0
          %v734 = vadd.f32 0.0, %v733
          %v735 = vpop.f32.mrb[0].mxu0
          %v736 = vadd.f32 0.0, %v735
          %v737 = vpop.f32.mrb[0].mxu0
          %v738 = vpop.f32.mrb[0].mxu0
          %739 = vdwg.mxu0
          %v742 = vunpack.c.l.s4 1983009808
          %v743 = vunpack.c.0.s8 %v742
          %v744 = vlaneseq
          %v745 = vshrl.u32 %v744, 7
          %v746 = vsub.s32 %v743, %v745
          %v747 = vrot.slane %v447, %v746
          %v748 = vcombine.high %v747, %v747
          %v783 = vunpack.c.l.b16 %v448
          %v784 = vunpack.c.h.b16 %v448
          %v785 = vunpack.c.l.b16 %v449
          %v786 = vunpack.c.h.b16 %v449
          %v787 = vunpack.c.l.b16 %v450
          %v788 = vunpack.c.h.b16 %v450
          %v789 = vunpack.c.l.b16 %v451
          %v790 = vunpack.c.h.b16 %v451
          %v791 = vunpack.c.l.b16 %v452
          %v792 = vunpack.c.h.b16 %v452
          %v793 = vunpack.c.l.b16 %v453
          %v794 = vunpack.c.h.b16 %v453
          %v795 = vunpack.c.l.b16 %v454
          %v796 = vunpack.c.h.b16 %v454
          %v797 = vunpack.c.l.b16 %v455
          %v798 = vunpack.c.h.b16 %v455
          %v799 = vunpack.c.l.b16 %v456
          %v800 = vunpack.c.h.b16 %v456
          %v801 = vunpack.c.l.b16 %v457
          %v802 = vunpack.c.h.b16 %v457
          %v803 = vunpack.c.l.b16 %v458
          %v804 = vunpack.c.h.b16 %v458
          %v805 = vunpack.c.l.b16 %v459
          %v806 = vunpack.c.h.b16 %v459
          %v807 = vunpack.c.l.b16 %v460
          %v808 = vunpack.c.h.b16 %v460
          %v809 = vunpack.c.l.b16 %v461
          %v810 = vunpack.c.h.b16 %v461
          %v811 = vunpack.c.l.b16 %v462
          %v812 = vunpack.c.h.b16 %v462
          %v813 = vunpack.c.l.b16 %v463
          %v814 = vunpack.c.h.b16 %v463
          %v815 = vunpack.c.l.b16 %v464
          %v816 = vunpack.c.h.b16 %v464
          %v817 = vunpack.c.l.b16 %v465
          %v818 = vunpack.c.h.b16 %v465
          %v819 = vunpack.c.l.b16 %v466
          %v820 = vunpack.c.h.b16 %v466
          %v821 = vunpack.c.l.b16 %v467
          %v822 = vunpack.c.h.b16 %v467
          %v823 = vunpack.c.l.b16 %v468
          %v824 = vunpack.c.h.b16 %v468
          %v825 = vunpack.c.l.b16 %v469
          %v826 = vunpack.c.h.b16 %v469
          %v827 = vunpack.c.l.b16 %v470
          %v828 = vunpack.c.h.b16 %v470
          %v829 = vunpack.c.l.b16 %v471
          %v830 = vunpack.c.h.b16 %v471
          %v831 = vunpack.c.l.b16 %v472
          %v832 = vunpack.c.h.b16 %v472
          %v833 = vunpack.c.l.b16 %v473
          %v834 = vunpack.c.h.b16 %v473
          %v835 = vunpack.c.l.b16 %v474
          %v836 = vunpack.c.h.b16 %v474
          %v837 = vunpack.c.l.b16 %v475
          %v838 = vunpack.c.h.b16 %v475
          %v839 = vunpack.c.l.b16 %v476
          %v840 = vunpack.c.h.b16 %v476
          %v841 = vunpack.c.l.b16 %v477
          %v842 = vunpack.c.h.b16 %v477
          %v843 = vunpack.c.l.b16 %v478
          %v844 = vunpack.c.h.b16 %v478
          %v845 = vunpack.c.l.b16 %v479
          %v846 = vunpack.c.h.b16 %v479
          %v847 = vpack.c.b16 %v785, %v783
          %v848 = vpack.c.b16 %v786, %v784
          %v849 = vpack.c.b16 %v789, %v787
          %v850 = vpack.c.b16 %v790, %v788
          %v851 = vpack.c.b16 %v793, %v791
          %v852 = vpack.c.b16 %v794, %v792
          %v853 = vpack.c.b16 %v797, %v795
          %v854 = vpack.c.b16 %v798, %v796
          %v855 = vpack.c.b16 %v801, %v799
          %v856 = vpack.c.b16 %v802, %v800
          %v857 = vpack.c.b16 %v805, %v803
          %v858 = vpack.c.b16 %v806, %v804
          %v859 = vpack.c.b16 %v809, %v807
          %v860 = vpack.c.b16 %v810, %v808
          %v861 = vpack.c.b16 %v813, %v811
          %v862 = vpack.c.b16 %v814, %v812
          %v863 = vpack.c.b16 %v817, %v815
          %v864 = vpack.c.b16 %v818, %v816
          %v865 = vpack.c.b16 %v821, %v819
          %v866 = vpack.c.b16 %v822, %v820
          %v867 = vpack.c.b16 %v825, %v823
          %v868 = vpack.c.b16 %v826, %v824
          %v869 = vpack.c.b16 %v829, %v827
          %v870 = vpack.c.b16 %v830, %v828
          %v871 = vpack.c.b16 %v833, %v831
          %v872 = vpack.c.b16 %v834, %v832
          %v873 = vpack.c.b16 %v837, %v835
          %v874 = vpack.c.b16 %v838, %v836
          %v875 = vpack.c.b16 %v841, %v839
          %v876 = vpack.c.b16 %v842, %v840
          %v877 = vpack.c.b16 %v845, %v843
          %v878 = vpack.c.b16 %v846, %v844
          %911 = vmatprep.subr.bf16.mxu0 %v848
          %912 = vmatpush1.bf16.msra.mxu0 %v847
          %913 = vmatprep.subr.bf16.mxu0 %v850
          %914 = vmatpush1.bf16.msra.mxu0 %v849
          %915 = vmatprep.subr.bf16.mxu0 %v852
          %916 = vmatpush1.bf16.msra.mxu0 %v851
          %917 = vmatprep.subr.bf16.mxu0 %v854
          %918 = vmatpush1.bf16.msra.mxu0 %v853
          %919 = vmatprep.subr.bf16.mxu0 %v856
          %920 = vmatpush1.bf16.msra.mxu0 %v855
          %921 = vmatprep.subr.bf16.mxu0 %v858
          %922 = vmatpush1.bf16.msra.mxu0 %v857
          %923 = vmatprep.subr.bf16.mxu0 %v860
          %924 = vmatpush1.bf16.msra.mxu0 %v859
          %925 = vmatprep.subr.bf16.mxu0 %v862
          %926 = vmatpush1.bf16.msra.mxu0 %v861
          %927 = vmatprep.subr.bf16.mxu0 %v864
          %928 = vmatpush1.bf16.msra.mxu0 %v863
          %929 = vmatprep.subr.bf16.mxu0 %v866
          %930 = vmatpush1.bf16.msra.mxu0 %v865
          %931 = vmatprep.subr.bf16.mxu0 %v868
          %932 = vmatpush1.bf16.msra.mxu0 %v867
          %933 = vmatprep.subr.bf16.mxu0 %v870
          %934 = vmatpush1.bf16.msra.mxu0 %v869
          %935 = vmatprep.subr.bf16.mxu0 %v872
          %936 = vmatpush1.bf16.msra.mxu0 %v871
          %937 = vmatprep.subr.bf16.mxu0 %v874
          %938 = vmatpush1.bf16.msra.mxu0 %v873
          %939 = vmatprep.subr.bf16.mxu0 %v876
          %940 = vmatpush1.bf16.msra.mxu0 %v875
          %941 = vmatprep.subr.bf16.mxu0 %v878
          %942 = vmatpush1.bf16.msra.mxu0 %v877
          %943 = vmatprep.mubr.bf16.mxu0 %v748
          %944 = vmatmul.mubr.bf16.gmra.mrb[0].mxu0 %v747
          %v945 = vpop.f32.mrb[0].mxu0
          %v946 = vadd.f32 %v734, %v945
          %v947 = vpop.f32.mrb[0].mxu0
          %v948 = vadd.f32 %v736, %v947
          %v949 = vpop.f32.mrb[0].mxu0
          %v950 = vpop.f32.mrb[0].mxu0
          %951 = vdwg.mxu0
          %v952 = vld [vmem:[%s446] sm:$0xa]
          %s953 = scalar_lea.vmem %s371, 512 [#allocation8]
          %v954 = vld [vmem:[%s953] sm:$0xff]
          %v955 = vld [vmem:[%s953 + $0x8] sm:$0xff]
          %v956 = vld [vmem:[%s953 + $0x10] sm:$0xff]
          %v957 = vld [vmem:[%s953 + $0x18] sm:$0xff]
          %v958 = vld [vmem:[%s953 + $0x20] sm:$0xff]
          %v959 = vld [vmem:[%s953 + $0x28] sm:$0xff]
          %v960 = vld [vmem:[%s953 + $0x30] sm:$0xff]
          %v961 = vld [vmem:[%s953 + $0x38] sm:$0xff]
          %v962 = vld [vmem:[%s953 + $0x40] sm:$0xff]
          %v963 = vld [vmem:[%s953 + $0x48] sm:$0xff]
          %v964 = vld [vmem:[%s953 + $0x50] sm:$0xff]
          %v965 = vld [vmem:[%s953 + $0x58] sm:$0xff]
          %v966 = vld [vmem:[%s953 + $0x60] sm:$0xff]
          %v967 = vld [vmem:[%s953 + $0x68] sm:$0xff]
          %v968 = vld [vmem:[%s953 + $0x70] sm:$0xff]
          %v969 = vld [vmem:[%s953 + $0x78] sm:$0xff]
          %v970 = vld [vmem:[%s953 + $0x80] sm:$0xff]
          %v971 = vld [vmem:[%s953 + $0x88] sm:$0xff]
          %v972 = vld [vmem:[%s953 + $0x90] sm:$0xff]
          %v973 = vld [vmem:[%s953 + $0x98] sm:$0xff]
          %v974 = vld [vmem:[%s953 + $0xa0] sm:$0xff]
          %v975 = vld [vmem:[%s953 + $0xa8] sm:$0xff]
          %v976 = vld [vmem:[%s953 + $0xb0] sm:$0xff]
          %v977 = vld [vmem:[%s953 + $0xb8] sm:$0xff]
          %v978 = vld [vmem:[%s953 + $0xc0] sm:$0xff]
          %v979 = vld [vmem:[%s953 + $0xc8] sm:$0xff]
          %v980 = vld [vmem:[%s953 + $0xd0] sm:$0xff]
          %v981 = vld [vmem:[%s953 + $0xd8] sm:$0xff]
          %v982 = vld [vmem:[%s953 + $0xe0] sm:$0xff]
          %v983 = vld [vmem:[%s953 + $0xe8] sm:$0xff]
          %v984 = vld [vmem:[%s953 + $0xf0] sm:$0xff]
          %v985 = vld [vmem:[%s953 + $0xf8] sm:$0xff]
          %v988 = vunpack.c.l.s4 1983009808
          %v989 = vunpack.c.0.s8 %v988
          %v990 = vlaneseq
          %v991 = vshrl.u32 %v990, 7
          %v992 = vsub.s32 %v989, %v991
          %v993 = vrot.slane %v952, %v992
          %v994 = vcombine.high %v993, %v993
          %v995 = vrot.slane %v993, 1
          %v996 = vrot.slane %v994, 1
          %v1031 = vunpack.c.l.b16 %v954
          %v1032 = vunpack.c.h.b16 %v954
          %v1033 = vunpack.c.l.b16 %v955
          %v1034 = vunpack.c.h.b16 %v955
          %v1035 = vunpack.c.l.b16 %v956
          %v1036 = vunpack.c.h.b16 %v956
          %v1037 = vunpack.c.l.b16 %v957
          %v1038 = vunpack.c.h.b16 %v957
          %v1039 = vunpack.c.l.b16 %v958
          %v1040 = vunpack.c.h.b16 %v958
          %v1041 = vunpack.c.l.b16 %v959
          %v1042 = vunpack.c.h.b16 %v959
          %v1043 = vunpack.c.l.b16 %v960
          %v1044 = vunpack.c.h.b16 %v960
          %v1045 = vunpack.c.l.b16 %v961
          %v1046 = vunpack.c.h.b16 %v961
          %v1047 = vunpack.c.l.b16 %v962
          %v1048 = vunpack.c.h.b16 %v962
          %v1049 = vunpack.c.l.b16 %v963
          %v1050 = vunpack.c.h.b16 %v963
          %v1051 = vunpack.c.l.b16 %v964
          %v1052 = vunpack.c.h.b16 %v964
          %v1053 = vunpack.c.l.b16 %v965
          %v1054 = vunpack.c.h.b16 %v965
          %v1055 = vunpack.c.l.b16 %v966
          %v1056 = vunpack.c.h.b16 %v966
          %v1057 = vunpack.c.l.b16 %v967
          %v1058 = vunpack.c.h.b16 %v967
          %v1059 = vunpack.c.l.b16 %v968
          %v1060 = vunpack.c.h.b16 %v968
          %v1061 = vunpack.c.l.b16 %v969
          %v1062 = vunpack.c.h.b16 %v969
          %v1063 = vunpack.c.l.b16 %v970
          %v1064 = vunpack.c.h.b16 %v970
          %v1065 = vunpack.c.l.b16 %v971
          %v1066 = vunpack.c.h.b16 %v971
          %v1067 = vunpack.c.l.b16 %v972
          %v1068 = vunpack.c.h.b16 %v972
          %v1069 = vunpack.c.l.b16 %v973
          %v1070 = vunpack.c.h.b16 %v973
          %v1071 = vunpack.c.l.b16 %v974
          %v1072 = vunpack.c.h.b16 %v974
          %v1073 = vunpack.c.l.b16 %v975
          %v1074 = vunpack.c.h.b16 %v975
          %v1075 = vunpack.c.l.b16 %v976
          %v1076 = vunpack.c.h.b16 %v976
          %v1077 = vunpack.c.l.b16 %v977
          %v1078 = vunpack.c.h.b16 %v977
          %v1079 = vunpack.c.l.b16 %v978
          %v1080 = vunpack.c.h.b16 %v978
          %v1081 = vunpack.c.l.b16 %v979
          %v1082 = vunpack.c.h.b16 %v979
          %v1083 = vunpack.c.l.b16 %v980
          %v1084 = vunpack.c.h.b16 %v980
          %v1085 = vunpack.c.l.b16 %v981
          %v1086 = vunpack.c.h.b16 %v981
          %v1087 = vunpack.c.l.b16 %v982
          %v1088 = vunpack.c.h.b16 %v982
          %v1089 = vunpack.c.l.b16 %v983
          %v1090 = vunpack.c.h.b16 %v983
          %v1091 = vunpack.c.l.b16 %v984
          %v1092 = vunpack.c.h.b16 %v984
          %v1093 = vunpack.c.l.b16 %v985
          %v1094 = vunpack.c.h.b16 %v985
          %v1095 = vpack.c.b16 %v1033, %v1031
          %v1096 = vpack.c.b16 %v1034, %v1032
          %v1097 = vpack.c.b16 %v1037, %v1035
          %v1098 = vpack.c.b16 %v1038, %v1036
          %v1099 = vpack.c.b16 %v1041, %v1039
          %v1100 = vpack.c.b16 %v1042, %v1040
          %v1101 = vpack.c.b16 %v1045, %v1043
          %v1102 = vpack.c.b16 %v1046, %v1044
          %v1103 = vpack.c.b16 %v1049, %v1047
          %v1104 = vpack.c.b16 %v1050, %v1048
          %v1105 = vpack.c.b16 %v1053, %v1051
          %v1106 = vpack.c.b16 %v1054, %v1052
          %v1107 = vpack.c.b16 %v1057, %v1055
          %v1108 = vpack.c.b16 %v1058, %v1056
          %v1109 = vpack.c.b16 %v1061, %v1059
          %v1110 = vpack.c.b16 %v1062, %v1060
          %v1111 = vpack.c.b16 %v1065, %v1063
          %v1112 = vpack.c.b16 %v1066, %v1064
          %v1113 = vpack.c.b16 %v1069, %v1067
          %v1114 = vpack.c.b16 %v1070, %v1068
          %v1115 = vpack.c.b16 %v1073, %v1071
          %v1116 = vpack.c.b16 %v1074, %v1072
          %v1117 = vpack.c.b16 %v1077, %v1075
          %v1118 = vpack.c.b16 %v1078, %v1076
          %v1119 = vpack.c.b16 %v1081, %v1079
          %v1120 = vpack.c.b16 %v1082, %v1080
          %v1121 = vpack.c.b16 %v1085, %v1083
          %v1122 = vpack.c.b16 %v1086, %v1084
          %v1123 = vpack.c.b16 %v1089, %v1087
          %v1124 = vpack.c.b16 %v1090, %v1088
          %v1125 = vpack.c.b16 %v1093, %v1091
          %v1126 = vpack.c.b16 %v1094, %v1092
          %1159 = vmatprep.subr.bf16.mxu0 %v1096
          %1160 = vmatpush1.bf16.msra.mxu0 %v1095
          %1161 = vmatprep.subr.bf16.mxu0 %v1098
          %1162 = vmatpush1.bf16.msra.mxu0 %v1097
          %1163 = vmatprep.subr.bf16.mxu0 %v1100
          %1164 = vmatpush1.bf16.msra.mxu0 %v1099
          %1165 = vmatprep.subr.bf16.mxu0 %v1102
          %1166 = vmatpush1.bf16.msra.mxu0 %v1101
          %1167 = vmatprep.subr.bf16.mxu0 %v1104
          %1168 = vmatpush1.bf16.msra.mxu0 %v1103
          %1169 = vmatprep.subr.bf16.mxu0 %v1106
          %1170 = vmatpush1.bf16.msra.mxu0 %v1105
          %1171 = vmatprep.subr.bf16.mxu0 %v1108
          %1172 = vmatpush1.bf16.msra.mxu0 %v1107
          %1173 = vmatprep.subr.bf16.mxu0 %v1110
          %1174 = vmatpush1.bf16.msra.mxu0 %v1109
          %1175 = vmatprep.subr.bf16.mxu0 %v1112
          %1176 = vmatpush1.bf16.msra.mxu0 %v1111
          %1177 = vmatprep.subr.bf16.mxu0 %v1114
          %1178 = vmatpush1.bf16.msra.mxu0 %v1113
          %1179 = vmatprep.subr.bf16.mxu0 %v1116
          %1180 = vmatpush1.bf16.msra.mxu0 %v1115
          %1181 = vmatprep.subr.bf16.mxu0 %v1118
          %1182 = vmatpush1.bf16.msra.mxu0 %v1117
          %1183 = vmatprep.subr.bf16.mxu0 %v1120
          %1184 = vmatpush1.bf16.msra.mxu0 %v1119
          %1185 = vmatprep.subr.bf16.mxu0 %v1122
          %1186 = vmatpush1.bf16.msra.mxu0 %v1121
          %1187 = vmatprep.subr.bf16.mxu0 %v1124
          %1188 = vmatpush1.bf16.msra.mxu0 %v1123
          %1189 = vmatprep.subr.bf16.mxu0 %v1126
          %1190 = vmatpush1.bf16.msra.mxu0 %v1125
          %1191 = vmatprep.mubr.bf16.mxu0 %v996
          %1192 = vmatmul.mubr.bf16.gmra.mrb[0].mxu0 %v995
          %v1193 = vpop.f32.mrb[0].mxu0
          %v1194 = vadd.f32 0.0, %v1193
          %v1195 = vpop.f32.mrb[0].mxu0
          %v1196 = vadd.f32 0.0, %v1195
          %v1197 = vpop.f32.mrb[0].mxu0
          %v1198 = vpop.f32.mrb[0].mxu0
          %1199 = vdwg.mxu0
          %v1200 = vadd.f32 %v946, %v1194
          %v1201 = vadd.f32 %v948, %v1196
          %s1202 = smul.addr %s444, 2
          %s1203 = scalar_lea.vmem [#allocation5], %s1202
          %v1204 = vld [vmem:[%s1203] sm:$0x5]
          %s1205 = scalar_lea.vmem %s371, 768 [#allocation8]
          %v1206 = vld [vmem:[%s1205] sm:$0xff]
          %v1207 = vld [vmem:[%s1205 + $0x8] sm:$0xff]
          %v1208 = vld [vmem:[%s1205 + $0x10] sm:$0xff]
          %v1209 = vld [vmem:[%s1205 + $0x18] sm:$0xff]
          %v1210 = vld [vmem:[%s1205 + $0x20] sm:$0xff]
          %v1211 = vld [vmem:[%s1205 + $0x28] sm:$0xff]
          %v1212 = vld [vmem:[%s1205 + $0x30] sm:$0xff]
          %v1213 = vld [vmem:[%s1205 + $0x38] sm:$0xff]
          %v1214 = vld [vmem:[%s1205 + $0x40] sm:$0xff]
          %v1215 = vld [vmem:[%s1205 + $0x48] sm:$0xff]
          %v1216 = vld [vmem:[%s1205 + $0x50] sm:$0xff]
          %v1217 = vld [vmem:[%s1205 + $0x58] sm:$0xff]
          %v1218 = vld [vmem:[%s1205 + $0x60] sm:$0xff]
          %v1219 = vld [vmem:[%s1205 + $0x68] sm:$0xff]
          %v1220 = vld [vmem:[%s1205 + $0x70] sm:$0xff]
          %v1221 = vld [vmem:[%s1205 + $0x78] sm:$0xff]
          %v1222 = vld [vmem:[%s1205 + $0x80] sm:$0xff]
          %v1223 = vld [vmem:[%s1205 + $0x88] sm:$0xff]
          %v1224 = vld [vmem:[%s1205 + $0x90] sm:$0xff]
          %v1225 = vld [vmem:[%s1205 + $0x98] sm:$0xff]
          %v1226 = vld [vmem:[%s1205 + $0xa0] sm:$0xff]
          %v1227 = vld [vmem:[%s1205 + $0xa8] sm:$0xff]
          %v1228 = vld [vmem:[%s1205 + $0xb0] sm:$0xff]
          %v1229 = vld [vmem:[%s1205 + $0xb8] sm:$0xff]
          %v1230 = vld [vmem:[%s1205 + $0xc0] sm:$0xff]
          %v1231 = vld [vmem:[%s1205 + $0xc8] sm:$0xff]
          %v1232 = vld [vmem:[%s1205 + $0xd0] sm:$0xff]
          %v1233 = vld [vmem:[%s1205 + $0xd8] sm:$0xff]
          %v1234 = vld [vmem:[%s1205 + $0xe0] sm:$0xff]
          %v1235 = vld [vmem:[%s1205 + $0xe8] sm:$0xff]
          %v1236 = vld [vmem:[%s1205 + $0xf0] sm:$0xff]
          %v1237 = vld [vmem:[%s1205 + $0xf8] sm:$0xff]
          %v1240 = vunpack.c.l.s4 1983009808
          %v1241 = vunpack.c.0.s8 %v1240
          %v1242 = vlaneseq
          %v1243 = vshrl.u32 %v1242, 7
          %v1244 = vsub.s32 %v1241, %v1243
          %v1245 = vrot.slane %v1204, %v1244
          %v1246 = vcombine.high %v1245, %v1245
          %v1281 = vunpack.c.l.b16 %v1206
          %v1282 = vunpack.c.h.b16 %v1206
          %v1283 = vunpack.c.l.b16 %v1207
          %v1284 = vunpack.c.h.b16 %v1207
          %v1285 = vunpack.c.l.b16 %v1208
          %v1286 = vunpack.c.h.b16 %v1208
          %v1287 = vunpack.c.l.b16 %v1209
          %v1288 = vunpack.c.h.b16 %v1209
          %v1289 = vunpack.c.l.b16 %v1210
          %v1290 = vunpack.c.h.b16 %v1210
          %v1291 = vunpack.c.l.b16 %v1211
          %v1292 = vunpack.c.h.b16 %v1211
          %v1293 = vunpack.c.l.b16 %v1212
          %v1294 = vunpack.c.h.b16 %v1212
          %v1295 = vunpack.c.l.b16 %v1213
          %v1296 = vunpack.c.h.b16 %v1213
          %v1297 = vunpack.c.l.b16 %v1214
          %v1298 = vunpack.c.h.b16 %v1214
          %v1299 = vunpack.c.l.b16 %v1215
          %v1300 = vunpack.c.h.b16 %v1215
          %v1301 = vunpack.c.l.b16 %v1216
          %v1302 = vunpack.c.h.b16 %v1216
          %v1303 = vunpack.c.l.b16 %v1217
          %v1304 = vunpack.c.h.b16 %v1217
          %v1305 = vunpack.c.l.b16 %v1218
          %v1306 = vunpack.c.h.b16 %v1218
          %v1307 = vunpack.c.l.b16 %v1219
          %v1308 = vunpack.c.h.b16 %v1219
          %v1309 = vunpack.c.l.b16 %v1220
          %v1310 = vunpack.c.h.b16 %v1220
          %v1311 = vunpack.c.l.b16 %v1221
          %v1312 = vunpack.c.h.b16 %v1221
          %v1313 = vunpack.c.l.b16 %v1222
          %v1314 = vunpack.c.h.b16 %v1222
          %v1315 = vunpack.c.l.b16 %v1223
          %v1316 = vunpack.c.h.b16 %v1223
          %v1317 = vunpack.c.l.b16 %v1224
          %v1318 = vunpack.c.h.b16 %v1224
          %v1319 = vunpack.c.l.b16 %v1225
          %v1320 = vunpack.c.h.b16 %v1225
          %v1321 = vunpack.c.l.b16 %v1226
          %v1322 = vunpack.c.h.b16 %v1226
          %v1323 = vunpack.c.l.b16 %v1227
          %v1324 = vunpack.c.h.b16 %v1227
          %v1325 = vunpack.c.l.b16 %v1228
          %v1326 = vunpack.c.h.b16 %v1228
          %v1327 = vunpack.c.l.b16 %v1229
          %v1328 = vunpack.c.h.b16 %v1229
          %v1329 = vunpack.c.l.b16 %v1230
          %v1330 = vunpack.c.h.b16 %v1230
          %v1331 = vunpack.c.l.b16 %v1231
          %v1332 = vunpack.c.h.b16 %v1231
          %v1333 = vunpack.c.l.b16 %v1232
          %v1334 = vunpack.c.h.b16 %v1232
          %v1335 = vunpack.c.l.b16 %v1233
          %v1336 = vunpack.c.h.b16 %v1233
          %v1337 = vunpack.c.l.b16 %v1234
          %v1338 = vunpack.c.h.b16 %v1234
          %v1339 = vunpack.c.l.b16 %v1235
          %v1340 = vunpack.c.h.b16 %v1235
          %v1341 = vunpack.c.l.b16 %v1236
          %v1342 = vunpack.c.h.b16 %v1236
          %v1343 = vunpack.c.l.b16 %v1237
          %v1344 = vunpack.c.h.b16 %v1237
          %v1345 = vpack.c.b16 %v1283, %v1281
          %v1346 = vpack.c.b16 %v1284, %v1282
          %v1347 = vpack.c.b16 %v1287, %v1285
          %v1348 = vpack.c.b16 %v1288, %v1286
          %v1349 = vpack.c.b16 %v1291, %v1289
          %v1350 = vpack.c.b16 %v1292, %v1290
          %v1351 = vpack.c.b16 %v1295, %v1293
          %v1352 = vpack.c.b16 %v1296, %v1294
          %v1353 = vpack.c.b16 %v1299, %v1297
          %v1354 = vpack.c.b16 %v1300, %v1298
          %v1355 = vpack.c.b16 %v1303, %v1301
          %v1356 = vpack.c.b16 %v1304, %v1302
          %v1357 = vpack.c.b16 %v1307, %v1305
          %v1358 = vpack.c.b16 %v1308, %v1306
          %v1359 = vpack.c.b16 %v1311, %v1309
          %v1360 = vpack.c.b16 %v1312, %v1310
          %v1361 = vpack.c.b16 %v1315, %v1313
          %v1362 = vpack.c.b16 %v1316, %v1314
          %v1363 = vpack.c.b16 %v1319, %v1317
          %v1364 = vpack.c.b16 %v1320, %v1318
          %v1365 = vpack.c.b16 %v1323, %v1321
          %v1366 = vpack.c.b16 %v1324, %v1322
          %v1367 = vpack.c.b16 %v1327, %v1325
          %v1368 = vpack.c.b16 %v1328, %v1326
          %v1369 = vpack.c.b16 %v1331, %v1329
          %v1370 = vpack.c.b16 %v1332, %v1330
          %v1371 = vpack.c.b16 %v1335, %v1333
          %v1372 = vpack.c.b16 %v1336, %v1334
          %v1373 = vpack.c.b16 %v1339, %v1337
          %v1374 = vpack.c.b16 %v1340, %v1338
          %v1375 = vpack.c.b16 %v1343, %v1341
          %v1376 = vpack.c.b16 %v1344, %v1342
          %1409 = vmatprep.subr.bf16.mxu0 %v1346
          %1410 = vmatpush1.bf16.msra.mxu0 %v1345
          %1411 = vmatprep.subr.bf16.mxu0 %v1348
          %1412 = vmatpush1.bf16.msra.mxu0 %v1347
          %1413 = vmatprep.subr.bf16.mxu0 %v1350
          %1414 = vmatpush1.bf16.msra.mxu0 %v1349
          %1415 = vmatprep.subr.bf16.mxu0 %v1352
          %1416 = vmatpush1.bf16.msra.mxu0 %v1351
          %1417 = vmatprep.subr.bf16.mxu0 %v1354
          %1418 = vmatpush1.bf16.msra.mxu0 %v1353
          %1419 = vmatprep.subr.bf16.mxu0 %v1356
          %1420 = vmatpush1.bf16.msra.mxu0 %v1355
          %1421 = vmatprep.subr.bf16.mxu0 %v1358
          %1422 = vmatpush1.bf16.msra.mxu0 %v1357
          %1423 = vmatprep.subr.bf16.mxu0 %v1360
          %1424 = vmatpush1.bf16.msra.mxu0 %v1359
          %1425 = vmatprep.subr.bf16.mxu0 %v1362
          %1426 = vmatpush1.bf16.msra.mxu0 %v1361
          %1427 = vmatprep.subr.bf16.mxu0 %v1364
          %1428 = vmatpush1.bf16.msra.mxu0 %v1363
          %1429 = vmatprep.subr.bf16.mxu0 %v1366
          %1430 = vmatpush1.bf16.msra.mxu0 %v1365
          %1431 = vmatprep.subr.bf16.mxu0 %v1368
          %1432 = vmatpush1.bf16.msra.mxu0 %v1367
          %1433 = vmatprep.subr.bf16.mxu0 %v1370
          %1434 = vmatpush1.bf16.msra.mxu0 %v1369
          %1435 = vmatprep.subr.bf16.mxu0 %v1372
          %1436 = vmatpush1.bf16.msra.mxu0 %v1371
          %1437 = vmatprep.subr.bf16.mxu0 %v1374
          %1438 = vmatpush1.bf16.msra.mxu0 %v1373
          %1439 = vmatprep.subr.bf16.mxu0 %v1376
          %1440 = vmatpush1.bf16.msra.mxu0 %v1375
          %1441 = vmatprep.mubr.bf16.mxu0 %v1246
          %1442 = vmatmul.mubr.bf16.gmra.mrb[0].mxu0 %v1245
          %v1443 = vpop.f32.mrb[0].mxu0
          %v1444 = vadd.f32 0.0, %v1443
          %v1445 = vpop.f32.mrb[0].mxu0
          %v1446 = vadd.f32 0.0, %v1445
          %v1447 = vpop.f32.mrb[0].mxu0
          %v1448 = vpop.f32.mrb[0].mxu0
          %1449 = vdwg.mxu0
          %v1450 = vadd.f32 %v1200, %v1444
          %v1451 = vadd.f32 %v1201, %v1446
          %v1452 = vld [vmem:[%s1203] sm:$0xf]
          %s1453 = scalar_lea.vmem %s371, 1024 [#allocation8]
          %v1454 = vld [vmem:[%s1453] sm:$0xff]
          %v1455 = vld [vmem:[%s1453 + $0x8] sm:$0xff]
          %v1456 = vld [vmem:[%s1453 + $0x10] sm:$0xff]
          %v1457 = vld [vmem:[%s1453 + $0x18] sm:$0xff]
          %v1458 = vld [vmem:[%s1453 + $0x20] sm:$0xff]
          %v1459 = vld [vmem:[%s1453 + $0x28] sm:$0xff]
          %v1460 = vld [vmem:[%s1453 + $0x30] sm:$0xff]
          %v1461 = vld [vmem:[%s1453 + $0x38] sm:$0xff]
          %v1462 = vld [vmem:[%s1453 + $0x40] sm:$0xff]
          %v1463 = vld [vmem:[%s1453 + $0x48] sm:$0xff]
          %v1464 = vld [vmem:[%s1453 + $0x50] sm:$0xff]
          %v1465 = vld [vmem:[%s1453 + $0x58] sm:$0xff]
          %v1466 = vld [vmem:[%s1453 + $0x60] sm:$0xff]
          %v1467 = vld [vmem:[%s1453 + $0x68] sm:$0xff]
          %v1468 = vld [vmem:[%s1453 + $0x70] sm:$0xff]
          %v1469 = vld [vmem:[%s1453 + $0x78] sm:$0xff]
          %v1470 = vld [vmem:[%s1453 + $0x80] sm:$0xff]
          %v1471 = vld [vmem:[%s1453 + $0x88] sm:$0xff]
          %v1472 = vld [vmem:[%s1453 + $0x90] sm:$0xff]
          %v1473 = vld [vmem:[%s1453 + $0x98] sm:$0xff]
          %v1474 = vld [vmem:[%s1453 + $0xa0] sm:$0xff]
          %v1475 = vld [vmem:[%s1453 + $0xa8] sm:$0xff]
          %v1476 = vld [vmem:[%s1453 + $0xb0] sm:$0xff]
          %v1477 = vld [vmem:[%s1453 + $0xb8] sm:$0xff]
          %v1478 = vld [vmem:[%s1453 + $0xc0] sm:$0xff]
          %v1479 = vld [vmem:[%s1453 + $0xc8] sm:$0xff]
          %v1480 = vld [vmem:[%s1453 + $0xd0] sm:$0xff]
          %v1481 = vld [vmem:[%s1453 + $0xd8] sm:$0xff]
          %v1482 = vld [vmem:[%s1453 + $0xe0] sm:$0xff]
          %v1483 = vld [vmem:[%s1453 + $0xe8] sm:$0xff]
          %v1484 = vld [vmem:[%s1453 + $0xf0] sm:$0xff]
          %v1485 = vld [vmem:[%s1453 + $0xf8] sm:$0xff]
          %v1488 = vunpack.c.l.s4 1983009808
          %v1489 = vunpack.c.0.s8 %v1488
          %v1490 = vlaneseq
          %v1491 = vshrl.u32 %v1490, 7
          %v1492 = vsub.s32 %v1489, %v1491
          %v1493 = vrot.slane %v1452, %v1492
          %v1494 = vcombine.high %v1493, %v1493
          %v1496 = vshrl.u32 %v1493, 16
          %v1498 = vshll.u32 %v1493, 16
          %v1500 = vrot.slane %v1498, 1
          %v1501 = vor.u32 %v1496, %v1500
          %v1503 = vshrl.u32 %v1494, 16
          %v1505 = vshll.u32 %v1494, 16
          %v1507 = vrot.slane %v1505, 1
          %v1508 = vor.u32 %v1503, %v1507
          %v1543 = vunpack.c.l.b16 %v1454
          %v1544 = vunpack.c.h.b16 %v1454
          %v1545 = vunpack.c.l.b16 %v1455
          %v1546 = vunpack.c.h.b16 %v1455
          %v1547 = vunpack.c.l.b16 %v1456
          %v1548 = vunpack.c.h.b16 %v1456
          %v1549 = vunpack.c.l.b16 %v1457
          %v1550 = vunpack.c.h.b16 %v1457
          %v1551 = vunpack.c.l.b16 %v1458
          %v1552 = vunpack.c.h.b16 %v1458
          %v1553 = vunpack.c.l.b16 %v1459
          %v1554 = vunpack.c.h.b16 %v1459
          %v1555 = vunpack.c.l.b16 %v1460
          %v1556 = vunpack.c.h.b16 %v1460
          %v1557 = vunpack.c.l.b16 %v1461
          %v1558 = vunpack.c.h.b16 %v1461
          %v1559 = vunpack.c.l.b16 %v1462
          %v1560 = vunpack.c.h.b16 %v1462
          %v1561 = vunpack.c.l.b16 %v1463
          %v1562 = vunpack.c.h.b16 %v1463
          %v1563 = vunpack.c.l.b16 %v1464
          %v1564 = vunpack.c.h.b16 %v1464
          %v1565 = vunpack.c.l.b16 %v1465
          %v1566 = vunpack.c.h.b16 %v1465
          %v1567 = vunpack.c.l.b16 %v1466
          %v1568 = vunpack.c.h.b16 %v1466
          %v1569 = vunpack.c.l.b16 %v1467
          %v1570 = vunpack.c.h.b16 %v1467
          %v1571 = vunpack.c.l.b16 %v1468
          %v1572 = vunpack.c.h.b16 %v1468
          %v1573 = vunpack.c.l.b16 %v1469
          %v1574 = vunpack.c.h.b16 %v1469
          %v1575 = vunpack.c.l.b16 %v1470
          %v1576 = vunpack.c.h.b16 %v1470
          %v1577 = vunpack.c.l.b16 %v1471
          %v1578 = vunpack.c.h.b16 %v1471
          %v1579 = vunpack.c.l.b16 %v1472
          %v1580 = vunpack.c.h.b16 %v1472
          %v1581 = vunpack.c.l.b16 %v1473
          %v1582 = vunpack.c.h.b16 %v1473
          %v1583 = vunpack.c.l.b16 %v1474
          %v1584 = vunpack.c.h.b16 %v1474
          %v1585 = vunpack.c.l.b16 %v1475
          %v1586 = vunpack.c.h.b16 %v1475
          %v1587 = vunpack.c.l.b16 %v1476
          %v1588 = vunpack.c.h.b16 %v1476
          %v1589 = vunpack.c.l.b16 %v1477
          %v1590 = vunpack.c.h.b16 %v1477
          %v1591 = vunpack.c.l.b16 %v1478
          %v1592 = vunpack.c.h.b16 %v1478
          %v1593 = vunpack.c.l.b16 %v1479
          %v1594 = vunpack.c.h.b16 %v1479
          %v1595 = vunpack.c.l.b16 %v1480
          %v1596 = vunpack.c.h.b16 %v1480
          %v1597 = vunpack.c.l.b16 %v1481
          %v1598 = vunpack.c.h.b16 %v1481
          %v1599 = vunpack.c.l.b16 %v1482
          %v1600 = vunpack.c.h.b16 %v1482
          %v1601 = vunpack.c.l.b16 %v1483
          %v1602 = vunpack.c.h.b16 %v1483
          %v1603 = vunpack.c.l.b16 %v1484
          %v1604 = vunpack.c.h.b16 %v1484
          %v1605 = vunpack.c.l.b16 %v1485
          %v1606 = vunpack.c.h.b16 %v1485
          %v1607 = vpack.c.b16 %v1545, %v1543
          %v1608 = vpack.c.b16 %v1546, %v1544
          %v1609 = vpack.c.b16 %v1549, %v1547
          %v1610 = vpack.c.b16 %v1550, %v1548
          %v1611 = vpack.c.b16 %v1553, %v1551
          %v1612 = vpack.c.b16 %v1554, %v1552
          %v1613 = vpack.c.b16 %v1557, %v1555
          %v1614 = vpack.c.b16 %v1558, %v1556
          %v1615 = vpack.c.b16 %v1561, %v1559
          %v1616 = vpack.c.b16 %v1562, %v1560
          %v1617 = vpack.c.b16 %v1565, %v1563
          %v1618 = vpack.c.b16 %v1566, %v1564
          %v1619 = vpack.c.b16 %v1569, %v1567
          %v1620 = vpack.c.b16 %v1570, %v1568
          %v1621 = vpack.c.b16 %v1573, %v1571
          %v1622 = vpack.c.b16 %v1574, %v1572
          %v1623 = vpack.c.b16 %v1577, %v1575
          %v1624 = vpack.c.b16 %v1578, %v1576
          %v1625 = vpack.c.b16 %v1581, %v1579
          %v1626 = vpack.c.b16 %v1582, %v1580
          %v1627 = vpack.c.b16 %v1585, %v1583
          %v1628 = vpack.c.b16 %v1586, %v1584
          %v1629 = vpack.c.b16 %v1589, %v1587
          %v1630 = vpack.c.b16 %v1590, %v1588
          %v1631 = vpack.c.b16 %v1593, %v1591
          %v1632 = vpack.c.b16 %v1594, %v1592
          %v1633 = vpack.c.b16 %v1597, %v1595
          %v1634 = vpack.c.b16 %v1598, %v1596
          %v1635 = vpack.c.b16 %v1601, %v1599
          %v1636 = vpack.c.b16 %v1602, %v1600
          %v1637 = vpack.c.b16 %v1605, %v1603
          %v1638 = vpack.c.b16 %v1606, %v1604
          %1671 = vmatprep.subr.bf16.mxu0 %v1608
          %1672 = vmatpush1.bf16.msra.mxu0 %v1607
          %1673 = vmatprep.subr.bf16.mxu0 %v1610
          %1674 = vmatpush1.bf16.msra.mxu0 %v1609
          %1675 = vmatprep.subr.bf16.mxu0 %v1612
          %1676 = vmatpush1.bf16.msra.mxu0 %v1611
          %1677 = vmatprep.subr.bf16.mxu0 %v1614
          %1678 = vmatpush1.bf16.msra.mxu0 %v1613
          %1679 = vmatprep.subr.bf16.mxu0 %v1616
          %1680 = vmatpush1.bf16.msra.mxu0 %v1615
          %1681 = vmatprep.subr.bf16.mxu0 %v1618
          %1682 = vmatpush1.bf16.msra.mxu0 %v1617
          %1683 = vmatprep.subr.bf16.mxu0 %v1620
          %1684 = vmatpush1.bf16.msra.mxu0 %v1619
          %1685 = vmatprep.subr.bf16.mxu0 %v1622
          %1686 = vmatpush1.bf16.msra.mxu0 %v1621
          %1687 = vmatprep.subr.bf16.mxu0 %v1624
          %1688 = vmatpush1.bf16.msra.mxu0 %v1623
          %1689 = vmatprep.subr.bf16.mxu0 %v1626
          %1690 = vmatpush1.bf16.msra.mxu0 %v1625
          %1691 = vmatprep.subr.bf16.mxu0 %v1628
          %1692 = vmatpush1.bf16.msra.mxu0 %v1627
          %1693 = vmatprep.subr.bf16.mxu0 %v1630
          %1694 = vmatpush1.bf16.msra.mxu0 %v1629
          %1695 = vmatprep.subr.bf16.mxu0 %v1632
          %1696 = vmatpush1.bf16.msra.mxu0 %v1631
          %1697 = vmatprep.subr.bf16.mxu0 %v1634
          %1698 = vmatpush1.bf16.msra.mxu0 %v1633
          %1699 = vmatprep.subr.bf16.mxu0 %v1636
          %1700 = vmatpush1.bf16.msra.mxu0 %v1635
          %1701 = vmatprep.subr.bf16.mxu0 %v1638
          %1702 = vmatpush1.bf16.msra.mxu0 %v1637
          %1703 = vmatprep.mubr.bf16.mxu0 %v1508
          %1704 = vmatmul.mubr.bf16.gmra.mrb[0].mxu0 %v1501
          %v1705 = vpop.f32.mrb[0].mxu0
          %v1706 = vadd.f32 0.0, %v1705
          %v1707 = vpop.f32.mrb[0].mxu0
          %v1708 = vadd.f32 0.0, %v1707
          %v1709 = vpop.f32.mrb[0].mxu0
          %v1710 = vpop.f32.mrb[0].mxu0
          %1711 = vdwg.mxu0
          %v1712 = vadd.f32 %v1450, %v1706
          %v1713 = vadd.f32 %v1451, %v1708
          %v1714 = vld [vmem:[%s1203] sm:$0xa]
          %s1715 = scalar_lea.vmem %s371, 1280 [#allocation8]
          %v1716 = vld [vmem:[%s1715] sm:$0xff]
          %v1717 = vld [vmem:[%s1715 + $0x8] sm:$0xff]
          %v1718 = vld [vmem:[%s1715 + $0x10] sm:$0xff]
          %v1719 = vld [vmem:[%s1715 + $0x18] sm:$0xff]
          %v1720 = vld [vmem:[%s1715 + $0x20] sm:$0xff]
          %v1721 = vld [vmem:[%s1715 + $0x28] sm:$0xff]
          %v1722 = vld [vmem:[%s1715 + $0x30] sm:$0xff]
          %v1723 = vld [vmem:[%s1715 + $0x38] sm:$0xff]
          %v1724 = vld [vmem:[%s1715 + $0x40] sm:$0xff]
          %v1725 = vld [vmem:[%s1715 + $0x48] sm:$0xff]
          %v1726 = vld [vmem:[%s1715 + $0x50] sm:$0xff]
          %v1727 = vld [vmem:[%s1715 + $0x58] sm:$0xff]
          %v1728 = vld [vmem:[%s1715 + $0x60] sm:$0xff]
          %v1729 = vld [vmem:[%s1715 + $0x68] sm:$0xff]
          %v1730 = vld [vmem:[%s1715 + $0x70] sm:$0xff]
          %v1731 = vld [vmem:[%s1715 + $0x78] sm:$0xff]
          %v1732 = vld [vmem:[%s1715 + $0x80] sm:$0xff]
          %v1733 = vld [vmem:[%s1715 + $0x88] sm:$0xff]
          %v1734 = vld [vmem:[%s1715 + $0x90] sm:$0xff]
          %v1735 = vld [vmem:[%s1715 + $0x98] sm:$0xff]
          %v1736 = vld [vmem:[%s1715 + $0xa0] sm:$0xff]
          %v1737 = vld [vmem:[%s1715 + $0xa8] sm:$0xff]
          %v1738 = vld [vmem:[%s1715 + $0xb0] sm:$0xff]
          %v1739 = vld [vmem:[%s1715 + $0xb8] sm:$0xff]
          %v1740 = vld [vmem:[%s1715 + $0xc0] sm:$0xff]
          %v1741 = vld [vmem:[%s1715 + $0xc8] sm:$0xff]
          %v1742 = vld [vmem:[%s1715 + $0xd0] sm:$0xff]
          %v1743 = vld [vmem:[%s1715 + $0xd8] sm:$0xff]
          %v1744 = vld [vmem:[%s1715 + $0xe0] sm:$0xff]
          %v1745 = vld [vmem:[%s1715 + $0xe8] sm:$0xff]
          %v1746 = vld [vmem:[%s1715 + $0xf0] sm:$0xff]
          %v1747 = vld [vmem:[%s1715 + $0xf8] sm:$0xff]
          %v1750 = vunpack.c.l.s4 1983009808
          %v1751 = vunpack.c.0.s8 %v1750
          %v1752 = vlaneseq
          %v1753 = vshrl.u32 %v1752, 7
          %v1754 = vsub.s32 %v1751, %v1753
          %v1755 = vrot.slane %v1714, %v1754
          %v1756 = vcombine.high %v1755, %v1755
          %v1757 = vrot.slane %v1755, 1
          %v1758 = vrot.slane %v1756, 1
          %v1793 = vunpack.c.l.b16 %v1716
          %v1794 = vunpack.c.h.b16 %v1716
          %v1795 = vunpack.c.l.b16 %v1717
          %v1796 = vunpack.c.h.b16 %v1717
          %v1797 = vunpack.c.l.b16 %v1718
          %v1798 = vunpack.c.h.b16 %v1718
          %v1799 = vunpack.c.l.b16 %v1719
          %v1800 = vunpack.c.h.b16 %v1719
          %v1801 = vunpack.c.l.b16 %v1720
          %v1802 = vunpack.c.h.b16 %v1720
          %v1803 = vunpack.c.l.b16 %v1721
          %v1804 = vunpack.c.h.b16 %v1721
          %v1805 = vunpack.c.l.b16 %v1722
          %v1806 = vunpack.c.h.b16 %v1722
          %v1807 = vunpack.c.l.b16 %v1723
          %v1808 = vunpack.c.h.b16 %v1723
          %v1809 = vunpack.c.l.b16 %v1724
          %v1810 = vunpack.c.h.b16 %v1724
          %v1811 = vunpack.c.l.b16 %v1725
          %v1812 = vunpack.c.h.b16 %v1725
          %v1813 = vunpack.c.l.b16 %v1726
          %v1814 = vunpack.c.h.b16 %v1726
          %v1815 = vunpack.c.l.b16 %v1727
          %v1816 = vunpack.c.h.b16 %v1727
          %v1817 = vunpack.c.l.b16 %v1728
          %v1818 = vunpack.c.h.b16 %v1728
          %v1819 = vunpack.c.l.b16 %v1729
          %v1820 = vunpack.c.h.b16 %v1729
          %v1821 = vunpack.c.l.b16 %v1730
          %v1822 = vunpack.c.h.b16 %v1730
          %v1823 = vunpack.c.l.b16 %v1731
          %v1824 = vunpack.c.h.b16 %v1731
          %v1825 = vunpack.c.l.b16 %v1732
          %v1826 = vunpack.c.h.b16 %v1732
          %v1827 = vunpack.c.l.b16 %v1733
          %v1828 = vunpack.c.h.b16 %v1733
          %v1829 = vunpack.c.l.b16 %v1734
          %v1830 = vunpack.c.h.b16 %v1734
          %v1831 = vunpack.c.l.b16 %v1735
          %v1832 = vunpack.c.h.b16 %v1735
          %v1833 = vunpack.c.l.b16 %v1736
          %v1834 = vunpack.c.h.b16 %v1736
          %v1835 = vunpack.c.l.b16 %v1737
          %v1836 = vunpack.c.h.b16 %v1737
          %v1837 = vunpack.c.l.b16 %v1738
          %v1838 = vunpack.c.h.b16 %v1738
          %v1839 = vunpack.c.l.b16 %v1739
          %v1840 = vunpack.c.h.b16 %v1739
          %v1841 = vunpack.c.l.b16 %v1740
          %v1842 = vunpack.c.h.b16 %v1740
          %v1843 = vunpack.c.l.b16 %v1741
          %v1844 = vunpack.c.h.b16 %v1741
          %v1845 = vunpack.c.l.b16 %v1742
          %v1846 = vunpack.c.h.b16 %v1742
          %v1847 = vunpack.c.l.b16 %v1743
          %v1848 = vunpack.c.h.b16 %v1743
          %v1849 = vunpack.c.l.b16 %v1744
          %v1850 = vunpack.c.h.b16 %v1744
          %v1851 = vunpack.c.l.b16 %v1745
          %v1852 = vunpack.c.h.b16 %v1745
          %v1853 = vunpack.c.l.b16 %v1746
          %v1854 = vunpack.c.h.b16 %v1746
          %v1855 = vunpack.c.l.b16 %v1747
          %v1856 = vunpack.c.h.b16 %v1747
          %v1857 = vpack.c.b16 %v1795, %v1793
          %v1858 = vpack.c.b16 %v1796, %v1794
          %v1859 = vpack.c.b16 %v1799, %v1797
          %v1860 = vpack.c.b16 %v1800, %v1798
          %v1861 = vpack.c.b16 %v1803, %v1801
          %v1862 = vpack.c.b16 %v1804, %v1802
          %v1863 = vpack.c.b16 %v1807, %v1805
          %v1864 = vpack.c.b16 %v1808, %v1806
          %v1865 = vpack.c.b16 %v1811, %v1809
          %v1866 = vpack.c.b16 %v1812, %v1810
          %v1867 = vpack.c.b16 %v1815, %v1813
          %v1868 = vpack.c.b16 %v1816, %v1814
          %v1869 = vpack.c.b16 %v1819, %v1817
          %v1870 = vpack.c.b16 %v1820, %v1818
          %v1871 = vpack.c.b16 %v1823, %v1821
          %v1872 = vpack.c.b16 %v1824, %v1822
          %v1873 = vpack.c.b16 %v1827, %v1825
          %v1874 = vpack.c.b16 %v1828, %v1826
          %v1875 = vpack.c.b16 %v1831, %v1829
          %v1876 = vpack.c.b16 %v1832, %v1830
          %v1877 = vpack.c.b16 %v1835, %v1833
          %v1878 = vpack.c.b16 %v1836, %v1834
          %v1879 = vpack.c.b16 %v1839, %v1837
          %v1880 = vpack.c.b16 %v1840, %v1838
          %v1881 = vpack.c.b16 %v1843, %v1841
          %v1882 = vpack.c.b16 %v1844, %v1842
          %v1883 = vpack.c.b16 %v1847, %v1845
          %v1884 = vpack.c.b16 %v1848, %v1846
          %v1885 = vpack.c.b16 %v1851, %v1849
          %v1886 = vpack.c.b16 %v1852, %v1850
          %v1887 = vpack.c.b16 %v1855, %v1853
          %v1888 = vpack.c.b16 %v1856, %v1854
          %1921 = vmatprep.subr.bf16.mxu0 %v1858
          %1922 = vmatpush1.bf16.msra.mxu0 %v1857
          %1923 = vmatprep.subr.bf16.mxu0 %v1860
          %1924 = vmatpush1.bf16.msra.mxu0 %v1859
          %1925 = vmatprep.subr.bf16.mxu0 %v1862
          %1926 = vmatpush1.bf16.msra.mxu0 %v1861
          %1927 = vmatprep.subr.bf16.mxu0 %v1864
          %1928 = vmatpush1.bf16.msra.mxu0 %v1863
          %1929 = vmatprep.subr.bf16.mxu0 %v1866
          %1930 = vmatpush1.bf16.msra.mxu0 %v1865
          %1931 = vmatprep.subr.bf16.mxu0 %v1868
          %1932 = vmatpush1.bf16.msra.mxu0 %v1867
          %1933 = vmatprep.subr.bf16.mxu0 %v1870
          %1934 = vmatpush1.bf16.msra.mxu0 %v1869
          %1935 = vmatprep.subr.bf16.mxu0 %v1872
          %1936 = vmatpush1.bf16.msra.mxu0 %v1871
          %1937 = vmatprep.subr.bf16.mxu0 %v1874
          %1938 = vmatpush1.bf16.msra.mxu0 %v1873
          %1939 = vmatprep.subr.bf16.mxu0 %v1876
          %1940 = vmatpush1.bf16.msra.mxu0 %v1875
          %1941 = vmatprep.subr.bf16.mxu0 %v1878
          %1942 = vmatpush1.bf16.msra.mxu0 %v1877
          %1943 = vmatprep.subr.bf16.mxu0 %v1880
          %1944 = vmatpush1.bf16.msra.mxu0 %v1879
          %1945 = vmatprep.subr.bf16.mxu0 %v1882
          %1946 = vmatpush1.bf16.msra.mxu0 %v1881
          %1947 = vmatprep.subr.bf16.mxu0 %v1884
          %1948 = vmatpush1.bf16.msra.mxu0 %v1883
          %1949 = vmatprep.subr.bf16.mxu0 %v1886
          %1950 = vmatpush1.bf16.msra.mxu0 %v1885
          %1951 = vmatprep.subr.bf16.mxu0 %v1888
          %1952 = vmatpush1.bf16.msra.mxu0 %v1887
          %1953 = vmatprep.mubr.bf16.mxu0 %v1758
          %1954 = vmatmul.mubr.bf16.gmra.mrb[0].mxu0 %v1757
          %v1955 = vpop.f32.mrb[0].mxu0
          %v1956 = vadd.f32 0.0, %v1955
          %v1957 = vpop.f32.mrb[0].mxu0
          %v1958 = vadd.f32 0.0, %v1957
          %v1959 = vpop.f32.mrb[0].mxu0
          %v1960 = vpop.f32.mrb[0].mxu0
          %1961 = vdwg.mxu0
          %v1962 = vadd.f32 %v1712, %v1956
          %v1963 = vadd.f32 %v1713, %v1958
          %s1964 = smul.addr %s444, 2
          %s1965 = scalar_lea.vmem [#allocation7], %s1964
          %v1966 = vld [vmem:[%s1965] sm:$0x5]
          %s1967 = scalar_lea.vmem %s371, 1536 [#allocation8]
          %v1968 = vld [vmem:[%s1967] sm:$0xff]
          %v1969 = vld [vmem:[%s1967 + $0x8] sm:$0xff]
          %v1970 = vld [vmem:[%s1967 + $0x10] sm:$0xff]
          %v1971 = vld [vmem:[%s1967 + $0x18] sm:$0xff]
          %v1972 = vld [vmem:[%s1967 + $0x20] sm:$0xff]
          %v1973 = vld [vmem:[%s1967 + $0x28] sm:$0xff]
          %v1974 = vld [vmem:[%s1967 + $0x30] sm:$0xff]
          %v1975 = vld [vmem:[%s1967 + $0x38] sm:$0xff]
          %v1976 = vld [vmem:[%s1967 + $0x40] sm:$0xff]
          %v1977 = vld [vmem:[%s1967 + $0x48] sm:$0xff]
          %v1978 = vld [vmem:[%s1967 + $0x50] sm:$0xff]
          %v1979 = vld [vmem:[%s1967 + $0x58] sm:$0xff]
          %v1980 = vld [vmem:[%s1967 + $0x60] sm:$0xff]
          %v1981 = vld [vmem:[%s1967 + $0x68] sm:$0xff]
          %v1982 = vld [vmem:[%s1967 + $0x70] sm:$0xff]
          %v1983 = vld [vmem:[%s1967 + $0x78] sm:$0xff]
          %v1984 = vld [vmem:[%s1967 + $0x80] sm:$0xff]
          %v1985 = vld [vmem:[%s1967 + $0x88] sm:$0xff]
          %v1986 = vld [vmem:[%s1967 + $0x90] sm:$0xff]
          %v1987 = vld [vmem:[%s1967 + $0x98] sm:$0xff]
          %v1988 = vld [vmem:[%s1967 + $0xa0] sm:$0xff]
          %v1989 = vld [vmem:[%s1967 + $0xa8] sm:$0xff]
          %v1990 = vld [vmem:[%s1967 + $0xb0] sm:$0xff]
          %v1991 = vld [vmem:[%s1967 + $0xb8] sm:$0xff]
          %v1992 = vld [vmem:[%s1967 + $0xc0] sm:$0xff]
          %v1993 = vld [vmem:[%s1967 + $0xc8] sm:$0xff]
          %v1994 = vld [vmem:[%s1967 + $0xd0] sm:$0xff]
          %v1995 = vld [vmem:[%s1967 + $0xd8] sm:$0xff]
          %v1996 = vld [vmem:[%s1967 + $0xe0] sm:$0xff]
          %v1997 = vld [vmem:[%s1967 + $0xe8] sm:$0xff]
          %v1998 = vld [vmem:[%s1967 + $0xf0] sm:$0xff]
          %v1999 = vld [vmem:[%s1967 + $0xf8] sm:$0xff]
          %v2002 = vunpack.c.l.s4 1983009808
          %v2003 = vunpack.c.0.s8 %v2002
          %v2004 = vlaneseq
          %v2005 = vshrl.u32 %v2004, 7
          %v2006 = vsub.s32 %v2003, %v2005
          %v2007 = vrot.slane %v1966, %v2006
          %v2008 = vcombine.high %v2007, %v2007
          %v2043 = vunpack.c.l.b16 %v1968
          %v2044 = vunpack.c.h.b16 %v1968
          %v2045 = vunpack.c.l.b16 %v1969
          %v2046 = vunpack.c.h.b16 %v1969
          %v2047 = vunpack.c.l.b16 %v1970
          %v2048 = vunpack.c.h.b16 %v1970
          %v2049 = vunpack.c.l.b16 %v1971
          %v2050 = vunpack.c.h.b16 %v1971
          %v2051 = vunpack.c.l.b16 %v1972
          %v2052 = vunpack.c.h.b16 %v1972
          %v2053 = vunpack.c.l.b16 %v1973
          %v2054 = vunpack.c.h.b16 %v1973
          %v2055 = vunpack.c.l.b16 %v1974
          %v2056 = vunpack.c.h.b16 %v1974
          %v2057 = vunpack.c.l.b16 %v1975
          %v2058 = vunpack.c.h.b16 %v1975
          %v2059 = vunpack.c.l.b16 %v1976
          %v2060 = vunpack.c.h.b16 %v1976
          %v2061 = vunpack.c.l.b16 %v1977
          %v2062 = vunpack.c.h.b16 %v1977
          %v2063 = vunpack.c.l.b16 %v1978
          %v2064 = vunpack.c.h.b16 %v1978
          %v2065 = vunpack.c.l.b16 %v1979
          %v2066 = vunpack.c.h.b16 %v1979
          %v2067 = vunpack.c.l.b16 %v1980
          %v2068 = vunpack.c.h.b16 %v1980
          %v2069 = vunpack.c.l.b16 %v1981
          %v2070 = vunpack.c.h.b16 %v1981
          %v2071 = vunpack.c.l.b16 %v1982
          %v2072 = vunpack.c.h.b16 %v1982
          %v2073 = vunpack.c.l.b16 %v1983
          %v2074 = vunpack.c.h.b16 %v1983
          %v2075 = vunpack.c.l.b16 %v1984
          %v2076 = vunpack.c.h.b16 %v1984
          %v2077 = vunpack.c.l.b16 %v1985
          %v2078 = vunpack.c.h.b16 %v1985
          %v2079 = vunpack.c.l.b16 %v1986
          %v2080 = vunpack.c.h.b16 %v1986
          %v2081 = vunpack.c.l.b16 %v1987
          %v2082 = vunpack.c.h.b16 %v1987
          %v2083 = vunpack.c.l.b16 %v1988
          %v2084 = vunpack.c.h.b16 %v1988
          %v2085 = vunpack.c.l.b16 %v1989
          %v2086 = vunpack.c.h.b16 %v1989
          %v2087 = vunpack.c.l.b16 %v1990
          %v2088 = vunpack.c.h.b16 %v1990
          %v2089 = vunpack.c.l.b16 %v1991
          %v2090 = vunpack.c.h.b16 %v1991
          %v2091 = vunpack.c.l.b16 %v1992
          %v2092 = vunpack.c.h.b16 %v1992
          %v2093 = vunpack.c.l.b16 %v1993
          %v2094 = vunpack.c.h.b16 %v1993
          %v2095 = vunpack.c.l.b16 %v1994
          %v2096 = vunpack.c.h.b16 %v1994
          %v2097 = vunpack.c.l.b16 %v1995
          %v2098 = vunpack.c.h.b16 %v1995
          %v2099 = vunpack.c.l.b16 %v1996
          %v2100 = vunpack.c.h.b16 %v1996
          %v2101 = vunpack.c.l.b16 %v1997
          %v2102 = vunpack.c.h.b16 %v1997
          %v2103 = vunpack.c.l.b16 %v1998
          %v2104 = vunpack.c.h.b16 %v1998
          %v2105 = vunpack.c.l.b16 %v1999
          %v2106 = vunpack.c.h.b16 %v1999
          %v2107 = vpack.c.b16 %v2045, %v2043
          %v2108 = vpack.c.b16 %v2046, %v2044
          %v2109 = vpack.c.b16 %v2049, %v2047
          %v2110 = vpack.c.b16 %v2050, %v2048
          %v2111 = vpack.c.b16 %v2053, %v2051
          %v2112 = vpack.c.b16 %v2054, %v2052
          %v2113 = vpack.c.b16 %v2057, %v2055
          %v2114 = vpack.c.b16 %v2058, %v2056
          %v2115 = vpack.c.b16 %v2061, %v2059
          %v2116 = vpack.c.b16 %v2062, %v2060
          %v2117 = vpack.c.b16 %v2065, %v2063
          %v2118 = vpack.c.b16 %v2066, %v2064
          %v2119 = vpack.c.b16 %v2069, %v2067
          %v2120 = vpack.c.b16 %v2070, %v2068
          %v2121 = vpack.c.b16 %v2073, %v2071
          %v2122 = vpack.c.b16 %v2074, %v2072
          %v2123 = vpack.c.b16 %v2077, %v2075
          %v2124 = vpack.c.b16 %v2078, %v2076
          %v2125 = vpack.c.b16 %v2081, %v2079
          %v2126 = vpack.c.b16 %v2082, %v2080
          %v2127 = vpack.c.b16 %v2085, %v2083
          %v2128 = vpack.c.b16 %v2086, %v2084
          %v2129 = vpack.c.b16 %v2089, %v2087
          %v2130 = vpack.c.b16 %v2090, %v2088
          %v2131 = vpack.c.b16 %v2093, %v2091
          %v2132 = vpack.c.b16 %v2094, %v2092
          %v2133 = vpack.c.b16 %v2097, %v2095
          %v2134 = vpack.c.b16 %v2098, %v2096
          %v2135 = vpack.c.b16 %v2101, %v2099
          %v2136 = vpack.c.b16 %v2102, %v2100
          %v2137 = vpack.c.b16 %v2105, %v2103
          %v2138 = vpack.c.b16 %v2106, %v2104
          %2171 = vmatprep.subr.bf16.mxu0 %v2108
          %2172 = vmatpush1.bf16.msra.mxu0 %v2107
          %2173 = vmatprep.subr.bf16.mxu0 %v2110
          %2174 = vmatpush1.bf16.msra.mxu0 %v2109
          %2175 = vmatprep.subr.bf16.mxu0 %v2112
          %2176 = vmatpush1.bf16.msra.mxu0 %v2111
          %2177 = vmatprep.subr.bf16.mxu0 %v2114
          %2178 = vmatpush1.bf16.msra.mxu0 %v2113
          %2179 = vmatprep.subr.bf16.mxu0 %v2116
          %2180 = vmatpush1.bf16.msra.mxu0 %v2115
          %2181 = vmatprep.subr.bf16.mxu0 %v2118
          %2182 = vmatpush1.bf16.msra.mxu0 %v2117
          %2183 = vmatprep.subr.bf16.mxu0 %v2120
          %2184 = vmatpush1.bf16.msra.mxu0 %v2119
          %2185 = vmatprep.subr.bf16.mxu0 %v2122
          %2186 = vmatpush1.bf16.msra.mxu0 %v2121
          %2187 = vmatprep.subr.bf16.mxu0 %v2124
          %2188 = vmatpush1.bf16.msra.mxu0 %v2123
          %2189 = vmatprep.subr.bf16.mxu0 %v2126
          %2190 = vmatpush1.bf16.msra.mxu0 %v2125
          %2191 = vmatprep.subr.bf16.mxu0 %v2128
          %2192 = vmatpush1.bf16.msra.mxu0 %v2127
          %2193 = vmatprep.subr.bf16.mxu0 %v2130
          %2194 = vmatpush1.bf16.msra.mxu0 %v2129
          %2195 = vmatprep.subr.bf16.mxu0 %v2132
          %2196 = vmatpush1.bf16.msra.mxu0 %v2131
          %2197 = vmatprep.subr.bf16.mxu0 %v2134
          %2198 = vmatpush1.bf16.msra.mxu0 %v2133
          %2199 = vmatprep.subr.bf16.mxu0 %v2136
          %2200 = vmatpush1.bf16.msra.mxu0 %v2135
          %2201 = vmatprep.subr.bf16.mxu0 %v2138
          %2202 = vmatpush1.bf16.msra.mxu0 %v2137
          %2203 = vmatprep.mubr.bf16.mxu0 %v2008
          %2204 = vmatmul.mubr.bf16.gmra.mrb[0].mxu0 %v2007
          %v2205 = vpop.f32.mrb[0].mxu0
          %v2206 = vadd.f32 0.0, %v2205
          %v2207 = vpop.f32.mrb[0].mxu0
          %v2208 = vadd.f32 0.0, %v2207
          %v2209 = vpop.f32.mrb[0].mxu0
          %v2210 = vpop.f32.mrb[0].mxu0
          %2211 = vdwg.mxu0
          %v2212 = vadd.f32 %v1962, %v2206
          %v2213 = vadd.f32 %v1963, %v2208
          %v2214 = vld [vmem:[%s1965] sm:$0xf]
          %s2215 = scalar_lea.vmem %s371, 1792 [#allocation8]
          %v2216 = vld [vmem:[%s2215] sm:$0xff]
          %v2217 = vld [vmem:[%s2215 + $0x8] sm:$0xff]
          %v2218 = vld [vmem:[%s2215 + $0x10] sm:$0xff]
          %v2219 = vld [vmem:[%s2215 + $0x18] sm:$0xff]
          %v2220 = vld [vmem:[%s2215 + $0x20] sm:$0xff]
          %v2221 = vld [vmem:[%s2215 + $0x28] sm:$0xff]
          %v2222 = vld [vmem:[%s2215 + $0x30] sm:$0xff]
          %v2223 = vld [vmem:[%s2215 + $0x38] sm:$0xff]
          %v2224 = vld [vmem:[%s2215 + $0x40] sm:$0xff]
          %v2225 = vld [vmem:[%s2215 + $0x48] sm:$0xff]
          %v2226 = vld [vmem:[%s2215 + $0x50] sm:$0xff]
          %v2227 = vld [vmem:[%s2215 + $0x58] sm:$0xff]
          %v2228 = vld [vmem:[%s2215 + $0x60] sm:$0xff]
          %v2229 = vld [vmem:[%s2215 + $0x68] sm:$0xff]
          %v2230 = vld [vmem:[%s2215 + $0x70] sm:$0xff]
          %v2231 = vld [vmem:[%s2215 + $0x78] sm:$0xff]
          %v2232 = vld [vmem:[%s2215 + $0x80] sm:$0xff]
          %v2233 = vld [vmem:[%s2215 + $0x88] sm:$0xff]
          %v2234 = vld [vmem:[%s2215 + $0x90] sm:$0xff]
          %v2235 = vld [vmem:[%s2215 + $0x98] sm:$0xff]
          %v2236 = vld [vmem:[%s2215 + $0xa0] sm:$0xff]
          %v2237 = vld [vmem:[%s2215 + $0xa8] sm:$0xff]
          %v2238 = vld [vmem:[%s2215 + $0xb0] sm:$0xff]
          %v2239 = vld [vmem:[%s2215 + $0xb8] sm:$0xff]
          %v2240 = vld [vmem:[%s2215 + $0xc0] sm:$0xff]
          %v2241 = vld [vmem:[%s2215 + $0xc8] sm:$0xff]
          %v2242 = vld [vmem:[%s2215 + $0xd0] sm:$0xff]
          %v2243 = vld [vmem:[%s2215 + $0xd8] sm:$0xff]
          %v2244 = vld [vmem:[%s2215 + $0xe0] sm:$0xff]
          %v2245 = vld [vmem:[%s2215 + $0xe8] sm:$0xff]
          %v2246 = vld [vmem:[%s2215 + $0xf0] sm:$0xff]
          %v2247 = vld [vmem:[%s2215 + $0xf8] sm:$0xff]
          %v2250 = vunpack.c.l.s4 1983009808
          %v2251 = vunpack.c.0.s8 %v2250
          %v2252 = vlaneseq
          %v2253 = vshrl.u32 %v2252, 7
          %v2254 = vsub.s32 %v2251, %v2253
          %v2255 = vrot.slane %v2214, %v2254
          %v2256 = vcombine.high %v2255, %v2255
          %v2258 = vshrl.u32 %v2255, 16
          %v2260 = vshll.u32 %v2255, 16
          %v2262 = vrot.slane %v2260, 1
          %v2263 = vor.u32 %v2258, %v2262
          %v2265 = vshrl.u32 %v2256, 16
          %v2267 = vshll.u32 %v2256, 16
          %v2269 = vrot.slane %v2267, 1
          %v2270 = vor.u32 %v2265, %v2269
          %v2305 = vunpack.c.l.b16 %v2216
          %v2306 = vunpack.c.h.b16 %v2216
          %v2307 = vunpack.c.l.b16 %v2217
          %v2308 = vunpack.c.h.b16 %v2217
          %v2309 = vunpack.c.l.b16 %v2218
          %v2310 = vunpack.c.h.b16 %v2218
          %v2311 = vunpack.c.l.b16 %v2219
          %v2312 = vunpack.c.h.b16 %v2219
          %v2313 = vunpack.c.l.b16 %v2220
          %v2314 = vunpack.c.h.b16 %v2220
          %v2315 = vunpack.c.l.b16 %v2221
          %v2316 = vunpack.c.h.b16 %v2221
          %v2317 = vunpack.c.l.b16 %v2222
          %v2318 = vunpack.c.h.b16 %v2222
          %v2319 = vunpack.c.l.b16 %v2223
          %v2320 = vunpack.c.h.b16 %v2223
          %v2321 = vunpack.c.l.b16 %v2224
          %v2322 = vunpack.c.h.b16 %v2224
          %v2323 = vunpack.c.l.b16 %v2225
          %v2324 = vunpack.c.h.b16 %v2225
          %v2325 = vunpack.c.l.b16 %v2226
          %v2326 = vunpack.c.h.b16 %v2226
          %v2327 = vunpack.c.l.b16 %v2227
          %v2328 = vunpack.c.h.b16 %v2227
          %v2329 = vunpack.c.l.b16 %v2228
          %v2330 = vunpack.c.h.b16 %v2228
          %v2331 = vunpack.c.l.b16 %v2229
          %v2332 = vunpack.c.h.b16 %v2229
          %v2333 = vunpack.c.l.b16 %v2230
          %v2334 = vunpack.c.h.b16 %v2230
          %v2335 = vunpack.c.l.b16 %v2231
          %v2336 = vunpack.c.h.b16 %v2231
          %v2337 = vunpack.c.l.b16 %v2232
          %v2338 = vunpack.c.h.b16 %v2232
          %v2339 = vunpack.c.l.b16 %v2233
          %v2340 = vunpack.c.h.b16 %v2233
          %v2341 = vunpack.c.l.b16 %v2234
          %v2342 = vunpack.c.h.b16 %v2234
          %v2343 = vunpack.c.l.b16 %v2235
          %v2344 = vunpack.c.h.b16 %v2235
          %v2345 = vunpack.c.l.b16 %v2236
          %v2346 = vunpack.c.h.b16 %v2236
          %v2347 = vunpack.c.l.b16 %v2237
          %v2348 = vunpack.c.h.b16 %v2237
          %v2349 = vunpack.c.l.b16 %v2238
          %v2350 = vunpack.c.h.b16 %v2238
          %v2351 = vunpack.c.l.b16 %v2239
          %v2352 = vunpack.c.h.b16 %v2239
          %v2353 = vunpack.c.l.b16 %v2240
          %v2354 = vunpack.c.h.b16 %v2240
          %v2355 = vunpack.c.l.b16 %v2241
          %v2356 = vunpack.c.h.b16 %v2241
          %v2357 = vunpack.c.l.b16 %v2242
          %v2358 = vunpack.c.h.b16 %v2242
          %v2359 = vunpack.c.l.b16 %v2243
          %v2360 = vunpack.c.h.b16 %v2243
          %v2361 = vunpack.c.l.b16 %v2244
          %v2362 = vunpack.c.h.b16 %v2244
          %v2363 = vunpack.c.l.b16 %v2245
          %v2364 = vunpack.c.h.b16 %v2245
          %v2365 = vunpack.c.l.b16 %v2246
          %v2366 = vunpack.c.h.b16 %v2246
          %v2367 = vunpack.c.l.b16 %v2247
          %v2368 = vunpack.c.h.b16 %v2247
          %v2369 = vpack.c.b16 %v2307, %v2305
          %v2370 = vpack.c.b16 %v2308, %v2306
          %v2371 = vpack.c.b16 %v2311, %v2309
          %v2372 = vpack.c.b16 %v2312, %v2310
          %v2373 = vpack.c.b16 %v2315, %v2313
          %v2374 = vpack.c.b16 %v2316, %v2314
          %v2375 = vpack.c.b16 %v2319, %v2317
          %v2376 = vpack.c.b16 %v2320, %v2318
          %v2377 = vpack.c.b16 %v2323, %v2321
          %v2378 = vpack.c.b16 %v2324, %v2322
          %v2379 = vpack.c.b16 %v2327, %v2325
          %v2380 = vpack.c.b16 %v2328, %v2326
          %v2381 = vpack.c.b16 %v2331, %v2329
          %v2382 = vpack.c.b16 %v2332, %v2330
          %v2383 = vpack.c.b16 %v2335, %v2333
          %v2384 = vpack.c.b16 %v2336, %v2334
          %v2385 = vpack.c.b16 %v2339, %v2337
          %v2386 = vpack.c.b16 %v2340, %v2338
          %v2387 = vpack.c.b16 %v2343, %v2341
          %v2388 = vpack.c.b16 %v2344, %v2342
          %v2389 = vpack.c.b16 %v2347, %v2345
          %v2390 = vpack.c.b16 %v2348, %v2346
          %v2391 = vpack.c.b16 %v2351, %v2349
          %v2392 = vpack.c.b16 %v2352, %v2350
          %v2393 = vpack.c.b16 %v2355, %v2353
          %v2394 = vpack.c.b16 %v2356, %v2354
          %v2395 = vpack.c.b16 %v2359, %v2357
          %v2396 = vpack.c.b16 %v2360, %v2358
          %v2397 = vpack.c.b16 %v2363, %v2361
          %v2398 = vpack.c.b16 %v2364, %v2362
          %v2399 = vpack.c.b16 %v2367, %v2365
          %v2400 = vpack.c.b16 %v2368, %v2366
          %2433 = vmatprep.subr.bf16.mxu0 %v2370
          %2434 = vmatpush1.bf16.msra.mxu0 %v2369
          %2435 = vmatprep.subr.bf16.mxu0 %v2372
          %2436 = vmatpush1.bf16.msra.mxu0 %v2371
          %2437 = vmatprep.subr.bf16.mxu0 %v2374
          %2438 = vmatpush1.bf16.msra.mxu0 %v2373
          %2439 = vmatprep.subr.bf16.mxu0 %v2376
          %2440 = vmatpush1.bf16.msra.mxu0 %v2375
          %2441 = vmatprep.subr.bf16.mxu0 %v2378
          %2442 = vmatpush1.bf16.msra.mxu0 %v2377
          %2443 = vmatprep.subr.bf16.mxu0 %v2380
          %2444 = vmatpush1.bf16.msra.mxu0 %v2379
          %2445 = vmatprep.subr.bf16.mxu0 %v2382
          %2446 = vmatpush1.bf16.msra.mxu0 %v2381
          %2447 = vmatprep.subr.bf16.mxu0 %v2384
          %2448 = vmatpush1.bf16.msra.mxu0 %v2383
          %2449 = vmatprep.subr.bf16.mxu0 %v2386
          %2450 = vmatpush1.bf16.msra.mxu0 %v2385
          %2451 = vmatprep.subr.bf16.mxu0 %v2388
          %2452 = vmatpush1.bf16.msra.mxu0 %v2387
          %2453 = vmatprep.subr.bf16.mxu0 %v2390
          %2454 = vmatpush1.bf16.msra.mxu0 %v2389
          %2455 = vmatprep.subr.bf16.mxu0 %v2392
          %2456 = vmatpush1.bf16.msra.mxu0 %v2391
          %2457 = vmatprep.subr.bf16.mxu0 %v2394
          %2458 = vmatpush1.bf16.msra.mxu0 %v2393
          %2459 = vmatprep.subr.bf16.mxu0 %v2396
          %2460 = vmatpush1.bf16.msra.mxu0 %v2395
          %2461 = vmatprep.subr.bf16.mxu0 %v2398
          %2462 = vmatpush1.bf16.msra.mxu0 %v2397
          %2463 = vmatprep.subr.bf16.mxu0 %v2400
          %2464 = vmatpush1.bf16.msra.mxu0 %v2399
          %2465 = vmatprep.mubr.bf16.mxu0 %v2270
          %2466 = vmatmul.mubr.bf16.gmra.mrb[0].mxu0 %v2263
          %v2467 = vpop.f32.mrb[0].mxu0
          %v2468 = vadd.f32 0.0, %v2467
          %v2469 = vpop.f32.mrb[0].mxu0
          %v2470 = vadd.f32 0.0, %v2469
          %v2471 = vpop.f32.mrb[0].mxu0
          %v2472 = vpop.f32.mrb[0].mxu0
          %2473 = vdwg.mxu0
          %v2474 = vadd.f32 %v2212, %v2468
          %v2475 = vadd.f32 %v2213, %v2470
          %v2476 = vld [vmem:[%s1965] sm:$0xa]
          %s2477 = scalar_lea.vmem %s371, 2048 [#allocation8]
          %v2478 = vld [vmem:[%s2477] sm:$0xff]
          %v2479 = vld [vmem:[%s2477 + $0x8] sm:$0xff]
          %v2480 = vld [vmem:[%s2477 + $0x10] sm:$0xff]
          %v2481 = vld [vmem:[%s2477 + $0x18] sm:$0xff]
          %v2482 = vld [vmem:[%s2477 + $0x20] sm:$0xff]
          %v2483 = vld [vmem:[%s2477 + $0x28] sm:$0xff]
          %v2484 = vld [vmem:[%s2477 + $0x30] sm:$0xff]
          %v2485 = vld [vmem:[%s2477 + $0x38] sm:$0xff]
          %v2486 = vld [vmem:[%s2477 + $0x40] sm:$0xff]
          %v2487 = vld [vmem:[%s2477 + $0x48] sm:$0xff]
          %v2488 = vld [vmem:[%s2477 + $0x50] sm:$0xff]
          %v2489 = vld [vmem:[%s2477 + $0x58] sm:$0xff]
          %v2490 = vld [vmem:[%s2477 + $0x60] sm:$0xff]
          %v2491 = vld [vmem:[%s2477 + $0x68] sm:$0xff]
          %v2492 = vld [vmem:[%s2477 + $0x70] sm:$0xff]
          %v2493 = vld [vmem:[%s2477 + $0x78] sm:$0xff]
          %v2494 = vld [vmem:[%s2477 + $0x80] sm:$0xff]
          %v2495 = vld [vmem:[%s2477 + $0x88] sm:$0xff]
          %v2496 = vld [vmem:[%s2477 + $0x90] sm:$0xff]
          %v2497 = vld [vmem:[%s2477 + $0x98] sm:$0xff]
          %v2498 = vld [vmem:[%s2477 + $0xa0] sm:$0xff]
          %v2499 = vld [vmem:[%s2477 + $0xa8] sm:$0xff]
          %v2500 = vld [vmem:[%s2477 + $0xb0] sm:$0xff]
          %v2501 = vld [vmem:[%s2477 + $0xb8] sm:$0xff]
          %v2502 = vld [vmem:[%s2477 + $0xc0] sm:$0xff]
          %v2503 = vld [vmem:[%s2477 + $0xc8] sm:$0xff]
          %v2504 = vld [vmem:[%s2477 + $0xd0] sm:$0xff]
          %v2505 = vld [vmem:[%s2477 + $0xd8] sm:$0xff]
          %v2506 = vld [vmem:[%s2477 + $0xe0] sm:$0xff]
          %v2507 = vld [vmem:[%s2477 + $0xe8] sm:$0xff]
          %v2508 = vld [vmem:[%s2477 + $0xf0] sm:$0xff]
          %v2509 = vld [vmem:[%s2477 + $0xf8] sm:$0xff]
          %v2512 = vunpack.c.l.s4 1983009808
          %v2513 = vunpack.c.0.s8 %v2512
          %v2514 = vlaneseq
          %v2515 = vshrl.u32 %v2514, 7
          %v2516 = vsub.s32 %v2513, %v2515
          %v2517 = vrot.slane %v2476, %v2516
          %v2518 = vcombine.high %v2517, %v2517
          %v2519 = vrot.slane %v2517, 1
          %v2520 = vrot.slane %v2518, 1
          %v2555 = vunpack.c.l.b16 %v2478
          %v2556 = vunpack.c.h.b16 %v2478
          %v2557 = vunpack.c.l.b16 %v2479
          %v2558 = vunpack.c.h.b16 %v2479
          %v2559 = vunpack.c.l.b16 %v2480
          %v2560 = vunpack.c.h.b16 %v2480
          %v2561 = vunpack.c.l.b16 %v2481
          %v2562 = vunpack.c.h.b16 %v2481
          %v2563 = vunpack.c.l.b16 %v2482
          %v2564 = vunpack.c.h.b16 %v2482
          %v2565 = vunpack.c.l.b16 %v2483
          %v2566 = vunpack.c.h.b16 %v2483
          %v2567 = vunpack.c.l.b16 %v2484
          %v2568 = vunpack.c.h.b16 %v2484
          %v2569 = vunpack.c.l.b16 %v2485
          %v2570 = vunpack.c.h.b16 %v2485
          %v2571 = vunpack.c.l.b16 %v2486
          %v2572 = vunpack.c.h.b16 %v2486
          %v2573 = vunpack.c.l.b16 %v2487
          %v2574 = vunpack.c.h.b16 %v2487
          %v2575 = vunpack.c.l.b16 %v2488
          %v2576 = vunpack.c.h.b16 %v2488
          %v2577 = vunpack.c.l.b16 %v2489
          %v2578 = vunpack.c.h.b16 %v2489
          %v2579 = vunpack.c.l.b16 %v2490
          %v2580 = vunpack.c.h.b16 %v2490
          %v2581 = vunpack.c.l.b16 %v2491
          %v2582 = vunpack.c.h.b16 %v2491
          %v2583 = vunpack.c.l.b16 %v2492
          %v2584 = vunpack.c.h.b16 %v2492
          %v2585 = vunpack.c.l.b16 %v2493
          %v2586 = vunpack.c.h.b16 %v2493
          %v2587 = vunpack.c.l.b16 %v2494
          %v2588 = vunpack.c.h.b16 %v2494
          %v2589 = vunpack.c.l.b16 %v2495
          %v2590 = vunpack.c.h.b16 %v2495
          %v2591 = vunpack.c.l.b16 %v2496
          %v2592 = vunpack.c.h.b16 %v2496
          %v2593 = vunpack.c.l.b16 %v2497
          %v2594 = vunpack.c.h.b16 %v2497
          %v2595 = vunpack.c.l.b16 %v2498
          %v2596 = vunpack.c.h.b16 %v2498
          %v2597 = vunpack.c.l.b16 %v2499
          %v2598 = vunpack.c.h.b16 %v2499
          %v2599 = vunpack.c.l.b16 %v2500
          %v2600 = vunpack.c.h.b16 %v2500
          %v2601 = vunpack.c.l.b16 %v2501
          %v2602 = vunpack.c.h.b16 %v2501
          %v2603 = vunpack.c.l.b16 %v2502
          %v2604 = vunpack.c.h.b16 %v2502
          %v2605 = vunpack.c.l.b16 %v2503
          %v2606 = vunpack.c.h.b16 %v2503
          %v2607 = vunpack.c.l.b16 %v2504
          %v2608 = vunpack.c.h.b16 %v2504
          %v2609 = vunpack.c.l.b16 %v2505
          %v2610 = vunpack.c.h.b16 %v2505
          %v2611 = vunpack.c.l.b16 %v2506
          %v2612 = vunpack.c.h.b16 %v2506
          %v2613 = vunpack.c.l.b16 %v2507
          %v2614 = vunpack.c.h.b16 %v2507
          %v2615 = vunpack.c.l.b16 %v2508
          %v2616 = vunpack.c.h.b16 %v2508
          %v2617 = vunpack.c.l.b16 %v2509
          %v2618 = vunpack.c.h.b16 %v2509
          %v2619 = vpack.c.b16 %v2557, %v2555
          %v2620 = vpack.c.b16 %v2558, %v2556
          %v2621 = vpack.c.b16 %v2561, %v2559
          %v2622 = vpack.c.b16 %v2562, %v2560
          %v2623 = vpack.c.b16 %v2565, %v2563
          %v2624 = vpack.c.b16 %v2566, %v2564
          %v2625 = vpack.c.b16 %v2569, %v2567
          %v2626 = vpack.c.b16 %v2570, %v2568
          %v2627 = vpack.c.b16 %v2573, %v2571
          %v2628 = vpack.c.b16 %v2574, %v2572
          %v2629 = vpack.c.b16 %v2577, %v2575
          %v2630 = vpack.c.b16 %v2578, %v2576
          %v2631 = vpack.c.b16 %v2581, %v2579
          %v2632 = vpack.c.b16 %v2582, %v2580
          %v2633 = vpack.c.b16 %v2585, %v2583
          %v2634 = vpack.c.b16 %v2586, %v2584
          %v2635 = vpack.c.b16 %v2589, %v2587
          %v2636 = vpack.c.b16 %v2590, %v2588
          %v2637 = vpack.c.b16 %v2593, %v2591
          %v2638 = vpack.c.b16 %v2594, %v2592
          %v2639 = vpack.c.b16 %v2597, %v2595
          %v2640 = vpack.c.b16 %v2598, %v2596
          %v2641 = vpack.c.b16 %v2601, %v2599
          %v2642 = vpack.c.b16 %v2602, %v2600
          %v2643 = vpack.c.b16 %v2605, %v2603
          %v2644 = vpack.c.b16 %v2606, %v2604
          %v2645 = vpack.c.b16 %v2609, %v2607
          %v2646 = vpack.c.b16 %v2610, %v2608
          %v2647 = vpack.c.b16 %v2613, %v2611
          %v2648 = vpack.c.b16 %v2614, %v2612
          %v2649 = vpack.c.b16 %v2617, %v2615
          %v2650 = vpack.c.b16 %v2618, %v2616
          %2683 = vmatprep.subr.bf16.mxu0 %v2620
          %2684 = vmatpush1.bf16.msra.mxu0 %v2619
          %2685 = vmatprep.subr.bf16.mxu0 %v2622
          %2686 = vmatpush1.bf16.msra.mxu0 %v2621
          %2687 = vmatprep.subr.bf16.mxu0 %v2624
          %2688 = vmatpush1.bf16.msra.mxu0 %v2623
          %2689 = vmatprep.subr.bf16.mxu0 %v2626
          %2690 = vmatpush1.bf16.msra.mxu0 %v2625
          %2691 = vmatprep.subr.bf16.mxu0 %v2628
          %2692 = vmatpush1.bf16.msra.mxu0 %v2627
          %2693 = vmatprep.subr.bf16.mxu0 %v2630
          %2694 = vmatpush1.bf16.msra.mxu0 %v2629
          %2695 = vmatprep.subr.bf16.mxu0 %v2632
          %2696 = vmatpush1.bf16.msra.mxu0 %v2631
          %2697 = vmatprep.subr.bf16.mxu0 %v2634
          %2698 = vmatpush1.bf16.msra.mxu0 %v2633
          %2699 = vmatprep.subr.bf16.mxu0 %v2636
          %2700 = vmatpush1.bf16.msra.mxu0 %v2635
          %2701 = vmatprep.subr.bf16.mxu0 %v2638
          %2702 = vmatpush1.bf16.msra.mxu0 %v2637
          %2703 = vmatprep.subr.bf16.mxu0 %v2640
          %2704 = vmatpush1.bf16.msra.mxu0 %v2639
          %2705 = vmatprep.subr.bf16.mxu0 %v2642
          %2706 = vmatpush1.bf16.msra.mxu0 %v2641
          %2707 = vmatprep.subr.bf16.mxu0 %v2644
          %2708 = vmatpush1.bf16.msra.mxu0 %v2643
          %2709 = vmatprep.subr.bf16.mxu0 %v2646
          %2710 = vmatpush1.bf16.msra.mxu0 %v2645
          %2711 = vmatprep.subr.bf16.mxu0 %v2648
          %2712 = vmatpush1.bf16.msra.mxu0 %v2647
          %2713 = vmatprep.subr.bf16.mxu0 %v2650
          %2714 = vmatpush1.bf16.msra.mxu0 %v2649
          %2715 = vmatprep.mubr.bf16.mxu0 %v2520
          %2716 = vmatmul.mubr.bf16.gmra.mrb[0].mxu0 %v2519
          %v2717 = vpop.f32.mrb[0].mxu0
          %v2718 = vadd.f32 0.0, %v2717
          %v2719 = vpop.f32.mrb[0].mxu0
          %v2720 = vadd.f32 0.0, %v2719
          %v2721 = vpop.f32.mrb[0].mxu0
          %v2722 = vpop.f32.mrb[0].mxu0
          %2723 = vdwg.mxu0
          %v2724 = vadd.f32 %v2474, %v2718
          %v2725 = vadd.f32 %v2475, %v2720
          %v2727 = vlaneseq
          %v2728 = vshrl.u32 %v2727, 7
          %v2729 = vsub.s32 0, %v2728
          %v2730 = vrot.slane %v436, %v2729
          %v2731 = vlaneseq
          %v2732 = vshrl.u32 %v2731, 7
          %v2733 = vsub.s32 1, %v2732
          %v2734 = vrot.slane %v436, %v2733
          %v2737 = vmul.f32 %v2724, %v2730
          %v2738 = vmul.f32 %v2725, %v2734
          %v2740 = vlaneseq
          %v2741 = vshrl.u32 %v2740, 7
          %v2742 = vsub.s32 0, %v2741
          %v2743 = vrot.slane %v437, %v2742
          %v2744 = vlaneseq
          %v2745 = vshrl.u32 %v2744, 7
          %v2746 = vsub.s32 1, %v2745
          %v2747 = vrot.slane %v437, %v2746
          %v2750 = vadd.f32 %v2737, %v2743
          %v2751 = vadd.f32 %v2738, %v2747
          %v2752 = vmax.f32 %v2750, 0.0
          %v2753 = vmax.f32 %v2751, 0.0
          %v2756 = vcombine.low %v2752, %v2753
          %v2758 = vunpack.c.l.s4 1983009808
          %v2759 = vunpack.c.0.s8 %v2758
          %v2760 = vlaneseq
          %v2761 = vshrl.u32 %v2760, 7
          %v2762 = vsub.s32 %v2759, %v2761
          %v2763 = vrot.slane %v2756, %v2762
          %s2765 = smul.addr %s444, 2
          %s2766 = scalar_lea.vmem %s427, %s2765 [#allocation13]
          %2767 = vst [vmem:[%s2766] sm:$0xf] %v2763
        $region73: #{tower.11} parent=43 // loop_footer
          %s443 = sadd.s32 1, %s439
        $region74: #{tower.11} parent=43 // loop_footer_branch
          %438 = sbr.rel target = $region70
        $region75: #{tower.11} parent=43 // loop_exit
          _
        %s2768 = sand.u32 %s206, 1
        %s2769 = scalar_lea.sflag [#allocation4], %s2768
        %s2770 = sand.u32 %s206, 1
        %s2771 = smul.addr %s2770, 32
        %s2772 = scalar_lea.vmem [#allocation13], %s2771
        // Predicated region
        $region76: #{tower.11} parent=43 // pred_check
          %p2773 = pneg %p216
        $region77: #{tower.11} parent=43 // pred_check_branch
          %2775 = sbr.rel (%p2773) target = $region79
        $region78: #{tower.11} parent=43 // pred_region
          %s2776 = smul.u32 8, %s33
          %s2777 = smul.u32 2, %s32
          %s2779 = ssub.s32 512, 512
          %2780 = vsyncadd %s2769, %s2779
          %s2781 = smul.addr %s2776, 4
          %s2782 = sadd.s32 %s2777, %s2781
          %s2783 = smul.addr %s2782, 32
          %s2784 = scalar_lea.hbm %s6, %s2783
          %s2785 = sshll.u32 %s2772, 4
          %s2786 = int_to_ptr.vmem [resolvable:$true] %s2785
          %2791 = dma.vmem_to_hbm [thread:$0]  %s2786, 512, %s2784, %s2769, 64, 128, 4
        $region79: #{tower.11} parent=43 // pred_fallthru
          _
      $region44: #{tower.11} parent=5 // pred_fallthru
        _
      %p2792 = scmp.le.s32.totalorder 2, %s23
      // Predicated region
      $region80: #{tower.11} parent=5 // pred_check
        %p2793 = pneg %p2792
      $region81: #{tower.11} parent=5 // pred_check_branch
        %2795 = sbr.rel (%p2793) target = $region83
      $region82: #{tower.11} parent=5 // pred_region
        %s2796 = ssub.s32 %s23, 2
        // Predicated region
        $region84: #{tower.11} parent=82 // pred_check
          %p2797 = pneg %p222
        $region85: #{tower.11} parent=82 // pred_check_branch
          %2799 = sbr.rel (%p2797) target = $region87
        $region86: #{tower.11} parent=82 // pred_region
          %s2800 = sand.u32 %s207, 1
          %s2801 = scalar_lea.sflag [#allocation4], %s2800
          %s2802 = sand.u32 %s207, 1
          %s2803 = smul.addr %s2802, 32
          %s2804 = scalar_lea.vmem [#allocation13], %s2803
          %2805 = dma.done %s2801, 512
        $region87: #{tower.11} parent=82 // pred_fallthru
          _
      $region83: #{tower.11} parent=5 // pred_fallthru
        _
    $region6: #{tower.11} parent=1 // loop_footer
      %s27 = sadd.s32 1, %s23
    $region7: #{tower.11} parent=1 // loop_footer_branch
      %22 = sbr.rel target = $region3
    $region8: #{tower.11} parent=1 // loop_exit
      _
    %2806 = vsyncpa [#allocation3], 1
    %s2807 = scalar_lea.sflag [#allocation3], 1
    %2808 = vsyncpa %s2807, 1
    %2809 = vsyncpa [#allocation6], 1
    %2810 = vsyncpa [#allocation9], 1
    %s2811 = scalar_lea.sflag [#allocation9], 1
    %2812 = vsyncpa %s2811, 1
    %2813 = vsyncpa [#allocation12], 1
    %s2814 = scalar_lea.sflag [#allocation12], 1
    %2815 = vsyncpa %s2814, 1
    %2816 = vsyncpa [#allocation4], 1
    %s2817 = scalar_lea.sflag [#allocation4], 1
    %2818 = vsyncpa %s2817, 1

</llo_original>
